<compile_context>
chip_gen: v7x
topology: tpu7x:2x2x1
jax: 0.10.0
libtpu: 0.0.40
codegen_flags: <defaults>
</compile_context>

<pallas_src>
import numpy as np
import jax
import jax.numpy as jnp
from jax.experimental import pallas as pl
from jax.experimental.pallas import tpu as pltpu

FRAG = 96
N_FRAG = 18
N_PAIR = 24           # 12 horizontal + 12 vertical pairs
N_BAND = 3            # 96-row bands of the 288-row image
IMG_H = 288
IMG_W = 576
FEN_DIM = 512         # fen_model output dim (fc_0 input)
FC0_DIM = 128
HIDDEN = 256          # dqn_model(256)
BN_EPS = 1e-5

HORI_PAIRS = [(0, 1), (1, 2), (3, 4), (4, 5), (6, 7), (7, 8),
              (9, 10), (10, 11), (12, 13), (13, 14), (15, 16), (16, 17)]
VERT_PAIRS = [(0, 3), (1, 4), (2, 5), (3, 6), (4, 7), (5, 8),
              (9, 12), (10, 13), (11, 14), (12, 15), (13, 16), (14, 17)]


# --------------------------------------------------------------------------
# Kernel.  grid = (B, 3): one batch element x one 96-row band per step.
# Bands 0..2 pool their 6 column-fragments into a [C, 18] scratch; the last
# band additionally runs the whole per-sample MLP and writes the Q value.
# --------------------------------------------------------------------------
def _dqn_kernel(img_ref, colsel_ref, sah_ref, sbh_ref, sav_ref, sbv_ref,
                whv_ref, bhv_ref, w0_ref, b0_ref, w1_ref, b1_ref,
                gamma_ref, beta_ref, mu_ref, var_ref, w2_ref, b2_ref,
                out_ref, pooled_ref):
    band = pl.program_id(1)
    C = img_ref.shape[1]
    inv_hw = 1.0 / float(FRAG * FRAG)

    # ---- pool the 6 column-fragments of this band (all channels) -----------
    # per-channel sublane reduce over the 96 rows, then a constant [576, 18]
    # 0/1 selection matmul that drops each 96-column window onto its fragment.
    col_sums = jnp.concatenate(
        [jnp.sum(img_ref[0, c], axis=0, keepdims=True) for c in range(C)],
        axis=0)                                                     # [C, 576]
    contrib = jnp.dot(col_sums, colsel_ref[0],
                      preferred_element_type=jnp.float32) * inv_hw  # [C, 18]

    @pl.when(band == 0)
    def _init():
        pooled_ref[...] = contrib

    @pl.when(band > 0)
    def _accum():
        pooled_ref[...] = pooled_ref[...] + contrib

    # ---- last band: pair gather -> FEN -> fc_0 -> fc_1 -> BN -> ReLU -> fc_2
    @pl.when(band == pl.num_programs(1) - 1)
    def _mlp():
        pooled = pooled_ref[...]                                    # [C, 18]

        def gather(sel_ref):
            # sel [24, 18] contracted against pooled [C, 18] -> [24, C]
            return jax.lax.dot_general(
                sel_ref[...], pooled,
                dimension_numbers=(((1,), (1,)), ((), ())),
                preferred_element_type=jnp.float32)

        # [24, 4C]: hori (a||b) channels in cols 0..2C-1, vert in 2C..4C-1
        pairs = jnp.concatenate(
            [gather(sah_ref), gather(sbh_ref), gather(sav_ref), gather(sbv_ref)],
            axis=1)

        # merged hori/vert FEN: Linear(4C, 512) with per-pair-row bias + ReLU
        z = jnp.maximum(
            jnp.dot(pairs, whv_ref[...], preferred_element_type=jnp.float32)
            + bhv_ref[...], 0.0)                                    # [24, 512]

        # fc_0 over all 24 pairs at once
        f = (jnp.dot(z, w0_ref[...], preferred_element_type=jnp.float32)
             + b0_ref[...])                                         # [24, 128]

        # fc_1: contract over (pair, 128) as 24 per-pair dots (see header TODO)
        h = b1_ref[...]                                             # [1, 256]
        for p in range(N_PAIR):
            h = h + jnp.dot(f[p:p + 1, :],
                            w1_ref[p * FC0_DIM:(p + 1) * FC0_DIM, :],
                            preferred_element_type=jnp.float32)

        # dropout(eval) = identity; BatchNorm1d(eval); ReLU
        h = (h - mu_ref[...]) * jax.lax.rsqrt(var_ref[...] + BN_EPS)
        h = jnp.maximum(h * gamma_ref[...] + beta_ref[...], 0.0)

        # fc_2 (N = 1): VPU multiply + lane reduce, no 1-lane MXU matmul
        out_ref[0] = (jnp.sum(h * w2_ref[...], axis=-1, keepdims=True)
                      + b2_ref[...])


# --------------------------------------------------------------------------
# Constants (batch-size independent) and wrapper.
# --------------------------------------------------------------------------
def _pool_and_pair_constants():
    # colsel[k, w, f] = 1 iff image column w of row-band k belongs to fragment f
    colsel = np.zeros((N_BAND, IMG_W, N_FRAG), np.float32)
    for k in range(N_BAND):
        for j in range(6):
            f = 3 * k + j if j < 3 else 9 + 3 * k + (j - 3)
            colsel[k, 96 * j:96 * (j + 1), f] = 1.0

    # per-pair fragment selectors (rows 0..11 hori, 12..23 vert; others zero)
    sel_ah = np.zeros((N_PAIR, N_FRAG), np.float32)
    sel_bh = np.zeros((N_PAIR, N_FRAG), np.float32)
    sel_av = np.zeros((N_PAIR, N_FRAG), np.float32)
    sel_bv = np.zeros((N_PAIR, N_FRAG), np.float32)
    for p, (fa, fb) in enumerate(HORI_PAIRS):
        sel_ah[p, fa] = 1.0
        sel_bh[p, fb] = 1.0
    for p, (fa, fb) in enumerate(VERT_PAIRS):
        sel_av[12 + p, fa] = 1.0
        sel_bv[12 + p, fb] = 1.0
    return colsel, sel_ah, sel_bh, sel_av, sel_bv


def dqn_forward(image, params):
    B, C, H, W = image.shape
    assert (H, W) == (IMG_H, IMG_W)

    colsel, sel_ah, sel_bh, sel_av, sel_bv = _pool_and_pair_constants()

    # merged FEN weights/biases: pairs are [24, 4C] (hori cols first, vert last)
    whv = jnp.concatenate([params["fen_hori_w"], params["fen_vert_w"]], axis=0)
    bhv = jnp.concatenate(
        [jnp.tile(params["fen_hori_b"][None, :], (N_PAIR // 2, 1)),
         jnp.tile(params["fen_vert_b"][None, :], (N_PAIR // 2, 1))], axis=0)

    vspec = pl.BlockSpec(memory_space=pltpu.MemorySpace.VMEM)
    out3 = pl.pallas_call(
        _dqn_kernel,
        out_shape=jax.ShapeDtypeStruct((B, 1, 1), jnp.float32),
        grid=(B, N_BAND),
        in_specs=[
            pl.BlockSpec((1, C, FRAG, IMG_W), lambda b, k: (b, 0, k, 0)),
            pl.BlockSpec((1, IMG_W, N_FRAG), lambda b, k: (k, 0, 0)),
        ] + [vspec] * 16,
        out_specs=pl.BlockSpec((1, 1, 1), lambda b, k: (b, 0, 0)),
        scratch_shapes=[pltpu.VMEM((C, N_FRAG), jnp.float32)],
        compiler_params=pltpu.CompilerParams(
            dimension_semantics=("parallel", "arbitrary")),
    )(
        image,
        jnp.asarray(colsel),
        jnp.asarray(sel_ah), jnp.asarray(sel_bh),
        jnp.asarray(sel_av), jnp.asarray(sel_bv),
        whv, bhv,
        params["fc0_w"], params["fc0_b"][None, :],
        params["fc1_w"], params["fc1_b"][None, :],
        params["gamma"][None, :], params["beta"][None, :],
        params["run_mean"][None, :], params["run_var"][None, :],
        params["fc2_w"].reshape(1, HIDDEN), params["fc2_b"][None, :],
    )
    return out3.reshape(B, 1)


# --------------------------------------------------------------------------
# Parameters and pure-JAX reference (mirrors the PyTorch forward).
# --------------------------------------------------------------------------
def init_params(key, C):
    ks = jax.random.split(key, 10)
    s = 0.1
    return {
        "fen_hori_w": jax.random.normal(ks[0], (2 * C, FEN_DIM), jnp.float32) * s,
        "fen_hori_b": jax.random.normal(ks[1], (FEN_DIM,), jnp.float32) * s,
        "fen_vert_w": jax.random.normal(ks[2], (2 * C, FEN_DIM), jnp.float32) * s,
        "fen_vert_b": jax.random.normal(ks[3], (FEN_DIM,), jnp.float32) * s,
        "fc0_w": jax.random.normal(ks[4], (FEN_DIM, FC0_DIM), jnp.float32) * s,
        "fc0_b": jax.random.normal(ks[5], (FC0_DIM,), jnp.float32) * s,
        "fc1_w": jax.random.normal(ks[6], (FC0_DIM * N_PAIR, HIDDEN), jnp.float32) * (s / 10),
        "fc1_b": jax.random.normal(ks[7], (HIDDEN,), jnp.float32) * s,
        "gamma": jnp.ones((HIDDEN,), jnp.float32),
        "beta": jnp.zeros((HIDDEN,), jnp.float32),
        "run_mean": jnp.zeros((HIDDEN,), jnp.float32),
        "run_var": jnp.ones((HIDDEN,), jnp.float32),
        "fc2_w": jax.random.normal(ks[8], (HIDDEN, 1), jnp.float32) * s,
        "fc2_b": jax.random.normal(ks[9], (1,), jnp.float32) * s,
    }


def make_fragments(image):
    rows = [(0, 96), (96, 192), (192, 288)]
    cols = [(0, 96), (96, 192), (192, 288), (288, 384), (384, 480), (480, 576)]
    frags = []
    for cols_block in (cols[:3], cols[3:]):
        for r0, r1 in rows:
            for c0, c1 in cols_block:
                frags.append(image[:, :, r0:r1, c0:c1])
    return jnp.stack(frags, axis=0)      # [18, B, C, 96, 96]


def reference_forward(image, params):
    frags = make_fragments(image)

    def fen(a, b, w, bias):
        pa = jnp.mean(frags[a], axis=(-2, -1))
        pb = jnp.mean(frags[b], axis=(-2, -1))
        h = jnp.concatenate([pa, pb], axis=-1) @ w + bias
        return jnp.maximum(h, 0.0)

    feats = []
    for a, b in HORI_PAIRS:
        feats.append(fen(a, b, params["fen_hori_w"], params["fen_hori_b"])
                     @ params["fc0_w"] + params["fc0_b"])
    for a, b in VERT_PAIRS:
        feats.append(fen(a, b, params["fen_vert_w"], params["fen_vert_b"])
                     @ params["fc0_w"] + params["fc0_b"])
    feat = jnp.concatenate(feats, axis=1)          # [B, 3072]
    h = feat @ params["fc1_w"] + params["fc1_b"]
    h = (h - params["run_mean"]) / jnp.sqrt(params["run_var"] + BN_EPS)
    h = h * params["gamma"] + params["beta"]
    h = jnp.maximum(h, 0.0)
    return h @ params["fc2_w"] + params["fc2_b"]


if __name__ == "__main__":
    key = jax.random.PRNGKey(0)
    k_img, k_par = jax.random.split(key)

    B, C = 2, 3
    image = jax.random.normal(k_img, (B, C, IMG_H, IMG_W), dtype=jnp.float32)
    params = init_params(k_par, C)

    fwd = jax.jit(dqn_forward)
    out = jax.block_until_ready(fwd(image, params))

    assert out.shape == (B, 1), out.shape
    assert bool(jnp.all(jnp.isfinite(out)))

    ref = reference_forward(image, params)
    max_err = float(jnp.max(jnp.abs(out - ref)))
    assert max_err < 5e-2, f"mismatch vs JAX reference: {max_err}"

    print("KERNEL_OK")
</pallas_src>

<mosaic_0001>
module attributes {stable_mosaic.version = 11 : i64} {
  func.func @_dqn_kernel(%arg0: i32, %arg1: i32, %arg2: memref<1x3x96x576xf32, #tpu.memory_space<vmem>>, %arg3: memref<1x576x18xf32, #tpu.memory_space<vmem>>, %arg4: memref<24x18xf32, #tpu.memory_space<vmem>>, %arg5: memref<24x18xf32, #tpu.memory_space<vmem>>, %arg6: memref<24x18xf32, #tpu.memory_space<vmem>>, %arg7: memref<24x18xf32, #tpu.memory_space<vmem>>, %arg8: memref<12x512xf32, #tpu.memory_space<vmem>>, %arg9: memref<24x512xf32, #tpu.memory_space<vmem>>, %arg10: memref<512x128xf32, #tpu.memory_space<vmem>>, %arg11: memref<1x128xf32, #tpu.memory_space<vmem>>, %arg12: memref<3072x256xf32, #tpu.memory_space<vmem>>, %arg13: memref<1x256xf32, #tpu.memory_space<vmem>>, %arg14: memref<1x256xf32, #tpu.memory_space<vmem>>, %arg15: memref<1x256xf32, #tpu.memory_space<vmem>>, %arg16: memref<1x256xf32, #tpu.memory_space<vmem>>, %arg17: memref<1x256xf32, #tpu.memory_space<vmem>>, %arg18: memref<1x256xf32, #tpu.memory_space<vmem>>, %arg19: memref<1x1xf32, #tpu.memory_space<vmem>>, %arg20: memref<1x1x1xf32, #tpu.memory_space<vmem>>, %arg21: memref<3x18xf32, #tpu.memory_space<vmem>>) attributes {dimension_semantics = [#tpu.dimension_semantics<parallel>, #tpu.dimension_semantics<arbitrary>], iteration_bounds = array<i64: 2, 3>, scalar_prefetch = 0 : i64, scratch_operands = 1 : i64, tpu.core_type = #tpu.core_type<tc>, window_params = [{transform_indices = @transform_0, window_bounds = array<i64: 1, 3, 96, 576>}, {transform_indices = @transform_1, window_bounds = array<i64: 1, 576, 18>}, {pipeline_mode = #tpu.pipeline_mode<synchronous>, transform_indices = @transform_2, window_bounds = array<i64: 24, 18>}, {pipeline_mode = #tpu.pipeline_mode<synchronous>, transform_indices = @transform_3, window_bounds = array<i64: 24, 18>}, {pipeline_mode = #tpu.pipeline_mode<synchronous>, transform_indices = @transform_4, window_bounds = array<i64: 24, 18>}, {pipeline_mode = #tpu.pipeline_mode<synchronous>, transform_indices = @transform_5, window_bounds = array<i64: 24, 18>}, {pipeline_mode = #tpu.pipeline_mode<synchronous>, transform_indices = @transform_6, window_bounds = array<i64: 12, 512>}, {pipeline_mode = #tpu.pipeline_mode<synchronous>, transform_indices = @transform_7, window_bounds = array<i64: 24, 512>}, {pipeline_mode = #tpu.pipeline_mode<synchronous>, transform_indices = @transform_8, window_bounds = array<i64: 512, 128>}, {pipeline_mode = #tpu.pipeline_mode<synchronous>, transform_indices = @transform_9, window_bounds = array<i64: 1, 128>}, {pipeline_mode = #tpu.pipeline_mode<synchronous>, transform_indices = @transform_10, window_bounds = array<i64: 3072, 256>}, {pipeline_mode = #tpu.pipeline_mode<synchronous>, transform_indices = @transform_11, window_bounds = array<i64: 1, 256>}, {pipeline_mode = #tpu.pipeline_mode<synchronous>, transform_indices = @transform_12, window_bounds = array<i64: 1, 256>}, {pipeline_mode = #tpu.pipeline_mode<synchronous>, transform_indices = @transform_13, window_bounds = array<i64: 1, 256>}, {pipeline_mode = #tpu.pipeline_mode<synchronous>, transform_indices = @transform_14, window_bounds = array<i64: 1, 256>}, {pipeline_mode = #tpu.pipeline_mode<synchronous>, transform_indices = @transform_15, window_bounds = array<i64: 1, 256>}, {pipeline_mode = #tpu.pipeline_mode<synchronous>, transform_indices = @transform_16, window_bounds = array<i64: 1, 256>}, {pipeline_mode = #tpu.pipeline_mode<synchronous>, transform_indices = @transform_17, window_bounds = array<i64: 1, 1>}, {transform_indices = @transform_18, window_bounds = array<i64: 1, 1, 1>}]} {
    %c0 = arith.constant 0 : index
    %c0_0 = arith.constant 0 : index
    %c0_1 = arith.constant 0 : index
    %c0_2 = arith.constant 0 : index
    %0 = vector.load %arg2[%c0, %c0_0, %c0_1, %c0_2] : memref<1x3x96x576xf32, #tpu.memory_space<vmem>>, vector<1x1x96x576xf32>
    %1 = vector.shape_cast %0 : vector<1x1x96x576xf32> to vector<96x576xf32>
    %cst = arith.constant dense<0.000000e+00> : vector<576xf32>
    %2 = vector.multi_reduction <add>, %1, %cst [0] : vector<96x576xf32> to vector<576xf32>
    %3 = vector.shape_cast %2 : vector<576xf32> to vector<1x576xf32>
    %c0_3 = arith.constant 0 : index
    %c1 = arith.constant 1 : index
    %c0_4 = arith.constant 0 : index
    %c0_5 = arith.constant 0 : index
    %4 = vector.load %arg2[%c0_3, %c1, %c0_4, %c0_5] : memref<1x3x96x576xf32, #tpu.memory_space<vmem>>, vector<1x1x96x576xf32>
    %5 = vector.shape_cast %4 : vector<1x1x96x576xf32> to vector<96x576xf32>
    %cst_6 = arith.constant dense<0.000000e+00> : vector<576xf32>
    %6 = vector.multi_reduction <add>, %5, %cst_6 [0] : vector<96x576xf32> to vector<576xf32>
    %7 = vector.shape_cast %6 : vector<576xf32> to vector<1x576xf32>
    %c0_7 = arith.constant 0 : index
    %c2 = arith.constant 2 : index
    %c0_8 = arith.constant 0 : index
    %c0_9 = arith.constant 0 : index
    %8 = vector.load %arg2[%c0_7, %c2, %c0_8, %c0_9] : memref<1x3x96x576xf32, #tpu.memory_space<vmem>>, vector<1x1x96x576xf32>
    %9 = vector.shape_cast %8 : vector<1x1x96x576xf32> to vector<96x576xf32>
    %cst_10 = arith.constant dense<0.000000e+00> : vector<576xf32>
    %10 = vector.multi_reduction <add>, %9, %cst_10 [0] : vector<96x576xf32> to vector<576xf32>
    %11 = vector.shape_cast %10 : vector<576xf32> to vector<1x576xf32>
    %12 = tpu.concatenate %3, %7, %11 in 0 : vector<1x576xf32>, vector<1x576xf32>, vector<1x576xf32> -> vector<3x576xf32>
    %c0_11 = arith.constant 0 : index
    %c0_12 = arith.constant 0 : index
    %c0_13 = arith.constant 0 : index
    %13 = vector.load %arg3[%c0_11, %c0_12, %c0_13] : memref<1x576x18xf32, #tpu.memory_space<vmem>>, vector<1x576x18xf32>
    %14 = vector.shape_cast %13 : vector<1x576x18xf32> to vector<576x18xf32>
    %cst_14 = arith.constant dense<0.000000e+00> : vector<3x18xf32>
    %15 = tpu.matmul %12, %14, %cst_14 {dimension_numbers = #tpu.dot_dimension_numbers<[1], [0], [0], [1], [0, 0, 1, 1], [], []>} : vector<3x576xf32>, vector<576x18xf32>, vector<3x18xf32> -> vector<3x18xf32>
    %cst_15 = arith.constant 1.08506945E-4 : f32
    %16 = vector.broadcast %cst_15 : f32 to vector<3x18xf32>
    %17 = arith.mulf %15, %16 : vector<3x18xf32>
    %c0_i32 = arith.constant 0 : i32
    %18 = arith.cmpi eq, %arg1, %c0_i32 : i32
    %19 = arith.extui %18 : i1 to i32
    %c0_i32_16 = arith.constant 0 : i32
    %20 = arith.cmpi ne, %19, %c0_i32_16 : i32
    scf.if %20 {
      %c0_20 = arith.constant 0 : index
      %c0_21 = arith.constant 0 : index
      %27 = vector.load %arg21[%c0_20, %c0_21] : memref<3x18xf32, #tpu.memory_space<vmem>>, vector<3x18xf32>
      tpu.vector_store %arg21[%c0_20, %c0_21], %17 {strides = array<i32>} : memref<3x18xf32, #tpu.memory_space<vmem>>, vector<3x18xf32>,
    } else {
    }
    %c0_i32_17 = arith.constant 0 : i32
    %21 = arith.cmpi sgt, %arg1, %c0_i32_17 : i32
    %22 = arith.extui %21 : i1 to i32
    %c0_i32_18 = arith.constant 0 : i32
    %23 = arith.cmpi ne, %22, %c0_i32_18 : i32
    scf.if %23 {
      %c0_20 = arith.constant 0 : index
      %c0_21 = arith.constant 0 : index
      %27 = vector.load %arg21[%c0_20, %c0_21] : memref<3x18xf32, #tpu.memory_space<vmem>>, vector<3x18xf32>
      %28 = arith.addf %27, %17 : vector<3x18xf32>
      %c0_22 = arith.constant 0 : index
      %c0_23 = arith.constant 0 : index
      %29 = vector.load %arg21[%c0_22, %c0_23] : memref<3x18xf32, #tpu.memory_space<vmem>>, vector<3x18xf32>
      tpu.vector_store %arg21[%c0_22, %c0_23], %28 {strides = array<i32>} : memref<3x18xf32, #tpu.memory_space<vmem>>, vector<3x18xf32>,
    } else {
    }
    %c2_i32 = arith.constant 2 : i32
    %24 = arith.cmpi eq, %arg1, %c2_i32 : i32
    %25 = arith.extui %24 : i1 to i32
    %c0_i32_19 = arith.constant 0 : i32
    %26 = arith.cmpi ne, %25, %c0_i32_19 : i32
    scf.if %26 {
      %c0_20 = arith.constant 0 : index
      %c0_21 = arith.constant 0 : index
      %27 = vector.load %arg21[%c0_20, %c0_21] : memref<3x18xf32, #tpu.memory_space<vmem>>, vector<3x18xf32>
      %c0_22 = arith.constant 0 : index
      %c0_23 = arith.constant 0 : index
      %28 = vector.load %arg4[%c0_22, %c0_23] : memref<24x18xf32, #tpu.memory_space<vmem>>, vector<24x18xf32>
      %cst_24 = arith.constant dense<0.000000e+00> : vector<24x3xf32>
      %29 = tpu.matmul %28, %27, %cst_24 {dimension_numbers = #tpu.dot_dimension_numbers<[1], [1], [0], [0], [0, 0, 1, 0], [], []>} : vector<24x18xf32>, vector<3x18xf32>, vector<24x3xf32> -> vector<24x3xf32>
      %c0_25 = arith.constant 0 : index
      %c0_26 = arith.constant 0 : index
      %30 = vector.load %arg5[%c0_25, %c0_26] : memref<24x18xf32, #tpu.memory_space<vmem>>, vector<24x18xf32>
      %cst_27 = arith.constant dense<0.000000e+00> : vector<24x3xf32>
      %31 = tpu.matmul %30, %27, %cst_27 {dimension_numbers = #tpu.dot_dimension_numbers<[1], [1], [0], [0], [0, 0, 1, 0], [], []>} : vector<24x18xf32>, vector<3x18xf32>, vector<24x3xf32> -> vector<24x3xf32>
      %c0_28 = arith.constant 0 : index
      %c0_29 = arith.constant 0 : index
      %32 = vector.load %arg6[%c0_28, %c0_29] : memref<24x18xf32, #tpu.memory_space<vmem>>, vector<24x18xf32>
      %cst_30 = arith.constant dense<0.000000e+00> : vector<24x3xf32>
      %33 = tpu.matmul %32, %27, %cst_30 {dimension_numbers = #tpu.dot_dimension_numbers<[1], [1], [0], [0], [0, 0, 1, 0], [], []>} : vector<24x18xf32>, vector<3x18xf32>, vector<24x3xf32> -> vector<24x3xf32>
      %c0_31 = arith.constant 0 : index
      %c0_32 = arith.constant 0 : index
      %34 = vector.load %arg7[%c0_31, %c0_32] : memref<24x18xf32, #tpu.memory_space<vmem>>, vector<24x18xf32>
      %cst_33 = arith.constant dense<0.000000e+00> : vector<24x3xf32>
      %35 = tpu.matmul %34, %27, %cst_33 {dimension_numbers = #tpu.dot_dimension_numbers<[1], [1], [0], [0], [0, 0, 1, 0], [], []>} : vector<24x18xf32>, vector<3x18xf32>, vector<24x3xf32> -> vector<24x3xf32>
      %36 = tpu.concatenate %29, %31, %33, %35 in 1 : vector<24x3xf32>, vector<24x3xf32>, vector<24x3xf32>, vector<24x3xf32> -> vector<24x12xf32>
      %c0_34 = arith.constant 0 : index
      %c0_35 = arith.constant 0 : index
      %37 = vector.load %arg8[%c0_34, %c0_35] : memref<12x512xf32, #tpu.memory_space<vmem>>, vector<12x512xf32>
      %cst_36 = arith.constant dense<0.000000e+00> : vector<24x512xf32>
      %38 = tpu.matmul %36, %37, %cst_36 {dimension_numbers = #tpu.dot_dimension_numbers<[1], [0], [0], [1], [0, 0, 1, 1], [], []>} : vector<24x12xf32>, vector<12x512xf32>, vector<24x512xf32> -> vector<24x512xf32>
      %c0_37 = arith.constant 0 : index
      %c0_38 = arith.constant 0 : index
      %39 = vector.load %arg9[%c0_37, %c0_38] : memref<24x512xf32, #tpu.memory_space<vmem>>, vector<24x512xf32>
      %40 = arith.addf %38, %39 : vector<24x512xf32>
      %cst_39 = arith.constant 0.000000e+00 : f32
      %41 = vector.broadcast %cst_39 : f32 to vector<24x512xf32>
      %42 = arith.maximumf %40, %41 : vector<24x512xf32>
      %c0_40 = arith.constant 0 : index
      %c0_41 = arith.constant 0 : index
      %43 = vector.load %arg10[%c0_40, %c0_41] : memref<512x128xf32, #tpu.memory_space<vmem>>, vector<512x128xf32>
      %cst_42 = arith.constant dense<0.000000e+00> : vector<24x128xf32>
      %44 = tpu.matmul %42, %43, %cst_42 {dimension_numbers = #tpu.dot_dimension_numbers<[1], [0], [0], [1], [0, 0, 1, 1], [], []>} : vector<24x512xf32>, vector<512x128xf32>, vector<24x128xf32> -> vector<24x128xf32>
      %c0_43 = arith.constant 0 : index
      %c0_44 = arith.constant 0 : index
      %45 = vector.load %arg11[%c0_43, %c0_44] : memref<1x128xf32, #tpu.memory_space<vmem>>, vector<1x128xf32>
      %46 = vector.broadcast %45 : vector<1x128xf32> to vector<24x128xf32>
      %47 = arith.addf %44, %46 : vector<24x128xf32>
      %c0_45 = arith.constant 0 : index
      %c0_46 = arith.constant 0 : index
      %48 = vector.load %arg13[%c0_45, %c0_46] : memref<1x256xf32, #tpu.memory_space<vmem>>, vector<1x256xf32>
      %49 = vector.extract_strided_slice %47 {offsets = [0, 0], sizes = [1, 128], strides = [1, 1]} : vector<24x128xf32> to vector<1x128xf32>
      %c0_47 = arith.constant 0 : index
      %c0_48 = arith.constant 0 : index
      %50 = vector.load %arg12[%c0_47, %c0_48] : memref<3072x256xf32, #tpu.memory_space<vmem>>, vector<128x256xf32>
      %cst_49 = arith.constant dense<0.000000e+00> : vector<1x256xf32>
      %51 = tpu.matmul %49, %50, %cst_49 {dimension_numbers = #tpu.dot_dimension_numbers<[1], [0], [0], [1], [0, 0, 1, 1], [], []>} : vector<1x128xf32>, vector<128x256xf32>, vector<1x256xf32> -> vector<1x256xf32>
      %52 = arith.addf %48, %51 : vector<1x256xf32>
      %53 = vector.extract_strided_slice %47 {offsets = [1, 0], sizes = [1, 128], strides = [1, 1]} : vector<24x128xf32> to vector<1x128xf32>
      %c128 = arith.constant 128 : index
      %c0_50 = arith.constant 0 : index
      %54 = vector.load %arg12[%c128, %c0_50] : memref<3072x256xf32, #tpu.memory_space<vmem>>, vector<128x256xf32>
      %cst_51 = arith.constant dense<0.000000e+00> : vector<1x256xf32>
      %55 = tpu.matmul %53, %54, %cst_51 {dimension_numbers = #tpu.dot_dimension_numbers<[1], [0], [0], [1], [0, 0, 1, 1], [], []>} : vector<1x128xf32>, vector<128x256xf32>, vector<1x256xf32> -> vector<1x256xf32>
      %56 = arith.addf %52, %55 : vector<1x256xf32>
      %57 = vector.extract_strided_slice %47 {offsets = [2, 0], sizes = [1, 128], strides = [1, 1]} : vector<24x128xf32> to vector<1x128xf32>
      %c256 = arith.constant 256 : index
      %c0_52 = arith.constant 0 : index
      %58 = vector.load %arg12[%c256, %c0_52] : memref<3072x256xf32, #tpu.memory_space<vmem>>, vector<128x256xf32>
      %cst_53 = arith.constant dense<0.000000e+00> : vector<1x256xf32>
      %59 = tpu.matmul %57, %58, %cst_53 {dimension_numbers = #tpu.dot_dimension_numbers<[1], [0], [0], [1], [0, 0, 1, 1], [], []>} : vector<1x128xf32>, vector<128x256xf32>, vector<1x256xf32> -> vector<1x256xf32>
      %60 = arith.addf %56, %59 : vector<1x256xf32>
      %61 = vector.extract_strided_slice %47 {offsets = [3, 0], sizes = [1, 128], strides = [1, 1]} : vector<24x128xf32> to vector<1x128xf32>
      %c384 = arith.constant 384 : index
      %c0_54 = arith.constant 0 : index
      %62 = vector.load %arg12[%c384, %c0_54] : memref<3072x256xf32, #tpu.memory_space<vmem>>, vector<128x256xf32>
      %cst_55 = arith.constant dense<0.000000e+00> : vector<1x256xf32>
      %63 = tpu.matmul %61, %62, %cst_55 {dimension_numbers = #tpu.dot_dimension_numbers<[1], [0], [0], [1], [0, 0, 1, 1], [], []>} : vector<1x128xf32>, vector<128x256xf32>, vector<1x256xf32> -> vector<1x256xf32>
      %64 = arith.addf %60, %63 : vector<1x256xf32>
      %65 = vector.extract_strided_slice %47 {offsets = [4, 0], sizes = [1, 128], strides = [1, 1]} : vector<24x128xf32> to vector<1x128xf32>
      %c512 = arith.constant 512 : index
      %c0_56 = arith.constant 0 : index
      %66 = vector.load %arg12[%c512, %c0_56] : memref<3072x256xf32, #tpu.memory_space<vmem>>, vector<128x256xf32>
      %cst_57 = arith.constant dense<0.000000e+00> : vector<1x256xf32>
      %67 = tpu.matmul %65, %66, %cst_57 {dimension_numbers = #tpu.dot_dimension_numbers<[1], [0], [0], [1], [0, 0, 1, 1], [], []>} : vector<1x128xf32>, vector<128x256xf32>, vector<1x256xf32> -> vector<1x256xf32>
      %68 = arith.addf %64, %67 : vector<1x256xf32>
      %69 = vector.extract_strided_slice %47 {offsets = [5, 0], sizes = [1, 128], strides = [1, 1]} : vector<24x128xf32> to vector<1x128xf32>
      %c640 = arith.constant 640 : index
      %c0_58 = arith.constant 0 : index
      %70 = vector.load %arg12[%c640, %c0_58] : memref<3072x256xf32, #tpu.memory_space<vmem>>, vector<128x256xf32>
      %cst_59 = arith.constant dense<0.000000e+00> : vector<1x256xf32>
      %71 = tpu.matmul %69, %70, %cst_59 {dimension_numbers = #tpu.dot_dimension_numbers<[1], [0], [0], [1], [0, 0, 1, 1], [], []>} : vector<1x128xf32>, vector<128x256xf32>, vector<1x256xf32> -> vector<1x256xf32>
      %72 = arith.addf %68, %71 : vector<1x256xf32>
      %73 = vector.extract_strided_slice %47 {offsets = [6, 0], sizes = [1, 128], strides = [1, 1]} : vector<24x128xf32> to vector<1x128xf32>
      %c768 = arith.constant 768 : index
      %c0_60 = arith.constant 0 : index
      %74 = vector.load %arg12[%c768, %c0_60] : memref<3072x256xf32, #tpu.memory_space<vmem>>, vector<128x256xf32>
      %cst_61 = arith.constant dense<0.000000e+00> : vector<1x256xf32>
      %75 = tpu.matmul %73, %74, %cst_61 {dimension_numbers = #tpu.dot_dimension_numbers<[1], [0], [0], [1], [0, 0, 1, 1], [], []>} : vector<1x128xf32>, vector<128x256xf32>, vector<1x256xf32> -> vector<1x256xf32>
      %76 = arith.addf %72, %75 : vector<1x256xf32>
      %77 = vector.extract_strided_slice %47 {offsets = [7, 0], sizes = [1, 128], strides = [1, 1]} : vector<24x128xf32> to vector<1x128xf32>
      %c896 = arith.constant 896 : index
      %c0_62 = arith.constant 0 : index
      %78 = vector.load %arg12[%c896, %c0_62] : memref<3072x256xf32, #tpu.memory_space<vmem>>, vector<128x256xf32>
      %cst_63 = arith.constant dense<0.000000e+00> : vector<1x256xf32>
      %79 = tpu.matmul %77, %78, %cst_63 {dimension_numbers = #tpu.dot_dimension_numbers<[1], [0], [0], [1], [0, 0, 1, 1], [], []>} : vector<1x128xf32>, vector<128x256xf32>, vector<1x256xf32> -> vector<1x256xf32>
      %80 = arith.addf %76, %79 : vector<1x256xf32>
      %81 = vector.extract_strided_slice %47 {offsets = [8, 0], sizes = [1, 128], strides = [1, 1]} : vector<24x128xf32> to vector<1x128xf32>
      %c1024 = arith.constant 1024 : index
      %c0_64 = arith.constant 0 : index
      %82 = vector.load %arg12[%c1024, %c0_64] : memref<3072x256xf32, #tpu.memory_space<vmem>>, vector<128x256xf32>
      %cst_65 = arith.constant dense<0.000000e+00> : vector<1x256xf32>
      %83 = tpu.matmul %81, %82, %cst_65 {dimension_numbers = #tpu.dot_dimension_numbers<[1], [0], [0], [1], [0, 0, 1, 1], [], []>} : vector<1x128xf32>, vector<128x256xf32>, vector<1x256xf32> -> vector<1x256xf32>
      %84 = arith.addf %80, %83 : vector<1x256xf32>
      %85 = vector.extract_strided_slice %47 {offsets = [9, 0], sizes = [1, 128], strides = [1, 1]} : vector<24x128xf32> to vector<1x128xf32>
      %c1152 = arith.constant 1152 : index
      %c0_66 = arith.constant 0 : index
      %86 = vector.load %arg12[%c1152, %c0_66] : memref<3072x256xf32, #tpu.memory_space<vmem>>, vector<128x256xf32>
      %cst_67 = arith.constant dense<0.000000e+00> : vector<1x256xf32>
      %87 = tpu.matmul %85, %86, %cst_67 {dimension_numbers = #tpu.dot_dimension_numbers<[1], [0], [0], [1], [0, 0, 1, 1], [], []>} : vector<1x128xf32>, vector<128x256xf32>, vector<1x256xf32> -> vector<1x256xf32>
      %88 = arith.addf %84, %87 : vector<1x256xf32>
      %89 = vector.extract_strided_slice %47 {offsets = [10, 0], sizes = [1, 128], strides = [1, 1]} : vector<24x128xf32> to vector<1x128xf32>
      %c1280 = arith.constant 1280 : index
      %c0_68 = arith.constant 0 : index
      %90 = vector.load %arg12[%c1280, %c0_68] : memref<3072x256xf32, #tpu.memory_space<vmem>>, vector<128x256xf32>
      %cst_69 = arith.constant dense<0.000000e+00> : vector<1x256xf32>
      %91 = tpu.matmul %89, %90, %cst_69 {dimension_numbers = #tpu.dot_dimension_numbers<[1], [0], [0], [1], [0, 0, 1, 1], [], []>} : vector<1x128xf32>, vector<128x256xf32>, vector<1x256xf32> -> vector<1x256xf32>
      %92 = arith.addf %88, %91 : vector<1x256xf32>
      %93 = vector.extract_strided_slice %47 {offsets = [11, 0], sizes = [1, 128], strides = [1, 1]} : vector<24x128xf32> to vector<1x128xf32>
      %c1408 = arith.constant 1408 : index
      %c0_70 = arith.constant 0 : index
      %94 = vector.load %arg12[%c1408, %c0_70] : memref<3072x256xf32, #tpu.memory_space<vmem>>, vector<128x256xf32>
      %cst_71 = arith.constant dense<0.000000e+00> : vector<1x256xf32>
      %95 = tpu.matmul %93, %94, %cst_71 {dimension_numbers = #tpu.dot_dimension_numbers<[1], [0], [0], [1], [0, 0, 1, 1], [], []>} : vector<1x128xf32>, vector<128x256xf32>, vector<1x256xf32> -> vector<1x256xf32>
      %96 = arith.addf %92, %95 : vector<1x256xf32>
      %97 = vector.extract_strided_slice %47 {offsets = [12, 0], sizes = [1, 128], strides = [1, 1]} : vector<24x128xf32> to vector<1x128xf32>
      %c1536 = arith.constant 1536 : index
      %c0_72 = arith.constant 0 : index
      %98 = vector.load %arg12[%c1536, %c0_72] : memref<3072x256xf32, #tpu.memory_space<vmem>>, vector<128x256xf32>
      %cst_73 = arith.constant dense<0.000000e+00> : vector<1x256xf32>
      %99 = tpu.matmul %97, %98, %cst_73 {dimension_numbers = #tpu.dot_dimension_numbers<[1], [0], [0], [1], [0, 0, 1, 1], [], []>} : vector<1x128xf32>, vector<128x256xf32>, vector<1x256xf32> -> vector<1x256xf32>
      %100 = arith.addf %96, %99 : vector<1x256xf32>
      %101 = vector.extract_strided_slice %47 {offsets = [13, 0], sizes = [1, 128], strides = [1, 1]} : vector<24x128xf32> to vector<1x128xf32>
      %c1664 = arith.constant 1664 : index
      %c0_74 = arith.constant 0 : index
      %102 = vector.load %arg12[%c1664, %c0_74] : memref<3072x256xf32, #tpu.memory_space<vmem>>, vector<128x256xf32>
      %cst_75 = arith.constant dense<0.000000e+00> : vector<1x256xf32>
      %103 = tpu.matmul %101, %102, %cst_75 {dimension_numbers = #tpu.dot_dimension_numbers<[1], [0], [0], [1], [0, 0, 1, 1], [], []>} : vector<1x128xf32>, vector<128x256xf32>, vector<1x256xf32> -> vector<1x256xf32>
      %104 = arith.addf %100, %103 : vector<1x256xf32>
      %105 = vector.extract_strided_slice %47 {offsets = [14, 0], sizes = [1, 128], strides = [1, 1]} : vector<24x128xf32> to vector<1x128xf32>
      %c1792 = arith.constant 1792 : index
      %c0_76 = arith.constant 0 : index
      %106 = vector.load %arg12[%c1792, %c0_76] : memref<3072x256xf32, #tpu.memory_space<vmem>>, vector<128x256xf32>
      %cst_77 = arith.constant dense<0.000000e+00> : vector<1x256xf32>
      %107 = tpu.matmul %105, %106, %cst_77 {dimension_numbers = #tpu.dot_dimension_numbers<[1], [0], [0], [1], [0, 0, 1, 1], [], []>} : vector<1x128xf32>, vector<128x256xf32>, vector<1x256xf32> -> vector<1x256xf32>
      %108 = arith.addf %104, %107 : vector<1x256xf32>
      %109 = vector.extract_strided_slice %47 {offsets = [15, 0], sizes = [1, 128], strides = [1, 1]} : vector<24x128xf32> to vector<1x128xf32>
      %c1920 = arith.constant 1920 : index
      %c0_78 = arith.constant 0 : index
      %110 = vector.load %arg12[%c1920, %c0_78] : memref<3072x256xf32, #tpu.memory_space<vmem>>, vector<128x256xf32>
      %cst_79 = arith.constant dense<0.000000e+00> : vector<1x256xf32>
      %111 = tpu.matmul %109, %110, %cst_79 {dimension_numbers = #tpu.dot_dimension_numbers<[1], [0], [0], [1], [0, 0, 1, 1], [], []>} : vector<1x128xf32>, vector<128x256xf32>, vector<1x256xf32> -> vector<1x256xf32>
      %112 = arith.addf %108, %111 : vector<1x256xf32>
      %113 = vector.extract_strided_slice %47 {offsets = [16, 0], sizes = [1, 128], strides = [1, 1]} : vector<24x128xf32> to vector<1x128xf32>
      %c2048 = arith.constant 2048 : index
      %c0_80 = arith.constant 0 : index
      %114 = vector.load %arg12[%c2048, %c0_80] : memref<3072x256xf32, #tpu.memory_space<vmem>>, vector<128x256xf32>
      %cst_81 = arith.constant dense<0.000000e+00> : vector<1x256xf32>
      %115 = tpu.matmul %113, %114, %cst_81 {dimension_numbers = #tpu.dot_dimension_numbers<[1], [0], [0], [1], [0, 0, 1, 1], [], []>} : vector<1x128xf32>, vector<128x256xf32>, vector<1x256xf32> -> vector<1x256xf32>
      %116 = arith.addf %112, %115 : vector<1x256xf32>
      %117 = vector.extract_strided_slice %47 {offsets = [17, 0], sizes = [1, 128], strides = [1, 1]} : vector<24x128xf32> to vector<1x128xf32>
      %c2176 = arith.constant 2176 : index
      %c0_82 = arith.constant 0 : index
      %118 = vector.load %arg12[%c2176, %c0_82] : memref<3072x256xf32, #tpu.memory_space<vmem>>, vector<128x256xf32>
      %cst_83 = arith.constant dense<0.000000e+00> : vector<1x256xf32>
      %119 = tpu.matmul %117, %118, %cst_83 {dimension_numbers = #tpu.dot_dimension_numbers<[1], [0], [0], [1], [0, 0, 1, 1], [], []>} : vector<1x128xf32>, vector<128x256xf32>, vector<1x256xf32> -> vector<1x256xf32>
      %120 = arith.addf %116, %119 : vector<1x256xf32>
      %121 = vector.extract_strided_slice %47 {offsets = [18, 0], sizes = [1, 128], strides = [1, 1]} : vector<24x128xf32> to vector<1x128xf32>
      %c2304 = arith.constant 2304 : index
      %c0_84 = arith.constant 0 : index
      %122 = vector.load %arg12[%c2304, %c0_84] : memref<3072x256xf32, #tpu.memory_space<vmem>>, vector<128x256xf32>
      %cst_85 = arith.constant dense<0.000000e+00> : vector<1x256xf32>
      %123 = tpu.matmul %121, %122, %cst_85 {dimension_numbers = #tpu.dot_dimension_numbers<[1], [0], [0], [1], [0, 0, 1, 1], [], []>} : vector<1x128xf32>, vector<128x256xf32>, vector<1x256xf32> -> vector<1x256xf32>
      %124 = arith.addf %120, %123 : vector<1x256xf32>
      %125 = vector.extract_strided_slice %47 {offsets = [19, 0], sizes = [1, 128], strides = [1, 1]} : vector<24x128xf32> to vector<1x128xf32>
      %c2432 = arith.constant 2432 : index
      %c0_86 = arith.constant 0 : index
      %126 = vector.load %arg12[%c2432, %c0_86] : memref<3072x256xf32, #tpu.memory_space<vmem>>, vector<128x256xf32>
      %cst_87 = arith.constant dense<0.000000e+00> : vector<1x256xf32>
      %127 = tpu.matmul %125, %126, %cst_87 {dimension_numbers = #tpu.dot_dimension_numbers<[1], [0], [0], [1], [0, 0, 1, 1], [], []>} : vector<1x128xf32>, vector<128x256xf32>, vector<1x256xf32> -> vector<1x256xf32>
      %128 = arith.addf %124, %127 : vector<1x256xf32>
      %129 = vector.extract_strided_slice %47 {offsets = [20, 0], sizes = [1, 128], strides = [1, 1]} : vector<24x128xf32> to vector<1x128xf32>
      %c2560 = arith.constant 2560 : index
      %c0_88 = arith.constant 0 : index
      %130 = vector.load %arg12[%c2560, %c0_88] : memref<3072x256xf32, #tpu.memory_space<vmem>>, vector<128x256xf32>
      %cst_89 = arith.constant dense<0.000000e+00> : vector<1x256xf32>
      %131 = tpu.matmul %129, %130, %cst_89 {dimension_numbers = #tpu.dot_dimension_numbers<[1], [0], [0], [1], [0, 0, 1, 1], [], []>} : vector<1x128xf32>, vector<128x256xf32>, vector<1x256xf32> -> vector<1x256xf32>
      %132 = arith.addf %128, %131 : vector<1x256xf32>
      %133 = vector.extract_strided_slice %47 {offsets = [21, 0], sizes = [1, 128], strides = [1, 1]} : vector<24x128xf32> to vector<1x128xf32>
      %c2688 = arith.constant 2688 : index
      %c0_90 = arith.constant 0 : index
      %134 = vector.load %arg12[%c2688, %c0_90] : memref<3072x256xf32, #tpu.memory_space<vmem>>, vector<128x256xf32>
      %cst_91 = arith.constant dense<0.000000e+00> : vector<1x256xf32>
      %135 = tpu.matmul %133, %134, %cst_91 {dimension_numbers = #tpu.dot_dimension_numbers<[1], [0], [0], [1], [0, 0, 1, 1], [], []>} : vector<1x128xf32>, vector<128x256xf32>, vector<1x256xf32> -> vector<1x256xf32>
      %136 = arith.addf %132, %135 : vector<1x256xf32>
      %137 = vector.extract_strided_slice %47 {offsets = [22, 0], sizes = [1, 128], strides = [1, 1]} : vector<24x128xf32> to vector<1x128xf32>
      %c2816 = arith.constant 2816 : index
      %c0_92 = arith.constant 0 : index
      %138 = vector.load %arg12[%c2816, %c0_92] : memref<3072x256xf32, #tpu.memory_space<vmem>>, vector<128x256xf32>
      %cst_93 = arith.constant dense<0.000000e+00> : vector<1x256xf32>
      %139 = tpu.matmul %137, %138, %cst_93 {dimension_numbers = #tpu.dot_dimension_numbers<[1], [0], [0], [1], [0, 0, 1, 1], [], []>} : vector<1x128xf32>, vector<128x256xf32>, vector<1x256xf32> -> vector<1x256xf32>
      %140 = arith.addf %136, %139 : vector<1x256xf32>
      %141 = vector.extract_strided_slice %47 {offsets = [23, 0], sizes = [1, 128], strides = [1, 1]} : vector<24x128xf32> to vector<1x128xf32>
      %c2944 = arith.constant 2944 : index
      %c0_94 = arith.constant 0 : index
      %142 = vector.load %arg12[%c2944, %c0_94] : memref<3072x256xf32, #tpu.memory_space<vmem>>, vector<128x256xf32>
      %cst_95 = arith.constant dense<0.000000e+00> : vector<1x256xf32>
      %143 = tpu.matmul %141, %142, %cst_95 {dimension_numbers = #tpu.dot_dimension_numbers<[1], [0], [0], [1], [0, 0, 1, 1], [], []>} : vector<1x128xf32>, vector<128x256xf32>, vector<1x256xf32> -> vector<1x256xf32>
      %144 = arith.addf %140, %143 : vector<1x256xf32>
      %c0_96 = arith.constant 0 : index
      %c0_97 = arith.constant 0 : index
      %145 = vector.load %arg16[%c0_96, %c0_97] : memref<1x256xf32, #tpu.memory_space<vmem>>, vector<1x256xf32>
      %146 = arith.subf %144, %145 : vector<1x256xf32>
      %c0_98 = arith.constant 0 : index
      %c0_99 = arith.constant 0 : index
      %147 = vector.load %arg17[%c0_98, %c0_99] : memref<1x256xf32, #tpu.memory_space<vmem>>, vector<1x256xf32>
      %cst_100 = arith.constant 9.99999974E-6 : f32
      %148 = vector.broadcast %cst_100 : f32 to vector<1x256xf32>
      %149 = arith.addf %147, %148 : vector<1x256xf32>
      %150 = math.rsqrt %149 : vector<1x256xf32>
      %151 = arith.mulf %146, %150 : vector<1x256xf32>
      %c0_101 = arith.constant 0 : index
      %c0_102 = arith.constant 0 : index
      %152 = vector.load %arg14[%c0_101, %c0_102] : memref<1x256xf32, #tpu.memory_space<vmem>>, vector<1x256xf32>
      %153 = arith.mulf %151, %152 : vector<1x256xf32>
      %c0_103 = arith.constant 0 : index
      %c0_104 = arith.constant 0 : index
      %154 = vector.load %arg15[%c0_103, %c0_104] : memref<1x256xf32, #tpu.memory_space<vmem>>, vector<1x256xf32>
      %155 = arith.addf %153, %154 : vector<1x256xf32>
      %cst_105 = arith.constant 0.000000e+00 : f32
      %156 = vector.broadcast %cst_105 : f32 to vector<1x256xf32>
      %157 = arith.maximumf %155, %156 : vector<1x256xf32>
      %c0_106 = arith.constant 0 : index
      %c0_107 = arith.constant 0 : index
      %158 = vector.load %arg18[%c0_106, %c0_107] : memref<1x256xf32, #tpu.memory_space<vmem>>, vector<1x256xf32>
      %159 = arith.mulf %157, %158 : vector<1x256xf32>
      %cst_108 = arith.constant dense<0.000000e+00> : vector<1xf32>
      %160 = vector.multi_reduction <add>, %159, %cst_108 [1] : vector<1x256xf32> to vector<1xf32>
      %161 = vector.shape_cast %160 : vector<1xf32> to vector<1x1xf32>
      %c0_109 = arith.constant 0 : index
      %c0_110 = arith.constant 0 : index
      %162 = vector.load %arg19[%c0_109, %c0_110] : memref<1x1xf32, #tpu.memory_space<vmem>>, vector<1x1xf32>
      %163 = arith.addf %161, %162 : vector<1x1xf32>
      %c0_111 = arith.constant 0 : index
      %c0_112 = arith.constant 0 : index
      %c0_113 = arith.constant 0 : index
      %164 = vector.load %arg20[%c0_111, %c0_112, %c0_113] : memref<1x1x1xf32, #tpu.memory_space<vmem>>, vector<1x1x1xf32>
      %165 = vector.shape_cast %164 : vector<1x1x1xf32> to vector<1x1xf32>
      %166 = vector.shape_cast %163 : vector<1x1xf32> to vector<1x1x1xf32>
      tpu.vector_store %arg20[%c0_111, %c0_112, %c0_113], %166 {strides = array<i32>} : memref<1x1x1xf32, #tpu.memory_space<vmem>>, vector<1x1x1xf32>,
    } else {
    }
    return
  }
  func.func @transform_0(%arg0: i32, %arg1: i32) -> (i32, i32, i32, i32) {
    %c0_i32 = arith.constant 0 : i32
    %c0_i32_0 = arith.constant 0 : i32
    %c0_i32_1 = arith.constant 0 : i32
    return %arg0, %c0_i32, %arg1, %c0_i32_0 : i32, i32, i32, i32
  }
  func.func @transform_1(%arg0: i32, %arg1: i32) -> (i32, i32, i32) {
    %c0_i32 = arith.constant 0 : i32
    %c0_i32_0 = arith.constant 0 : i32
    %c0_i32_1 = arith.constant 0 : i32
    return %arg1, %c0_i32, %c0_i32_0 : i32, i32, i32
  }
  func.func @transform_2(%arg0: i32, %arg1: i32) -> (i32, i32) {
    %c0_i32 = arith.constant 0 : i32
    %c0_i32_0 = arith.constant 0 : i32
    %c0_i32_1 = arith.constant 0 : i32
    return %c0_i32, %c0_i32_0 : i32, i32
  }
  func.func @transform_3(%arg0: i32, %arg1: i32) -> (i32, i32) {
    %c0_i32 = arith.constant 0 : i32
    %c0_i32_0 = arith.constant 0 : i32
    %c0_i32_1 = arith.constant 0 : i32
    return %c0_i32, %c0_i32_0 : i32, i32
  }
  func.func @transform_4(%arg0: i32, %arg1: i32) -> (i32, i32) {
    %c0_i32 = arith.constant 0 : i32
    %c0_i32_0 = arith.constant 0 : i32
    %c0_i32_1 = arith.constant 0 : i32
    return %c0_i32, %c0_i32_0 : i32, i32
  }
  func.func @transform_5(%arg0: i32, %arg1: i32) -> (i32, i32) {
    %c0_i32 = arith.constant 0 : i32
    %c0_i32_0 = arith.constant 0 : i32
    %c0_i32_1 = arith.constant 0 : i32
    return %c0_i32, %c0_i32_0 : i32, i32
  }
  func.func @transform_6(%arg0: i32, %arg1: i32) -> (i32, i32) {
    %c0_i32 = arith.constant 0 : i32
    %c0_i32_0 = arith.constant 0 : i32
    %c0_i32_1 = arith.constant 0 : i32
    return %c0_i32, %c0_i32_0 : i32, i32
  }
  func.func @transform_7(%arg0: i32, %arg1: i32) -> (i32, i32) {
    %c0_i32 = arith.constant 0 : i32
    %c0_i32_0 = arith.constant 0 : i32
    %c0_i32_1 = arith.constant 0 : i32
    return %c0_i32, %c0_i32_0 : i32, i32
  }
  func.func @transform_8(%arg0: i32, %arg1: i32) -> (i32, i32) {
    %c0_i32 = arith.constant 0 : i32
    %c0_i32_0 = arith.constant 0 : i32
    %c0_i32_1 = arith.constant 0 : i32
    return %c0_i32, %c0_i32_0 : i32, i32
  }
  func.func @transform_9(%arg0: i32, %arg1: i32) -> (i32, i32) {
    %c0_i32 = arith.constant 0 : i32
    %c0_i32_0 = arith.constant 0 : i32
    %c0_i32_1 = arith.constant 0 : i32
    return %c0_i32, %c0_i32_0 : i32, i32
  }
  func.func @transform_10(%arg0: i32, %arg1: i32) -> (i32, i32) {
    %c0_i32 = arith.constant 0 : i32
    %c0_i32_0 = arith.constant 0 : i32
    %c0_i32_1 = arith.constant 0 : i32
    return %c0_i32, %c0_i32_0 : i32, i32
  }
  func.func @transform_11(%arg0: i32, %arg1: i32) -> (i32, i32) {
    %c0_i32 = arith.constant 0 : i32
    %c0_i32_0 = arith.constant 0 : i32
    %c0_i32_1 = arith.constant 0 : i32
    return %c0_i32, %c0_i32_0 : i32, i32
  }
  func.func @transform_12(%arg0: i32, %arg1: i32) -> (i32, i32) {
    %c0_i32 = arith.constant 0 : i32
    %c0_i32_0 = arith.constant 0 : i32
    %c0_i32_1 = arith.constant 0 : i32
    return %c0_i32, %c0_i32_0 : i32, i32
  }
  func.func @transform_13(%arg0: i32, %arg1: i32) -> (i32, i32) {
    %c0_i32 = arith.constant 0 : i32
    %c0_i32_0 = arith.constant 0 : i32
    %c0_i32_1 = arith.constant 0 : i32
    return %c0_i32, %c0_i32_0 : i32, i32
  }
  func.func @transform_14(%arg0: i32, %arg1: i32) -> (i32, i32) {
    %c0_i32 = arith.constant 0 : i32
    %c0_i32_0 = arith.constant 0 : i32
    %c0_i32_1 = arith.constant 0 : i32
    return %c0_i32, %c0_i32_0 : i32, i32
  }
  func.func @transform_15(%arg0: i32, %arg1: i32) -> (i32, i32) {
    %c0_i32 = arith.constant 0 : i32
    %c0_i32_0 = arith.constant 0 : i32
    %c0_i32_1 = arith.constant 0 : i32
    return %c0_i32, %c0_i32_0 : i32, i32
  }
  func.func @transform_16(%arg0: i32, %arg1: i32) -> (i32, i32) {
    %c0_i32 = arith.constant 0 : i32
    %c0_i32_0 = arith.constant 0 : i32
    %c0_i32_1 = arith.constant 0 : i32
    return %c0_i32, %c0_i32_0 : i32, i32
  }
  func.func @transform_17(%arg0: i32, %arg1: i32) -> (i32, i32) {
    %c0_i32 = arith.constant 0 : i32
    %c0_i32_0 = arith.constant 0 : i32
    %c0_i32_1 = arith.constant 0 : i32
    return %c0_i32, %c0_i32_0 : i32, i32
  }
  func.func @transform_18(%arg0: i32, %arg1: i32) -> (i32, i32, i32) {
    %c0_i32 = arith.constant 0 : i32
    %c0_i32_0 = arith.constant 0 : i32
    %c0_i32_1 = arith.constant 0 : i32
    return %arg0, %c0_i32, %c0_i32_0 : i32, i32, i32
  }
}

</mosaic_0001>

<llo_original>
// kernel: dqn_forward.1
$region0: #{dqn_forward.1}
  #allocation0 [shape = 'u32[]', space=smem, size = 0x4, offset = 0x4, fixed_abs, tag = 'smem constant byte address 0x4 - core index']
  #allocation1 [shape = 'u32[144,128]{1,0:T(1,128)}', space=vmem, size = 0x12000, scoped, tag = 'internal scratch']
  #allocation2 [shape = 'f32[3,18]{1,0:T(4,128)}', space=vmem, size = 0x800, scoped, tag = 'scratch operand']
  #allocation3 [shape = 'f32[1,1]{1,0:T(1,128)S(1)}', space=vmem, size = 0x200, scoped, tag = 'scoped memory for dqn_forward.1']
  #allocation27 [shape = 's32[]', space=sflag, size = 0x4, offset = 0, fixed_abs, tag = 'sflag constant byte address 0x0 - dummy sync flag']
  %s0 = inlined_call_operand.hbm [shape: f32[2,3,288,576], index: 0, kind: input, shape index: {}]
  %s1 = inlined_call_operand.hbm [shape: f32[3,576,18], index: 1, kind: input, shape index: {}]
  %s2 = inlined_call_operand.hbm [shape: f32[24,18], index: 2, kind: input, shape index: {}]
  %s3 = inlined_call_operand.hbm [shape: f32[24,18], index: 3, kind: input, shape index: {}]
  %s4 = inlined_call_operand.hbm [shape: f32[24,18], index: 4, kind: input, shape index: {}]
  %s5 = inlined_call_operand.hbm [shape: f32[24,18], index: 5, kind: input, shape index: {}]
  %s6 = inlined_call_operand.vmem [shape: f32[12,512], index: 6, kind: input, shape index: {}]
  %s7 = inlined_call_operand.vmem [shape: f32[24,512], index: 7, kind: input, shape index: {}]
  %s8 = inlined_call_operand.hbm [shape: f32[512,128], index: 8, kind: input, shape index: {}]
  %s9 = inlined_call_operand.hbm [shape: f32[1,128], index: 9, kind: input, shape index: {}]
  %s10 = inlined_call_operand.hbm [shape: f32[3072,256], index: 10, kind: input, shape index: {}]
  %s11 = inlined_call_operand.hbm [shape: f32[1,256], index: 11, kind: input, shape index: {}]
  %s12 = inlined_call_operand.hbm [shape: f32[1,256], index: 12, kind: input, shape index: {}]
  %s13 = inlined_call_operand.hbm [shape: f32[1,256], index: 13, kind: input, shape index: {}]
  %s14 = inlined_call_operand.hbm [shape: f32[1,256], index: 14, kind: input, shape index: {}]
  %s15 = inlined_call_operand.hbm [shape: f32[1,256], index: 15, kind: input, shape index: {}]
  %s16 = inlined_call_operand.hbm [shape: f32[1,256], index: 16, kind: input, shape index: {}]
  %s17 = inlined_call_operand.<no memory space> [shape: f32[1,1], index: 17, kind: input, shape index: {}]
  %s18 = inlined_call_operand.vmem [shape: f32[2,1,1], index: 18, kind: output, shape index: {}]
  %s19 = sld [smem:[#allocation0]]
  $region177: #{dqn_forward.1} parent=0
    _
  %s21 = ssub.s32 1, %s19
  %s22 = scalar_select 0, %s21, %s19
  %v23 = vstv %s17
  %24 = vst [vmem:[#allocation3] sm:$0x1] %v23
  $region1: #{dqn_forward.1} parent=0
    #allocation4 [shape = 'u8[1474560]{0}', space=vmem, size = 0x168000, scoped, tag = 'input window, operand 0']
    #allocation5 [shape = 's32[2]{0}', space=sflag, size = 0x8, scoped, tag = 'scoped memory for dqn_forward.1']
    #allocation6 [shape = 'u8[589824]{0}', space=vmem, size = 0x90000, scoped, tag = 'input window, operand 1']
    #allocation7 [shape = 's32[2]{0}', space=sflag, size = 0x8, scoped, tag = 'scoped memory for dqn_forward.1']
    #allocation8 [shape = 'u8[12288]{0}', space=vmem, size = 0x3000, scoped, tag = 'input window, operand 2, single buffered']
    #allocation9 [shape = 'u8[12288]{0}', space=vmem, size = 0x3000, scoped, tag = 'input window, operand 3, single buffered']
    #allocation10 [shape = 's32[1]{0}', space=sflag, size = 0x4, scoped, tag = 'scoped memory for dqn_forward.1']
    #allocation11 [shape = 'u8[12288]{0}', space=vmem, size = 0x3000, scoped, tag = 'input window, operand 4, single buffered']
    #allocation12 [shape = 'u8[12288]{0}', space=vmem, size = 0x3000, scoped, tag = 'input window, operand 5, single buffered']
    #allocation13 [shape = 's32[1]{0}', space=sflag, size = 0x4, scoped, tag = 'scoped memory for dqn_forward.1']
    #allocation14 [shape = 'u8[262144]{0}', space=vmem, size = 0x40000, scoped, tag = 'input window, operand 8, single buffered']
    #allocation15 [shape = 'u8[512]{0}', space=vmem, size = 0x400, scoped, tag = 'input window, operand 9, single buffered']
    #allocation16 [shape = 's32[1]{0}', space=sflag, size = 0x4, scoped, tag = 'scoped memory for dqn_forward.1']
    #allocation17 [shape = 'u8[3145728]{0}', space=vmem, size = 0x300000, scoped, tag = 'input window, operand 10, single buffered']
    #allocation18 [shape = 'u8[1024]{0}', space=vmem, size = 0x400, scoped, tag = 'input window, operand 11, single buffered']
    #allocation19 [shape = 's32[1]{0}', space=sflag, size = 0x4, scoped, tag = 'scoped memory for dqn_forward.1']
    #allocation20 [shape = 'u8[1024]{0}', space=vmem, size = 0x400, scoped, tag = 'input window, operand 12, single buffered']
    #allocation21 [shape = 'u8[1024]{0}', space=vmem, size = 0x400, scoped, tag = 'input window, operand 13, single buffered']
    #allocation22 [shape = 's32[1]{0}', space=sflag, size = 0x4, scoped, tag = 'scoped memory for dqn_forward.1']
    #allocation23 [shape = 'u8[1024]{0}', space=vmem, size = 0x400, scoped, tag = 'input window, operand 14, single buffered']
    #allocation24 [shape = 'u8[1024]{0}', space=vmem, size = 0x400, scoped, tag = 'input window, operand 15, single buffered']
    #allocation25 [shape = 's32[1]{0}', space=sflag, size = 0x4, scoped, tag = 'scoped memory for dqn_forward.1']
    #allocation26 [shape = 'u8[1024]{0}', space=vmem, size = 0x400, scoped, tag = 'input window, operand 16, single buffered']
    %25 = vsyncpa [#allocation5], 0
    %s26 = scalar_lea.sflag [#allocation5], 1
    %27 = vsyncpa %s26, 0
    %28 = vsyncpa [#allocation7], 0
    %s29 = scalar_lea.sflag [#allocation7], 1
    %30 = vsyncpa %s29, 0
    %31 = vsyncpa [#allocation10], 0
    %32 = vsyncpa [#allocation13], 0
    %33 = vsyncpa [#allocation16], 0
    %34 = vsyncpa [#allocation19], 0
    %35 = vsyncpa [#allocation22], 0
    %36 = vsyncpa [#allocation25], 0
    loop: start=0, step=1, limit=8
    $region2: #{dqn_forward.1} parent=1 // loop_pre_header
      _
    $region3: #{dqn_forward.1} parent=1 // loop_header
      %s38 = sphi 0, %s42
      %p39 = scmp.ge.s32.totalorder %s38, 8
      %s45 = sphi 0, %s57
      %s46 = sphi 0, %s53
      %s47 = sphi 0, %s45
      %s48 = sphi 0, %s46
      %s49 = sphi 0, %s47
      %s50 = sphi 0, %s48
      %s62 = sphi 0, %s64
      %s65 = sphi 0, %s62
      %s66 = sphi 0, %s65
      %s82 = sphi 0, %s66
      %s88 = sphi 0, %s90
      %s91 = sphi 0, %s88
      %s92 = sphi 0, %s91
      %s108 = sphi 0, %s92
      %s112 = sphi 0, %s112
      %s114 = sphi 0, %s112
      %s115 = sphi 0, %s114
      %s129 = sphi 0, %s115
      %s133 = sphi 0, %s133
      %s135 = sphi 0, %s133
      %s136 = sphi 0, %s135
      %s150 = sphi 0, %s136
      %s154 = sphi 0, %s154
      %s156 = sphi 0, %s154
      %s157 = sphi 0, %s156
      %s171 = sphi 0, %s157
      %s175 = sphi 0, %s175
      %s177 = sphi 0, %s175
      %s178 = sphi 0, %s177
      %s192 = sphi 0, %s178
      %s196 = sphi 0, %s196
      %s198 = sphi 0, %s196
      %s199 = sphi 0, %s198
      %s213 = sphi 0, %s199
      %s217 = sphi 0, %s217
      %s219 = sphi 0, %s217
      %s220 = sphi 0, %s219
      %s234 = sphi 0, %s220
      %s238 = sphi 0, %s238
      %s240 = sphi 0, %s238
      %s241 = sphi 0, %s240
      %s255 = sphi 0, %s241
      %s259 = sphi 0, %s259
      %s261 = sphi 0, %s259
      %s262 = sphi 0, %s261
      %s276 = sphi 0, %s262
      %s280 = sphi 0, %s280
      %s282 = sphi 0, %s280
      %s283 = sphi 0, %s282
      %s297 = sphi 0, %s283
      %s301 = sphi 0, %s301
      %s303 = sphi 0, %s301
      %s304 = sphi 0, %s303
      %s318 = sphi 0, %s304
      %s322 = sphi 0, %s322
      %s324 = sphi 0, %s322
      %s325 = sphi 0, %s324
      %s339 = sphi 0, %s325
      %s343 = sphi 0, %s343
      %s345 = sphi 0, %s343
      %s346 = sphi 0, %s345
      %s360 = sphi 0, %s346
      %s364 = sphi 0, %s364
      %s366 = sphi 0, %s364
      %s367 = sphi 0, %s366
      %s381 = sphi 0, %s367
      %s385 = sphi 0, %s385
      %s387 = sphi 0, %s385
      %s388 = sphi 0, %s387
      %s402 = sphi 0, %s388
      %s406 = sphi 0, %s406
      %s408 = sphi 0, %s406
      %s409 = sphi 0, %s408
      %s423 = sphi 0, %s409
      %s427 = sphi 0, %s427
      %s429 = sphi 0, %s427
      %s430 = sphi 0, %s429
      %s444 = sphi 0, %s430
      %s450 = sphi 0, %s452
      %s453 = sphi 0, %s450
      %s454 = sphi 0, %s453
      %s470 = sphi 0, %s454
    $region4: #{dqn_forward.1} parent=1 // loop_header_branch
      %41 = sbr.rel (%p39) target = $region8
    $region5: #{dqn_forward.1} parent=1 // loop_body
      %s43 = ssub.s32 %s38, 1
      %s44 = ssub.s32 %s38, 2
      %s51 = sadd.s32 1, %s46
      %p52 = scmp.ge.s32.totalorder %s51, 3
      %s53 = scalar_select %p52, 0, %s51
      %s54 = sadd.s32 1, %s45
      %s55 = scalar_select %p52, %s54, %s45
      %p56 = scmp.ge.s32.totalorder %s55, 2
      %s57 = scalar_select %p56, 0, %s55
      %s58 = ssub.s32 %s45, %s57
      %s59 = ssub.s32 %s46, %s53
      %s60 = sor.u32 %s58, %s59
      %p61 = scmp.eq.s32.totalorder %s60, 0
      %s63 = sadd.s32 %s62, 1
      %s64 = scalar_select %p61, %s62, %s63
      %p67 = pneg %p61
      %p68 = scmp.eq.s32.totalorder %s38, 5
      %p69 = por %p67, %p68
      %p70 = scmp.ne.s32.totalorder %s62, %s65
      %p71 = scmp.eq.s32.totalorder %s38, 0
      %p72 = por %p70, %p71
      %p73 = scmp.ne.s32.totalorder %s62, %s65
      %p74 = scmp.eq.s32.totalorder %s43, 5
      %p75 = por %p73, %p74
      %p76 = scmp.ne.s32.totalorder %s65, %s66
      %p77 = scmp.eq.s32.totalorder %s43, 0
      %p78 = por %p76, %p77
      %p79 = scmp.ne.s32.totalorder %s65, %s66
      %p80 = scmp.eq.s32.totalorder %s44, 5
      %p81 = por %p79, %p80
      %p83 = scmp.ne.s32.totalorder %s66, %s82
      %p84 = scmp.eq.s32.totalorder %s44, 0
      %p85 = por %p83, %p84
      %s86 = ssub.s32 %s46, %s53
      %p87 = scmp.eq.s32.totalorder %s86, 0
      %s89 = sadd.s32 %s88, 1
      %s90 = scalar_select %p87, %s88, %s89
      %p93 = pneg %p87
      %p94 = scmp.eq.s32.totalorder %s38, 5
      %p95 = por %p93, %p94
      %p96 = scmp.ne.s32.totalorder %s88, %s91
      %p97 = scmp.eq.s32.totalorder %s38, 0
      %p98 = por %p96, %p97
      %p99 = scmp.ne.s32.totalorder %s88, %s91
      %p100 = scmp.eq.s32.totalorder %s43, 5
      %p101 = por %p99, %p100
      %p102 = scmp.ne.s32.totalorder %s91, %s92
      %p103 = scmp.eq.s32.totalorder %s43, 0
      %p104 = por %p102, %p103
      %p105 = scmp.ne.s32.totalorder %s91, %s92
      %p106 = scmp.eq.s32.totalorder %s44, 5
      %p107 = por %p105, %p106
      %p109 = scmp.ne.s32.totalorder %s92, %s108
      %p110 = scmp.eq.s32.totalorder %s44, 0
      %p111 = por %p109, %p110
      %s113 = sadd.s32 %s112, 1
      %p116 = scmp.eq.s32.totalorder %s38, 5
      %p117 = scmp.ne.s32.totalorder %s112, %s114
      %p118 = scmp.eq.s32.totalorder %s38, 0
      %p119 = por %p117, %p118
      %p120 = scmp.ne.s32.totalorder %s112, %s114
      %p121 = scmp.eq.s32.totalorder %s43, 5
      %p122 = por %p120, %p121
      %p123 = scmp.ne.s32.totalorder %s114, %s115
      %p124 = scmp.eq.s32.totalorder %s43, 0
      %p125 = por %p123, %p124
      %p126 = scmp.ne.s32.totalorder %s114, %s115
      %p127 = scmp.eq.s32.totalorder %s44, 5
      %p128 = por %p126, %p127
      %p130 = scmp.ne.s32.totalorder %s115, %s129
      %p131 = scmp.eq.s32.totalorder %s44, 0
      %p132 = por %p130, %p131
      %s134 = sadd.s32 %s133, 1
      %p137 = scmp.eq.s32.totalorder %s38, 5
      %p138 = scmp.ne.s32.totalorder %s133, %s135
      %p139 = scmp.eq.s32.totalorder %s38, 0
      %p140 = por %p138, %p139
      %p141 = scmp.ne.s32.totalorder %s133, %s135
      %p142 = scmp.eq.s32.totalorder %s43, 5
      %p143 = por %p141, %p142
      %p144 = scmp.ne.s32.totalorder %s135, %s136
      %p145 = scmp.eq.s32.totalorder %s43, 0
      %p146 = por %p144, %p145
      %p147 = scmp.ne.s32.totalorder %s135, %s136
      %p148 = scmp.eq.s32.totalorder %s44, 5
      %p149 = por %p147, %p148
      %p151 = scmp.ne.s32.totalorder %s136, %s150
      %p152 = scmp.eq.s32.totalorder %s44, 0
      %p153 = por %p151, %p152
      %s155 = sadd.s32 %s154, 1
      %p158 = scmp.eq.s32.totalorder %s38, 5
      %p159 = scmp.ne.s32.totalorder %s154, %s156
      %p160 = scmp.eq.s32.totalorder %s38, 0
      %p161 = por %p159, %p160
      %p162 = scmp.ne.s32.totalorder %s154, %s156
      %p163 = scmp.eq.s32.totalorder %s43, 5
      %p164 = por %p162, %p163
      %p165 = scmp.ne.s32.totalorder %s156, %s157
      %p166 = scmp.eq.s32.totalorder %s43, 0
      %p167 = por %p165, %p166
      %p168 = scmp.ne.s32.totalorder %s156, %s157
      %p169 = scmp.eq.s32.totalorder %s44, 5
      %p170 = por %p168, %p169
      %p172 = scmp.ne.s32.totalorder %s157, %s171
      %p173 = scmp.eq.s32.totalorder %s44, 0
      %p174 = por %p172, %p173
      %s176 = sadd.s32 %s175, 1
      %p179 = scmp.eq.s32.totalorder %s38, 5
      %p180 = scmp.ne.s32.totalorder %s175, %s177
      %p181 = scmp.eq.s32.totalorder %s38, 0
      %p182 = por %p180, %p181
      %p183 = scmp.ne.s32.totalorder %s175, %s177
      %p184 = scmp.eq.s32.totalorder %s43, 5
      %p185 = por %p183, %p184
      %p186 = scmp.ne.s32.totalorder %s177, %s178
      %p187 = scmp.eq.s32.totalorder %s43, 0
      %p188 = por %p186, %p187
      %p189 = scmp.ne.s32.totalorder %s177, %s178
      %p190 = scmp.eq.s32.totalorder %s44, 5
      %p191 = por %p189, %p190
      %p193 = scmp.ne.s32.totalorder %s178, %s192
      %p194 = scmp.eq.s32.totalorder %s44, 0
      %p195 = por %p193, %p194
      %s197 = sadd.s32 %s196, 1
      %p200 = scmp.eq.s32.totalorder %s38, 5
      %p201 = scmp.ne.s32.totalorder %s196, %s198
      %p202 = scmp.eq.s32.totalorder %s38, 0
      %p203 = por %p201, %p202
      %p204 = scmp.ne.s32.totalorder %s196, %s198
      %p205 = scmp.eq.s32.totalorder %s43, 5
      %p206 = por %p204, %p205
      %p207 = scmp.ne.s32.totalorder %s198, %s199
      %p208 = scmp.eq.s32.totalorder %s43, 0
      %p209 = por %p207, %p208
      %p210 = scmp.ne.s32.totalorder %s198, %s199
      %p211 = scmp.eq.s32.totalorder %s44, 5
      %p212 = por %p210, %p211
      %p214 = scmp.ne.s32.totalorder %s199, %s213
      %p215 = scmp.eq.s32.totalorder %s44, 0
      %p216 = por %p214, %p215
      %s218 = sadd.s32 %s217, 1
      %p221 = scmp.eq.s32.totalorder %s38, 5
      %p222 = scmp.ne.s32.totalorder %s217, %s219
      %p223 = scmp.eq.s32.totalorder %s38, 0
      %p224 = por %p222, %p223
      %p225 = scmp.ne.s32.totalorder %s217, %s219
      %p226 = scmp.eq.s32.totalorder %s43, 5
      %p227 = por %p225, %p226
      %p228 = scmp.ne.s32.totalorder %s219, %s220
      %p229 = scmp.eq.s32.totalorder %s43, 0
      %p230 = por %p228, %p229
      %p231 = scmp.ne.s32.totalorder %s219, %s220
      %p232 = scmp.eq.s32.totalorder %s44, 5
      %p233 = por %p231, %p232
      %p235 = scmp.ne.s32.totalorder %s220, %s234
      %p236 = scmp.eq.s32.totalorder %s44, 0
      %p237 = por %p235, %p236
      %s239 = sadd.s32 %s238, 1
      %p242 = scmp.eq.s32.totalorder %s38, 5
      %p243 = scmp.ne.s32.totalorder %s238, %s240
      %p244 = scmp.eq.s32.totalorder %s38, 0
      %p245 = por %p243, %p244
      %p246 = scmp.ne.s32.totalorder %s238, %s240
      %p247 = scmp.eq.s32.totalorder %s43, 5
      %p248 = por %p246, %p247
      %p249 = scmp.ne.s32.totalorder %s240, %s241
      %p250 = scmp.eq.s32.totalorder %s43, 0
      %p251 = por %p249, %p250
      %p252 = scmp.ne.s32.totalorder %s240, %s241
      %p253 = scmp.eq.s32.totalorder %s44, 5
      %p254 = por %p252, %p253
      %p256 = scmp.ne.s32.totalorder %s241, %s255
      %p257 = scmp.eq.s32.totalorder %s44, 0
      %p258 = por %p256, %p257
      %s260 = sadd.s32 %s259, 1
      %p263 = scmp.eq.s32.totalorder %s38, 5
      %p264 = scmp.ne.s32.totalorder %s259, %s261
      %p265 = scmp.eq.s32.totalorder %s38, 0
      %p266 = por %p264, %p265
      %p267 = scmp.ne.s32.totalorder %s259, %s261
      %p268 = scmp.eq.s32.totalorder %s43, 5
      %p269 = por %p267, %p268
      %p270 = scmp.ne.s32.totalorder %s261, %s262
      %p271 = scmp.eq.s32.totalorder %s43, 0
      %p272 = por %p270, %p271
      %p273 = scmp.ne.s32.totalorder %s261, %s262
      %p274 = scmp.eq.s32.totalorder %s44, 5
      %p275 = por %p273, %p274
      %p277 = scmp.ne.s32.totalorder %s262, %s276
      %p278 = scmp.eq.s32.totalorder %s44, 0
      %p279 = por %p277, %p278
      %s281 = sadd.s32 %s280, 1
      %p284 = scmp.eq.s32.totalorder %s38, 5
      %p285 = scmp.ne.s32.totalorder %s280, %s282
      %p286 = scmp.eq.s32.totalorder %s38, 0
      %p287 = por %p285, %p286
      %p288 = scmp.ne.s32.totalorder %s280, %s282
      %p289 = scmp.eq.s32.totalorder %s43, 5
      %p290 = por %p288, %p289
      %p291 = scmp.ne.s32.totalorder %s282, %s283
      %p292 = scmp.eq.s32.totalorder %s43, 0
      %p293 = por %p291, %p292
      %p294 = scmp.ne.s32.totalorder %s282, %s283
      %p295 = scmp.eq.s32.totalorder %s44, 5
      %p296 = por %p294, %p295
      %p298 = scmp.ne.s32.totalorder %s283, %s297
      %p299 = scmp.eq.s32.totalorder %s44, 0
      %p300 = por %p298, %p299
      %s302 = sadd.s32 %s301, 1
      %p305 = scmp.eq.s32.totalorder %s38, 5
      %p306 = scmp.ne.s32.totalorder %s301, %s303
      %p307 = scmp.eq.s32.totalorder %s38, 0
      %p308 = por %p306, %p307
      %p309 = scmp.ne.s32.totalorder %s301, %s303
      %p310 = scmp.eq.s32.totalorder %s43, 5
      %p311 = por %p309, %p310
      %p312 = scmp.ne.s32.totalorder %s303, %s304
      %p313 = scmp.eq.s32.totalorder %s43, 0
      %p314 = por %p312, %p313
      %p315 = scmp.ne.s32.totalorder %s303, %s304
      %p316 = scmp.eq.s32.totalorder %s44, 5
      %p317 = por %p315, %p316
      %p319 = scmp.ne.s32.totalorder %s304, %s318
      %p320 = scmp.eq.s32.totalorder %s44, 0
      %p321 = por %p319, %p320
      %s323 = sadd.s32 %s322, 1
      %p326 = scmp.eq.s32.totalorder %s38, 5
      %p327 = scmp.ne.s32.totalorder %s322, %s324
      %p328 = scmp.eq.s32.totalorder %s38, 0
      %p329 = por %p327, %p328
      %p330 = scmp.ne.s32.totalorder %s322, %s324
      %p331 = scmp.eq.s32.totalorder %s43, 5
      %p332 = por %p330, %p331
      %p333 = scmp.ne.s32.totalorder %s324, %s325
      %p334 = scmp.eq.s32.totalorder %s43, 0
      %p335 = por %p333, %p334
      %p336 = scmp.ne.s32.totalorder %s324, %s325
      %p337 = scmp.eq.s32.totalorder %s44, 5
      %p338 = por %p336, %p337
      %p340 = scmp.ne.s32.totalorder %s325, %s339
      %p341 = scmp.eq.s32.totalorder %s44, 0
      %p342 = por %p340, %p341
      %s344 = sadd.s32 %s343, 1
      %p347 = scmp.eq.s32.totalorder %s38, 5
      %p348 = scmp.ne.s32.totalorder %s343, %s345
      %p349 = scmp.eq.s32.totalorder %s38, 0
      %p350 = por %p348, %p349
      %p351 = scmp.ne.s32.totalorder %s343, %s345
      %p352 = scmp.eq.s32.totalorder %s43, 5
      %p353 = por %p351, %p352
      %p354 = scmp.ne.s32.totalorder %s345, %s346
      %p355 = scmp.eq.s32.totalorder %s43, 0
      %p356 = por %p354, %p355
      %p357 = scmp.ne.s32.totalorder %s345, %s346
      %p358 = scmp.eq.s32.totalorder %s44, 5
      %p359 = por %p357, %p358
      %p361 = scmp.ne.s32.totalorder %s346, %s360
      %p362 = scmp.eq.s32.totalorder %s44, 0
      %p363 = por %p361, %p362
      %s365 = sadd.s32 %s364, 1
      %p368 = scmp.eq.s32.totalorder %s38, 5
      %p369 = scmp.ne.s32.totalorder %s364, %s366
      %p370 = scmp.eq.s32.totalorder %s38, 0
      %p371 = por %p369, %p370
      %p372 = scmp.ne.s32.totalorder %s364, %s366
      %p373 = scmp.eq.s32.totalorder %s43, 5
      %p374 = por %p372, %p373
      %p375 = scmp.ne.s32.totalorder %s366, %s367
      %p376 = scmp.eq.s32.totalorder %s43, 0
      %p377 = por %p375, %p376
      %p378 = scmp.ne.s32.totalorder %s366, %s367
      %p379 = scmp.eq.s32.totalorder %s44, 5
      %p380 = por %p378, %p379
      %p382 = scmp.ne.s32.totalorder %s367, %s381
      %p383 = scmp.eq.s32.totalorder %s44, 0
      %p384 = por %p382, %p383
      %s386 = sadd.s32 %s385, 1
      %p389 = scmp.eq.s32.totalorder %s38, 5
      %p390 = scmp.ne.s32.totalorder %s385, %s387
      %p391 = scmp.eq.s32.totalorder %s38, 0
      %p392 = por %p390, %p391
      %p393 = scmp.ne.s32.totalorder %s385, %s387
      %p394 = scmp.eq.s32.totalorder %s43, 5
      %p395 = por %p393, %p394
      %p396 = scmp.ne.s32.totalorder %s387, %s388
      %p397 = scmp.eq.s32.totalorder %s43, 0
      %p398 = por %p396, %p397
      %p399 = scmp.ne.s32.totalorder %s387, %s388
      %p400 = scmp.eq.s32.totalorder %s44, 5
      %p401 = por %p399, %p400
      %p403 = scmp.ne.s32.totalorder %s388, %s402
      %p404 = scmp.eq.s32.totalorder %s44, 0
      %p405 = por %p403, %p404
      %s407 = sadd.s32 %s406, 1
      %p410 = scmp.eq.s32.totalorder %s38, 5
      %p411 = scmp.ne.s32.totalorder %s406, %s408
      %p412 = scmp.eq.s32.totalorder %s38, 0
      %p413 = por %p411, %p412
      %p414 = scmp.ne.s32.totalorder %s406, %s408
      %p415 = scmp.eq.s32.totalorder %s43, 5
      %p416 = por %p414, %p415
      %p417 = scmp.ne.s32.totalorder %s408, %s409
      %p418 = scmp.eq.s32.totalorder %s43, 0
      %p419 = por %p417, %p418
      %p420 = scmp.ne.s32.totalorder %s408, %s409
      %p421 = scmp.eq.s32.totalorder %s44, 5
      %p422 = por %p420, %p421
      %p424 = scmp.ne.s32.totalorder %s409, %s423
      %p425 = scmp.eq.s32.totalorder %s44, 0
      %p426 = por %p424, %p425
      %s428 = sadd.s32 %s427, 1
      %p431 = scmp.eq.s32.totalorder %s38, 5
      %p432 = scmp.ne.s32.totalorder %s427, %s429
      %p433 = scmp.eq.s32.totalorder %s38, 0
      %p434 = por %p432, %p433
      %p435 = scmp.ne.s32.totalorder %s427, %s429
      %p436 = scmp.eq.s32.totalorder %s43, 5
      %p437 = por %p435, %p436
      %p438 = scmp.ne.s32.totalorder %s429, %s430
      %p439 = scmp.eq.s32.totalorder %s43, 0
      %p440 = por %p438, %p439
      %p441 = scmp.ne.s32.totalorder %s429, %s430
      %p442 = scmp.eq.s32.totalorder %s44, 5
      %p443 = por %p441, %p442
      %p445 = scmp.ne.s32.totalorder %s430, %s444
      %p446 = scmp.eq.s32.totalorder %s44, 0
      %p447 = por %p445, %p446
      %s448 = ssub.s32 %s45, %s57
      %p449 = scmp.eq.s32.totalorder %s448, 0
      %s451 = sadd.s32 %s450, 1
      %s452 = scalar_select %p449, %s450, %s451
      %p455 = pneg %p449
      %p456 = scmp.eq.s32.totalorder %s38, 5
      %p457 = por %p455, %p456
      %p458 = scmp.ne.s32.totalorder %s450, %s453
      %p459 = scmp.eq.s32.totalorder %s38, 0
      %p460 = por %p458, %p459
      %p461 = scmp.ne.s32.totalorder %s450, %s453
      %p462 = scmp.eq.s32.totalorder %s43, 5
      %p463 = por %p461, %p462
      %p464 = scmp.ne.s32.totalorder %s453, %s454
      %p465 = scmp.eq.s32.totalorder %s43, 0
      %p466 = por %p464, %p465
      %p467 = scmp.ne.s32.totalorder %s453, %s454
      %p468 = scmp.eq.s32.totalorder %s44, 5
      %p469 = por %p467, %p468
      %p471 = scmp.ne.s32.totalorder %s454, %s470
      %p472 = scmp.eq.s32.totalorder %s44, 0
      %p473 = por %p471, %p472
      %p474 = scmp.le.s32.totalorder 1, %s38
      %p475 = scmp.lt.s32.totalorder %s38, 7
      %p476 = pnand %p474, %p475
      %p477 = pneg %p476
      // Predicated region
      $region9: #{dqn_forward.1} parent=5 // pred_check
        _
      $region10: #{dqn_forward.1} parent=5 // pred_check_branch
        %479 = sbr.rel (%p476) target = $region12
      $region11: #{dqn_forward.1} parent=5 // pred_region
        %s480 = ssub.s32 %s38, 1
        // Predicated region
        $region13: #{dqn_forward.1} parent=11 // pred_check
          %p481 = pneg %p125
        $region14: #{dqn_forward.1} parent=11 // pred_check_branch
          %483 = sbr.rel (%p481) target = $region16
        $region15: #{dqn_forward.1} parent=11 // pred_region
          %s485 = ssub.s32 384, 384
          %486 = vsyncadd [#allocation7], %s485
          %s487 = sshll.u32 [#allocation8], 4
          %s488 = int_to_ptr.vmem [resolvable:$true] %s487
          %493 = dma.hbm_to_vmem [thread:$0]  %s2, 384, %s488, [#allocation7], 128, 128, 8
        $region16: #{dqn_forward.1} parent=11 // pred_fallthru
          _
        // Predicated region
        $region17: #{dqn_forward.1} parent=11 // pred_check
          %p494 = pneg %p146
        $region18: #{dqn_forward.1} parent=11 // pred_check_branch
          %496 = sbr.rel (%p494) target = $region20
        $region19: #{dqn_forward.1} parent=11 // pred_region
          %s498 = ssub.s32 384, 384
          %499 = vsyncadd [#allocation10], %s498
          %s500 = sshll.u32 [#allocation9], 4
          %s501 = int_to_ptr.vmem [resolvable:$true] %s500
          %506 = dma.hbm_to_vmem [thread:$0]  %s3, 384, %s501, [#allocation10], 128, 128, 8
        $region20: #{dqn_forward.1} parent=11 // pred_fallthru
          _
        // Predicated region
        $region21: #{dqn_forward.1} parent=11 // pred_check
          %p507 = pneg %p167
        $region22: #{dqn_forward.1} parent=11 // pred_check_branch
          %509 = sbr.rel (%p507) target = $region24
        $region23: #{dqn_forward.1} parent=11 // pred_region
          %s511 = ssub.s32 384, 384
          %512 = vsyncadd [#allocation10], %s511
          %s513 = sshll.u32 [#allocation11], 4
          %s514 = int_to_ptr.vmem [resolvable:$true] %s513
          %519 = dma.hbm_to_vmem [thread:$0]  %s4, 384, %s514, [#allocation10], 128, 128, 8
        $region24: #{dqn_forward.1} parent=11 // pred_fallthru
          _
        // Predicated region
        $region25: #{dqn_forward.1} parent=11 // pred_check
          %p520 = pneg %p188
        $region26: #{dqn_forward.1} parent=11 // pred_check_branch
          %522 = sbr.rel (%p520) target = $region28
        $region27: #{dqn_forward.1} parent=11 // pred_region
          %s524 = ssub.s32 384, 384
          %525 = vsyncadd [#allocation13], %s524
          %s526 = sshll.u32 [#allocation12], 4
          %s527 = int_to_ptr.vmem [resolvable:$true] %s526
          %532 = dma.hbm_to_vmem [thread:$0]  %s5, 384, %s527, [#allocation13], 128, 128, 8
        $region28: #{dqn_forward.1} parent=11 // pred_fallthru
          _
        // Predicated region
        $region29: #{dqn_forward.1} parent=11 // pred_check
          %p533 = pneg %p209
        $region30: #{dqn_forward.1} parent=11 // pred_check_branch
          %535 = sbr.rel (%p533) target = $region32
        $region31: #{dqn_forward.1} parent=11 // pred_region
          _
        $region32: #{dqn_forward.1} parent=11 // pred_fallthru
          _
        // Predicated region
        $region33: #{dqn_forward.1} parent=11 // pred_check
          %p536 = pneg %p230
        $region34: #{dqn_forward.1} parent=11 // pred_check_branch
          %538 = sbr.rel (%p536) target = $region36
        $region35: #{dqn_forward.1} parent=11 // pred_region
          _
        $region36: #{dqn_forward.1} parent=11 // pred_fallthru
          _
        // Predicated region
        $region37: #{dqn_forward.1} parent=11 // pred_check
          %p539 = pneg %p251
        $region38: #{dqn_forward.1} parent=11 // pred_check_branch
          %541 = sbr.rel (%p539) target = $region40
        $region39: #{dqn_forward.1} parent=11 // pred_region
          %s543 = ssub.s32 8192, 8192
          %544 = vsyncadd [#allocation13], %s543
          %s545 = sshll.u32 [#allocation14], 4
          %s546 = int_to_ptr.vmem [resolvable:$true] %s545
          %551 = dma.hbm_to_vmem [thread:$0]  %s8, 8192, %s546, [#allocation13], 128, 128, 8
        $region40: #{dqn_forward.1} parent=11 // pred_fallthru
          _
        // Predicated region
        $region41: #{dqn_forward.1} parent=11 // pred_check
          %p552 = pneg %p272
        $region42: #{dqn_forward.1} parent=11 // pred_check_branch
          %554 = sbr.rel (%p552) target = $region44
        $region43: #{dqn_forward.1} parent=11 // pred_region
          %s556 = ssub.s32 16, 16
          %557 = vsyncadd [#allocation16], %s556
          %s559 = sshll.u32 [#allocation15], 4
          %s560 = int_to_ptr.vmem [resolvable:$true] %s559
          %562 = dma.hbm_to_vmem [thread:$0]  %s9, 16, %s560, [#allocation16]
        $region44: #{dqn_forward.1} parent=11 // pred_fallthru
          _
        // Predicated region
        $region45: #{dqn_forward.1} parent=11 // pred_check
          %p563 = pneg %p293
        $region46: #{dqn_forward.1} parent=11 // pred_check_branch
          %565 = sbr.rel (%p563) target = $region48
        $region47: #{dqn_forward.1} parent=11 // pred_region
          %s567 = ssub.s32 98304, 98304
          %568 = vsyncadd [#allocation16], %s567
          %s569 = sshll.u32 [#allocation17], 4
          %s570 = int_to_ptr.vmem [resolvable:$true] %s569
          %575 = dma.hbm_to_vmem [thread:$0]  %s10, 98304, %s570, [#allocation16], 256, 256, 16
        $region48: #{dqn_forward.1} parent=11 // pred_fallthru
          _
        // Predicated region
        $region49: #{dqn_forward.1} parent=11 // pred_check
          %p576 = pneg %p314
        $region50: #{dqn_forward.1} parent=11 // pred_check_branch
          %578 = sbr.rel (%p576) target = $region52
        $region51: #{dqn_forward.1} parent=11 // pred_region
          %s580 = ssub.s32 32, 32
          %581 = vsyncadd [#allocation19], %s580
          %s583 = sshll.u32 [#allocation18], 4
          %s584 = int_to_ptr.vmem [resolvable:$true] %s583
          %586 = dma.hbm_to_vmem [thread:$0]  %s11, 32, %s584, [#allocation19]
        $region52: #{dqn_forward.1} parent=11 // pred_fallthru
          _
        // Predicated region
        $region53: #{dqn_forward.1} parent=11 // pred_check
          %p587 = pneg %p335
        $region54: #{dqn_forward.1} parent=11 // pred_check_branch
          %589 = sbr.rel (%p587) target = $region56
        $region55: #{dqn_forward.1} parent=11 // pred_region
          %s591 = ssub.s32 32, 32
          %592 = vsyncadd [#allocation19], %s591
          %s594 = sshll.u32 [#allocation20], 4
          %s595 = int_to_ptr.vmem [resolvable:$true] %s594
          %597 = dma.hbm_to_vmem [thread:$0]  %s12, 32, %s595, [#allocation19]
        $region56: #{dqn_forward.1} parent=11 // pred_fallthru
          _
        // Predicated region
        $region57: #{dqn_forward.1} parent=11 // pred_check
          %p598 = pneg %p356
        $region58: #{dqn_forward.1} parent=11 // pred_check_branch
          %600 = sbr.rel (%p598) target = $region60
        $region59: #{dqn_forward.1} parent=11 // pred_region
          %s602 = ssub.s32 32, 32
          %603 = vsyncadd [#allocation22], %s602
          %s605 = sshll.u32 [#allocation21], 4
          %s606 = int_to_ptr.vmem [resolvable:$true] %s605
          %608 = dma.hbm_to_vmem [thread:$0]  %s13, 32, %s606, [#allocation22]
        $region60: #{dqn_forward.1} parent=11 // pred_fallthru
          _
        // Predicated region
        $region61: #{dqn_forward.1} parent=11 // pred_check
          %p609 = pneg %p377
        $region62: #{dqn_forward.1} parent=11 // pred_check_branch
          %611 = sbr.rel (%p609) target = $region64
        $region63: #{dqn_forward.1} parent=11 // pred_region
          %s613 = ssub.s32 32, 32
          %614 = vsyncadd [#allocation22], %s613
          %s616 = sshll.u32 [#allocation23], 4
          %s617 = int_to_ptr.vmem [resolvable:$true] %s616
          %619 = dma.hbm_to_vmem [thread:$0]  %s14, 32, %s617, [#allocation22]
        $region64: #{dqn_forward.1} parent=11 // pred_fallthru
          _
        // Predicated region
        $region65: #{dqn_forward.1} parent=11 // pred_check
          %p620 = pneg %p398
        $region66: #{dqn_forward.1} parent=11 // pred_check_branch
          %622 = sbr.rel (%p620) target = $region68
        $region67: #{dqn_forward.1} parent=11 // pred_region
          %s624 = ssub.s32 32, 32
          %625 = vsyncadd [#allocation25], %s624
          %s627 = sshll.u32 [#allocation24], 4
          %s628 = int_to_ptr.vmem [resolvable:$true] %s627
          %630 = dma.hbm_to_vmem [thread:$0]  %s15, 32, %s628, [#allocation25]
        $region68: #{dqn_forward.1} parent=11 // pred_fallthru
          _
        // Predicated region
        $region69: #{dqn_forward.1} parent=11 // pred_check
          %p631 = pneg %p419
        $region70: #{dqn_forward.1} parent=11 // pred_check_branch
          %633 = sbr.rel (%p631) target = $region72
        $region71: #{dqn_forward.1} parent=11 // pred_region
          %s635 = ssub.s32 32, 32
          %636 = vsyncadd [#allocation25], %s635
          %s638 = sshll.u32 [#allocation26], 4
          %s639 = int_to_ptr.vmem [resolvable:$true] %s638
          %641 = dma.hbm_to_vmem [thread:$0]  %s16, 32, %s639, [#allocation25]
        $region72: #{dqn_forward.1} parent=11 // pred_fallthru
          _
        // Predicated region
        $region73: #{dqn_forward.1} parent=11 // pred_check
          %p642 = pneg %p440
        $region74: #{dqn_forward.1} parent=11 // pred_check_branch
          %644 = sbr.rel (%p642) target = $region76
        $region75: #{dqn_forward.1} parent=11 // pred_region
          _
        $region76: #{dqn_forward.1} parent=11 // pred_fallthru
          _
      $region12: #{dqn_forward.1} parent=5 // pred_fallthru
        _
      %p645 = scmp.lt.s32.totalorder %s38, 6
      // Predicated region
      $region77: #{dqn_forward.1} parent=5 // pred_check
        %p646 = pneg %p645
      $region78: #{dqn_forward.1} parent=5 // pred_check_branch
        %648 = sbr.rel (%p646) target = $region80
      $region79: #{dqn_forward.1} parent=5 // pred_region
        // Predicated region
        $region81: #{dqn_forward.1} parent=79 // pred_check
          %p649 = pneg %p72
        $region82: #{dqn_forward.1} parent=79 // pred_check_branch
          %651 = sbr.rel (%p649) target = $region84
        $region83: #{dqn_forward.1} parent=79 // pred_region
          #allocation28 [shape = 'u32[6]{0}', space=smem, size = 0x18, scoped, tag = 'DMA stride descriptor']
          %s652 = sand.u32 %s62, 1
          %s653 = scalar_lea.sflag [#allocation5], %s652
          %s654 = sand.u32 %s62, 1
          %s655 = smul.addr %s654, 1440
          %s656 = scalar_lea.vmem [#allocation4], %s655
          %s657 = smul.u32 12, %s46
          %s659 = ssub.s32 23040, 23040
          %660 = vsyncadd %s653, %s659
          %s661 = smul.addr %s657, 5
          %s662 = smul.addr %s45, 540
          %s663 = sadd.s32 %s661, %s662
          %s664 = smul.addr %s663, 128
          %s665 = scalar_lea.hbm %s0, %s664
          %s667 = sshll.u32 1, 14
          %s668 = sxor.u32 4294967295, %s667
          %s670 = sld [smem:[#allocation0]]
          %s671 = sadd.s32 2, %s670
          %s673 = sshll.u32 7, 26
          %s674 = sxor.u32 4294967295, %s673
          %s675 = sand.u32 0, %s674
          %s676 = sshll.u32 %s671, 26
          %s677 = sor.u32 %s675, %s676
          %s678 = sshll.u32 %s656, 4
          %s679 = int_to_ptr.vmem [resolvable:$true] %s678
          %685 = sst [smem:[#allocation28]] 23040
          %s686 = scalar_lea.smem [#allocation28], 1
          %687 = sst [smem:[%s686]] 7680
          %s688 = scalar_lea.smem [#allocation28], 2
          %689 = sst [smem:[%s688]] 12
          %s690 = scalar_lea.smem [#allocation28], 3
          %691 = sst [smem:[%s690]] 640
          %s692 = scalar_lea.smem [#allocation28], 4
          %693 = sst [smem:[%s692]] 640
          %s694 = scalar_lea.smem [#allocation28], 5
          %695 = sst [smem:[%s694]] 40
          %697 = dma.general %s665, 23040, %s679, %s653, [#allocation27], [#allocation28], %s677, 0
        $region84: #{dqn_forward.1} parent=79 // pred_fallthru
          _
        // Predicated region
        $region85: #{dqn_forward.1} parent=79 // pred_check
          %p698 = pneg %p98
        $region86: #{dqn_forward.1} parent=79 // pred_check_branch
          %700 = sbr.rel (%p698) target = $region88
        $region87: #{dqn_forward.1} parent=79 // pred_region
          %s701 = sand.u32 %s38, 1
          %s702 = scalar_lea.sflag [#allocation7], %s701
          %s703 = sand.u32 %s88, 1
          %s704 = smul.addr %s703, 576
          %s705 = scalar_lea.vmem [#allocation6], %s704
          %s707 = ssub.s32 9216, 9216
          %708 = vsyncadd %s702, %s707
          %s709 = smul.addr %s46, 72
          %s710 = smul.addr %s709, 128
          %s711 = scalar_lea.hbm %s1, %s710
          %s712 = sshll.u32 %s705, 4
          %s713 = int_to_ptr.vmem [resolvable:$true] %s712
          %718 = dma.hbm_to_vmem [thread:$0]  %s711, 9216, %s713, %s702, 128, 128, 8
        $region88: #{dqn_forward.1} parent=79 // pred_fallthru
          _
      $region80: #{dqn_forward.1} parent=5 // pred_fallthru
        _
      %p719 = scmp.le.s32.totalorder 1, %s38
      %p720 = scmp.lt.s32.totalorder %s38, 7
      %p721 = pnand %p719, %p720
      %p722 = pneg %p721
      // Predicated region
      $region89: #{dqn_forward.1} parent=5 // pred_check
        _
      $region90: #{dqn_forward.1} parent=5 // pred_check_branch
        %724 = sbr.rel (%p721) target = $region92
      $region91: #{dqn_forward.1} parent=5 // pred_region
        %s725 = ssub.s32 %s38, 1
        %s726 = sand.u32 %s65, 1
        %s727 = scalar_lea.sflag [#allocation5], %s726
        %s728 = sand.u32 %s65, 1
        %s729 = smul.addr %s728, 1440
        %s730 = scalar_lea.vmem [#allocation4], %s729
        // Predicated region
        $region93: #{dqn_forward.1} parent=91 // pred_check
          %p731 = pneg %p78
        $region94: #{dqn_forward.1} parent=91 // pred_check_branch
          %733 = sbr.rel (%p731) target = $region96
        $region95: #{dqn_forward.1} parent=91 // pred_region
          %734 = dma.done %s727, 23040
        $region96: #{dqn_forward.1} parent=91 // pred_fallthru
          _
        %s735 = sand.u32 %s43, 1
        %s736 = scalar_lea.sflag [#allocation7], %s735
        %s737 = sand.u32 %s91, 1
        %s738 = smul.addr %s737, 576
        %s739 = scalar_lea.vmem [#allocation6], %s738
        // Predicated region
        $region97: #{dqn_forward.1} parent=91 // pred_check
          %p740 = pneg %p104
        $region98: #{dqn_forward.1} parent=91 // pred_check_branch
          %742 = sbr.rel (%p740) target = $region100
        $region99: #{dqn_forward.1} parent=91 // pred_region
          %743 = dma.done %s736, 9216
        $region100: #{dqn_forward.1} parent=91 // pred_fallthru
          _
        // Predicated region
        $region101: #{dqn_forward.1} parent=91 // pred_check
          %p744 = pneg %p125
        $region102: #{dqn_forward.1} parent=91 // pred_check_branch
          %746 = sbr.rel (%p744) target = $region104
        $region103: #{dqn_forward.1} parent=91 // pred_region
          %747 = dma.done [#allocation7], 384
        $region104: #{dqn_forward.1} parent=91 // pred_fallthru
          _
        // Predicated region
        $region105: #{dqn_forward.1} parent=91 // pred_check
          %p748 = pneg %p146
        $region106: #{dqn_forward.1} parent=91 // pred_check_branch
          %750 = sbr.rel (%p748) target = $region108
        $region107: #{dqn_forward.1} parent=91 // pred_region
          %751 = dma.done [#allocation10], 384
        $region108: #{dqn_forward.1} parent=91 // pred_fallthru
          _
        // Predicated region
        $region109: #{dqn_forward.1} parent=91 // pred_check
          %p752 = pneg %p167
        $region110: #{dqn_forward.1} parent=91 // pred_check_branch
          %754 = sbr.rel (%p752) target = $region112
        $region111: #{dqn_forward.1} parent=91 // pred_region
          %755 = dma.done [#allocation10], 384
        $region112: #{dqn_forward.1} parent=91 // pred_fallthru
          _
        // Predicated region
        $region113: #{dqn_forward.1} parent=91 // pred_check
          %p756 = pneg %p188
        $region114: #{dqn_forward.1} parent=91 // pred_check_branch
          %758 = sbr.rel (%p756) target = $region116
        $region115: #{dqn_forward.1} parent=91 // pred_region
          %759 = dma.done [#allocation13], 384
        $region116: #{dqn_forward.1} parent=91 // pred_fallthru
          _
        // Predicated region
        $region117: #{dqn_forward.1} parent=91 // pred_check
          %p760 = pneg %p251
        $region118: #{dqn_forward.1} parent=91 // pred_check_branch
          %762 = sbr.rel (%p760) target = $region120
        $region119: #{dqn_forward.1} parent=91 // pred_region
          %763 = dma.done [#allocation13], 8192
        $region120: #{dqn_forward.1} parent=91 // pred_fallthru
          _
        // Predicated region
        $region121: #{dqn_forward.1} parent=91 // pred_check
          %p764 = pneg %p272
        $region122: #{dqn_forward.1} parent=91 // pred_check_branch
          %766 = sbr.rel (%p764) target = $region124
        $region123: #{dqn_forward.1} parent=91 // pred_region
          %767 = dma.done [#allocation16], 16
        $region124: #{dqn_forward.1} parent=91 // pred_fallthru
          _
        // Predicated region
        $region125: #{dqn_forward.1} parent=91 // pred_check
          %p768 = pneg %p293
        $region126: #{dqn_forward.1} parent=91 // pred_check_branch
          %770 = sbr.rel (%p768) target = $region128
        $region127: #{dqn_forward.1} parent=91 // pred_region
          %771 = dma.done [#allocation16], 98304
        $region128: #{dqn_forward.1} parent=91 // pred_fallthru
          _
        // Predicated region
        $region129: #{dqn_forward.1} parent=91 // pred_check
          %p772 = pneg %p314
        $region130: #{dqn_forward.1} parent=91 // pred_check_branch
          %774 = sbr.rel (%p772) target = $region132
        $region131: #{dqn_forward.1} parent=91 // pred_region
          %775 = dma.done [#allocation19], 32
        $region132: #{dqn_forward.1} parent=91 // pred_fallthru
          _
        // Predicated region
        $region133: #{dqn_forward.1} parent=91 // pred_check
          %p776 = pneg %p335
        $region134: #{dqn_forward.1} parent=91 // pred_check_branch
          %778 = sbr.rel (%p776) target = $region136
        $region135: #{dqn_forward.1} parent=91 // pred_region
          %779 = dma.done [#allocation19], 32
        $region136: #{dqn_forward.1} parent=91 // pred_fallthru
          _
        // Predicated region
        $region137: #{dqn_forward.1} parent=91 // pred_check
          %p780 = pneg %p356
        $region138: #{dqn_forward.1} parent=91 // pred_check_branch
          %782 = sbr.rel (%p780) target = $region140
        $region139: #{dqn_forward.1} parent=91 // pred_region
          %783 = dma.done [#allocation22], 32
        $region140: #{dqn_forward.1} parent=91 // pred_fallthru
          _
        // Predicated region
        $region141: #{dqn_forward.1} parent=91 // pred_check
          %p784 = pneg %p377
        $region142: #{dqn_forward.1} parent=91 // pred_check_branch
          %786 = sbr.rel (%p784) target = $region144
        $region143: #{dqn_forward.1} parent=91 // pred_region
          %787 = dma.done [#allocation22], 32
        $region144: #{dqn_forward.1} parent=91 // pred_fallthru
          _
        // Predicated region
        $region145: #{dqn_forward.1} parent=91 // pred_check
          %p788 = pneg %p398
        $region146: #{dqn_forward.1} parent=91 // pred_check_branch
          %790 = sbr.rel (%p788) target = $region148
        $region147: #{dqn_forward.1} parent=91 // pred_region
          %791 = dma.done [#allocation25], 32
        $region148: #{dqn_forward.1} parent=91 // pred_fallthru
          _
        // Predicated region
        $region149: #{dqn_forward.1} parent=91 // pred_check
          %p792 = pneg %p419
        $region150: #{dqn_forward.1} parent=91 // pred_check_branch
          %794 = sbr.rel (%p792) target = $region152
        $region151: #{dqn_forward.1} parent=91 // pred_region
          %795 = dma.done [#allocation25], 32
        $region152: #{dqn_forward.1} parent=91 // pred_fallthru
          _
        %s796 = sand.u32 %s65, 1
        %s797 = scalar_lea.sflag [#allocation5], %s796
        %s798 = sand.u32 %s65, 1
        %s799 = smul.addr %s798, 1440
        %s800 = scalar_lea.vmem [#allocation4], %s799
        %p801 = pneg %p78
        %p802 = pneg %p75
        %s803 = sand.u32 %s43, 1
        %s804 = scalar_lea.sflag [#allocation7], %s803
        %s805 = sand.u32 %s91, 1
        %s806 = smul.addr %s805, 576
        %s807 = scalar_lea.vmem [#allocation6], %s806
        %p808 = pneg %p104
        %p809 = pneg %p101
        %p810 = pneg %p125
        %p811 = pneg %p122
        %p812 = pneg %p146
        %p813 = pneg %p143
        %p814 = pneg %p167
        %p815 = pneg %p164
        %p816 = pneg %p188
        %p817 = pneg %p185
        %p818 = pneg %p209
        %p819 = pneg %p206
        %p820 = pneg %p230
        %p821 = pneg %p227
        %p822 = pneg %p251
        %p823 = pneg %p248
        %p824 = pneg %p272
        %p825 = pneg %p269
        %p826 = pneg %p293
        %p827 = pneg %p290
        %p828 = pneg %p314
        %p829 = pneg %p311
        %p830 = pneg %p335
        %p831 = pneg %p332
        %p832 = pneg %p356
        %p833 = pneg %p353
        %p834 = pneg %p377
        %p835 = pneg %p374
        %p836 = pneg %p398
        %p837 = pneg %p395
        %p838 = pneg %p419
        %p839 = pneg %p416
        %p840 = pneg %p440
        %p841 = pneg %p437
        %p842 = pneg %p466
        %p843 = pneg %p463
        %p844 = scmp.lt.s32.totalorder %s47, 1
        %s845 = scalar_select %p844, %s47, 1
        %s846 = scalar_lea.vmem %s18, %s845
        %s847 = smul.u32 12, %s48
        %p848 = scmp.lt.s32.totalorder %s47, 1
        %s849 = scalar_select %p848, %s47, 1
        %s850 = scalar_lea.vmem %s18, %s849
        %v851 = vld [vmem:[%s730] sm:$0xff]
        %v852 = vld [vmem:[%s730 + $0x8] sm:$0xff]
        %v853 = vld [vmem:[%s730 + $0x10] sm:$0xff]
        %v854 = vld [vmem:[%s730 + $0x18] sm:$0xff]
        %v855 = vld [vmem:[%s730 + $0x20] sm:$0xff]
        %v856 = vld [vmem:[%s730 + $0x28] sm:$0xff]
        %v857 = vld [vmem:[%s730 + $0x30] sm:$0xff]
        %v858 = vld [vmem:[%s730 + $0x38] sm:$0xff]
        %v859 = vld [vmem:[%s730 + $0x40] sm:$0xff]
        %v860 = vld [vmem:[%s730 + $0x48] sm:$0xff]
        %v861 = vld [vmem:[%s730 + $0x50] sm:$0xff]
        %v862 = vld [vmem:[%s730 + $0x58] sm:$0xff]
        %v863 = vld [vmem:[%s730 + $0x60] sm:$0xff]
        %v864 = vld [vmem:[%s730 + $0x68] sm:$0xff]
        %v865 = vld [vmem:[%s730 + $0x70] sm:$0xff]
        %v866 = vld [vmem:[%s730 + $0x78] sm:$0xff]
        %v867 = vld [vmem:[%s730 + $0x80] sm:$0xff]
        %v868 = vld [vmem:[%s730 + $0x88] sm:$0xff]
        %v869 = vld [vmem:[%s730 + $0x90] sm:$0xff]
        %v870 = vld [vmem:[%s730 + $0x98] sm:$0xff]
        %v871 = vld [vmem:[%s730 + $0xa0] sm:$0xff]
        %v872 = vld [vmem:[%s730 + $0xa8] sm:$0xff]
        %v873 = vld [vmem:[%s730 + $0xb0] sm:$0xff]
        %v874 = vld [vmem:[%s730 + $0xb8] sm:$0xff]
        %v875 = vld [vmem:[%s730 + $0xc0] sm:$0xff]
        %v876 = vld [vmem:[%s730 + $0xc8] sm:$0xff]
        %v877 = vld [vmem:[%s730 + $0xd0] sm:$0xff]
        %v878 = vld [vmem:[%s730 + $0xd8] sm:$0xff]
        %v879 = vld [vmem:[%s730 + $0xe0] sm:$0xff]
        %v880 = vld [vmem:[%s730 + $0xe8] sm:$0xff]
        %v881 = vld [vmem:[%s730 + $0xf0] sm:$0xff]
        %v882 = vld [vmem:[%s730 + $0xf8] sm:$0xff]
        %v883 = vld [vmem:[%s730 + $0x100] sm:$0xff]
        %v884 = vld [vmem:[%s730 + $0x108] sm:$0xff]
        %v885 = vld [vmem:[%s730 + $0x110] sm:$0xff]
        %v886 = vld [vmem:[%s730 + $0x118] sm:$0xff]
        %v887 = vld [vmem:[%s730 + $0x120] sm:$0xff]
        %v888 = vld [vmem:[%s730 + $0x128] sm:$0xff]
        %v889 = vld [vmem:[%s730 + $0x130] sm:$0xff]
        %v890 = vld [vmem:[%s730 + $0x138] sm:$0xff]
        %v891 = vld [vmem:[%s730 + $0x140] sm:$0xff]
        %v892 = vld [vmem:[%s730 + $0x148] sm:$0xff]
        %v893 = vld [vmem:[%s730 + $0x150] sm:$0xff]
        %v894 = vld [vmem:[%s730 + $0x158] sm:$0xff]
        %v895 = vld [vmem:[%s730 + $0x160] sm:$0xff]
        %v896 = vld [vmem:[%s730 + $0x168] sm:$0xff]
        %v897 = vld [vmem:[%s730 + $0x170] sm:$0xff]
        %v898 = vld [vmem:[%s730 + $0x178] sm:$0xff]
        %v899 = vld [vmem:[%s730 + $0x180] sm:$0xff]
        %v900 = vld [vmem:[%s730 + $0x188] sm:$0xff]
        %v901 = vld [vmem:[%s730 + $0x190] sm:$0xff]
        %v902 = vld [vmem:[%s730 + $0x198] sm:$0xff]
        %v903 = vld [vmem:[%s730 + $0x1a0] sm:$0xff]
        %v904 = vld [vmem:[%s730 + $0x1a8] sm:$0xff]
        %v905 = vld [vmem:[%s730 + $0x1b0] sm:$0xff]
        %v906 = vld [vmem:[%s730 + $0x1b8] sm:$0xff]
        %v907 = vld [vmem:[%s730 + $0x1c0] sm:$0xff]
        %v908 = vld [vmem:[%s730 + $0x1c8] sm:$0xff]
        %v909 = vld [vmem:[%s730 + $0x1d0] sm:$0xff]
        %v910 = vld [vmem:[%s730 + $0x1d8] sm:$0xff]
        %v911 = vadd.f32 %v851, %v856
        %v912 = vadd.f32 %v911, %v861
        %v913 = vadd.f32 %v912, %v866
        %v914 = vadd.f32 %v913, %v871
        %v915 = vadd.f32 %v914, %v876
        %v916 = vadd.f32 %v915, %v881
        %v917 = vadd.f32 %v916, %v886
        %v918 = vadd.f32 %v917, %v891
        %v919 = vadd.f32 %v918, %v896
        %v920 = vadd.f32 %v919, %v901
        %v921 = vadd.f32 %v920, %v906
        %v922 = vrot.slane %v921, 4
        %v923 = vadd.f32 %v921, %v922
        %v924 = vrot.slane %v923, 2
        %v925 = vadd.f32 %v923, %v924
        %v926 = vrot.slane %v925, 1
        %v927 = vadd.f32 %v925, %v926
        %v928 = vadd.f32 %v852, %v857
        %v929 = vadd.f32 %v928, %v862
        %v930 = vadd.f32 %v929, %v867
        %v931 = vadd.f32 %v930, %v872
        %v932 = vadd.f32 %v931, %v877
        %v933 = vadd.f32 %v932, %v882
        %v934 = vadd.f32 %v933, %v887
        %v935 = vadd.f32 %v934, %v892
        %v936 = vadd.f32 %v935, %v897
        %v937 = vadd.f32 %v936, %v902
        %v938 = vadd.f32 %v937, %v907
        %v939 = vrot.slane %v938, 4
        %v940 = vadd.f32 %v938, %v939
        %v941 = vrot.slane %v940, 2
        %v942 = vadd.f32 %v940, %v941
        %v943 = vrot.slane %v942, 1
        %v944 = vadd.f32 %v942, %v943
        %v945 = vadd.f32 %v853, %v858
        %v946 = vadd.f32 %v945, %v863
        %v947 = vadd.f32 %v946, %v868
        %v948 = vadd.f32 %v947, %v873
        %v949 = vadd.f32 %v948, %v878
        %v950 = vadd.f32 %v949, %v883
        %v951 = vadd.f32 %v950, %v888
        %v952 = vadd.f32 %v951, %v893
        %v953 = vadd.f32 %v952, %v898
        %v954 = vadd.f32 %v953, %v903
        %v955 = vadd.f32 %v954, %v908
        %v956 = vrot.slane %v955, 4
        %v957 = vadd.f32 %v955, %v956
        %v958 = vrot.slane %v957, 2
        %v959 = vadd.f32 %v957, %v958
        %v960 = vrot.slane %v959, 1
        %v961 = vadd.f32 %v959, %v960
        %v962 = vadd.f32 %v854, %v859
        %v963 = vadd.f32 %v962, %v864
        %v964 = vadd.f32 %v963, %v869
        %v965 = vadd.f32 %v964, %v874
        %v966 = vadd.f32 %v965, %v879
        %v967 = vadd.f32 %v966, %v884
        %v968 = vadd.f32 %v967, %v889
        %v969 = vadd.f32 %v968, %v894
        %v970 = vadd.f32 %v969, %v899
        %v971 = vadd.f32 %v970, %v904
        %v972 = vadd.f32 %v971, %v909
        %v973 = vrot.slane %v972, 4
        %v974 = vadd.f32 %v972, %v973
        %v975 = vrot.slane %v974, 2
        %v976 = vadd.f32 %v974, %v975
        %v977 = vrot.slane %v976, 1
        %v978 = vadd.f32 %v976, %v977
        %vm979 = vcmask 523264
        %v980 = vsel %vm979, %v855, 0.0
        %v981 = vsel %vm979, %v860, 0.0
        %v982 = vadd.f32 %v980, %v981
        %v983 = vsel %vm979, %v865, 0.0
        %v984 = vadd.f32 %v982, %v983
        %v985 = vsel %vm979, %v870, 0.0
        %v986 = vadd.f32 %v984, %v985
        %v987 = vsel %vm979, %v875, 0.0
        %v988 = vadd.f32 %v986, %v987
        %v989 = vsel %vm979, %v880, 0.0
        %v990 = vadd.f32 %v988, %v989
        %v991 = vsel %vm979, %v885, 0.0
        %v992 = vadd.f32 %v990, %v991
        %v993 = vsel %vm979, %v890, 0.0
        %v994 = vadd.f32 %v992, %v993
        %v995 = vsel %vm979, %v895, 0.0
        %v996 = vadd.f32 %v994, %v995
        %v997 = vsel %vm979, %v900, 0.0
        %v998 = vadd.f32 %v996, %v997
        %v999 = vsel %vm979, %v905, 0.0
        %v1000 = vadd.f32 %v998, %v999
        %v1001 = vsel %vm979, %v910, 0.0
        %v1002 = vadd.f32 %v1000, %v1001
        %v1003 = vrot.slane %v1002, 4
        %v1004 = vadd.f32 %v1002, %v1003
        %v1005 = vrot.slane %v1004, 2
        %v1006 = vadd.f32 %v1004, %v1005
        %v1007 = vrot.slane %v1006, 1
        %v1008 = vadd.f32 %v1006, %v1007
        %s1009 = scalar_lea.vmem %s730, 480 [#allocation4]
        %v1010 = vld [vmem:[%s1009] sm:$0xff]
        %v1011 = vld [vmem:[%s1009 + $0x8] sm:$0xff]
        %v1012 = vld [vmem:[%s1009 + $0x10] sm:$0xff]
        %v1013 = vld [vmem:[%s1009 + $0x18] sm:$0xff]
        %v1014 = vld [vmem:[%s1009 + $0x20] sm:$0xff]
        %v1015 = vld [vmem:[%s1009 + $0x28] sm:$0xff]
        %v1016 = vld [vmem:[%s1009 + $0x30] sm:$0xff]
        %v1017 = vld [vmem:[%s1009 + $0x38] sm:$0xff]
        %v1018 = vld [vmem:[%s1009 + $0x40] sm:$0xff]
        %v1019 = vld [vmem:[%s1009 + $0x48] sm:$0xff]
        %v1020 = vld [vmem:[%s1009 + $0x50] sm:$0xff]
        %v1021 = vld [vmem:[%s1009 + $0x58] sm:$0xff]
        %v1022 = vld [vmem:[%s1009 + $0x60] sm:$0xff]
        %v1023 = vld [vmem:[%s1009 + $0x68] sm:$0xff]
        %v1024 = vld [vmem:[%s1009 + $0x70] sm:$0xff]
        %v1025 = vld [vmem:[%s1009 + $0x78] sm:$0xff]
        %v1026 = vld [vmem:[%s1009 + $0x80] sm:$0xff]
        %v1027 = vld [vmem:[%s1009 + $0x88] sm:$0xff]
        %v1028 = vld [vmem:[%s1009 + $0x90] sm:$0xff]
        %v1029 = vld [vmem:[%s1009 + $0x98] sm:$0xff]
        %v1030 = vld [vmem:[%s1009 + $0xa0] sm:$0xff]
        %v1031 = vld [vmem:[%s1009 + $0xa8] sm:$0xff]
        %v1032 = vld [vmem:[%s1009 + $0xb0] sm:$0xff]
        %v1033 = vld [vmem:[%s1009 + $0xb8] sm:$0xff]
        %v1034 = vld [vmem:[%s1009 + $0xc0] sm:$0xff]
        %v1035 = vld [vmem:[%s1009 + $0xc8] sm:$0xff]
        %v1036 = vld [vmem:[%s1009 + $0xd0] sm:$0xff]
        %v1037 = vld [vmem:[%s1009 + $0xd8] sm:$0xff]
        %v1038 = vld [vmem:[%s1009 + $0xe0] sm:$0xff]
        %v1039 = vld [vmem:[%s1009 + $0xe8] sm:$0xff]
        %v1040 = vld [vmem:[%s1009 + $0xf0] sm:$0xff]
        %v1041 = vld [vmem:[%s1009 + $0xf8] sm:$0xff]
        %v1042 = vld [vmem:[%s1009 + $0x100] sm:$0xff]
        %v1043 = vld [vmem:[%s1009 + $0x108] sm:$0xff]
        %v1044 = vld [vmem:[%s1009 + $0x110] sm:$0xff]
        %v1045 = vld [vmem:[%s1009 + $0x118] sm:$0xff]
        %v1046 = vld [vmem:[%s1009 + $0x120] sm:$0xff]
        %v1047 = vld [vmem:[%s1009 + $0x128] sm:$0xff]
        %v1048 = vld [vmem:[%s1009 + $0x130] sm:$0xff]
        %v1049 = vld [vmem:[%s1009 + $0x138] sm:$0xff]
        %v1050 = vld [vmem:[%s1009 + $0x140] sm:$0xff]
        %v1051 = vld [vmem:[%s1009 + $0x148] sm:$0xff]
        %v1052 = vld [vmem:[%s1009 + $0x150] sm:$0xff]
        %v1053 = vld [vmem:[%s1009 + $0x158] sm:$0xff]
        %v1054 = vld [vmem:[%s1009 + $0x160] sm:$0xff]
        %v1055 = vld [vmem:[%s1009 + $0x168] sm:$0xff]
        %v1056 = vld [vmem:[%s1009 + $0x170] sm:$0xff]
        %v1057 = vld [vmem:[%s1009 + $0x178] sm:$0xff]
        %v1058 = vld [vmem:[%s1009 + $0x180] sm:$0xff]
        %v1059 = vld [vmem:[%s1009 + $0x188] sm:$0xff]
        %v1060 = vld [vmem:[%s1009 + $0x190] sm:$0xff]
        %v1061 = vld [vmem:[%s1009 + $0x198] sm:$0xff]
        %v1062 = vld [vmem:[%s1009 + $0x1a0] sm:$0xff]
        %v1063 = vld [vmem:[%s1009 + $0x1a8] sm:$0xff]
        %v1064 = vld [vmem:[%s1009 + $0x1b0] sm:$0xff]
        %v1065 = vld [vmem:[%s1009 + $0x1b8] sm:$0xff]
        %v1066 = vld [vmem:[%s1009 + $0x1c0] sm:$0xff]
        %v1067 = vld [vmem:[%s1009 + $0x1c8] sm:$0xff]
        %v1068 = vld [vmem:[%s1009 + $0x1d0] sm:$0xff]
        %v1069 = vld [vmem:[%s1009 + $0x1d8] sm:$0xff]
        %v1070 = vadd.f32 %v1010, %v1015
        %v1071 = vadd.f32 %v1070, %v1020
        %v1072 = vadd.f32 %v1071, %v1025
        %v1073 = vadd.f32 %v1072, %v1030
        %v1074 = vadd.f32 %v1073, %v1035
        %v1075 = vadd.f32 %v1074, %v1040
        %v1076 = vadd.f32 %v1075, %v1045
        %v1077 = vadd.f32 %v1076, %v1050
        %v1078 = vadd.f32 %v1077, %v1055
        %v1079 = vadd.f32 %v1078, %v1060
        %v1080 = vadd.f32 %v1079, %v1065
        %v1081 = vrot.slane %v1080, 4
        %v1082 = vadd.f32 %v1080, %v1081
        %v1083 = vrot.slane %v1082, 2
        %v1084 = vadd.f32 %v1082, %v1083
        %v1085 = vrot.slane %v1084, 1
        %v1086 = vadd.f32 %v1084, %v1085
        %v1087 = vadd.f32 %v1011, %v1016
        %v1088 = vadd.f32 %v1087, %v1021
        %v1089 = vadd.f32 %v1088, %v1026
        %v1090 = vadd.f32 %v1089, %v1031
        %v1091 = vadd.f32 %v1090, %v1036
        %v1092 = vadd.f32 %v1091, %v1041
        %v1093 = vadd.f32 %v1092, %v1046
        %v1094 = vadd.f32 %v1093, %v1051
        %v1095 = vadd.f32 %v1094, %v1056
        %v1096 = vadd.f32 %v1095, %v1061
        %v1097 = vadd.f32 %v1096, %v1066
        %v1098 = vrot.slane %v1097, 4
        %v1099 = vadd.f32 %v1097, %v1098
        %v1100 = vrot.slane %v1099, 2
        %v1101 = vadd.f32 %v1099, %v1100
        %v1102 = vrot.slane %v1101, 1
        %v1103 = vadd.f32 %v1101, %v1102
        %v1104 = vadd.f32 %v1012, %v1017
        %v1105 = vadd.f32 %v1104, %v1022
        %v1106 = vadd.f32 %v1105, %v1027
        %v1107 = vadd.f32 %v1106, %v1032
        %v1108 = vadd.f32 %v1107, %v1037
        %v1109 = vadd.f32 %v1108, %v1042
        %v1110 = vadd.f32 %v1109, %v1047
        %v1111 = vadd.f32 %v1110, %v1052
        %v1112 = vadd.f32 %v1111, %v1057
        %v1113 = vadd.f32 %v1112, %v1062
        %v1114 = vadd.f32 %v1113, %v1067
        %v1115 = vrot.slane %v1114, 4
        %v1116 = vadd.f32 %v1114, %v1115
        %v1117 = vrot.slane %v1116, 2
        %v1118 = vadd.f32 %v1116, %v1117
        %v1119 = vrot.slane %v1118, 1
        %v1120 = vadd.f32 %v1118, %v1119
        %v1121 = vadd.f32 %v1013, %v1018
        %v1122 = vadd.f32 %v1121, %v1023
        %v1123 = vadd.f32 %v1122, %v1028
        %v1124 = vadd.f32 %v1123, %v1033
        %v1125 = vadd.f32 %v1124, %v1038
        %v1126 = vadd.f32 %v1125, %v1043
        %v1127 = vadd.f32 %v1126, %v1048
        %v1128 = vadd.f32 %v1127, %v1053
        %v1129 = vadd.f32 %v1128, %v1058
        %v1130 = vadd.f32 %v1129, %v1063
        %v1131 = vadd.f32 %v1130, %v1068
        %v1132 = vrot.slane %v1131, 4
        %v1133 = vadd.f32 %v1131, %v1132
        %v1134 = vrot.slane %v1133, 2
        %v1135 = vadd.f32 %v1133, %v1134
        %v1136 = vrot.slane %v1135, 1
        %v1137 = vadd.f32 %v1135, %v1136
        %v1138 = vsel %vm979, %v1014, 0.0
        %v1139 = vsel %vm979, %v1019, 0.0
        %v1140 = vadd.f32 %v1138, %v1139
        %v1141 = vsel %vm979, %v1024, 0.0
        %v1142 = vadd.f32 %v1140, %v1141
        %v1143 = vsel %vm979, %v1029, 0.0
        %v1144 = vadd.f32 %v1142, %v1143
        %v1145 = vsel %vm979, %v1034, 0.0
        %v1146 = vadd.f32 %v1144, %v1145
        %v1147 = vsel %vm979, %v1039, 0.0
        %v1148 = vadd.f32 %v1146, %v1147
        %v1149 = vsel %vm979, %v1044, 0.0
        %v1150 = vadd.f32 %v1148, %v1149
        %v1151 = vsel %vm979, %v1049, 0.0
        %v1152 = vadd.f32 %v1150, %v1151
        %v1153 = vsel %vm979, %v1054, 0.0
        %v1154 = vadd.f32 %v1152, %v1153
        %v1155 = vsel %vm979, %v1059, 0.0
        %v1156 = vadd.f32 %v1154, %v1155
        %v1157 = vsel %vm979, %v1064, 0.0
        %v1158 = vadd.f32 %v1156, %v1157
        %v1159 = vsel %vm979, %v1069, 0.0
        %v1160 = vadd.f32 %v1158, %v1159
        %v1161 = vrot.slane %v1160, 4
        %v1162 = vadd.f32 %v1160, %v1161
        %v1163 = vrot.slane %v1162, 2
        %v1164 = vadd.f32 %v1162, %v1163
        %v1165 = vrot.slane %v1164, 1
        %v1166 = vadd.f32 %v1164, %v1165
        %s1167 = scalar_lea.vmem %s730, 960 [#allocation4]
        %v1168 = vld [vmem:[%s1167] sm:$0xff]
        %v1169 = vld [vmem:[%s1167 + $0x8] sm:$0xff]
        %v1170 = vld [vmem:[%s1167 + $0x10] sm:$0xff]
        %v1171 = vld [vmem:[%s1167 + $0x18] sm:$0xff]
        %v1172 = vld [vmem:[%s1167 + $0x20] sm:$0xff]
        %v1173 = vld [vmem:[%s1167 + $0x28] sm:$0xff]
        %v1174 = vld [vmem:[%s1167 + $0x30] sm:$0xff]
        %v1175 = vld [vmem:[%s1167 + $0x38] sm:$0xff]
        %v1176 = vld [vmem:[%s1167 + $0x40] sm:$0xff]
        %v1177 = vld [vmem:[%s1167 + $0x48] sm:$0xff]
        %v1178 = vld [vmem:[%s1167 + $0x50] sm:$0xff]
        %v1179 = vld [vmem:[%s1167 + $0x58] sm:$0xff]
        %v1180 = vld [vmem:[%s1167 + $0x60] sm:$0xff]
        %v1181 = vld [vmem:[%s1167 + $0x68] sm:$0xff]
        %v1182 = vld [vmem:[%s1167 + $0x70] sm:$0xff]
        %v1183 = vld [vmem:[%s1167 + $0x78] sm:$0xff]
        %v1184 = vld [vmem:[%s1167 + $0x80] sm:$0xff]
        %v1185 = vld [vmem:[%s1167 + $0x88] sm:$0xff]
        %v1186 = vld [vmem:[%s1167 + $0x90] sm:$0xff]
        %v1187 = vld [vmem:[%s1167 + $0x98] sm:$0xff]
        %v1188 = vld [vmem:[%s1167 + $0xa0] sm:$0xff]
        %v1189 = vld [vmem:[%s1167 + $0xa8] sm:$0xff]
        %v1190 = vld [vmem:[%s1167 + $0xb0] sm:$0xff]
        %v1191 = vld [vmem:[%s1167 + $0xb8] sm:$0xff]
        %v1192 = vld [vmem:[%s1167 + $0xc0] sm:$0xff]
        %v1193 = vld [vmem:[%s1167 + $0xc8] sm:$0xff]
        %v1194 = vld [vmem:[%s1167 + $0xd0] sm:$0xff]
        %v1195 = vld [vmem:[%s1167 + $0xd8] sm:$0xff]
        %v1196 = vld [vmem:[%s1167 + $0xe0] sm:$0xff]
        %v1197 = vld [vmem:[%s1167 + $0xe8] sm:$0xff]
        %v1198 = vld [vmem:[%s1167 + $0xf0] sm:$0xff]
        %v1199 = vld [vmem:[%s1167 + $0xf8] sm:$0xff]
        %v1200 = vld [vmem:[%s1167 + $0x100] sm:$0xff]
        %v1201 = vld [vmem:[%s1167 + $0x108] sm:$0xff]
        %v1202 = vld [vmem:[%s1167 + $0x110] sm:$0xff]
        %v1203 = vld [vmem:[%s1167 + $0x118] sm:$0xff]
        %v1204 = vld [vmem:[%s1167 + $0x120] sm:$0xff]
        %v1205 = vld [vmem:[%s1167 + $0x128] sm:$0xff]
        %v1206 = vld [vmem:[%s1167 + $0x130] sm:$0xff]
        %v1207 = vld [vmem:[%s1167 + $0x138] sm:$0xff]
        %v1208 = vld [vmem:[%s1167 + $0x140] sm:$0xff]
        %v1209 = vld [vmem:[%s1167 + $0x148] sm:$0xff]
        %v1210 = vld [vmem:[%s1167 + $0x150] sm:$0xff]
        %v1211 = vld [vmem:[%s1167 + $0x158] sm:$0xff]
        %v1212 = vld [vmem:[%s1167 + $0x160] sm:$0xff]
        %v1213 = vld [vmem:[%s1167 + $0x168] sm:$0xff]
        %v1214 = vld [vmem:[%s1167 + $0x170] sm:$0xff]
        %v1215 = vld [vmem:[%s1167 + $0x178] sm:$0xff]
        %v1216 = vld [vmem:[%s1167 + $0x180] sm:$0xff]
        %v1217 = vld [vmem:[%s1167 + $0x188] sm:$0xff]
        %v1218 = vld [vmem:[%s1167 + $0x190] sm:$0xff]
        %v1219 = vld [vmem:[%s1167 + $0x198] sm:$0xff]
        %v1220 = vld [vmem:[%s1167 + $0x1a0] sm:$0xff]
        %v1221 = vld [vmem:[%s1167 + $0x1a8] sm:$0xff]
        %v1222 = vld [vmem:[%s1167 + $0x1b0] sm:$0xff]
        %v1223 = vld [vmem:[%s1167 + $0x1b8] sm:$0xff]
        %v1224 = vld [vmem:[%s1167 + $0x1c0] sm:$0xff]
        %v1225 = vld [vmem:[%s1167 + $0x1c8] sm:$0xff]
        %v1226 = vld [vmem:[%s1167 + $0x1d0] sm:$0xff]
        %v1227 = vld [vmem:[%s1167 + $0x1d8] sm:$0xff]
        %v1228 = vadd.f32 %v1168, %v1173
        %v1229 = vadd.f32 %v1228, %v1178
        %v1230 = vadd.f32 %v1229, %v1183
        %v1231 = vadd.f32 %v1230, %v1188
        %v1232 = vadd.f32 %v1231, %v1193
        %v1233 = vadd.f32 %v1232, %v1198
        %v1234 = vadd.f32 %v1233, %v1203
        %v1235 = vadd.f32 %v1234, %v1208
        %v1236 = vadd.f32 %v1235, %v1213
        %v1237 = vadd.f32 %v1236, %v1218
        %v1238 = vadd.f32 %v1237, %v1223
        %v1239 = vrot.slane %v1238, 4
        %v1240 = vadd.f32 %v1238, %v1239
        %v1241 = vrot.slane %v1240, 2
        %v1242 = vadd.f32 %v1240, %v1241
        %v1243 = vrot.slane %v1242, 1
        %v1244 = vadd.f32 %v1242, %v1243
        %v1245 = vadd.f32 %v1169, %v1174
        %v1246 = vadd.f32 %v1245, %v1179
        %v1247 = vadd.f32 %v1246, %v1184
        %v1248 = vadd.f32 %v1247, %v1189
        %v1249 = vadd.f32 %v1248, %v1194
        %v1250 = vadd.f32 %v1249, %v1199
        %v1251 = vadd.f32 %v1250, %v1204
        %v1252 = vadd.f32 %v1251, %v1209
        %v1253 = vadd.f32 %v1252, %v1214
        %v1254 = vadd.f32 %v1253, %v1219
        %v1255 = vadd.f32 %v1254, %v1224
        %v1256 = vrot.slane %v1255, 4
        %v1257 = vadd.f32 %v1255, %v1256
        %v1258 = vrot.slane %v1257, 2
        %v1259 = vadd.f32 %v1257, %v1258
        %v1260 = vrot.slane %v1259, 1
        %v1261 = vadd.f32 %v1259, %v1260
        %v1262 = vadd.f32 %v1170, %v1175
        %v1263 = vadd.f32 %v1262, %v1180
        %v1264 = vadd.f32 %v1263, %v1185
        %v1265 = vadd.f32 %v1264, %v1190
        %v1266 = vadd.f32 %v1265, %v1195
        %v1267 = vadd.f32 %v1266, %v1200
        %v1268 = vadd.f32 %v1267, %v1205
        %v1269 = vadd.f32 %v1268, %v1210
        %v1270 = vadd.f32 %v1269, %v1215
        %v1271 = vadd.f32 %v1270, %v1220
        %v1272 = vadd.f32 %v1271, %v1225
        %v1273 = vrot.slane %v1272, 4
        %v1274 = vadd.f32 %v1272, %v1273
        %v1275 = vrot.slane %v1274, 2
        %v1276 = vadd.f32 %v1274, %v1275
        %v1277 = vrot.slane %v1276, 1
        %v1278 = vadd.f32 %v1276, %v1277
        %v1279 = vadd.f32 %v1171, %v1176
        %v1280 = vadd.f32 %v1279, %v1181
        %v1281 = vadd.f32 %v1280, %v1186
        %v1282 = vadd.f32 %v1281, %v1191
        %v1283 = vadd.f32 %v1282, %v1196
        %v1284 = vadd.f32 %v1283, %v1201
        %v1285 = vadd.f32 %v1284, %v1206
        %v1286 = vadd.f32 %v1285, %v1211
        %v1287 = vadd.f32 %v1286, %v1216
        %v1288 = vadd.f32 %v1287, %v1221
        %v1289 = vadd.f32 %v1288, %v1226
        %v1290 = vrot.slane %v1289, 4
        %v1291 = vadd.f32 %v1289, %v1290
        %v1292 = vrot.slane %v1291, 2
        %v1293 = vadd.f32 %v1291, %v1292
        %v1294 = vrot.slane %v1293, 1
        %v1295 = vadd.f32 %v1293, %v1294
        %v1296 = vsel %vm979, %v1172, 0.0
        %v1297 = vsel %vm979, %v1177, 0.0
        %v1298 = vadd.f32 %v1296, %v1297
        %v1299 = vsel %vm979, %v1182, 0.0
        %v1300 = vadd.f32 %v1298, %v1299
        %v1301 = vsel %vm979, %v1187, 0.0
        %v1302 = vadd.f32 %v1300, %v1301
        %v1303 = vsel %vm979, %v1192, 0.0
        %v1304 = vadd.f32 %v1302, %v1303
        %v1305 = vsel %vm979, %v1197, 0.0
        %v1306 = vadd.f32 %v1304, %v1305
        %v1307 = vsel %vm979, %v1202, 0.0
        %v1308 = vadd.f32 %v1306, %v1307
        %v1309 = vsel %vm979, %v1207, 0.0
        %v1310 = vadd.f32 %v1308, %v1309
        %v1311 = vsel %vm979, %v1212, 0.0
        %v1312 = vadd.f32 %v1310, %v1311
        %v1313 = vsel %vm979, %v1217, 0.0
        %v1314 = vadd.f32 %v1312, %v1313
        %v1315 = vsel %vm979, %v1222, 0.0
        %v1316 = vadd.f32 %v1314, %v1315
        %v1317 = vsel %vm979, %v1227, 0.0
        %v1318 = vadd.f32 %v1316, %v1317
        %v1319 = vrot.slane %v1318, 4
        %v1320 = vadd.f32 %v1318, %v1319
        %v1321 = vrot.slane %v1320, 2
        %v1322 = vadd.f32 %v1320, %v1321
        %v1323 = vrot.slane %v1322, 1
        %v1324 = vadd.f32 %v1322, %v1323
        %vm1325 = vcmask 1040384
        %v1326 = vsel %vm1325, %v927, %v1086
        %v1327 = vsel %vm1325, %v944, %v1103
        %v1328 = vsel %vm1325, %v961, %v1120
        %v1329 = vsel %vm1325, %v978, %v1137
        %v1330 = vsel %vm1325, %v1008, %v1166
        %vm1331 = vcmask 1041408
        %v1332 = vsel %vm1331, %v1326, %v1244
        %v1333 = vsel %vm1331, %v1327, %v1261
        %v1334 = vsel %vm1331, %v1328, %v1278
        %v1335 = vsel %vm1331, %v1329, %v1295
        %v1336 = vsel %vm1331, %v1330, %v1324
        %v1337 = vld [vmem:[%s739] sm:$0xff]
        %v1338 = vld [vmem:[%s739 + $0x8] sm:$0xff]
        %v1339 = vld [vmem:[%s739 + $0x10] sm:$0xff]
        %v1340 = vld [vmem:[%s739 + $0x18] sm:$0xff]
        %v1341 = vld [vmem:[%s739 + $0x20] sm:$0xff]
        %v1342 = vld [vmem:[%s739 + $0x28] sm:$0xff]
        %v1343 = vld [vmem:[%s739 + $0x30] sm:$0xff]
        %v1344 = vld [vmem:[%s739 + $0x38] sm:$0xff]
        %v1345 = vld [vmem:[%s739 + $0x40] sm:$0xff]
        %v1346 = vld [vmem:[%s739 + $0x48] sm:$0xff]
        %v1347 = vld [vmem:[%s739 + $0x50] sm:$0xff]
        %v1348 = vld [vmem:[%s739 + $0x58] sm:$0xff]
        %v1349 = vld [vmem:[%s739 + $0x60] sm:$0xff]
        %v1350 = vld [vmem:[%s739 + $0x68] sm:$0xff]
        %v1351 = vld [vmem:[%s739 + $0x70] sm:$0xff]
        %v1352 = vld [vmem:[%s739 + $0x78] sm:$0xff]
        %v1353 = vld [vmem:[%s739 + $0x80] sm:$0xff]
        %v1354 = vld [vmem:[%s739 + $0x88] sm:$0xff]
        %v1355 = vld [vmem:[%s739 + $0x90] sm:$0xff]
        %v1356 = vld [vmem:[%s739 + $0x98] sm:$0xff]
        %v1357 = vld [vmem:[%s739 + $0xa0] sm:$0xff]
        %v1358 = vld [vmem:[%s739 + $0xa8] sm:$0xff]
        %v1359 = vld [vmem:[%s739 + $0xb0] sm:$0xff]
        %v1360 = vld [vmem:[%s739 + $0xb8] sm:$0xff]
        %v1361 = vld [vmem:[%s739 + $0xc0] sm:$0xff]
        %v1362 = vld [vmem:[%s739 + $0xc8] sm:$0xff]
        %v1363 = vld [vmem:[%s739 + $0xd0] sm:$0xff]
        %v1364 = vld [vmem:[%s739 + $0xd8] sm:$0xff]
        %v1365 = vld [vmem:[%s739 + $0xe0] sm:$0xff]
        %v1366 = vld [vmem:[%s739 + $0xe8] sm:$0xff]
        %v1367 = vld [vmem:[%s739 + $0xf0] sm:$0xff]
        %v1368 = vld [vmem:[%s739 + $0xf8] sm:$0xff]
        %v1369 = vld [vmem:[%s739 + $0x100] sm:$0xff]
        %v1370 = vld [vmem:[%s739 + $0x108] sm:$0xff]
        %v1371 = vld [vmem:[%s739 + $0x110] sm:$0xff]
        %v1372 = vld [vmem:[%s739 + $0x118] sm:$0xff]
        %v1373 = vld [vmem:[%s739 + $0x120] sm:$0xff]
        %v1374 = vld [vmem:[%s739 + $0x128] sm:$0xff]
        %v1375 = vld [vmem:[%s739 + $0x130] sm:$0xff]
        %v1376 = vld [vmem:[%s739 + $0x138] sm:$0xff]
        %v1377 = vld [vmem:[%s739 + $0x140] sm:$0xff]
        %v1378 = vld [vmem:[%s739 + $0x148] sm:$0xff]
        %v1379 = vld [vmem:[%s739 + $0x150] sm:$0xff]
        %v1380 = vld [vmem:[%s739 + $0x158] sm:$0xff]
        %v1381 = vld [vmem:[%s739 + $0x160] sm:$0xff]
        %v1382 = vld [vmem:[%s739 + $0x168] sm:$0xff]
        %v1383 = vld [vmem:[%s739 + $0x170] sm:$0xff]
        %v1384 = vld [vmem:[%s739 + $0x178] sm:$0xff]
        %v1385 = vld [vmem:[%s739 + $0x180] sm:$0xff]
        %v1386 = vld [vmem:[%s739 + $0x188] sm:$0xff]
        %v1387 = vld [vmem:[%s739 + $0x190] sm:$0xff]
        %v1388 = vld [vmem:[%s739 + $0x198] sm:$0xff]
        %v1389 = vld [vmem:[%s739 + $0x1a0] sm:$0xff]
        %v1390 = vld [vmem:[%s739 + $0x1a8] sm:$0xff]
        %v1391 = vld [vmem:[%s739 + $0x1b0] sm:$0xff]
        %v1392 = vld [vmem:[%s739 + $0x1b8] sm:$0xff]
        %v1393 = vld [vmem:[%s739 + $0x1c0] sm:$0xff]
        %v1394 = vld [vmem:[%s739 + $0x1c8] sm:$0xff]
        %v1395 = vld [vmem:[%s739 + $0x1d0] sm:$0xff]
        %v1396 = vld [vmem:[%s739 + $0x1d8] sm:$0xff]
        %v1397 = vld [vmem:[%s739 + $0x1e0] sm:$0xff]
        %v1398 = vld [vmem:[%s739 + $0x1e8] sm:$0xff]
        %v1399 = vld [vmem:[%s739 + $0x1f0] sm:$0xff]
        %v1400 = vld [vmem:[%s739 + $0x1f8] sm:$0xff]
        %v1401 = vld [vmem:[%s739 + $0x200] sm:$0xff]
        %v1402 = vld [vmem:[%s739 + $0x208] sm:$0xff]
        %v1403 = vld [vmem:[%s739 + $0x210] sm:$0xff]
        %v1404 = vld [vmem:[%s739 + $0x218] sm:$0xff]
        %v1405 = vld [vmem:[%s739 + $0x220] sm:$0xff]
        %v1406 = vld [vmem:[%s739 + $0x228] sm:$0xff]
        %v1407 = vld [vmem:[%s739 + $0x230] sm:$0xff]
        %v1408 = vld [vmem:[%s739 + $0x238] sm:$0xff]
        %v1410 = vsel %vm979, %v1336, 0
        %1412 = vmatprep.subr.mxu0 0.0
        %1413 = vmatpush1.msra.mxu0 %v1337
        %1414 = vmatprep.subr.mxu0 0.0
        %1415 = vmatpush1.msra.mxu0 %v1338
        %1416 = vmatprep.subr.mxu0 0.0
        %1417 = vmatpush1.msra.mxu0 %v1339
        %1418 = vmatprep.subr.mxu0 0.0
        %1419 = vmatpush1.msra.mxu0 %v1340
        %1420 = vmatprep.subr.mxu0 0.0
        %1421 = vmatpush1.msra.mxu0 %v1341
        %1422 = vmatprep.subr.mxu0 0.0
        %1423 = vmatpush1.msra.mxu0 %v1342
        %1424 = vmatprep.subr.mxu0 0.0
        %1425 = vmatpush1.msra.mxu0 %v1343
        %1426 = vmatprep.subr.mxu0 0.0
        %1427 = vmatpush1.msra.mxu0 %v1344
        %1428 = vmatprep.subr.mxu0 0.0
        %1429 = vmatpush1.msra.mxu0 %v1345
        %1430 = vmatprep.subr.mxu0 0.0
        %1431 = vmatpush1.msra.mxu0 %v1346
        %1432 = vmatprep.subr.mxu0 0.0
        %1433 = vmatpush1.msra.mxu0 %v1347
        %1434 = vmatprep.subr.mxu0 0.0
        %1435 = vmatpush1.msra.mxu0 %v1348
        %1436 = vmatprep.subr.mxu0 0.0
        %1437 = vmatpush1.msra.mxu0 %v1349
        %1438 = vmatprep.subr.mxu0 0.0
        %1439 = vmatpush1.msra.mxu0 %v1350
        %1440 = vmatprep.subr.mxu0 0.0
        %1441 = vmatpush1.msra.mxu0 %v1351
        %1442 = vmatprep.subr.mxu0 0.0
        %1443 = vmatpush1.msra.mxu0 %v1352
        %1444 = vmatprep.subr.mxu0 0.0
        %1445 = vmatpush1.msra.mxu0 %v1353
        %1446 = vmatprep.subr.mxu0 0.0
        %1447 = vmatpush1.msra.mxu0 %v1354
        %1448 = vmatprep.subr.mxu0 0.0
        %1449 = vmatpush1.msra.mxu0 %v1355
        %1450 = vmatprep.subr.mxu0 0.0
        %1451 = vmatpush1.msra.mxu0 %v1356
        %1452 = vmatprep.subr.mxu0 0.0
        %1453 = vmatpush1.msra.mxu0 %v1357
        %1454 = vmatprep.subr.mxu0 0.0
        %1455 = vmatpush1.msra.mxu0 %v1358
        %1456 = vmatprep.subr.mxu0 0.0
        %1457 = vmatpush1.msra.mxu0 %v1359
        %1458 = vmatprep.subr.mxu0 0.0
        %1459 = vmatpush1.msra.mxu0 %v1360
        %1460 = vmatprep.subr.mxu0 0.0
        %1461 = vmatpush1.msra.mxu0 %v1361
        %1462 = vmatprep.subr.mxu0 0.0
        %1463 = vmatpush1.msra.mxu0 %v1362
        %1464 = vmatprep.subr.mxu0 0.0
        %1465 = vmatpush1.msra.mxu0 %v1363
        %1466 = vmatprep.subr.mxu0 0.0
        %1467 = vmatpush1.msra.mxu0 %v1364
        %1468 = vmatprep.subr.mxu0 0.0
        %1469 = vmatpush1.msra.mxu0 %v1365
        %1470 = vmatprep.subr.mxu0 0.0
        %1471 = vmatpush1.msra.mxu0 %v1366
        %1472 = vmatprep.subr.mxu0 0.0
        %1473 = vmatpush1.msra.mxu0 %v1367
        %1474 = vmatprep.subr.mxu0 0.0
        %1475 = vmatpush1.msra.mxu0 %v1368
        %1476 = vmatprep.mubr.f32.mxu0 %v1333
        %1477 = vmatmul.mubr.f32.gmra.mrb[0].mxu0 %v1332
        %v1478 = vpop.f32.mrb[0].mxu0
        %v1479 = vadd.f32 0.0, %v1478
        %v1480 = vpop.f32.mrb[0].mxu0
        %1481 = vdwg.mxu0
        %1482 = vmatprep.subr.mxu0 0.0
        %1483 = vmatpush1.msra.mxu0 %v1369
        %1484 = vmatprep.subr.mxu0 0.0
        %1485 = vmatpush1.msra.mxu0 %v1370
        %1486 = vmatprep.subr.mxu0 0.0
        %1487 = vmatpush1.msra.mxu0 %v1371
        %1488 = vmatprep.subr.mxu0 0.0
        %1489 = vmatpush1.msra.mxu0 %v1372
        %1490 = vmatprep.subr.mxu0 0.0
        %1491 = vmatpush1.msra.mxu0 %v1373
        %1492 = vmatprep.subr.mxu0 0.0
        %1493 = vmatpush1.msra.mxu0 %v1374
        %1494 = vmatprep.subr.mxu0 0.0
        %1495 = vmatpush1.msra.mxu0 %v1375
        %1496 = vmatprep.subr.mxu0 0.0
        %1497 = vmatpush1.msra.mxu0 %v1376
        %1498 = vmatprep.subr.mxu0 0.0
        %1499 = vmatpush1.msra.mxu0 %v1377
        %1500 = vmatprep.subr.mxu0 0.0
        %1501 = vmatpush1.msra.mxu0 %v1378
        %1502 = vmatprep.subr.mxu0 0.0
        %1503 = vmatpush1.msra.mxu0 %v1379
        %1504 = vmatprep.subr.mxu0 0.0
        %1505 = vmatpush1.msra.mxu0 %v1380
        %1506 = vmatprep.subr.mxu0 0.0
        %1507 = vmatpush1.msra.mxu0 %v1381
        %1508 = vmatprep.subr.mxu0 0.0
        %1509 = vmatpush1.msra.mxu0 %v1382
        %1510 = vmatprep.subr.mxu0 0.0
        %1511 = vmatpush1.msra.mxu0 %v1383
        %1512 = vmatprep.subr.mxu0 0.0
        %1513 = vmatpush1.msra.mxu0 %v1384
        %1514 = vmatprep.subr.mxu0 0.0
        %1515 = vmatpush1.msra.mxu0 %v1385
        %1516 = vmatprep.subr.mxu0 0.0
        %1517 = vmatpush1.msra.mxu0 %v1386
        %1518 = vmatprep.subr.mxu0 0.0
        %1519 = vmatpush1.msra.mxu0 %v1387
        %1520 = vmatprep.subr.mxu0 0.0
        %1521 = vmatpush1.msra.mxu0 %v1388
        %1522 = vmatprep.subr.mxu0 0.0
        %1523 = vmatpush1.msra.mxu0 %v1389
        %1524 = vmatprep.subr.mxu0 0.0
        %1525 = vmatpush1.msra.mxu0 %v1390
        %1526 = vmatprep.subr.mxu0 0.0
        %1527 = vmatpush1.msra.mxu0 %v1391
        %1528 = vmatprep.subr.mxu0 0.0
        %1529 = vmatpush1.msra.mxu0 %v1392
        %1530 = vmatprep.subr.mxu0 0.0
        %1531 = vmatpush1.msra.mxu0 %v1393
        %1532 = vmatprep.subr.mxu0 0.0
        %1533 = vmatpush1.msra.mxu0 %v1394
        %1534 = vmatprep.subr.mxu0 0.0
        %1535 = vmatpush1.msra.mxu0 %v1395
        %1536 = vmatprep.subr.mxu0 0.0
        %1537 = vmatpush1.msra.mxu0 %v1396
        %1538 = vmatprep.subr.mxu0 0.0
        %1539 = vmatpush1.msra.mxu0 %v1397
        %1540 = vmatprep.subr.mxu0 0.0
        %1541 = vmatpush1.msra.mxu0 %v1398
        %1542 = vmatprep.subr.mxu0 0.0
        %1543 = vmatpush1.msra.mxu0 %v1399
        %1544 = vmatprep.subr.mxu0 0.0
        %1545 = vmatpush1.msra.mxu0 %v1400
        %1546 = vmatprep.mubr.f32.mxu0 %v1335
        %1547 = vmatmul.mubr.f32.gmra.mrb[0].mxu0 %v1334
        %v1548 = vpop.f32.mrb[0].mxu0
        %v1549 = vadd.f32 %v1479, %v1548
        %v1550 = vpop.f32.mrb[0].mxu0
        %1551 = vdwg.mxu0
        %1552 = vmatprep.subr.mxu0 0.0
        %1553 = vmatpush1.msra.mxu0 %v1401
        %1554 = vmatprep.subr.mxu0 0.0
        %1555 = vmatpush1.msra.mxu0 %v1402
        %1556 = vmatprep.subr.mxu0 0.0
        %1557 = vmatpush1.msra.mxu0 %v1403
        %1558 = vmatprep.subr.mxu0 0.0
        %1559 = vmatpush1.msra.mxu0 %v1404
        %1560 = vmatprep.subr.mxu0 0.0
        %1561 = vmatpush1.msra.mxu0 %v1405
        %1562 = vmatprep.subr.mxu0 0.0
        %1563 = vmatpush1.msra.mxu0 %v1406
        %1564 = vmatprep.subr.mxu0 0.0
        %1565 = vmatpush1.msra.mxu0 %v1407
        %1566 = vmatprep.subr.mxu0 0.0
        %1567 = vmatpush1.msra.mxu0 %v1408
        %1568 = vmatprep.subr.mxu0 0.0
        %1569 = vmatpush1.msra.mxu0 0.0
        %1570 = vmatprep.subr.mxu0 0.0
        %1571 = vmatpush1.msra.mxu0 0.0
        %1572 = vmatprep.subr.mxu0 0.0
        %1573 = vmatpush1.msra.mxu0 0.0
        %1574 = vmatprep.subr.mxu0 0.0
        %1575 = vmatpush1.msra.mxu0 0.0
        %1576 = vmatprep.subr.mxu0 0.0
        %1577 = vmatpush1.msra.mxu0 0.0
        %1578 = vmatprep.subr.mxu0 0.0
        %1579 = vmatpush1.msra.mxu0 0.0
        %1580 = vmatprep.subr.mxu0 0.0
        %1581 = vmatpush1.msra.mxu0 0.0
        %1582 = vmatprep.subr.mxu0 0.0
        %1583 = vmatpush1.msra.mxu0 0.0
        %1584 = vmatprep.subr.mxu0 0.0
        %1585 = vmatpush1.msra.mxu0 0.0
        %1586 = vmatprep.subr.mxu0 0.0
        %1587 = vmatpush1.msra.mxu0 0.0
        %1588 = vmatprep.subr.mxu0 0.0
        %1589 = vmatpush1.msra.mxu0 0.0
        %1590 = vmatprep.subr.mxu0 0.0
        %1591 = vmatpush1.msra.mxu0 0.0
        %1592 = vmatprep.subr.mxu0 0.0
        %1593 = vmatpush1.msra.mxu0 0.0
        %1594 = vmatprep.subr.mxu0 0.0
        %1595 = vmatpush1.msra.mxu0 0.0
        %1596 = vmatprep.subr.mxu0 0.0
        %1597 = vmatpush1.msra.mxu0 0.0
        %1598 = vmatprep.subr.mxu0 0.0
        %1599 = vmatpush1.msra.mxu0 0.0
        %1600 = vmatprep.subr.mxu0 0.0
        %1601 = vmatpush1.msra.mxu0 0.0
        %1602 = vmatprep.subr.mxu0 0.0
        %1603 = vmatpush1.msra.mxu0 0.0
        %1604 = vmatprep.subr.mxu0 0.0
        %1605 = vmatpush1.msra.mxu0 0.0
        %1606 = vmatprep.subr.mxu0 0.0
        %1607 = vmatpush1.msra.mxu0 0.0
        %1608 = vmatprep.subr.mxu0 0.0
        %1609 = vmatpush1.msra.mxu0 0.0
        %1610 = vmatprep.subr.mxu0 0.0
        %1611 = vmatpush1.msra.mxu0 0.0
        %1612 = vmatprep.subr.mxu0 0.0
        %1613 = vmatpush1.msra.mxu0 0.0
        %1614 = vmatprep.subr.mxu0 0.0
        %1615 = vmatpush1.msra.mxu0 0.0
        %1616 = vmatprep.mubr.f32.mxu0 0.0
        %1617 = vmatmul.mubr.f32.gmra.mrb[0].mxu0 %v1410
        %v1618 = vpop.f32.mrb[0].mxu0
        %v1619 = vadd.f32 %v1549, %v1618
        %v1620 = vpop.f32.mrb[0].mxu0
        %1621 = vdwg.mxu0
        %v1622 = vmul.f32 %v1619, 0.000108506945
        %p1623 = scmp.eq.s32.totalorder %s48, 0
        // Predicated region
        $region153: #{dqn_forward.1} parent=91 // pred_check
          %p1624 = pneg %p1623
        $region154: #{dqn_forward.1} parent=91 // pred_check_branch
          %1626 = sbr.rel (%p1624) target = $region156
        $region155: #{dqn_forward.1} parent=91 // pred_region
          %vm1627 = vcmask 141312
          %1628 = vst.msk [vmem:[#allocation2] sm:$0x7] %vm1627, %v1622
        $region156: #{dqn_forward.1} parent=91 // pred_fallthru
          _
        %p1629 = scmp.gt.s32.totalorder %s48, 0
        // Predicated region
        $region157: #{dqn_forward.1} parent=91 // pred_check
          %p1630 = pneg %p1629
        $region158: #{dqn_forward.1} parent=91 // pred_check_branch
          %1632 = sbr.rel (%p1630) target = $region160
        $region159: #{dqn_forward.1} parent=91 // pred_region
          %v1633 = vld [vmem:[#allocation2] sm:$0x7]
          %v1634 = vadd.f32 %v1633, %v1622
          %vm1635 = vcmask 141312
          %1636 = vst.msk [vmem:[#allocation2] sm:$0x7] %vm1635, %v1634
        $region160: #{dqn_forward.1} parent=91 // pred_fallthru
          _
        %p1637 = scmp.eq.s32.totalorder %s48, 2
        // Predicated region
        $region161: #{dqn_forward.1} parent=91 // pred_check
          %p1638 = pneg %p1637
        $region162: #{dqn_forward.1} parent=91 // pred_check_branch
          %1640 = sbr.rel (%p1638) target = $region164
        $region163: #{dqn_forward.1} parent=91 // pred_region
          %v1641 = vld [vmem:[#allocation2] sm:$0x7]
          %v1642 = vld [vmem:[#allocation8] sm:$0xff]
          %v1643 = vld [vmem:[#allocation8 + $0x8] sm:$0xff]
          %v1644 = vld [vmem:[#allocation8 + $0x10] sm:$0xff]
          %vm1645 = vcmask 146432
          %v1647 = vsel %vm1645, %v1642, 0
          %v1650 = vsel %vm1645, %v1643, 0
          %v1653 = vsel %vm1645, %v1644, 0
          %v1656 = vsel %vm1645, %v1641, 0
          %1658 = vmatprep.subr.mxu0 0.0
          %1659 = vmatpush1.xpose.msra.mxu0 %v1656
          %1660 = vmatprep.subr.mxu0 0.0
          %1661 = vmatpush1.xpose.msra.mxu0 0.0
          %1662 = vmatprep.subr.mxu0 0.0
          %1663 = vmatpush1.xpose.msra.mxu0 0.0
          %1664 = vmatprep.subr.mxu0 0.0
          %1665 = vmatpush1.xpose.msra.mxu0 0.0
          %1666 = vmatprep.subr.mxu0 0.0
          %1667 = vmatpush1.xpose.msra.mxu0 0.0
          %1668 = vmatprep.subr.mxu0 0.0
          %1669 = vmatpush1.xpose.msra.mxu0 0.0
          %1670 = vmatprep.subr.mxu0 0.0
          %1671 = vmatpush1.xpose.msra.mxu0 0.0
          %1672 = vmatprep.subr.mxu0 0.0
          %1673 = vmatpush1.xpose.msra.mxu0 0.0
          %1674 = vmatprep.subr.mxu0 0.0
          %1675 = vmatpush1.xpose.msra.mxu0 0.0
          %1676 = vmatprep.subr.mxu0 0.0
          %1677 = vmatpush1.xpose.msra.mxu0 0.0
          %1678 = vmatprep.subr.mxu0 0.0
          %1679 = vmatpush1.xpose.msra.mxu0 0.0
          %1680 = vmatprep.subr.mxu0 0.0
          %1681 = vmatpush1.xpose.msra.mxu0 0.0
          %1682 = vmatprep.subr.mxu0 0.0
          %1683 = vmatpush1.xpose.msra.mxu0 0.0
          %1684 = vmatprep.subr.mxu0 0.0
          %1685 = vmatpush1.xpose.msra.mxu0 0.0
          %1686 = vmatprep.subr.mxu0 0.0
          %1687 = vmatpush1.xpose.msra.mxu0 0.0
          %1688 = vmatprep.subr.mxu0 0.0
          %1689 = vmatpush1.xpose.msra.mxu0 0.0
          %1690 = vmatprep.subr.mxu0 0.0
          %1691 = vmatpush1.xpose.msra.mxu0 0.0
          %1692 = vmatprep.subr.mxu0 0.0
          %1693 = vmatpush1.xpose.msra.mxu0 0.0
          %1694 = vmatprep.subr.mxu0 0.0
          %1695 = vmatpush1.xpose.msra.mxu0 0.0
          %1696 = vmatprep.subr.mxu0 0.0
          %1697 = vmatpush1.xpose.msra.mxu0 0.0
          %1698 = vmatprep.subr.mxu0 0.0
          %1699 = vmatpush1.xpose.msra.mxu0 0.0
          %1700 = vmatprep.subr.mxu0 0.0
          %1701 = vmatpush1.xpose.msra.mxu0 0.0
          %1702 = vmatprep.subr.mxu0 0.0
          %1703 = vmatpush1.xpose.msra.mxu0 0.0
          %1704 = vmatprep.subr.mxu0 0.0
          %1705 = vmatpush1.xpose.msra.mxu0 0.0
          %1706 = vmatprep.subr.mxu0 0.0
          %1707 = vmatpush1.xpose.msra.mxu0 0.0
          %1708 = vmatprep.subr.mxu0 0.0
          %1709 = vmatpush1.xpose.msra.mxu0 0.0
          %1710 = vmatprep.subr.mxu0 0.0
          %1711 = vmatpush1.xpose.msra.mxu0 0.0
          %1712 = vmatprep.subr.mxu0 0.0
          %1713 = vmatpush1.xpose.msra.mxu0 0.0
          %1714 = vmatprep.subr.mxu0 0.0
          %1715 = vmatpush1.xpose.msra.mxu0 0.0
          %1716 = vmatprep.subr.mxu0 0.0
          %1717 = vmatpush1.xpose.msra.mxu0 0.0
          %1718 = vmatprep.subr.mxu0 0.0
          %1719 = vmatpush1.xpose.msra.mxu0 0.0
          %1720 = vmatprep.subr.mxu0 0.0
          %1721 = vmatpush1.xpose.msra.mxu0 0.0
          %1722 = vmatprep.mubr.f32.mxu0 0.0
          %1723 = vmatmul.mubr.f32.gmra.mrb[0].mxu0 %v1647
          %v1724 = vpop.f32.mrb[0].mxu0
          %v1725 = vadd.f32 0.0, %v1724
          %v1726 = vpop.f32.mrb[0].mxu0
          %1727 = vmatprep.mubr.f32.mxu0 0.0
          %1728 = vmatmul.mubr.f32.gmra.mrb[0].mxu0 %v1650
          %v1729 = vpop.f32.mrb[0].mxu0
          %v1730 = vadd.f32 0.0, %v1729
          %v1731 = vpop.f32.mrb[0].mxu0
          %1732 = vmatprep.mubr.f32.mxu0 0.0
          %1733 = vmatmul.mubr.f32.gmra.mrb[0].mxu0 %v1653
          %v1734 = vpop.f32.mrb[0].mxu0
          %v1735 = vadd.f32 0.0, %v1734
          %v1736 = vpop.f32.mrb[0].mxu0
          %1737 = vdwg.mxu0
          %v1738 = vld [vmem:[#allocation9] sm:$0xff]
          %v1739 = vld [vmem:[#allocation9 + $0x8] sm:$0xff]
          %v1740 = vld [vmem:[#allocation9 + $0x10] sm:$0xff]
          %v1742 = vsel %vm1645, %v1738, 0
          %v1745 = vsel %vm1645, %v1739, 0
          %v1748 = vsel %vm1645, %v1740, 0
          %1750 = vmatprep.subr.mxu0 0.0
          %1751 = vmatpush1.xpose.msra.mxu0 %v1656
          %1752 = vmatprep.subr.mxu0 0.0
          %1753 = vmatpush1.xpose.msra.mxu0 0.0
          %1754 = vmatprep.subr.mxu0 0.0
          %1755 = vmatpush1.xpose.msra.mxu0 0.0
          %1756 = vmatprep.subr.mxu0 0.0
          %1757 = vmatpush1.xpose.msra.mxu0 0.0
          %1758 = vmatprep.subr.mxu0 0.0
          %1759 = vmatpush1.xpose.msra.mxu0 0.0
          %1760 = vmatprep.subr.mxu0 0.0
          %1761 = vmatpush1.xpose.msra.mxu0 0.0
          %1762 = vmatprep.subr.mxu0 0.0
          %1763 = vmatpush1.xpose.msra.mxu0 0.0
          %1764 = vmatprep.subr.mxu0 0.0
          %1765 = vmatpush1.xpose.msra.mxu0 0.0
          %1766 = vmatprep.subr.mxu0 0.0
          %1767 = vmatpush1.xpose.msra.mxu0 0.0
          %1768 = vmatprep.subr.mxu0 0.0
          %1769 = vmatpush1.xpose.msra.mxu0 0.0
          %1770 = vmatprep.subr.mxu0 0.0
          %1771 = vmatpush1.xpose.msra.mxu0 0.0
          %1772 = vmatprep.subr.mxu0 0.0
          %1773 = vmatpush1.xpose.msra.mxu0 0.0
          %1774 = vmatprep.subr.mxu0 0.0
          %1775 = vmatpush1.xpose.msra.mxu0 0.0
          %1776 = vmatprep.subr.mxu0 0.0
          %1777 = vmatpush1.xpose.msra.mxu0 0.0
          %1778 = vmatprep.subr.mxu0 0.0
          %1779 = vmatpush1.xpose.msra.mxu0 0.0
          %1780 = vmatprep.subr.mxu0 0.0
          %1781 = vmatpush1.xpose.msra.mxu0 0.0
          %1782 = vmatprep.subr.mxu0 0.0
          %1783 = vmatpush1.xpose.msra.mxu0 0.0
          %1784 = vmatprep.subr.mxu0 0.0
          %1785 = vmatpush1.xpose.msra.mxu0 0.0
          %1786 = vmatprep.subr.mxu0 0.0
          %1787 = vmatpush1.xpose.msra.mxu0 0.0
          %1788 = vmatprep.subr.mxu0 0.0
          %1789 = vmatpush1.xpose.msra.mxu0 0.0
          %1790 = vmatprep.subr.mxu0 0.0
          %1791 = vmatpush1.xpose.msra.mxu0 0.0
          %1792 = vmatprep.subr.mxu0 0.0
          %1793 = vmatpush1.xpose.msra.mxu0 0.0
          %1794 = vmatprep.subr.mxu0 0.0
          %1795 = vmatpush1.xpose.msra.mxu0 0.0
          %1796 = vmatprep.subr.mxu0 0.0
          %1797 = vmatpush1.xpose.msra.mxu0 0.0
          %1798 = vmatprep.subr.mxu0 0.0
          %1799 = vmatpush1.xpose.msra.mxu0 0.0
          %1800 = vmatprep.subr.mxu0 0.0
          %1801 = vmatpush1.xpose.msra.mxu0 0.0
          %1802 = vmatprep.subr.mxu0 0.0
          %1803 = vmatpush1.xpose.msra.mxu0 0.0
          %1804 = vmatprep.subr.mxu0 0.0
          %1805 = vmatpush1.xpose.msra.mxu0 0.0
          %1806 = vmatprep.subr.mxu0 0.0
          %1807 = vmatpush1.xpose.msra.mxu0 0.0
          %1808 = vmatprep.subr.mxu0 0.0
          %1809 = vmatpush1.xpose.msra.mxu0 0.0
          %1810 = vmatprep.subr.mxu0 0.0
          %1811 = vmatpush1.xpose.msra.mxu0 0.0
          %1812 = vmatprep.subr.mxu0 0.0
          %1813 = vmatpush1.xpose.msra.mxu0 0.0
          %1814 = vmatprep.mubr.f32.mxu0 0.0
          %1815 = vmatmul.mubr.f32.gmra.mrb[0].mxu0 %v1742
          %v1816 = vpop.f32.mrb[0].mxu0
          %v1817 = vadd.f32 0.0, %v1816
          %v1818 = vpop.f32.mrb[0].mxu0
          %1819 = vmatprep.mubr.f32.mxu0 0.0
          %1820 = vmatmul.mubr.f32.gmra.mrb[0].mxu0 %v1745
          %v1821 = vpop.f32.mrb[0].mxu0
          %v1822 = vadd.f32 0.0, %v1821
          %v1823 = vpop.f32.mrb[0].mxu0
          %1824 = vmatprep.mubr.f32.mxu0 0.0
          %1825 = vmatmul.mubr.f32.gmra.mrb[0].mxu0 %v1748
          %v1826 = vpop.f32.mrb[0].mxu0
          %v1827 = vadd.f32 0.0, %v1826
          %v1828 = vpop.f32.mrb[0].mxu0
          %1829 = vdwg.mxu0
          %v1830 = vld [vmem:[#allocation11] sm:$0xff]
          %v1831 = vld [vmem:[#allocation11 + $0x8] sm:$0xff]
          %v1832 = vld [vmem:[#allocation11 + $0x10] sm:$0xff]
          %v1834 = vsel %vm1645, %v1830, 0
          %v1837 = vsel %vm1645, %v1831, 0
          %v1840 = vsel %vm1645, %v1832, 0
          %1842 = vmatprep.subr.mxu0 0.0
          %1843 = vmatpush1.xpose.msra.mxu0 %v1656
          %1844 = vmatprep.subr.mxu0 0.0
          %1845 = vmatpush1.xpose.msra.mxu0 0.0
          %1846 = vmatprep.subr.mxu0 0.0
          %1847 = vmatpush1.xpose.msra.mxu0 0.0
          %1848 = vmatprep.subr.mxu0 0.0
          %1849 = vmatpush1.xpose.msra.mxu0 0.0
          %1850 = vmatprep.subr.mxu0 0.0
          %1851 = vmatpush1.xpose.msra.mxu0 0.0
          %1852 = vmatprep.subr.mxu0 0.0
          %1853 = vmatpush1.xpose.msra.mxu0 0.0
          %1854 = vmatprep.subr.mxu0 0.0
          %1855 = vmatpush1.xpose.msra.mxu0 0.0
          %1856 = vmatprep.subr.mxu0 0.0
          %1857 = vmatpush1.xpose.msra.mxu0 0.0
          %1858 = vmatprep.subr.mxu0 0.0
          %1859 = vmatpush1.xpose.msra.mxu0 0.0
          %1860 = vmatprep.subr.mxu0 0.0
          %1861 = vmatpush1.xpose.msra.mxu0 0.0
          %1862 = vmatprep.subr.mxu0 0.0
          %1863 = vmatpush1.xpose.msra.mxu0 0.0
          %1864 = vmatprep.subr.mxu0 0.0
          %1865 = vmatpush1.xpose.msra.mxu0 0.0
          %1866 = vmatprep.subr.mxu0 0.0
          %1867 = vmatpush1.xpose.msra.mxu0 0.0
          %1868 = vmatprep.subr.mxu0 0.0
          %1869 = vmatpush1.xpose.msra.mxu0 0.0
          %1870 = vmatprep.subr.mxu0 0.0
          %1871 = vmatpush1.xpose.msra.mxu0 0.0
          %1872 = vmatprep.subr.mxu0 0.0
          %1873 = vmatpush1.xpose.msra.mxu0 0.0
          %1874 = vmatprep.subr.mxu0 0.0
          %1875 = vmatpush1.xpose.msra.mxu0 0.0
          %1876 = vmatprep.subr.mxu0 0.0
          %1877 = vmatpush1.xpose.msra.mxu0 0.0
          %1878 = vmatprep.subr.mxu0 0.0
          %1879 = vmatpush1.xpose.msra.mxu0 0.0
          %1880 = vmatprep.subr.mxu0 0.0
          %1881 = vmatpush1.xpose.msra.mxu0 0.0
          %1882 = vmatprep.subr.mxu0 0.0
          %1883 = vmatpush1.xpose.msra.mxu0 0.0
          %1884 = vmatprep.subr.mxu0 0.0
          %1885 = vmatpush1.xpose.msra.mxu0 0.0
          %1886 = vmatprep.subr.mxu0 0.0
          %1887 = vmatpush1.xpose.msra.mxu0 0.0
          %1888 = vmatprep.subr.mxu0 0.0
          %1889 = vmatpush1.xpose.msra.mxu0 0.0
          %1890 = vmatprep.subr.mxu0 0.0
          %1891 = vmatpush1.xpose.msra.mxu0 0.0
          %1892 = vmatprep.subr.mxu0 0.0
          %1893 = vmatpush1.xpose.msra.mxu0 0.0
          %1894 = vmatprep.subr.mxu0 0.0
          %1895 = vmatpush1.xpose.msra.mxu0 0.0
          %1896 = vmatprep.subr.mxu0 0.0
          %1897 = vmatpush1.xpose.msra.mxu0 0.0
          %1898 = vmatprep.subr.mxu0 0.0
          %1899 = vmatpush1.xpose.msra.mxu0 0.0
          %1900 = vmatprep.subr.mxu0 0.0
          %1901 = vmatpush1.xpose.msra.mxu0 0.0
          %1902 = vmatprep.subr.mxu0 0.0
          %1903 = vmatpush1.xpose.msra.mxu0 0.0
          %1904 = vmatprep.subr.mxu0 0.0
          %1905 = vmatpush1.xpose.msra.mxu0 0.0
          %1906 = vmatprep.mubr.f32.mxu0 0.0
          %1907 = vmatmul.mubr.f32.gmra.mrb[0].mxu0 %v1834
          %v1908 = vpop.f32.mrb[0].mxu0
          %v1909 = vadd.f32 0.0, %v1908
          %v1910 = vpop.f32.mrb[0].mxu0
          %1911 = vmatprep.mubr.f32.mxu0 0.0
          %1912 = vmatmul.mubr.f32.gmra.mrb[0].mxu0 %v1837
          %v1913 = vpop.f32.mrb[0].mxu0
          %v1914 = vadd.f32 0.0, %v1913
          %v1915 = vpop.f32.mrb[0].mxu0
          %1916 = vmatprep.mubr.f32.mxu0 0.0
          %1917 = vmatmul.mubr.f32.gmra.mrb[0].mxu0 %v1840
          %v1918 = vpop.f32.mrb[0].mxu0
          %v1919 = vadd.f32 0.0, %v1918
          %v1920 = vpop.f32.mrb[0].mxu0
          %1921 = vdwg.mxu0
          %v1922 = vld [vmem:[#allocation12] sm:$0xff]
          %v1923 = vld [vmem:[#allocation12 + $0x8] sm:$0xff]
          %v1924 = vld [vmem:[#allocation12 + $0x10] sm:$0xff]
          %v1926 = vsel %vm1645, %v1922, 0
          %v1929 = vsel %vm1645, %v1923, 0
          %v1932 = vsel %vm1645, %v1924, 0
          %1934 = vmatprep.subr.mxu0 0.0
          %1935 = vmatpush1.xpose.msra.mxu0 %v1656
          %1936 = vmatprep.subr.mxu0 0.0
          %1937 = vmatpush1.xpose.msra.mxu0 0.0
          %1938 = vmatprep.subr.mxu0 0.0
          %1939 = vmatpush1.xpose.msra.mxu0 0.0
          %1940 = vmatprep.subr.mxu0 0.0
          %1941 = vmatpush1.xpose.msra.mxu0 0.0
          %1942 = vmatprep.subr.mxu0 0.0
          %1943 = vmatpush1.xpose.msra.mxu0 0.0
          %1944 = vmatprep.subr.mxu0 0.0
          %1945 = vmatpush1.xpose.msra.mxu0 0.0
          %1946 = vmatprep.subr.mxu0 0.0
          %1947 = vmatpush1.xpose.msra.mxu0 0.0
          %1948 = vmatprep.subr.mxu0 0.0
          %1949 = vmatpush1.xpose.msra.mxu0 0.0
          %1950 = vmatprep.subr.mxu0 0.0
          %1951 = vmatpush1.xpose.msra.mxu0 0.0
          %1952 = vmatprep.subr.mxu0 0.0
          %1953 = vmatpush1.xpose.msra.mxu0 0.0
          %1954 = vmatprep.subr.mxu0 0.0
          %1955 = vmatpush1.xpose.msra.mxu0 0.0
          %1956 = vmatprep.subr.mxu0 0.0
          %1957 = vmatpush1.xpose.msra.mxu0 0.0
          %1958 = vmatprep.subr.mxu0 0.0
          %1959 = vmatpush1.xpose.msra.mxu0 0.0
          %1960 = vmatprep.subr.mxu0 0.0
          %1961 = vmatpush1.xpose.msra.mxu0 0.0
          %1962 = vmatprep.subr.mxu0 0.0
          %1963 = vmatpush1.xpose.msra.mxu0 0.0
          %1964 = vmatprep.subr.mxu0 0.0
          %1965 = vmatpush1.xpose.msra.mxu0 0.0
          %1966 = vmatprep.subr.mxu0 0.0
          %1967 = vmatpush1.xpose.msra.mxu0 0.0
          %1968 = vmatprep.subr.mxu0 0.0
          %1969 = vmatpush1.xpose.msra.mxu0 0.0
          %1970 = vmatprep.subr.mxu0 0.0
          %1971 = vmatpush1.xpose.msra.mxu0 0.0
          %1972 = vmatprep.subr.mxu0 0.0
          %1973 = vmatpush1.xpose.msra.mxu0 0.0
          %1974 = vmatprep.subr.mxu0 0.0
          %1975 = vmatpush1.xpose.msra.mxu0 0.0
          %1976 = vmatprep.subr.mxu0 0.0
          %1977 = vmatpush1.xpose.msra.mxu0 0.0
          %1978 = vmatprep.subr.mxu0 0.0
          %1979 = vmatpush1.xpose.msra.mxu0 0.0
          %1980 = vmatprep.subr.mxu0 0.0
          %1981 = vmatpush1.xpose.msra.mxu0 0.0
          %1982 = vmatprep.subr.mxu0 0.0
          %1983 = vmatpush1.xpose.msra.mxu0 0.0
          %1984 = vmatprep.subr.mxu0 0.0
          %1985 = vmatpush1.xpose.msra.mxu0 0.0
          %1986 = vmatprep.subr.mxu0 0.0
          %1987 = vmatpush1.xpose.msra.mxu0 0.0
          %1988 = vmatprep.subr.mxu0 0.0
          %1989 = vmatpush1.xpose.msra.mxu0 0.0
          %1990 = vmatprep.subr.mxu0 0.0
          %1991 = vmatpush1.xpose.msra.mxu0 0.0
          %1992 = vmatprep.subr.mxu0 0.0
          %1993 = vmatpush1.xpose.msra.mxu0 0.0
          %1994 = vmatprep.subr.mxu0 0.0
          %1995 = vmatpush1.xpose.msra.mxu0 0.0
          %1996 = vmatprep.subr.mxu0 0.0
          %1997 = vmatpush1.xpose.msra.mxu0 0.0
          %1998 = vmatprep.mubr.f32.mxu0 0.0
          %1999 = vmatmul.mubr.f32.gmra.mrb[0].mxu0 %v1926
          %v2000 = vpop.f32.mrb[0].mxu0
          %v2001 = vadd.f32 0.0, %v2000
          %v2002 = vpop.f32.mrb[0].mxu0
          %2003 = vmatprep.mubr.f32.mxu0 0.0
          %2004 = vmatmul.mubr.f32.gmra.mrb[0].mxu0 %v1929
          %v2005 = vpop.f32.mrb[0].mxu0
          %v2006 = vadd.f32 0.0, %v2005
          %v2007 = vpop.f32.mrb[0].mxu0
          %2008 = vmatprep.mubr.f32.mxu0 0.0
          %2009 = vmatmul.mubr.f32.gmra.mrb[0].mxu0 %v1932
          %v2010 = vpop.f32.mrb[0].mxu0
          %v2011 = vadd.f32 0.0, %v2010
          %v2012 = vpop.f32.mrb[0].mxu0
          %2013 = vdwg.mxu0
          %2017 = vrot.lane.b32.xlu0 %v1817, 3
          %v2018 = vpop.permute.xlu0 %2017
          %2019 = vrot.lane.b32.xlu0 %v1822, 3
          %v2020 = vpop.permute.xlu0 %2019
          %2021 = vrot.lane.b32.xlu0 %v1827, 3
          %v2022 = vpop.permute.xlu0 %2021
          %2029 = vrot.lane.b32.xlu0 %v1909, 6
          %v2030 = vpop.permute.xlu0 %2029
          %2031 = vrot.lane.b32.xlu0 %v1914, 6
          %v2032 = vpop.permute.xlu0 %2031
          %2033 = vrot.lane.b32.xlu0 %v1919, 6
          %v2034 = vpop.permute.xlu0 %2033
          %2041 = vrot.lane.b32.xlu0 %v2001, 9
          %v2042 = vpop.permute.xlu0 %2041
          %2043 = vrot.lane.b32.xlu0 %v2006, 9
          %v2044 = vpop.permute.xlu0 %2043
          %2045 = vrot.lane.b32.xlu0 %v2011, 9
          %v2046 = vpop.permute.xlu0 %2045
          %vm2050 = vcmask 23552
          %v2051 = vsel %vm2050, %v1725, %v2018
          %v2052 = vsel %vm2050, %v1730, %v2020
          %v2053 = vsel %vm2050, %v1735, %v2022
          %vm2054 = vcmask 48128
          %v2055 = vsel %vm2054, %v2051, %v2030
          %v2056 = vsel %vm2054, %v2052, %v2032
          %v2057 = vsel %vm2054, %v2053, %v2034
          %vm2058 = vcmask 72704
          %v2059 = vsel %vm2058, %v2055, %v2042
          %v2060 = vsel %vm2058, %v2056, %v2044
          %v2061 = vsel %vm2058, %v2057, %v2046
          %v2062 = vld [vmem:[%s6] sm:$0xff]
          %v2063 = vld [vmem:[%s6 + $0x8] sm:$0xff]
          %v2064 = vld [vmem:[%s6 + $0x10] sm:$0xff]
          %v2065 = vld [vmem:[%s6 + $0x18] sm:$0xff]
          %v2066 = vld [vmem:[%s6 + $0x20] sm:$0xf]
          %v2067 = vld [vmem:[%s6 + $0x28] sm:$0xf]
          %v2068 = vld [vmem:[%s6 + $0x30] sm:$0xf]
          %v2069 = vld [vmem:[%s6 + $0x38] sm:$0xf]
          %v2070 = vld [vmem:[%s7] sm:$0xff]
          %v2071 = vld [vmem:[%s7 + $0x8] sm:$0xff]
          %v2072 = vld [vmem:[%s7 + $0x10] sm:$0xff]
          %v2073 = vld [vmem:[%s7 + $0x18] sm:$0xff]
          %v2074 = vld [vmem:[%s7 + $0x20] sm:$0xff]
          %v2075 = vld [vmem:[%s7 + $0x28] sm:$0xff]
          %v2076 = vld [vmem:[%s7 + $0x30] sm:$0xff]
          %v2077 = vld [vmem:[%s7 + $0x38] sm:$0xff]
          %v2078 = vld [vmem:[%s7 + $0x40] sm:$0xff]
          %v2079 = vld [vmem:[%s7 + $0x48] sm:$0xff]
          %v2080 = vld [vmem:[%s7 + $0x50] sm:$0xff]
          %v2081 = vld [vmem:[%s7 + $0x58] sm:$0xff]
          %vm2082 = vcmask 97280
          %v2084 = vsel %vm2082, %v2059, 0
          %v2087 = vsel %vm2082, %v2060, 0
          %v2090 = vsel %vm2082, %v2061, 0
          %vm2092 = vcmask 1043456
          %v2094 = vsel %vm2092, %v2066, 0
          %v2097 = vsel %vm2092, %v2067, 0
          %v2100 = vsel %vm2092, %v2068, 0
          %v2103 = vsel %vm2092, %v2069, 0
          %2105 = vmatprep.subr.mxu0 %v2063
          %2106 = vmatpush1.msra.mxu0 %v2062
          %2107 = vmatprep.subr.mxu0 %v2097
          %2108 = vmatpush1.msra.mxu0 %v2094
          %2109 = vmatprep.subr.mxu0 0.0
          %2110 = vmatpush1.msra.mxu0 0.0
          %2111 = vmatprep.subr.mxu0 0.0
          %2112 = vmatpush1.msra.mxu0 0.0
          %2113 = vmatprep.subr.mxu0 0.0
          %2114 = vmatpush1.msra.mxu0 0.0
          %2115 = vmatprep.subr.mxu0 0.0
          %2116 = vmatpush1.msra.mxu0 0.0
          %2117 = vmatprep.subr.mxu0 0.0
          %2118 = vmatpush1.msra.mxu0 0.0
          %2119 = vmatprep.subr.mxu0 0.0
          %2120 = vmatpush1.msra.mxu0 0.0
          %2121 = vmatprep.subr.mxu0 0.0
          %2122 = vmatpush1.msra.mxu0 0.0
          %2123 = vmatprep.subr.mxu0 0.0
          %2124 = vmatpush1.msra.mxu0 0.0
          %2125 = vmatprep.subr.mxu0 0.0
          %2126 = vmatpush1.msra.mxu0 0.0
          %2127 = vmatprep.subr.mxu0 0.0
          %2128 = vmatpush1.msra.mxu0 0.0
          %2129 = vmatprep.subr.mxu0 0.0
          %2130 = vmatpush1.msra.mxu0 0.0
          %2131 = vmatprep.subr.mxu0 0.0
          %2132 = vmatpush1.msra.mxu0 0.0
          %2133 = vmatprep.subr.mxu0 0.0
          %2134 = vmatpush1.msra.mxu0 0.0
          %2135 = vmatprep.subr.mxu0 0.0
          %2136 = vmatpush1.msra.mxu0 0.0
          %2137 = vmatprep.subr.mxu0 0.0
          %2138 = vmatpush1.msra.mxu0 0.0
          %2139 = vmatprep.subr.mxu0 0.0
          %2140 = vmatpush1.msra.mxu0 0.0
          %2141 = vmatprep.subr.mxu0 0.0
          %2142 = vmatpush1.msra.mxu0 0.0
          %2143 = vmatprep.subr.mxu0 0.0
          %2144 = vmatpush1.msra.mxu0 0.0
          %2145 = vmatprep.subr.mxu0 0.0
          %2146 = vmatpush1.msra.mxu0 0.0
          %2147 = vmatprep.subr.mxu0 0.0
          %2148 = vmatpush1.msra.mxu0 0.0
          %2149 = vmatprep.subr.mxu0 0.0
          %2150 = vmatpush1.msra.mxu0 0.0
          %2151 = vmatprep.subr.mxu0 0.0
          %2152 = vmatpush1.msra.mxu0 0.0
          %2153 = vmatprep.subr.mxu0 0.0
          %2154 = vmatpush1.msra.mxu0 0.0
          %2155 = vmatprep.subr.mxu0 0.0
          %2156 = vmatpush1.msra.mxu0 0.0
          %2157 = vmatprep.subr.mxu0 0.0
          %2158 = vmatpush1.msra.mxu0 0.0
          %2159 = vmatprep.subr.mxu0 0.0
          %2160 = vmatpush1.msra.mxu0 0.0
          %2161 = vmatprep.subr.mxu0 0.0
          %2162 = vmatpush1.msra.mxu0 0.0
          %2163 = vmatprep.subr.mxu0 0.0
          %2164 = vmatpush1.msra.mxu0 0.0
          %2165 = vmatprep.subr.mxu0 0.0
          %2166 = vmatpush1.msra.mxu0 0.0
          %2167 = vmatprep.subr.mxu0 0.0
          %2168 = vmatpush1.msra.mxu0 0.0
          %2169 = vmatprep.mubr.f32.mxu0 0.0
          %2170 = vmatmul.mubr.f32.gmra.mrb[0].mxu0 %v2084
          %v2171 = vpop.f32.mrb[0].mxu0
          %v2172 = vadd.f32 %v2070, %v2171
          %v2173 = vpop.f32.mrb[0].mxu0
          %v2174 = vadd.f32 %v2071, %v2173
          %2175 = vmatprep.mubr.f32.mxu0 0.0
          %2176 = vmatmul.mubr.f32.gmra.mrb[0].mxu0 %v2087
          %v2177 = vpop.f32.mrb[0].mxu0
          %v2178 = vadd.f32 %v2074, %v2177
          %v2179 = vpop.f32.mrb[0].mxu0
          %v2180 = vadd.f32 %v2075, %v2179
          %2181 = vmatprep.mubr.f32.mxu0 0.0
          %2182 = vmatmul.mubr.f32.gmra.mrb[0].mxu0 %v2090
          %v2183 = vpop.f32.mrb[0].mxu0
          %v2184 = vadd.f32 %v2078, %v2183
          %v2185 = vpop.f32.mrb[0].mxu0
          %v2186 = vadd.f32 %v2079, %v2185
          %2187 = vdwg.mxu0
          %2188 = vmatprep.subr.mxu0 %v2065
          %2189 = vmatpush1.msra.mxu0 %v2064
          %2190 = vmatprep.subr.mxu0 %v2103
          %2191 = vmatpush1.msra.mxu0 %v2100
          %2192 = vmatprep.subr.mxu0 0.0
          %2193 = vmatpush1.msra.mxu0 0.0
          %2194 = vmatprep.subr.mxu0 0.0
          %2195 = vmatpush1.msra.mxu0 0.0
          %2196 = vmatprep.subr.mxu0 0.0
          %2197 = vmatpush1.msra.mxu0 0.0
          %2198 = vmatprep.subr.mxu0 0.0
          %2199 = vmatpush1.msra.mxu0 0.0
          %2200 = vmatprep.subr.mxu0 0.0
          %2201 = vmatpush1.msra.mxu0 0.0
          %2202 = vmatprep.subr.mxu0 0.0
          %2203 = vmatpush1.msra.mxu0 0.0
          %2204 = vmatprep.subr.mxu0 0.0
          %2205 = vmatpush1.msra.mxu0 0.0
          %2206 = vmatprep.subr.mxu0 0.0
          %2207 = vmatpush1.msra.mxu0 0.0
          %2208 = vmatprep.subr.mxu0 0.0
          %2209 = vmatpush1.msra.mxu0 0.0
          %2210 = vmatprep.subr.mxu0 0.0
          %2211 = vmatpush1.msra.mxu0 0.0
          %2212 = vmatprep.subr.mxu0 0.0
          %2213 = vmatpush1.msra.mxu0 0.0
          %2214 = vmatprep.subr.mxu0 0.0
          %2215 = vmatpush1.msra.mxu0 0.0
          %2216 = vmatprep.subr.mxu0 0.0
          %2217 = vmatpush1.msra.mxu0 0.0
          %2218 = vmatprep.subr.mxu0 0.0
          %2219 = vmatpush1.msra.mxu0 0.0
          %2220 = vmatprep.subr.mxu0 0.0
          %2221 = vmatpush1.msra.mxu0 0.0
          %2222 = vmatprep.subr.mxu0 0.0
          %2223 = vmatpush1.msra.mxu0 0.0
          %2224 = vmatprep.subr.mxu0 0.0
          %2225 = vmatpush1.msra.mxu0 0.0
          %2226 = vmatprep.subr.mxu0 0.0
          %2227 = vmatpush1.msra.mxu0 0.0
          %2228 = vmatprep.subr.mxu0 0.0
          %2229 = vmatpush1.msra.mxu0 0.0
          %2230 = vmatprep.subr.mxu0 0.0
          %2231 = vmatpush1.msra.mxu0 0.0
          %2232 = vmatprep.subr.mxu0 0.0
          %2233 = vmatpush1.msra.mxu0 0.0
          %2234 = vmatprep.subr.mxu0 0.0
          %2235 = vmatpush1.msra.mxu0 0.0
          %2236 = vmatprep.subr.mxu0 0.0
          %2237 = vmatpush1.msra.mxu0 0.0
          %2238 = vmatprep.subr.mxu0 0.0
          %2239 = vmatpush1.msra.mxu0 0.0
          %2240 = vmatprep.subr.mxu0 0.0
          %2241 = vmatpush1.msra.mxu0 0.0
          %2242 = vmatprep.subr.mxu0 0.0
          %2243 = vmatpush1.msra.mxu0 0.0
          %2244 = vmatprep.subr.mxu0 0.0
          %2245 = vmatpush1.msra.mxu0 0.0
          %2246 = vmatprep.subr.mxu0 0.0
          %2247 = vmatpush1.msra.mxu0 0.0
          %2248 = vmatprep.subr.mxu0 0.0
          %2249 = vmatpush1.msra.mxu0 0.0
          %2250 = vmatprep.subr.mxu0 0.0
          %2251 = vmatpush1.msra.mxu0 0.0
          %2252 = vmatprep.mubr.f32.mxu0 0.0
          %2253 = vmatmul.mubr.f32.gmra.mrb[0].mxu0 %v2084
          %v2254 = vpop.f32.mrb[0].mxu0
          %v2255 = vadd.f32 %v2072, %v2254
          %v2256 = vpop.f32.mrb[0].mxu0
          %v2257 = vadd.f32 %v2073, %v2256
          %2258 = vmatprep.mubr.f32.mxu0 0.0
          %2259 = vmatmul.mubr.f32.gmra.mrb[0].mxu0 %v2087
          %v2260 = vpop.f32.mrb[0].mxu0
          %v2261 = vadd.f32 %v2076, %v2260
          %v2262 = vpop.f32.mrb[0].mxu0
          %v2263 = vadd.f32 %v2077, %v2262
          %2264 = vmatprep.mubr.f32.mxu0 0.0
          %2265 = vmatmul.mubr.f32.gmra.mrb[0].mxu0 %v2090
          %v2266 = vpop.f32.mrb[0].mxu0
          %v2267 = vadd.f32 %v2080, %v2266
          %v2268 = vpop.f32.mrb[0].mxu0
          %v2269 = vadd.f32 %v2081, %v2268
          %2270 = vdwg.mxu0
          %v2271 = vmax.f32 %v2172, 0.0
          %v2272 = vmax.f32 %v2174, 0.0
          %v2273 = vmax.f32 %v2255, 0.0
          %v2274 = vmax.f32 %v2257, 0.0
          %v2275 = vmax.f32 %v2178, 0.0
          %v2276 = vmax.f32 %v2180, 0.0
          %v2277 = vmax.f32 %v2261, 0.0
          %v2278 = vmax.f32 %v2263, 0.0
          %v2279 = vmax.f32 %v2184, 0.0
          %v2280 = vmax.f32 %v2186, 0.0
          %v2281 = vmax.f32 %v2267, 0.0
          %v2282 = vmax.f32 %v2269, 0.0
          %v2283 = vld [vmem:[#allocation14] sm:$0xff]
          %v2284 = vld [vmem:[#allocation14 + $0x8] sm:$0xff]
          %v2285 = vld [vmem:[#allocation14 + $0x10] sm:$0xff]
          %v2286 = vld [vmem:[#allocation14 + $0x18] sm:$0xff]
          %v2287 = vld [vmem:[#allocation14 + $0x20] sm:$0xff]
          %v2288 = vld [vmem:[#allocation14 + $0x28] sm:$0xff]
          %v2289 = vld [vmem:[#allocation14 + $0x30] sm:$0xff]
          %v2290 = vld [vmem:[#allocation14 + $0x38] sm:$0xff]
          %v2291 = vld [vmem:[#allocation14 + $0x40] sm:$0xff]
          %v2292 = vld [vmem:[#allocation14 + $0x48] sm:$0xff]
          %v2293 = vld [vmem:[#allocation14 + $0x50] sm:$0xff]
          %v2294 = vld [vmem:[#allocation14 + $0x58] sm:$0xff]
          %v2295 = vld [vmem:[#allocation14 + $0x60] sm:$0xff]
          %v2296 = vld [vmem:[#allocation14 + $0x68] sm:$0xff]
          %v2297 = vld [vmem:[#allocation14 + $0x70] sm:$0xff]
          %v2298 = vld [vmem:[#allocation14 + $0x78] sm:$0xff]
          %v2299 = vld [vmem:[#allocation14 + $0x80] sm:$0xff]
          %v2300 = vld [vmem:[#allocation14 + $0x88] sm:$0xff]
          %v2301 = vld [vmem:[#allocation14 + $0x90] sm:$0xff]
          %v2302 = vld [vmem:[#allocation14 + $0x98] sm:$0xff]
          %v2303 = vld [vmem:[#allocation14 + $0xa0] sm:$0xff]
          %v2304 = vld [vmem:[#allocation14 + $0xa8] sm:$0xff]
          %v2305 = vld [vmem:[#allocation14 + $0xb0] sm:$0xff]
          %v2306 = vld [vmem:[#allocation14 + $0xb8] sm:$0xff]
          %v2307 = vld [vmem:[#allocation14 + $0xc0] sm:$0xff]
          %v2308 = vld [vmem:[#allocation14 + $0xc8] sm:$0xff]
          %v2309 = vld [vmem:[#allocation14 + $0xd0] sm:$0xff]
          %v2310 = vld [vmem:[#allocation14 + $0xd8] sm:$0xff]
          %v2311 = vld [vmem:[#allocation14 + $0xe0] sm:$0xff]
          %v2312 = vld [vmem:[#allocation14 + $0xe8] sm:$0xff]
          %v2313 = vld [vmem:[#allocation14 + $0xf0] sm:$0xff]
          %v2314 = vld [vmem:[#allocation14 + $0xf8] sm:$0xff]
          %v2315 = vld [vmem:[#allocation14 + $0x100] sm:$0xff]
          %v2316 = vld [vmem:[#allocation14 + $0x108] sm:$0xff]
          %v2317 = vld [vmem:[#allocation14 + $0x110] sm:$0xff]
          %v2318 = vld [vmem:[#allocation14 + $0x118] sm:$0xff]
          %v2319 = vld [vmem:[#allocation14 + $0x120] sm:$0xff]
          %v2320 = vld [vmem:[#allocation14 + $0x128] sm:$0xff]
          %v2321 = vld [vmem:[#allocation14 + $0x130] sm:$0xff]
          %v2322 = vld [vmem:[#allocation14 + $0x138] sm:$0xff]
          %v2323 = vld [vmem:[#allocation14 + $0x140] sm:$0xff]
          %v2324 = vld [vmem:[#allocation14 + $0x148] sm:$0xff]
          %v2325 = vld [vmem:[#allocation14 + $0x150] sm:$0xff]
          %v2326 = vld [vmem:[#allocation14 + $0x158] sm:$0xff]
          %v2327 = vld [vmem:[#allocation14 + $0x160] sm:$0xff]
          %v2328 = vld [vmem:[#allocation14 + $0x168] sm:$0xff]
          %v2329 = vld [vmem:[#allocation14 + $0x170] sm:$0xff]
          %v2330 = vld [vmem:[#allocation14 + $0x178] sm:$0xff]
          %v2331 = vld [vmem:[#allocation14 + $0x180] sm:$0xff]
          %v2332 = vld [vmem:[#allocation14 + $0x188] sm:$0xff]
          %v2333 = vld [vmem:[#allocation14 + $0x190] sm:$0xff]
          %v2334 = vld [vmem:[#allocation14 + $0x198] sm:$0xff]
          %v2335 = vld [vmem:[#allocation14 + $0x1a0] sm:$0xff]
          %v2336 = vld [vmem:[#allocation14 + $0x1a8] sm:$0xff]
          %v2337 = vld [vmem:[#allocation14 + $0x1b0] sm:$0xff]
          %v2338 = vld [vmem:[#allocation14 + $0x1b8] sm:$0xff]
          %v2339 = vld [vmem:[#allocation14 + $0x1c0] sm:$0xff]
          %v2340 = vld [vmem:[#allocation14 + $0x1c8] sm:$0xff]
          %v2341 = vld [vmem:[#allocation14 + $0x1d0] sm:$0xff]
          %v2342 = vld [vmem:[#allocation14 + $0x1d8] sm:$0xff]
          %v2343 = vld [vmem:[#allocation14 + $0x1e0] sm:$0xff]
          %v2344 = vld [vmem:[#allocation14 + $0x1e8] sm:$0xff]
          %v2345 = vld [vmem:[#allocation14 + $0x1f0] sm:$0xff]
          %v2346 = vld [vmem:[#allocation14 + $0x1f8] sm:$0xff]
          %v2347 = vld [vmem:[#allocation15] sm:$0x1]
          %v2349 = vlaneseq
          %v2350 = vshrl.u32 %v2349, 7
          %v2351 = vsub.s32 0, %v2350
          %v2352 = vrot.slane %v2347, %v2351
          %2354 = vmatprep.subr.mxu0 0.0
          %2355 = vmatpush1.msra.mxu0 %v2283
          %2356 = vmatprep.subr.mxu0 0.0
          %2357 = vmatpush1.msra.mxu0 %v2284
          %2358 = vmatprep.subr.mxu0 0.0
          %2359 = vmatpush1.msra.mxu0 %v2285
          %2360 = vmatprep.subr.mxu0 0.0
          %2361 = vmatpush1.msra.mxu0 %v2286
          %2362 = vmatprep.subr.mxu0 0.0
          %2363 = vmatpush1.msra.mxu0 %v2287
          %2364 = vmatprep.subr.mxu0 0.0
          %2365 = vmatpush1.msra.mxu0 %v2288
          %2366 = vmatprep.subr.mxu0 0.0
          %2367 = vmatpush1.msra.mxu0 %v2289
          %2368 = vmatprep.subr.mxu0 0.0
          %2369 = vmatpush1.msra.mxu0 %v2290
          %2370 = vmatprep.subr.mxu0 0.0
          %2371 = vmatpush1.msra.mxu0 %v2291
          %2372 = vmatprep.subr.mxu0 0.0
          %2373 = vmatpush1.msra.mxu0 %v2292
          %2374 = vmatprep.subr.mxu0 0.0
          %2375 = vmatpush1.msra.mxu0 %v2293
          %2376 = vmatprep.subr.mxu0 0.0
          %2377 = vmatpush1.msra.mxu0 %v2294
          %2378 = vmatprep.subr.mxu0 0.0
          %2379 = vmatpush1.msra.mxu0 %v2295
          %2380 = vmatprep.subr.mxu0 0.0
          %2381 = vmatpush1.msra.mxu0 %v2296
          %2382 = vmatprep.subr.mxu0 0.0
          %2383 = vmatpush1.msra.mxu0 %v2297
          %2384 = vmatprep.subr.mxu0 0.0
          %2385 = vmatpush1.msra.mxu0 %v2298
          %2386 = vmatprep.subr.mxu0 0.0
          %2387 = vmatpush1.msra.mxu0 %v2299
          %2388 = vmatprep.subr.mxu0 0.0
          %2389 = vmatpush1.msra.mxu0 %v2300
          %2390 = vmatprep.subr.mxu0 0.0
          %2391 = vmatpush1.msra.mxu0 %v2301
          %2392 = vmatprep.subr.mxu0 0.0
          %2393 = vmatpush1.msra.mxu0 %v2302
          %2394 = vmatprep.subr.mxu0 0.0
          %2395 = vmatpush1.msra.mxu0 %v2303
          %2396 = vmatprep.subr.mxu0 0.0
          %2397 = vmatpush1.msra.mxu0 %v2304
          %2398 = vmatprep.subr.mxu0 0.0
          %2399 = vmatpush1.msra.mxu0 %v2305
          %2400 = vmatprep.subr.mxu0 0.0
          %2401 = vmatpush1.msra.mxu0 %v2306
          %2402 = vmatprep.subr.mxu0 0.0
          %2403 = vmatpush1.msra.mxu0 %v2307
          %2404 = vmatprep.subr.mxu0 0.0
          %2405 = vmatpush1.msra.mxu0 %v2308
          %2406 = vmatprep.subr.mxu0 0.0
          %2407 = vmatpush1.msra.mxu0 %v2309
          %2408 = vmatprep.subr.mxu0 0.0
          %2409 = vmatpush1.msra.mxu0 %v2310
          %2410 = vmatprep.subr.mxu0 0.0
          %2411 = vmatpush1.msra.mxu0 %v2311
          %2412 = vmatprep.subr.mxu0 0.0
          %2413 = vmatpush1.msra.mxu0 %v2312
          %2414 = vmatprep.subr.mxu0 0.0
          %2415 = vmatpush1.msra.mxu0 %v2313
          %2416 = vmatprep.subr.mxu0 0.0
          %2417 = vmatpush1.msra.mxu0 %v2314
          %2418 = vmatprep.mubr.f32.mxu0 %v2272
          %2419 = vmatmul.mubr.f32.gmra.mrb[0].mxu0 %v2271
          %v2420 = vpop.f32.mrb[0].mxu0
          %v2421 = vadd.f32 %v2352, %v2420
          %v2422 = vpop.f32.mrb[0].mxu0
          %2423 = vmatprep.mubr.f32.mxu0 %v2276
          %2424 = vmatmul.mubr.f32.gmra.mrb[0].mxu0 %v2275
          %v2425 = vpop.f32.mrb[0].mxu0
          %v2426 = vadd.f32 %v2352, %v2425
          %v2427 = vpop.f32.mrb[0].mxu0
          %2428 = vmatprep.mubr.f32.mxu0 %v2280
          %2429 = vmatmul.mubr.f32.gmra.mrb[0].mxu0 %v2279
          %v2430 = vpop.f32.mrb[0].mxu0
          %v2431 = vadd.f32 %v2352, %v2430
          %v2432 = vpop.f32.mrb[0].mxu0
          %2433 = vdwg.mxu0
          %2434 = vmatprep.subr.mxu0 0.0
          %2435 = vmatpush1.msra.mxu0 %v2315
          %2436 = vmatprep.subr.mxu0 0.0
          %2437 = vmatpush1.msra.mxu0 %v2316
          %2438 = vmatprep.subr.mxu0 0.0
          %2439 = vmatpush1.msra.mxu0 %v2317
          %2440 = vmatprep.subr.mxu0 0.0
          %2441 = vmatpush1.msra.mxu0 %v2318
          %2442 = vmatprep.subr.mxu0 0.0
          %2443 = vmatpush1.msra.mxu0 %v2319
          %2444 = vmatprep.subr.mxu0 0.0
          %2445 = vmatpush1.msra.mxu0 %v2320
          %2446 = vmatprep.subr.mxu0 0.0
          %2447 = vmatpush1.msra.mxu0 %v2321
          %2448 = vmatprep.subr.mxu0 0.0
          %2449 = vmatpush1.msra.mxu0 %v2322
          %2450 = vmatprep.subr.mxu0 0.0
          %2451 = vmatpush1.msra.mxu0 %v2323
          %2452 = vmatprep.subr.mxu0 0.0
          %2453 = vmatpush1.msra.mxu0 %v2324
          %2454 = vmatprep.subr.mxu0 0.0
          %2455 = vmatpush1.msra.mxu0 %v2325
          %2456 = vmatprep.subr.mxu0 0.0
          %2457 = vmatpush1.msra.mxu0 %v2326
          %2458 = vmatprep.subr.mxu0 0.0
          %2459 = vmatpush1.msra.mxu0 %v2327
          %2460 = vmatprep.subr.mxu0 0.0
          %2461 = vmatpush1.msra.mxu0 %v2328
          %2462 = vmatprep.subr.mxu0 0.0
          %2463 = vmatpush1.msra.mxu0 %v2329
          %2464 = vmatprep.subr.mxu0 0.0
          %2465 = vmatpush1.msra.mxu0 %v2330
          %2466 = vmatprep.subr.mxu0 0.0
          %2467 = vmatpush1.msra.mxu0 %v2331
          %2468 = vmatprep.subr.mxu0 0.0
          %2469 = vmatpush1.msra.mxu0 %v2332
          %2470 = vmatprep.subr.mxu0 0.0
          %2471 = vmatpush1.msra.mxu0 %v2333
          %2472 = vmatprep.subr.mxu0 0.0
          %2473 = vmatpush1.msra.mxu0 %v2334
          %2474 = vmatprep.subr.mxu0 0.0
          %2475 = vmatpush1.msra.mxu0 %v2335
          %2476 = vmatprep.subr.mxu0 0.0
          %2477 = vmatpush1.msra.mxu0 %v2336
          %2478 = vmatprep.subr.mxu0 0.0
          %2479 = vmatpush1.msra.mxu0 %v2337
          %2480 = vmatprep.subr.mxu0 0.0
          %2481 = vmatpush1.msra.mxu0 %v2338
          %2482 = vmatprep.subr.mxu0 0.0
          %2483 = vmatpush1.msra.mxu0 %v2339
          %2484 = vmatprep.subr.mxu0 0.0
          %2485 = vmatpush1.msra.mxu0 %v2340
          %2486 = vmatprep.subr.mxu0 0.0
          %2487 = vmatpush1.msra.mxu0 %v2341
          %2488 = vmatprep.subr.mxu0 0.0
          %2489 = vmatpush1.msra.mxu0 %v2342
          %2490 = vmatprep.subr.mxu0 0.0
          %2491 = vmatpush1.msra.mxu0 %v2343
          %2492 = vmatprep.subr.mxu0 0.0
          %2493 = vmatpush1.msra.mxu0 %v2344
          %2494 = vmatprep.subr.mxu0 0.0
          %2495 = vmatpush1.msra.mxu0 %v2345
          %2496 = vmatprep.subr.mxu0 0.0
          %2497 = vmatpush1.msra.mxu0 %v2346
          %2498 = vmatprep.mubr.f32.mxu0 %v2274
          %2499 = vmatmul.mubr.f32.gmra.mrb[0].mxu0 %v2273
          %v2500 = vpop.f32.mrb[0].mxu0
          %v2501 = vadd.f32 %v2421, %v2500
          %v2502 = vpop.f32.mrb[0].mxu0
          %2503 = vmatprep.mubr.f32.mxu0 %v2278
          %2504 = vmatmul.mubr.f32.gmra.mrb[0].mxu0 %v2277
          %v2505 = vpop.f32.mrb[0].mxu0
          %v2506 = vadd.f32 %v2426, %v2505
          %v2507 = vpop.f32.mrb[0].mxu0
          %2508 = vmatprep.mubr.f32.mxu0 %v2282
          %2509 = vmatmul.mubr.f32.gmra.mrb[0].mxu0 %v2281
          %v2510 = vpop.f32.mrb[0].mxu0
          %v2511 = vadd.f32 %v2431, %v2510
          %v2512 = vpop.f32.mrb[0].mxu0
          %2513 = vdwg.mxu0
          %v2514 = vld [vmem:[#allocation18] sm:$0x3]
          %v2515 = vld [vmem:[#allocation17] sm:$0xff]
          %v2516 = vld [vmem:[#allocation17 + $0x8] sm:$0xff]
          %v2517 = vld [vmem:[#allocation17 + $0x10] sm:$0xff]
          %v2518 = vld [vmem:[#allocation17 + $0x18] sm:$0xff]
          %v2519 = vld [vmem:[#allocation17 + $0x20] sm:$0xff]
          %v2520 = vld [vmem:[#allocation17 + $0x28] sm:$0xff]
          %v2521 = vld [vmem:[#allocation17 + $0x30] sm:$0xff]
          %v2522 = vld [vmem:[#allocation17 + $0x38] sm:$0xff]
          %v2523 = vld [vmem:[#allocation17 + $0x40] sm:$0xff]
          %v2524 = vld [vmem:[#allocation17 + $0x48] sm:$0xff]
          %v2525 = vld [vmem:[#allocation17 + $0x50] sm:$0xff]
          %v2526 = vld [vmem:[#allocation17 + $0x58] sm:$0xff]
          %v2527 = vld [vmem:[#allocation17 + $0x60] sm:$0xff]
          %v2528 = vld [vmem:[#allocation17 + $0x68] sm:$0xff]
          %v2529 = vld [vmem:[#allocation17 + $0x70] sm:$0xff]
          %v2530 = vld [vmem:[#allocation17 + $0x78] sm:$0xff]
          %v2531 = vld [vmem:[#allocation17 + $0x80] sm:$0xff]
          %v2532 = vld [vmem:[#allocation17 + $0x88] sm:$0xff]
          %v2533 = vld [vmem:[#allocation17 + $0x90] sm:$0xff]
          %v2534 = vld [vmem:[#allocation17 + $0x98] sm:$0xff]
          %v2535 = vld [vmem:[#allocation17 + $0xa0] sm:$0xff]
          %v2536 = vld [vmem:[#allocation17 + $0xa8] sm:$0xff]
          %v2537 = vld [vmem:[#allocation17 + $0xb0] sm:$0xff]
          %v2538 = vld [vmem:[#allocation17 + $0xb8] sm:$0xff]
          %v2539 = vld [vmem:[#allocation17 + $0xc0] sm:$0xff]
          %v2540 = vld [vmem:[#allocation17 + $0xc8] sm:$0xff]
          %v2541 = vld [vmem:[#allocation17 + $0xd0] sm:$0xff]
          %v2542 = vld [vmem:[#allocation17 + $0xd8] sm:$0xff]
          %v2543 = vld [vmem:[#allocation17 + $0xe0] sm:$0xff]
          %v2544 = vld [vmem:[#allocation17 + $0xe8] sm:$0xff]
          %v2545 = vld [vmem:[#allocation17 + $0xf0] sm:$0xff]
          %v2546 = vld [vmem:[#allocation17 + $0xf8] sm:$0xff]
          %2547 = vmatprep.subr.mxu0 %v2516
          %2548 = vmatpush1.msra.mxu0 %v2515
          %2549 = vmatprep.subr.mxu0 %v2518
          %2550 = vmatpush1.msra.mxu0 %v2517
          %2551 = vmatprep.subr.mxu0 %v2520
          %2552 = vmatpush1.msra.mxu0 %v2519
          %2553 = vmatprep.subr.mxu0 %v2522
          %2554 = vmatpush1.msra.mxu0 %v2521
          %2555 = vmatprep.subr.mxu0 %v2524
          %2556 = vmatpush1.msra.mxu0 %v2523
          %2557 = vmatprep.subr.mxu0 %v2526
          %2558 = vmatpush1.msra.mxu0 %v2525
          %2559 = vmatprep.subr.mxu0 %v2528
          %2560 = vmatpush1.msra.mxu0 %v2527
          %2561 = vmatprep.subr.mxu0 %v2530
          %2562 = vmatpush1.msra.mxu0 %v2529
          %2563 = vmatprep.subr.mxu0 %v2532
          %2564 = vmatpush1.msra.mxu0 %v2531
          %2565 = vmatprep.subr.mxu0 %v2534
          %2566 = vmatpush1.msra.mxu0 %v2533
          %2567 = vmatprep.subr.mxu0 %v2536
          %2568 = vmatpush1.msra.mxu0 %v2535
          %2569 = vmatprep.subr.mxu0 %v2538
          %2570 = vmatpush1.msra.mxu0 %v2537
          %2571 = vmatprep.subr.mxu0 %v2540
          %2572 = vmatpush1.msra.mxu0 %v2539
          %2573 = vmatprep.subr.mxu0 %v2542
          %2574 = vmatpush1.msra.mxu0 %v2541
          %2575 = vmatprep.subr.mxu0 %v2544
          %2576 = vmatpush1.msra.mxu0 %v2543
          %2577 = vmatprep.subr.mxu0 %v2546
          %2578 = vmatpush1.msra.mxu0 %v2545
          %2579 = vmatprep.subr.mxu0 0.0
          %2580 = vmatpush1.msra.mxu0 0.0
          %2581 = vmatprep.subr.mxu0 0.0
          %2582 = vmatpush1.msra.mxu0 0.0
          %2583 = vmatprep.subr.mxu0 0.0
          %2584 = vmatpush1.msra.mxu0 0.0
          %2585 = vmatprep.subr.mxu0 0.0
          %2586 = vmatpush1.msra.mxu0 0.0
          %2587 = vmatprep.subr.mxu0 0.0
          %2588 = vmatpush1.msra.mxu0 0.0
          %2589 = vmatprep.subr.mxu0 0.0
          %2590 = vmatpush1.msra.mxu0 0.0
          %2591 = vmatprep.subr.mxu0 0.0
          %2592 = vmatpush1.msra.mxu0 0.0
          %2593 = vmatprep.subr.mxu0 0.0
          %2594 = vmatpush1.msra.mxu0 0.0
          %2595 = vmatprep.subr.mxu0 0.0
          %2596 = vmatpush1.msra.mxu0 0.0
          %2597 = vmatprep.subr.mxu0 0.0
          %2598 = vmatpush1.msra.mxu0 0.0
          %2599 = vmatprep.subr.mxu0 0.0
          %2600 = vmatpush1.msra.mxu0 0.0
          %2601 = vmatprep.subr.mxu0 0.0
          %2602 = vmatpush1.msra.mxu0 0.0
          %2603 = vmatprep.subr.mxu0 0.0
          %2604 = vmatpush1.msra.mxu0 0.0
          %2605 = vmatprep.subr.mxu0 0.0
          %2606 = vmatpush1.msra.mxu0 0.0
          %2607 = vmatprep.subr.mxu0 0.0
          %2608 = vmatpush1.msra.mxu0 0.0
          %2609 = vmatprep.subr.mxu0 0.0
          %2610 = vmatpush1.msra.mxu0 0.0
          %2611 = vmatprep.mubr.f32.mxu0 0.0
          %2612 = vmatmul.mubr.f32.gmra.mrb[0].mxu0 %v2501
          %v2613 = vpop.f32.mrb[0].mxu0
          %v2614 = vadd.f32 0.0, %v2613
          %v2615 = vpop.f32.mrb[0].mxu0
          %v2616 = vadd.f32 0.0, %v2615
          %2617 = vdwg.mxu0
          %v2620 = vcombine.low %v2614, %v2616
          %v2622 = vunpack.c.l.s4 1966171168
          %v2623 = vunpack.c.0.s8 %v2622
          %v2624 = vlaneseq
          %v2625 = vshrl.u32 %v2624, 7
          %v2626 = vsub.s32 %v2623, %v2625
          %v2627 = vrot.slane %v2620, %v2626
          %v2629 = vunpack.c.l.s4 1966171168
          %v2630 = vunpack.c.0.s8 %v2629
          %v2631 = vlaneseq
          %v2632 = vshrl.u32 %v2631, 7
          %v2633 = vsub.s32 %v2630, %v2632
          %v2634 = vrot.slane %v2627, %v2633
          %v2636 = vadd.f32 %v2514, %v2634
          %v2637 = vld [vmem:[#allocation17 + $0x100] sm:$0xff]
          %v2638 = vld [vmem:[#allocation17 + $0x108] sm:$0xff]
          %v2639 = vld [vmem:[#allocation17 + $0x110] sm:$0xff]
          %v2640 = vld [vmem:[#allocation17 + $0x118] sm:$0xff]
          %v2641 = vld [vmem:[#allocation17 + $0x120] sm:$0xff]
          %v2642 = vld [vmem:[#allocation17 + $0x128] sm:$0xff]
          %v2643 = vld [vmem:[#allocation17 + $0x130] sm:$0xff]
          %v2644 = vld [vmem:[#allocation17 + $0x138] sm:$0xff]
          %v2645 = vld [vmem:[#allocation17 + $0x140] sm:$0xff]
          %v2646 = vld [vmem:[#allocation17 + $0x148] sm:$0xff]
          %v2647 = vld [vmem:[#allocation17 + $0x150] sm:$0xff]
          %v2648 = vld [vmem:[#allocation17 + $0x158] sm:$0xff]
          %v2649 = vld [vmem:[#allocation17 + $0x160] sm:$0xff]
          %v2650 = vld [vmem:[#allocation17 + $0x168] sm:$0xff]
          %v2651 = vld [vmem:[#allocation17 + $0x170] sm:$0xff]
          %v2652 = vld [vmem:[#allocation17 + $0x178] sm:$0xff]
          %v2653 = vld [vmem:[#allocation17 + $0x180] sm:$0xff]
          %v2654 = vld [vmem:[#allocation17 + $0x188] sm:$0xff]
          %v2655 = vld [vmem:[#allocation17 + $0x190] sm:$0xff]
          %v2656 = vld [vmem:[#allocation17 + $0x198] sm:$0xff]
          %v2657 = vld [vmem:[#allocation17 + $0x1a0] sm:$0xff]
          %v2658 = vld [vmem:[#allocation17 + $0x1a8] sm:$0xff]
          %v2659 = vld [vmem:[#allocation17 + $0x1b0] sm:$0xff]
          %v2660 = vld [vmem:[#allocation17 + $0x1b8] sm:$0xff]
          %v2661 = vld [vmem:[#allocation17 + $0x1c0] sm:$0xff]
          %v2662 = vld [vmem:[#allocation17 + $0x1c8] sm:$0xff]
          %v2663 = vld [vmem:[#allocation17 + $0x1d0] sm:$0xff]
          %v2664 = vld [vmem:[#allocation17 + $0x1d8] sm:$0xff]
          %v2665 = vld [vmem:[#allocation17 + $0x1e0] sm:$0xff]
          %v2666 = vld [vmem:[#allocation17 + $0x1e8] sm:$0xff]
          %v2667 = vld [vmem:[#allocation17 + $0x1f0] sm:$0xff]
          %v2668 = vld [vmem:[#allocation17 + $0x1f8] sm:$0xff]
          %v2670 = vrot.slane %v2501, 1
          %2672 = vmatprep.subr.mxu0 %v2638
          %2673 = vmatpush1.msra.mxu0 %v2637
          %2674 = vmatprep.subr.mxu0 %v2640
          %2675 = vmatpush1.msra.mxu0 %v2639
          %2676 = vmatprep.subr.mxu0 %v2642
          %2677 = vmatpush1.msra.mxu0 %v2641
          %2678 = vmatprep.subr.mxu0 %v2644
          %2679 = vmatpush1.msra.mxu0 %v2643
          %2680 = vmatprep.subr.mxu0 %v2646
          %2681 = vmatpush1.msra.mxu0 %v2645
          %2682 = vmatprep.subr.mxu0 %v2648
          %2683 = vmatpush1.msra.mxu0 %v2647
          %2684 = vmatprep.subr.mxu0 %v2650
          %2685 = vmatpush1.msra.mxu0 %v2649
          %2686 = vmatprep.subr.mxu0 %v2652
          %2687 = vmatpush1.msra.mxu0 %v2651
          %2688 = vmatprep.subr.mxu0 %v2654
          %2689 = vmatpush1.msra.mxu0 %v2653
          %2690 = vmatprep.subr.mxu0 %v2656
          %2691 = vmatpush1.msra.mxu0 %v2655
          %2692 = vmatprep.subr.mxu0 %v2658
          %2693 = vmatpush1.msra.mxu0 %v2657
          %2694 = vmatprep.subr.mxu0 %v2660
          %2695 = vmatpush1.msra.mxu0 %v2659
          %2696 = vmatprep.subr.mxu0 %v2662
          %2697 = vmatpush1.msra.mxu0 %v2661
          %2698 = vmatprep.subr.mxu0 %v2664
          %2699 = vmatpush1.msra.mxu0 %v2663
          %2700 = vmatprep.subr.mxu0 %v2666
          %2701 = vmatpush1.msra.mxu0 %v2665
          %2702 = vmatprep.subr.mxu0 %v2668
          %2703 = vmatpush1.msra.mxu0 %v2667
          %2704 = vmatprep.subr.mxu0 0.0
          %2705 = vmatpush1.msra.mxu0 0.0
          %2706 = vmatprep.subr.mxu0 0.0
          %2707 = vmatpush1.msra.mxu0 0.0
          %2708 = vmatprep.subr.mxu0 0.0
          %2709 = vmatpush1.msra.mxu0 0.0
          %2710 = vmatprep.subr.mxu0 0.0
          %2711 = vmatpush1.msra.mxu0 0.0
          %2712 = vmatprep.subr.mxu0 0.0
          %2713 = vmatpush1.msra.mxu0 0.0
          %2714 = vmatprep.subr.mxu0 0.0
          %2715 = vmatpush1.msra.mxu0 0.0
          %2716 = vmatprep.subr.mxu0 0.0
          %2717 = vmatpush1.msra.mxu0 0.0
          %2718 = vmatprep.subr.mxu0 0.0
          %2719 = vmatpush1.msra.mxu0 0.0
          %2720 = vmatprep.subr.mxu0 0.0
          %2721 = vmatpush1.msra.mxu0 0.0
          %2722 = vmatprep.subr.mxu0 0.0
          %2723 = vmatpush1.msra.mxu0 0.0
          %2724 = vmatprep.subr.mxu0 0.0
          %2725 = vmatpush1.msra.mxu0 0.0
          %2726 = vmatprep.subr.mxu0 0.0
          %2727 = vmatpush1.msra.mxu0 0.0
          %2728 = vmatprep.subr.mxu0 0.0
          %2729 = vmatpush1.msra.mxu0 0.0
          %2730 = vmatprep.subr.mxu0 0.0
          %2731 = vmatpush1.msra.mxu0 0.0
          %2732 = vmatprep.subr.mxu0 0.0
          %2733 = vmatpush1.msra.mxu0 0.0
          %2734 = vmatprep.subr.mxu0 0.0
          %2735 = vmatpush1.msra.mxu0 0.0
          %2736 = vmatprep.mubr.f32.mxu0 0.0
          %2737 = vmatmul.mubr.f32.gmra.mrb[0].mxu0 %v2670
          %v2738 = vpop.f32.mrb[0].mxu0
          %v2739 = vadd.f32 0.0, %v2738
          %v2740 = vpop.f32.mrb[0].mxu0
          %v2741 = vadd.f32 0.0, %v2740
          %2742 = vdwg.mxu0
          %v2745 = vcombine.low %v2739, %v2741
          %v2747 = vunpack.c.l.s4 1966171168
          %v2748 = vunpack.c.0.s8 %v2747
          %v2749 = vlaneseq
          %v2750 = vshrl.u32 %v2749, 7
          %v2751 = vsub.s32 %v2748, %v2750
          %v2752 = vrot.slane %v2745, %v2751
          %v2754 = vunpack.c.l.s4 1966171168
          %v2755 = vunpack.c.0.s8 %v2754
          %v2756 = vlaneseq
          %v2757 = vshrl.u32 %v2756, 7
          %v2758 = vsub.s32 %v2755, %v2757
          %v2759 = vrot.slane %v2752, %v2758
          %v2761 = vadd.f32 %v2636, %v2759
          %v2762 = vld [vmem:[#allocation17 + $0x200] sm:$0xff]
          %v2763 = vld [vmem:[#allocation17 + $0x208] sm:$0xff]
          %v2764 = vld [vmem:[#allocation17 + $0x210] sm:$0xff]
          %v2765 = vld [vmem:[#allocation17 + $0x218] sm:$0xff]
          %v2766 = vld [vmem:[#allocation17 + $0x220] sm:$0xff]
          %v2767 = vld [vmem:[#allocation17 + $0x228] sm:$0xff]
          %v2768 = vld [vmem:[#allocation17 + $0x230] sm:$0xff]
          %v2769 = vld [vmem:[#allocation17 + $0x238] sm:$0xff]
          %v2770 = vld [vmem:[#allocation17 + $0x240] sm:$0xff]
          %v2771 = vld [vmem:[#allocation17 + $0x248] sm:$0xff]
          %v2772 = vld [vmem:[#allocation17 + $0x250] sm:$0xff]
          %v2773 = vld [vmem:[#allocation17 + $0x258] sm:$0xff]
          %v2774 = vld [vmem:[#allocation17 + $0x260] sm:$0xff]
          %v2775 = vld [vmem:[#allocation17 + $0x268] sm:$0xff]
          %v2776 = vld [vmem:[#allocation17 + $0x270] sm:$0xff]
          %v2777 = vld [vmem:[#allocation17 + $0x278] sm:$0xff]
          %v2778 = vld [vmem:[#allocation17 + $0x280] sm:$0xff]
          %v2779 = vld [vmem:[#allocation17 + $0x288] sm:$0xff]
          %v2780 = vld [vmem:[#allocation17 + $0x290] sm:$0xff]
          %v2781 = vld [vmem:[#allocation17 + $0x298] sm:$0xff]
          %v2782 = vld [vmem:[#allocation17 + $0x2a0] sm:$0xff]
          %v2783 = vld [vmem:[#allocation17 + $0x2a8] sm:$0xff]
          %v2784 = vld [vmem:[#allocation17 + $0x2b0] sm:$0xff]
          %v2785 = vld [vmem:[#allocation17 + $0x2b8] sm:$0xff]
          %v2786 = vld [vmem:[#allocation17 + $0x2c0] sm:$0xff]
          %v2787 = vld [vmem:[#allocation17 + $0x2c8] sm:$0xff]
          %v2788 = vld [vmem:[#allocation17 + $0x2d0] sm:$0xff]
          %v2789 = vld [vmem:[#allocation17 + $0x2d8] sm:$0xff]
          %v2790 = vld [vmem:[#allocation17 + $0x2e0] sm:$0xff]
          %v2791 = vld [vmem:[#allocation17 + $0x2e8] sm:$0xff]
          %v2792 = vld [vmem:[#allocation17 + $0x2f0] sm:$0xff]
          %v2793 = vld [vmem:[#allocation17 + $0x2f8] sm:$0xff]
          %v2794 = vrot.slane %v2501, 2
          %2796 = vmatprep.subr.mxu0 %v2763
          %2797 = vmatpush1.msra.mxu0 %v2762
          %2798 = vmatprep.subr.mxu0 %v2765
          %2799 = vmatpush1.msra.mxu0 %v2764
          %2800 = vmatprep.subr.mxu0 %v2767
          %2801 = vmatpush1.msra.mxu0 %v2766
          %2802 = vmatprep.subr.mxu0 %v2769
          %2803 = vmatpush1.msra.mxu0 %v2768
          %2804 = vmatprep.subr.mxu0 %v2771
          %2805 = vmatpush1.msra.mxu0 %v2770
          %2806 = vmatprep.subr.mxu0 %v2773
          %2807 = vmatpush1.msra.mxu0 %v2772
          %2808 = vmatprep.subr.mxu0 %v2775
          %2809 = vmatpush1.msra.mxu0 %v2774
          %2810 = vmatprep.subr.mxu0 %v2777
          %2811 = vmatpush1.msra.mxu0 %v2776
          %2812 = vmatprep.subr.mxu0 %v2779
          %2813 = vmatpush1.msra.mxu0 %v2778
          %2814 = vmatprep.subr.mxu0 %v2781
          %2815 = vmatpush1.msra.mxu0 %v2780
          %2816 = vmatprep.subr.mxu0 %v2783
          %2817 = vmatpush1.msra.mxu0 %v2782
          %2818 = vmatprep.subr.mxu0 %v2785
          %2819 = vmatpush1.msra.mxu0 %v2784
          %2820 = vmatprep.subr.mxu0 %v2787
          %2821 = vmatpush1.msra.mxu0 %v2786
          %2822 = vmatprep.subr.mxu0 %v2789
          %2823 = vmatpush1.msra.mxu0 %v2788
          %2824 = vmatprep.subr.mxu0 %v2791
          %2825 = vmatpush1.msra.mxu0 %v2790
          %2826 = vmatprep.subr.mxu0 %v2793
          %2827 = vmatpush1.msra.mxu0 %v2792
          %2828 = vmatprep.subr.mxu0 0.0
          %2829 = vmatpush1.msra.mxu0 0.0
          %2830 = vmatprep.subr.mxu0 0.0
          %2831 = vmatpush1.msra.mxu0 0.0
          %2832 = vmatprep.subr.mxu0 0.0
          %2833 = vmatpush1.msra.mxu0 0.0
          %2834 = vmatprep.subr.mxu0 0.0
          %2835 = vmatpush1.msra.mxu0 0.0
          %2836 = vmatprep.subr.mxu0 0.0
          %2837 = vmatpush1.msra.mxu0 0.0
          %2838 = vmatprep.subr.mxu0 0.0
          %2839 = vmatpush1.msra.mxu0 0.0
          %2840 = vmatprep.subr.mxu0 0.0
          %2841 = vmatpush1.msra.mxu0 0.0
          %2842 = vmatprep.subr.mxu0 0.0
          %2843 = vmatpush1.msra.mxu0 0.0
          %2844 = vmatprep.subr.mxu0 0.0
          %2845 = vmatpush1.msra.mxu0 0.0
          %2846 = vmatprep.subr.mxu0 0.0
          %2847 = vmatpush1.msra.mxu0 0.0
          %2848 = vmatprep.subr.mxu0 0.0
          %2849 = vmatpush1.msra.mxu0 0.0
          %2850 = vmatprep.subr.mxu0 0.0
          %2851 = vmatpush1.msra.mxu0 0.0
          %2852 = vmatprep.subr.mxu0 0.0
          %2853 = vmatpush1.msra.mxu0 0.0
          %2854 = vmatprep.subr.mxu0 0.0
          %2855 = vmatpush1.msra.mxu0 0.0
          %2856 = vmatprep.subr.mxu0 0.0
          %2857 = vmatpush1.msra.mxu0 0.0
          %2858 = vmatprep.subr.mxu0 0.0
          %2859 = vmatpush1.msra.mxu0 0.0
          %2860 = vmatprep.mubr.f32.mxu0 0.0
          %2861 = vmatmul.mubr.f32.gmra.mrb[0].mxu0 %v2794
          %v2862 = vpop.f32.mrb[0].mxu0
          %v2863 = vadd.f32 0.0, %v2862
          %v2864 = vpop.f32.mrb[0].mxu0
          %v2865 = vadd.f32 0.0, %v2864
          %2866 = vdwg.mxu0
          %v2869 = vcombine.low %v2863, %v2865
          %v2871 = vunpack.c.l.s4 1966171168
          %v2872 = vunpack.c.0.s8 %v2871
          %v2873 = vlaneseq
          %v2874 = vshrl.u32 %v2873, 7
          %v2875 = vsub.s32 %v2872, %v2874
          %v2876 = vrot.slane %v2869, %v2875
          %v2878 = vunpack.c.l.s4 1966171168
          %v2879 = vunpack.c.0.s8 %v2878
          %v2880 = vlaneseq
          %v2881 = vshrl.u32 %v2880, 7
          %v2882 = vsub.s32 %v2879, %v2881
          %v2883 = vrot.slane %v2876, %v2882
          %v2885 = vadd.f32 %v2761, %v2883
          %v2886 = vld [vmem:[#allocation17 + $0x300] sm:$0xff]
          %v2887 = vld [vmem:[#allocation17 + $0x308] sm:$0xff]
          %v2888 = vld [vmem:[#allocation17 + $0x310] sm:$0xff]
          %v2889 = vld [vmem:[#allocation17 + $0x318] sm:$0xff]
          %v2890 = vld [vmem:[#allocation17 + $0x320] sm:$0xff]
          %v2891 = vld [vmem:[#allocation17 + $0x328] sm:$0xff]
          %v2892 = vld [vmem:[#allocation17 + $0x330] sm:$0xff]
          %v2893 = vld [vmem:[#allocation17 + $0x338] sm:$0xff]
          %v2894 = vld [vmem:[#allocation17 + $0x340] sm:$0xff]
          %v2895 = vld [vmem:[#allocation17 + $0x348] sm:$0xff]
          %v2896 = vld [vmem:[#allocation17 + $0x350] sm:$0xff]
          %v2897 = vld [vmem:[#allocation17 + $0x358] sm:$0xff]
          %v2898 = vld [vmem:[#allocation17 + $0x360] sm:$0xff]
          %v2899 = vld [vmem:[#allocation17 + $0x368] sm:$0xff]
          %v2900 = vld [vmem:[#allocation17 + $0x370] sm:$0xff]
          %v2901 = vld [vmem:[#allocation17 + $0x378] sm:$0xff]
          %v2902 = vld [vmem:[#allocation17 + $0x380] sm:$0xff]
          %v2903 = vld [vmem:[#allocation17 + $0x388] sm:$0xff]
          %v2904 = vld [vmem:[#allocation17 + $0x390] sm:$0xff]
          %v2905 = vld [vmem:[#allocation17 + $0x398] sm:$0xff]
          %v2906 = vld [vmem:[#allocation17 + $0x3a0] sm:$0xff]
          %v2907 = vld [vmem:[#allocation17 + $0x3a8] sm:$0xff]
          %v2908 = vld [vmem:[#allocation17 + $0x3b0] sm:$0xff]
          %v2909 = vld [vmem:[#allocation17 + $0x3b8] sm:$0xff]
          %v2910 = vld [vmem:[#allocation17 + $0x3c0] sm:$0xff]
          %v2911 = vld [vmem:[#allocation17 + $0x3c8] sm:$0xff]
          %v2912 = vld [vmem:[#allocation17 + $0x3d0] sm:$0xff]
          %v2913 = vld [vmem:[#allocation17 + $0x3d8] sm:$0xff]
          %v2914 = vld [vmem:[#allocation17 + $0x3e0] sm:$0xff]
          %v2915 = vld [vmem:[#allocation17 + $0x3e8] sm:$0xff]
          %v2916 = vld [vmem:[#allocation17 + $0x3f0] sm:$0xff]
          %v2917 = vld [vmem:[#allocation17 + $0x3f8] sm:$0xff]
          %v2918 = vrot.slane %v2501, 3
          %2920 = vmatprep.subr.mxu0 %v2887
          %2921 = vmatpush1.msra.mxu0 %v2886
          %2922 = vmatprep.subr.mxu0 %v2889
          %2923 = vmatpush1.msra.mxu0 %v2888
          %2924 = vmatprep.subr.mxu0 %v2891
          %2925 = vmatpush1.msra.mxu0 %v2890
          %2926 = vmatprep.subr.mxu0 %v2893
          %2927 = vmatpush1.msra.mxu0 %v2892
          %2928 = vmatprep.subr.mxu0 %v2895
          %2929 = vmatpush1.msra.mxu0 %v2894
          %2930 = vmatprep.subr.mxu0 %v2897
          %2931 = vmatpush1.msra.mxu0 %v2896
          %2932 = vmatprep.subr.mxu0 %v2899
          %2933 = vmatpush1.msra.mxu0 %v2898
          %2934 = vmatprep.subr.mxu0 %v2901
          %2935 = vmatpush1.msra.mxu0 %v2900
          %2936 = vmatprep.subr.mxu0 %v2903
          %2937 = vmatpush1.msra.mxu0 %v2902
          %2938 = vmatprep.subr.mxu0 %v2905
          %2939 = vmatpush1.msra.mxu0 %v2904
          %2940 = vmatprep.subr.mxu0 %v2907
          %2941 = vmatpush1.msra.mxu0 %v2906
          %2942 = vmatprep.subr.mxu0 %v2909
          %2943 = vmatpush1.msra.mxu0 %v2908
          %2944 = vmatprep.subr.mxu0 %v2911
          %2945 = vmatpush1.msra.mxu0 %v2910
          %2946 = vmatprep.subr.mxu0 %v2913
          %2947 = vmatpush1.msra.mxu0 %v2912
          %2948 = vmatprep.subr.mxu0 %v2915
          %2949 = vmatpush1.msra.mxu0 %v2914
          %2950 = vmatprep.subr.mxu0 %v2917
          %2951 = vmatpush1.msra.mxu0 %v2916
          %2952 = vmatprep.subr.mxu0 0.0
          %2953 = vmatpush1.msra.mxu0 0.0
          %2954 = vmatprep.subr.mxu0 0.0
          %2955 = vmatpush1.msra.mxu0 0.0
          %2956 = vmatprep.subr.mxu0 0.0
          %2957 = vmatpush1.msra.mxu0 0.0
          %2958 = vmatprep.subr.mxu0 0.0
          %2959 = vmatpush1.msra.mxu0 0.0
          %2960 = vmatprep.subr.mxu0 0.0
          %2961 = vmatpush1.msra.mxu0 0.0
          %2962 = vmatprep.subr.mxu0 0.0
          %2963 = vmatpush1.msra.mxu0 0.0
          %2964 = vmatprep.subr.mxu0 0.0
          %2965 = vmatpush1.msra.mxu0 0.0
          %2966 = vmatprep.subr.mxu0 0.0
          %2967 = vmatpush1.msra.mxu0 0.0
          %2968 = vmatprep.subr.mxu0 0.0
          %2969 = vmatpush1.msra.mxu0 0.0
          %2970 = vmatprep.subr.mxu0 0.0
          %2971 = vmatpush1.msra.mxu0 0.0
          %2972 = vmatprep.subr.mxu0 0.0
          %2973 = vmatpush1.msra.mxu0 0.0
          %2974 = vmatprep.subr.mxu0 0.0
          %2975 = vmatpush1.msra.mxu0 0.0
          %2976 = vmatprep.subr.mxu0 0.0
          %2977 = vmatpush1.msra.mxu0 0.0
          %2978 = vmatprep.subr.mxu0 0.0
          %2979 = vmatpush1.msra.mxu0 0.0
          %2980 = vmatprep.subr.mxu0 0.0
          %2981 = vmatpush1.msra.mxu0 0.0
          %2982 = vmatprep.subr.mxu0 0.0
          %2983 = vmatpush1.msra.mxu0 0.0
          %2984 = vmatprep.mubr.f32.mxu0 0.0
          %2985 = vmatmul.mubr.f32.gmra.mrb[0].mxu0 %v2918
          %v2986 = vpop.f32.mrb[0].mxu0
          %v2987 = vadd.f32 0.0, %v2986
          %v2988 = vpop.f32.mrb[0].mxu0
          %v2989 = vadd.f32 0.0, %v2988
          %2990 = vdwg.mxu0
          %v2993 = vcombine.low %v2987, %v2989
          %v2995 = vunpack.c.l.s4 1966171168
          %v2996 = vunpack.c.0.s8 %v2995
          %v2997 = vlaneseq
          %v2998 = vshrl.u32 %v2997, 7
          %v2999 = vsub.s32 %v2996, %v2998
          %v3000 = vrot.slane %v2993, %v2999
          %v3002 = vunpack.c.l.s4 1966171168
          %v3003 = vunpack.c.0.s8 %v3002
          %v3004 = vlaneseq
          %v3005 = vshrl.u32 %v3004, 7
          %v3006 = vsub.s32 %v3003, %v3005
          %v3007 = vrot.slane %v3000, %v3006
          %v3009 = vadd.f32 %v2885, %v3007
          %v3010 = vld [vmem:[#allocation17 + $0x400] sm:$0xff]
          %v3011 = vld [vmem:[#allocation17 + $0x408] sm:$0xff]
          %v3012 = vld [vmem:[#allocation17 + $0x410] sm:$0xff]
          %v3013 = vld [vmem:[#allocation17 + $0x418] sm:$0xff]
          %v3014 = vld [vmem:[#allocation17 + $0x420] sm:$0xff]
          %v3015 = vld [vmem:[#allocation17 + $0x428] sm:$0xff]
          %v3016 = vld [vmem:[#allocation17 + $0x430] sm:$0xff]
          %v3017 = vld [vmem:[#allocation17 + $0x438] sm:$0xff]
          %v3018 = vld [vmem:[#allocation17 + $0x440] sm:$0xff]
          %v3019 = vld [vmem:[#allocation17 + $0x448] sm:$0xff]
          %v3020 = vld [vmem:[#allocation17 + $0x450] sm:$0xff]
          %v3021 = vld [vmem:[#allocation17 + $0x458] sm:$0xff]
          %v3022 = vld [vmem:[#allocation17 + $0x460] sm:$0xff]
          %v3023 = vld [vmem:[#allocation17 + $0x468] sm:$0xff]
          %v3024 = vld [vmem:[#allocation17 + $0x470] sm:$0xff]
          %v3025 = vld [vmem:[#allocation17 + $0x478] sm:$0xff]
          %v3026 = vld [vmem:[#allocation17 + $0x480] sm:$0xff]
          %v3027 = vld [vmem:[#allocation17 + $0x488] sm:$0xff]
          %v3028 = vld [vmem:[#allocation17 + $0x490] sm:$0xff]
          %v3029 = vld [vmem:[#allocation17 + $0x498] sm:$0xff]
          %v3030 = vld [vmem:[#allocation17 + $0x4a0] sm:$0xff]
          %v3031 = vld [vmem:[#allocation17 + $0x4a8] sm:$0xff]
          %v3032 = vld [vmem:[#allocation17 + $0x4b0] sm:$0xff]
          %v3033 = vld [vmem:[#allocation17 + $0x4b8] sm:$0xff]
          %v3034 = vld [vmem:[#allocation17 + $0x4c0] sm:$0xff]
          %v3035 = vld [vmem:[#allocation17 + $0x4c8] sm:$0xff]
          %v3036 = vld [vmem:[#allocation17 + $0x4d0] sm:$0xff]
          %v3037 = vld [vmem:[#allocation17 + $0x4d8] sm:$0xff]
          %v3038 = vld [vmem:[#allocation17 + $0x4e0] sm:$0xff]
          %v3039 = vld [vmem:[#allocation17 + $0x4e8] sm:$0xff]
          %v3040 = vld [vmem:[#allocation17 + $0x4f0] sm:$0xff]
          %v3041 = vld [vmem:[#allocation17 + $0x4f8] sm:$0xff]
          %v3042 = vrot.slane %v2501, 4
          %3044 = vmatprep.subr.mxu0 %v3011
          %3045 = vmatpush1.msra.mxu0 %v3010
          %3046 = vmatprep.subr.mxu0 %v3013
          %3047 = vmatpush1.msra.mxu0 %v3012
          %3048 = vmatprep.subr.mxu0 %v3015
          %3049 = vmatpush1.msra.mxu0 %v3014
          %3050 = vmatprep.subr.mxu0 %v3017
          %3051 = vmatpush1.msra.mxu0 %v3016
          %3052 = vmatprep.subr.mxu0 %v3019
          %3053 = vmatpush1.msra.mxu0 %v3018
          %3054 = vmatprep.subr.mxu0 %v3021
          %3055 = vmatpush1.msra.mxu0 %v3020
          %3056 = vmatprep.subr.mxu0 %v3023
          %3057 = vmatpush1.msra.mxu0 %v3022
          %3058 = vmatprep.subr.mxu0 %v3025
          %3059 = vmatpush1.msra.mxu0 %v3024
          %3060 = vmatprep.subr.mxu0 %v3027
          %3061 = vmatpush1.msra.mxu0 %v3026
          %3062 = vmatprep.subr.mxu0 %v3029
          %3063 = vmatpush1.msra.mxu0 %v3028
          %3064 = vmatprep.subr.mxu0 %v3031
          %3065 = vmatpush1.msra.mxu0 %v3030
          %3066 = vmatprep.subr.mxu0 %v3033
          %3067 = vmatpush1.msra.mxu0 %v3032
          %3068 = vmatprep.subr.mxu0 %v3035
          %3069 = vmatpush1.msra.mxu0 %v3034
          %3070 = vmatprep.subr.mxu0 %v3037
          %3071 = vmatpush1.msra.mxu0 %v3036
          %3072 = vmatprep.subr.mxu0 %v3039
          %3073 = vmatpush1.msra.mxu0 %v3038
          %3074 = vmatprep.subr.mxu0 %v3041
          %3075 = vmatpush1.msra.mxu0 %v3040
          %3076 = vmatprep.subr.mxu0 0.0
          %3077 = vmatpush1.msra.mxu0 0.0
          %3078 = vmatprep.subr.mxu0 0.0
          %3079 = vmatpush1.msra.mxu0 0.0
          %3080 = vmatprep.subr.mxu0 0.0
          %3081 = vmatpush1.msra.mxu0 0.0
          %3082 = vmatprep.subr.mxu0 0.0
          %3083 = vmatpush1.msra.mxu0 0.0
          %3084 = vmatprep.subr.mxu0 0.0
          %3085 = vmatpush1.msra.mxu0 0.0
          %3086 = vmatprep.subr.mxu0 0.0
          %3087 = vmatpush1.msra.mxu0 0.0
          %3088 = vmatprep.subr.mxu0 0.0
          %3089 = vmatpush1.msra.mxu0 0.0
          %3090 = vmatprep.subr.mxu0 0.0
          %3091 = vmatpush1.msra.mxu0 0.0
          %3092 = vmatprep.subr.mxu0 0.0
          %3093 = vmatpush1.msra.mxu0 0.0
          %3094 = vmatprep.subr.mxu0 0.0
          %3095 = vmatpush1.msra.mxu0 0.0
          %3096 = vmatprep.subr.mxu0 0.0
          %3097 = vmatpush1.msra.mxu0 0.0
          %3098 = vmatprep.subr.mxu0 0.0
          %3099 = vmatpush1.msra.mxu0 0.0
          %3100 = vmatprep.subr.mxu0 0.0
          %3101 = vmatpush1.msra.mxu0 0.0
          %3102 = vmatprep.subr.mxu0 0.0
          %3103 = vmatpush1.msra.mxu0 0.0
          %3104 = vmatprep.subr.mxu0 0.0
          %3105 = vmatpush1.msra.mxu0 0.0
          %3106 = vmatprep.subr.mxu0 0.0
          %3107 = vmatpush1.msra.mxu0 0.0
          %3108 = vmatprep.mubr.f32.mxu0 0.0
          %3109 = vmatmul.mubr.f32.gmra.mrb[0].mxu0 %v3042
          %v3110 = vpop.f32.mrb[0].mxu0
          %v3111 = vadd.f32 0.0, %v3110
          %v3112 = vpop.f32.mrb[0].mxu0
          %v3113 = vadd.f32 0.0, %v3112
          %3114 = vdwg.mxu0
          %v3117 = vcombine.low %v3111, %v3113
          %v3119 = vunpack.c.l.s4 1966171168
          %v3120 = vunpack.c.0.s8 %v3119
          %v3121 = vlaneseq
          %v3122 = vshrl.u32 %v3121, 7
          %v3123 = vsub.s32 %v3120, %v3122
          %v3124 = vrot.slane %v3117, %v3123
          %v3126 = vunpack.c.l.s4 1966171168
          %v3127 = vunpack.c.0.s8 %v3126
          %v3128 = vlaneseq
          %v3129 = vshrl.u32 %v3128, 7
          %v3130 = vsub.s32 %v3127, %v3129
          %v3131 = vrot.slane %v3124, %v3130
          %v3133 = vadd.f32 %v3009, %v3131
          %v3134 = vld [vmem:[#allocation17 + $0x500] sm:$0xff]
          %v3135 = vld [vmem:[#allocation17 + $0x508] sm:$0xff]
          %v3136 = vld [vmem:[#allocation17 + $0x510] sm:$0xff]
          %v3137 = vld [vmem:[#allocation17 + $0x518] sm:$0xff]
          %v3138 = vld [vmem:[#allocation17 + $0x520] sm:$0xff]
          %v3139 = vld [vmem:[#allocation17 + $0x528] sm:$0xff]
          %v3140 = vld [vmem:[#allocation17 + $0x530] sm:$0xff]
          %v3141 = vld [vmem:[#allocation17 + $0x538] sm:$0xff]
          %v3142 = vld [vmem:[#allocation17 + $0x540] sm:$0xff]
          %v3143 = vld [vmem:[#allocation17 + $0x548] sm:$0xff]
          %v3144 = vld [vmem:[#allocation17 + $0x550] sm:$0xff]
          %v3145 = vld [vmem:[#allocation17 + $0x558] sm:$0xff]
          %v3146 = vld [vmem:[#allocation17 + $0x560] sm:$0xff]
          %v3147 = vld [vmem:[#allocation17 + $0x568] sm:$0xff]
          %v3148 = vld [vmem:[#allocation17 + $0x570] sm:$0xff]
          %v3149 = vld [vmem:[#allocation17 + $0x578] sm:$0xff]
          %v3150 = vld [vmem:[#allocation17 + $0x580] sm:$0xff]
          %v3151 = vld [vmem:[#allocation17 + $0x588] sm:$0xff]
          %v3152 = vld [vmem:[#allocation17 + $0x590] sm:$0xff]
          %v3153 = vld [vmem:[#allocation17 + $0x598] sm:$0xff]
          %v3154 = vld [vmem:[#allocation17 + $0x5a0] sm:$0xff]
          %v3155 = vld [vmem:[#allocation17 + $0x5a8] sm:$0xff]
          %v3156 = vld [vmem:[#allocation17 + $0x5b0] sm:$0xff]
          %v3157 = vld [vmem:[#allocation17 + $0x5b8] sm:$0xff]
          %v3158 = vld [vmem:[#allocation17 + $0x5c0] sm:$0xff]
          %v3159 = vld [vmem:[#allocation17 + $0x5c8] sm:$0xff]
          %v3160 = vld [vmem:[#allocation17 + $0x5d0] sm:$0xff]
          %v3161 = vld [vmem:[#allocation17 + $0x5d8] sm:$0xff]
          %v3162 = vld [vmem:[#allocation17 + $0x5e0] sm:$0xff]
          %v3163 = vld [vmem:[#allocation17 + $0x5e8] sm:$0xff]
          %v3164 = vld [vmem:[#allocation17 + $0x5f0] sm:$0xff]
          %v3165 = vld [vmem:[#allocation17 + $0x5f8] sm:$0xff]
          %v3166 = vrot.slane %v2501, 5
          %3168 = vmatprep.subr.mxu0 %v3135
          %3169 = vmatpush1.msra.mxu0 %v3134
          %3170 = vmatprep.subr.mxu0 %v3137
          %3171 = vmatpush1.msra.mxu0 %v3136
          %3172 = vmatprep.subr.mxu0 %v3139
          %3173 = vmatpush1.msra.mxu0 %v3138
          %3174 = vmatprep.subr.mxu0 %v3141
          %3175 = vmatpush1.msra.mxu0 %v3140
          %3176 = vmatprep.subr.mxu0 %v3143
          %3177 = vmatpush1.msra.mxu0 %v3142
          %3178 = vmatprep.subr.mxu0 %v3145
          %3179 = vmatpush1.msra.mxu0 %v3144
          %3180 = vmatprep.subr.mxu0 %v3147
          %3181 = vmatpush1.msra.mxu0 %v3146
          %3182 = vmatprep.subr.mxu0 %v3149
          %3183 = vmatpush1.msra.mxu0 %v3148
          %3184 = vmatprep.subr.mxu0 %v3151
          %3185 = vmatpush1.msra.mxu0 %v3150
          %3186 = vmatprep.subr.mxu0 %v3153
          %3187 = vmatpush1.msra.mxu0 %v3152
          %3188 = vmatprep.subr.mxu0 %v3155
          %3189 = vmatpush1.msra.mxu0 %v3154
          %3190 = vmatprep.subr.mxu0 %v3157
          %3191 = vmatpush1.msra.mxu0 %v3156
          %3192 = vmatprep.subr.mxu0 %v3159
          %3193 = vmatpush1.msra.mxu0 %v3158
          %3194 = vmatprep.subr.mxu0 %v3161
          %3195 = vmatpush1.msra.mxu0 %v3160
          %3196 = vmatprep.subr.mxu0 %v3163
          %3197 = vmatpush1.msra.mxu0 %v3162
          %3198 = vmatprep.subr.mxu0 %v3165
          %3199 = vmatpush1.msra.mxu0 %v3164
          %3200 = vmatprep.subr.mxu0 0.0
          %3201 = vmatpush1.msra.mxu0 0.0
          %3202 = vmatprep.subr.mxu0 0.0
          %3203 = vmatpush1.msra.mxu0 0.0
          %3204 = vmatprep.subr.mxu0 0.0
          %3205 = vmatpush1.msra.mxu0 0.0
          %3206 = vmatprep.subr.mxu0 0.0
          %3207 = vmatpush1.msra.mxu0 0.0
          %3208 = vmatprep.subr.mxu0 0.0
          %3209 = vmatpush1.msra.mxu0 0.0
          %3210 = vmatprep.subr.mxu0 0.0
          %3211 = vmatpush1.msra.mxu0 0.0
          %3212 = vmatprep.subr.mxu0 0.0
          %3213 = vmatpush1.msra.mxu0 0.0
          %3214 = vmatprep.subr.mxu0 0.0
          %3215 = vmatpush1.msra.mxu0 0.0
          %3216 = vmatprep.subr.mxu0 0.0
          %3217 = vmatpush1.msra.mxu0 0.0
          %3218 = vmatprep.subr.mxu0 0.0
          %3219 = vmatpush1.msra.mxu0 0.0
          %3220 = vmatprep.subr.mxu0 0.0
          %3221 = vmatpush1.msra.mxu0 0.0
          %3222 = vmatprep.subr.mxu0 0.0
          %3223 = vmatpush1.msra.mxu0 0.0
          %3224 = vmatprep.subr.mxu0 0.0
          %3225 = vmatpush1.msra.mxu0 0.0
          %3226 = vmatprep.subr.mxu0 0.0
          %3227 = vmatpush1.msra.mxu0 0.0
          %3228 = vmatprep.subr.mxu0 0.0
          %3229 = vmatpush1.msra.mxu0 0.0
          %3230 = vmatprep.subr.mxu0 0.0
          %3231 = vmatpush1.msra.mxu0 0.0
          %3232 = vmatprep.mubr.f32.mxu0 0.0
          %3233 = vmatmul.mubr.f32.gmra.mrb[0].mxu0 %v3166
          %v3234 = vpop.f32.mrb[0].mxu0
          %v3235 = vadd.f32 0.0, %v3234
          %v3236 = vpop.f32.mrb[0].mxu0
          %v3237 = vadd.f32 0.0, %v3236
          %3238 = vdwg.mxu0
          %v3241 = vcombine.low %v3235, %v3237
          %v3243 = vunpack.c.l.s4 1966171168
          %v3244 = vunpack.c.0.s8 %v3243
          %v3245 = vlaneseq
          %v3246 = vshrl.u32 %v3245, 7
          %v3247 = vsub.s32 %v3244, %v3246
          %v3248 = vrot.slane %v3241, %v3247
          %v3250 = vunpack.c.l.s4 1966171168
          %v3251 = vunpack.c.0.s8 %v3250
          %v3252 = vlaneseq
          %v3253 = vshrl.u32 %v3252, 7
          %v3254 = vsub.s32 %v3251, %v3253
          %v3255 = vrot.slane %v3248, %v3254
          %v3257 = vadd.f32 %v3133, %v3255
          %v3258 = vld [vmem:[#allocation17 + $0x600] sm:$0xff]
          %v3259 = vld [vmem:[#allocation17 + $0x608] sm:$0xff]
          %v3260 = vld [vmem:[#allocation17 + $0x610] sm:$0xff]
          %v3261 = vld [vmem:[#allocation17 + $0x618] sm:$0xff]
          %v3262 = vld [vmem:[#allocation17 + $0x620] sm:$0xff]
          %v3263 = vld [vmem:[#allocation17 + $0x628] sm:$0xff]
          %v3264 = vld [vmem:[#allocation17 + $0x630] sm:$0xff]
          %v3265 = vld [vmem:[#allocation17 + $0x638] sm:$0xff]
          %v3266 = vld [vmem:[#allocation17 + $0x640] sm:$0xff]
          %v3267 = vld [vmem:[#allocation17 + $0x648] sm:$0xff]
          %v3268 = vld [vmem:[#allocation17 + $0x650] sm:$0xff]
          %v3269 = vld [vmem:[#allocation17 + $0x658] sm:$0xff]
          %v3270 = vld [vmem:[#allocation17 + $0x660] sm:$0xff]
          %v3271 = vld [vmem:[#allocation17 + $0x668] sm:$0xff]
          %v3272 = vld [vmem:[#allocation17 + $0x670] sm:$0xff]
          %v3273 = vld [vmem:[#allocation17 + $0x678] sm:$0xff]
          %v3274 = vld [vmem:[#allocation17 + $0x680] sm:$0xff]
          %v3275 = vld [vmem:[#allocation17 + $0x688] sm:$0xff]
          %v3276 = vld [vmem:[#allocation17 + $0x690] sm:$0xff]
          %v3277 = vld [vmem:[#allocation17 + $0x698] sm:$0xff]
          %v3278 = vld [vmem:[#allocation17 + $0x6a0] sm:$0xff]
          %v3279 = vld [vmem:[#allocation17 + $0x6a8] sm:$0xff]
          %v3280 = vld [vmem:[#allocation17 + $0x6b0] sm:$0xff]
          %v3281 = vld [vmem:[#allocation17 + $0x6b8] sm:$0xff]
          %v3282 = vld [vmem:[#allocation17 + $0x6c0] sm:$0xff]
          %v3283 = vld [vmem:[#allocation17 + $0x6c8] sm:$0xff]
          %v3284 = vld [vmem:[#allocation17 + $0x6d0] sm:$0xff]
          %v3285 = vld [vmem:[#allocation17 + $0x6d8] sm:$0xff]
          %v3286 = vld [vmem:[#allocation17 + $0x6e0] sm:$0xff]
          %v3287 = vld [vmem:[#allocation17 + $0x6e8] sm:$0xff]
          %v3288 = vld [vmem:[#allocation17 + $0x6f0] sm:$0xff]
          %v3289 = vld [vmem:[#allocation17 + $0x6f8] sm:$0xff]
          %v3290 = vrot.slane %v2501, 6
          %3292 = vmatprep.subr.mxu0 %v3259
          %3293 = vmatpush1.msra.mxu0 %v3258
          %3294 = vmatprep.subr.mxu0 %v3261
          %3295 = vmatpush1.msra.mxu0 %v3260
          %3296 = vmatprep.subr.mxu0 %v3263
          %3297 = vmatpush1.msra.mxu0 %v3262
          %3298 = vmatprep.subr.mxu0 %v3265
          %3299 = vmatpush1.msra.mxu0 %v3264
          %3300 = vmatprep.subr.mxu0 %v3267
          %3301 = vmatpush1.msra.mxu0 %v3266
          %3302 = vmatprep.subr.mxu0 %v3269
          %3303 = vmatpush1.msra.mxu0 %v3268
          %3304 = vmatprep.subr.mxu0 %v3271
          %3305 = vmatpush1.msra.mxu0 %v3270
          %3306 = vmatprep.subr.mxu0 %v3273
          %3307 = vmatpush1.msra.mxu0 %v3272
          %3308 = vmatprep.subr.mxu0 %v3275
          %3309 = vmatpush1.msra.mxu0 %v3274
          %3310 = vmatprep.subr.mxu0 %v3277
          %3311 = vmatpush1.msra.mxu0 %v3276
          %3312 = vmatprep.subr.mxu0 %v3279
          %3313 = vmatpush1.msra.mxu0 %v3278
          %3314 = vmatprep.subr.mxu0 %v3281
          %3315 = vmatpush1.msra.mxu0 %v3280
          %3316 = vmatprep.subr.mxu0 %v3283
          %3317 = vmatpush1.msra.mxu0 %v3282
          %3318 = vmatprep.subr.mxu0 %v3285
          %3319 = vmatpush1.msra.mxu0 %v3284
          %3320 = vmatprep.subr.mxu0 %v3287
          %3321 = vmatpush1.msra.mxu0 %v3286
          %3322 = vmatprep.subr.mxu0 %v3289
          %3323 = vmatpush1.msra.mxu0 %v3288
          %3324 = vmatprep.subr.mxu0 0.0
          %3325 = vmatpush1.msra.mxu0 0.0
          %3326 = vmatprep.subr.mxu0 0.0
          %3327 = vmatpush1.msra.mxu0 0.0
          %3328 = vmatprep.subr.mxu0 0.0
          %3329 = vmatpush1.msra.mxu0 0.0
          %3330 = vmatprep.subr.mxu0 0.0
          %3331 = vmatpush1.msra.mxu0 0.0
          %3332 = vmatprep.subr.mxu0 0.0
          %3333 = vmatpush1.msra.mxu0 0.0
          %3334 = vmatprep.subr.mxu0 0.0
          %3335 = vmatpush1.msra.mxu0 0.0
          %3336 = vmatprep.subr.mxu0 0.0
          %3337 = vmatpush1.msra.mxu0 0.0
          %3338 = vmatprep.subr.mxu0 0.0
          %3339 = vmatpush1.msra.mxu0 0.0
          %3340 = vmatprep.subr.mxu0 0.0
          %3341 = vmatpush1.msra.mxu0 0.0
          %3342 = vmatprep.subr.mxu0 0.0
          %3343 = vmatpush1.msra.mxu0 0.0
          %3344 = vmatprep.subr.mxu0 0.0
          %3345 = vmatpush1.msra.mxu0 0.0
          %3346 = vmatprep.subr.mxu0 0.0
          %3347 = vmatpush1.msra.mxu0 0.0
          %3348 = vmatprep.subr.mxu0 0.0
          %3349 = vmatpush1.msra.mxu0 0.0
          %3350 = vmatprep.subr.mxu0 0.0
          %3351 = vmatpush1.msra.mxu0 0.0
          %3352 = vmatprep.subr.mxu0 0.0
          %3353 = vmatpush1.msra.mxu0 0.0
          %3354 = vmatprep.subr.mxu0 0.0
          %3355 = vmatpush1.msra.mxu0 0.0
          %3356 = vmatprep.mubr.f32.mxu0 0.0
          %3357 = vmatmul.mubr.f32.gmra.mrb[0].mxu0 %v3290
          %v3358 = vpop.f32.mrb[0].mxu0
          %v3359 = vadd.f32 0.0, %v3358
          %v3360 = vpop.f32.mrb[0].mxu0
          %v3361 = vadd.f32 0.0, %v3360
          %3362 = vdwg.mxu0
          %v3365 = vcombine.low %v3359, %v3361
          %v3367 = vunpack.c.l.s4 1966171168
          %v3368 = vunpack.c.0.s8 %v3367
          %v3369 = vlaneseq
          %v3370 = vshrl.u32 %v3369, 7
          %v3371 = vsub.s32 %v3368, %v3370
          %v3372 = vrot.slane %v3365, %v3371
          %v3374 = vunpack.c.l.s4 1966171168
          %v3375 = vunpack.c.0.s8 %v3374
          %v3376 = vlaneseq
          %v3377 = vshrl.u32 %v3376, 7
          %v3378 = vsub.s32 %v3375, %v3377
          %v3379 = vrot.slane %v3372, %v3378
          %v3381 = vadd.f32 %v3257, %v3379
          %v3382 = vld [vmem:[#allocation17 + $0x700] sm:$0xff]
          %v3383 = vld [vmem:[#allocation17 + $0x708] sm:$0xff]
          %v3384 = vld [vmem:[#allocation17 + $0x710] sm:$0xff]
          %v3385 = vld [vmem:[#allocation17 + $0x718] sm:$0xff]
          %v3386 = vld [vmem:[#allocation17 + $0x720] sm:$0xff]
          %v3387 = vld [vmem:[#allocation17 + $0x728] sm:$0xff]
          %v3388 = vld [vmem:[#allocation17 + $0x730] sm:$0xff]
          %v3389 = vld [vmem:[#allocation17 + $0x738] sm:$0xff]
          %v3390 = vld [vmem:[#allocation17 + $0x740] sm:$0xff]
          %v3391 = vld [vmem:[#allocation17 + $0x748] sm:$0xff]
          %v3392 = vld [vmem:[#allocation17 + $0x750] sm:$0xff]
          %v3393 = vld [vmem:[#allocation17 + $0x758] sm:$0xff]
          %v3394 = vld [vmem:[#allocation17 + $0x760] sm:$0xff]
          %v3395 = vld [vmem:[#allocation17 + $0x768] sm:$0xff]
          %v3396 = vld [vmem:[#allocation17 + $0x770] sm:$0xff]
          %v3397 = vld [vmem:[#allocation17 + $0x778] sm:$0xff]
          %v3398 = vld [vmem:[#allocation17 + $0x780] sm:$0xff]
          %v3399 = vld [vmem:[#allocation17 + $0x788] sm:$0xff]
          %v3400 = vld [vmem:[#allocation17 + $0x790] sm:$0xff]
          %v3401 = vld [vmem:[#allocation17 + $0x798] sm:$0xff]
          %v3402 = vld [vmem:[#allocation17 + $0x7a0] sm:$0xff]
          %v3403 = vld [vmem:[#allocation17 + $0x7a8] sm:$0xff]
          %v3404 = vld [vmem:[#allocation17 + $0x7b0] sm:$0xff]
          %v3405 = vld [vmem:[#allocation17 + $0x7b8] sm:$0xff]
          %v3406 = vld [vmem:[#allocation17 + $0x7c0] sm:$0xff]
          %v3407 = vld [vmem:[#allocation17 + $0x7c8] sm:$0xff]
          %v3408 = vld [vmem:[#allocation17 + $0x7d0] sm:$0xff]
          %v3409 = vld [vmem:[#allocation17 + $0x7d8] sm:$0xff]
          %v3410 = vld [vmem:[#allocation17 + $0x7e0] sm:$0xff]
          %v3411 = vld [vmem:[#allocation17 + $0x7e8] sm:$0xff]
          %v3412 = vld [vmem:[#allocation17 + $0x7f0] sm:$0xff]
          %v3413 = vld [vmem:[#allocation17 + $0x7f8] sm:$0xff]
          %v3414 = vrot.slane %v2501, 7
          %3416 = vmatprep.subr.mxu0 %v3383
          %3417 = vmatpush1.msra.mxu0 %v3382
          %3418 = vmatprep.subr.mxu0 %v3385
          %3419 = vmatpush1.msra.mxu0 %v3384
          %3420 = vmatprep.subr.mxu0 %v3387
          %3421 = vmatpush1.msra.mxu0 %v3386
          %3422 = vmatprep.subr.mxu0 %v3389
          %3423 = vmatpush1.msra.mxu0 %v3388
          %3424 = vmatprep.subr.mxu0 %v3391
          %3425 = vmatpush1.msra.mxu0 %v3390
          %3426 = vmatprep.subr.mxu0 %v3393
          %3427 = vmatpush1.msra.mxu0 %v3392
          %3428 = vmatprep.subr.mxu0 %v3395
          %3429 = vmatpush1.msra.mxu0 %v3394
          %3430 = vmatprep.subr.mxu0 %v3397
          %3431 = vmatpush1.msra.mxu0 %v3396
          %3432 = vmatprep.subr.mxu0 %v3399
          %3433 = vmatpush1.msra.mxu0 %v3398
          %3434 = vmatprep.subr.mxu0 %v3401
          %3435 = vmatpush1.msra.mxu0 %v3400
          %3436 = vmatprep.subr.mxu0 %v3403
          %3437 = vmatpush1.msra.mxu0 %v3402
          %3438 = vmatprep.subr.mxu0 %v3405
          %3439 = vmatpush1.msra.mxu0 %v3404
          %3440 = vmatprep.subr.mxu0 %v3407
          %3441 = vmatpush1.msra.mxu0 %v3406
          %3442 = vmatprep.subr.mxu0 %v3409
          %3443 = vmatpush1.msra.mxu0 %v3408
          %3444 = vmatprep.subr.mxu0 %v3411
          %3445 = vmatpush1.msra.mxu0 %v3410
          %3446 = vmatprep.subr.mxu0 %v3413
          %3447 = vmatpush1.msra.mxu0 %v3412
          %3448 = vmatprep.subr.mxu0 0.0
          %3449 = vmatpush1.msra.mxu0 0.0
          %3450 = vmatprep.subr.mxu0 0.0
          %3451 = vmatpush1.msra.mxu0 0.0
          %3452 = vmatprep.subr.mxu0 0.0
          %3453 = vmatpush1.msra.mxu0 0.0
          %3454 = vmatprep.subr.mxu0 0.0
          %3455 = vmatpush1.msra.mxu0 0.0
          %3456 = vmatprep.subr.mxu0 0.0
          %3457 = vmatpush1.msra.mxu0 0.0
          %3458 = vmatprep.subr.mxu0 0.0
          %3459 = vmatpush1.msra.mxu0 0.0
          %3460 = vmatprep.subr.mxu0 0.0
          %3461 = vmatpush1.msra.mxu0 0.0
          %3462 = vmatprep.subr.mxu0 0.0
          %3463 = vmatpush1.msra.mxu0 0.0
          %3464 = vmatprep.subr.mxu0 0.0
          %3465 = vmatpush1.msra.mxu0 0.0
          %3466 = vmatprep.subr.mxu0 0.0
          %3467 = vmatpush1.msra.mxu0 0.0
          %3468 = vmatprep.subr.mxu0 0.0
          %3469 = vmatpush1.msra.mxu0 0.0
          %3470 = vmatprep.subr.mxu0 0.0
          %3471 = vmatpush1.msra.mxu0 0.0
          %3472 = vmatprep.subr.mxu0 0.0
          %3473 = vmatpush1.msra.mxu0 0.0
          %3474 = vmatprep.subr.mxu0 0.0
          %3475 = vmatpush1.msra.mxu0 0.0
          %3476 = vmatprep.subr.mxu0 0.0
          %3477 = vmatpush1.msra.mxu0 0.0
          %3478 = vmatprep.subr.mxu0 0.0
          %3479 = vmatpush1.msra.mxu0 0.0
          %3480 = vmatprep.mubr.f32.mxu0 0.0
          %3481 = vmatmul.mubr.f32.gmra.mrb[0].mxu0 %v3414
          %v3482 = vpop.f32.mrb[0].mxu0
          %v3483 = vadd.f32 0.0, %v3482
          %v3484 = vpop.f32.mrb[0].mxu0
          %v3485 = vadd.f32 0.0, %v3484
          %3486 = vdwg.mxu0
          %v3489 = vcombine.low %v3483, %v3485
          %v3491 = vunpack.c.l.s4 1966171168
          %v3492 = vunpack.c.0.s8 %v3491
          %v3493 = vlaneseq
          %v3494 = vshrl.u32 %v3493, 7
          %v3495 = vsub.s32 %v3492, %v3494
          %v3496 = vrot.slane %v3489, %v3495
          %v3498 = vunpack.c.l.s4 1966171168
          %v3499 = vunpack.c.0.s8 %v3498
          %v3500 = vlaneseq
          %v3501 = vshrl.u32 %v3500, 7
          %v3502 = vsub.s32 %v3499, %v3501
          %v3503 = vrot.slane %v3496, %v3502
          %v3505 = vadd.f32 %v3381, %v3503
          %v3506 = vld [vmem:[#allocation17 + $0x800] sm:$0xff]
          %v3507 = vld [vmem:[#allocation17 + $0x808] sm:$0xff]
          %v3508 = vld [vmem:[#allocation17 + $0x810] sm:$0xff]
          %v3509 = vld [vmem:[#allocation17 + $0x818] sm:$0xff]
          %v3510 = vld [vmem:[#allocation17 + $0x820] sm:$0xff]
          %v3511 = vld [vmem:[#allocation17 + $0x828] sm:$0xff]
          %v3512 = vld [vmem:[#allocation17 + $0x830] sm:$0xff]
          %v3513 = vld [vmem:[#allocation17 + $0x838] sm:$0xff]
          %v3514 = vld [vmem:[#allocation17 + $0x840] sm:$0xff]
          %v3515 = vld [vmem:[#allocation17 + $0x848] sm:$0xff]
          %v3516 = vld [vmem:[#allocation17 + $0x850] sm:$0xff]
          %v3517 = vld [vmem:[#allocation17 + $0x858] sm:$0xff]
          %v3518 = vld [vmem:[#allocation17 + $0x860] sm:$0xff]
          %v3519 = vld [vmem:[#allocation17 + $0x868] sm:$0xff]
          %v3520 = vld [vmem:[#allocation17 + $0x870] sm:$0xff]
          %v3521 = vld [vmem:[#allocation17 + $0x878] sm:$0xff]
          %v3522 = vld [vmem:[#allocation17 + $0x880] sm:$0xff]
          %v3523 = vld [vmem:[#allocation17 + $0x888] sm:$0xff]
          %v3524 = vld [vmem:[#allocation17 + $0x890] sm:$0xff]
          %v3525 = vld [vmem:[#allocation17 + $0x898] sm:$0xff]
          %v3526 = vld [vmem:[#allocation17 + $0x8a0] sm:$0xff]
          %v3527 = vld [vmem:[#allocation17 + $0x8a8] sm:$0xff]
          %v3528 = vld [vmem:[#allocation17 + $0x8b0] sm:$0xff]
          %v3529 = vld [vmem:[#allocation17 + $0x8b8] sm:$0xff]
          %v3530 = vld [vmem:[#allocation17 + $0x8c0] sm:$0xff]
          %v3531 = vld [vmem:[#allocation17 + $0x8c8] sm:$0xff]
          %v3532 = vld [vmem:[#allocation17 + $0x8d0] sm:$0xff]
          %v3533 = vld [vmem:[#allocation17 + $0x8d8] sm:$0xff]
          %v3534 = vld [vmem:[#allocation17 + $0x8e0] sm:$0xff]
          %v3535 = vld [vmem:[#allocation17 + $0x8e8] sm:$0xff]
          %v3536 = vld [vmem:[#allocation17 + $0x8f0] sm:$0xff]
          %v3537 = vld [vmem:[#allocation17 + $0x8f8] sm:$0xff]
          %3538 = vmatprep.subr.mxu0 %v3507
          %3539 = vmatpush1.msra.mxu0 %v3506
          %3540 = vmatprep.subr.mxu0 %v3509
          %3541 = vmatpush1.msra.mxu0 %v3508
          %3542 = vmatprep.subr.mxu0 %v3511
          %3543 = vmatpush1.msra.mxu0 %v3510
          %3544 = vmatprep.subr.mxu0 %v3513
          %3545 = vmatpush1.msra.mxu0 %v3512
          %3546 = vmatprep.subr.mxu0 %v3515
          %3547 = vmatpush1.msra.mxu0 %v3514
          %3548 = vmatprep.subr.mxu0 %v3517
          %3549 = vmatpush1.msra.mxu0 %v3516
          %3550 = vmatprep.subr.mxu0 %v3519
          %3551 = vmatpush1.msra.mxu0 %v3518
          %3552 = vmatprep.subr.mxu0 %v3521
          %3553 = vmatpush1.msra.mxu0 %v3520
          %3554 = vmatprep.subr.mxu0 %v3523
          %3555 = vmatpush1.msra.mxu0 %v3522
          %3556 = vmatprep.subr.mxu0 %v3525
          %3557 = vmatpush1.msra.mxu0 %v3524
          %3558 = vmatprep.subr.mxu0 %v3527
          %3559 = vmatpush1.msra.mxu0 %v3526
          %3560 = vmatprep.subr.mxu0 %v3529
          %3561 = vmatpush1.msra.mxu0 %v3528
          %3562 = vmatprep.subr.mxu0 %v3531
          %3563 = vmatpush1.msra.mxu0 %v3530
          %3564 = vmatprep.subr.mxu0 %v3533
          %3565 = vmatpush1.msra.mxu0 %v3532
          %3566 = vmatprep.subr.mxu0 %v3535
          %3567 = vmatpush1.msra.mxu0 %v3534
          %3568 = vmatprep.subr.mxu0 %v3537
          %3569 = vmatpush1.msra.mxu0 %v3536
          %3570 = vmatprep.subr.mxu0 0.0
          %3571 = vmatpush1.msra.mxu0 0.0
          %3572 = vmatprep.subr.mxu0 0.0
          %3573 = vmatpush1.msra.mxu0 0.0
          %3574 = vmatprep.subr.mxu0 0.0
          %3575 = vmatpush1.msra.mxu0 0.0
          %3576 = vmatprep.subr.mxu0 0.0
          %3577 = vmatpush1.msra.mxu0 0.0
          %3578 = vmatprep.subr.mxu0 0.0
          %3579 = vmatpush1.msra.mxu0 0.0
          %3580 = vmatprep.subr.mxu0 0.0
          %3581 = vmatpush1.msra.mxu0 0.0
          %3582 = vmatprep.subr.mxu0 0.0
          %3583 = vmatpush1.msra.mxu0 0.0
          %3584 = vmatprep.subr.mxu0 0.0
          %3585 = vmatpush1.msra.mxu0 0.0
          %3586 = vmatprep.subr.mxu0 0.0
          %3587 = vmatpush1.msra.mxu0 0.0
          %3588 = vmatprep.subr.mxu0 0.0
          %3589 = vmatpush1.msra.mxu0 0.0
          %3590 = vmatprep.subr.mxu0 0.0
          %3591 = vmatpush1.msra.mxu0 0.0
          %3592 = vmatprep.subr.mxu0 0.0
          %3593 = vmatpush1.msra.mxu0 0.0
          %3594 = vmatprep.subr.mxu0 0.0
          %3595 = vmatpush1.msra.mxu0 0.0
          %3596 = vmatprep.subr.mxu0 0.0
          %3597 = vmatpush1.msra.mxu0 0.0
          %3598 = vmatprep.subr.mxu0 0.0
          %3599 = vmatpush1.msra.mxu0 0.0
          %3600 = vmatprep.subr.mxu0 0.0
          %3601 = vmatpush1.msra.mxu0 0.0
          %3602 = vmatprep.mubr.f32.mxu0 0.0
          %3603 = vmatmul.mubr.f32.gmra.mrb[0].mxu0 %v2506
          %v3604 = vpop.f32.mrb[0].mxu0
          %v3605 = vadd.f32 0.0, %v3604
          %v3606 = vpop.f32.mrb[0].mxu0
          %v3607 = vadd.f32 0.0, %v3606
          %3608 = vdwg.mxu0
          %v3611 = vcombine.low %v3605, %v3607
          %v3613 = vunpack.c.l.s4 1966171168
          %v3614 = vunpack.c.0.s8 %v3613
          %v3615 = vlaneseq
          %v3616 = vshrl.u32 %v3615, 7
          %v3617 = vsub.s32 %v3614, %v3616
          %v3618 = vrot.slane %v3611, %v3617
          %v3620 = vunpack.c.l.s4 1966171168
          %v3621 = vunpack.c.0.s8 %v3620
          %v3622 = vlaneseq
          %v3623 = vshrl.u32 %v3622, 7
          %v3624 = vsub.s32 %v3621, %v3623
          %v3625 = vrot.slane %v3618, %v3624
          %v3627 = vadd.f32 %v3505, %v3625
          %v3628 = vld [vmem:[#allocation17 + $0x900] sm:$0xff]
          %v3629 = vld [vmem:[#allocation17 + $0x908] sm:$0xff]
          %v3630 = vld [vmem:[#allocation17 + $0x910] sm:$0xff]
          %v3631 = vld [vmem:[#allocation17 + $0x918] sm:$0xff]
          %v3632 = vld [vmem:[#allocation17 + $0x920] sm:$0xff]
          %v3633 = vld [vmem:[#allocation17 + $0x928] sm:$0xff]
          %v3634 = vld [vmem:[#allocation17 + $0x930] sm:$0xff]
          %v3635 = vld [vmem:[#allocation17 + $0x938] sm:$0xff]
          %v3636 = vld [vmem:[#allocation17 + $0x940] sm:$0xff]
          %v3637 = vld [vmem:[#allocation17 + $0x948] sm:$0xff]
          %v3638 = vld [vmem:[#allocation17 + $0x950] sm:$0xff]
          %v3639 = vld [vmem:[#allocation17 + $0x958] sm:$0xff]
          %v3640 = vld [vmem:[#allocation17 + $0x960] sm:$0xff]
          %v3641 = vld [vmem:[#allocation17 + $0x968] sm:$0xff]
          %v3642 = vld [vmem:[#allocation17 + $0x970] sm:$0xff]
          %v3643 = vld [vmem:[#allocation17 + $0x978] sm:$0xff]
          %v3644 = vld [vmem:[#allocation17 + $0x980] sm:$0xff]
          %v3645 = vld [vmem:[#allocation17 + $0x988] sm:$0xff]
          %v3646 = vld [vmem:[#allocation17 + $0x990] sm:$0xff]
          %v3647 = vld [vmem:[#allocation17 + $0x998] sm:$0xff]
          %v3648 = vld [vmem:[#allocation17 + $0x9a0] sm:$0xff]
          %v3649 = vld [vmem:[#allocation17 + $0x9a8] sm:$0xff]
          %v3650 = vld [vmem:[#allocation17 + $0x9b0] sm:$0xff]
          %v3651 = vld [vmem:[#allocation17 + $0x9b8] sm:$0xff]
          %v3652 = vld [vmem:[#allocation17 + $0x9c0] sm:$0xff]
          %v3653 = vld [vmem:[#allocation17 + $0x9c8] sm:$0xff]
          %v3654 = vld [vmem:[#allocation17 + $0x9d0] sm:$0xff]
          %v3655 = vld [vmem:[#allocation17 + $0x9d8] sm:$0xff]
          %v3656 = vld [vmem:[#allocation17 + $0x9e0] sm:$0xff]
          %v3657 = vld [vmem:[#allocation17 + $0x9e8] sm:$0xff]
          %v3658 = vld [vmem:[#allocation17 + $0x9f0] sm:$0xff]
          %v3659 = vld [vmem:[#allocation17 + $0x9f8] sm:$0xff]
          %v3661 = vrot.slane %v2506, 1
          %3663 = vmatprep.subr.mxu0 %v3629
          %3664 = vmatpush1.msra.mxu0 %v3628
          %3665 = vmatprep.subr.mxu0 %v3631
          %3666 = vmatpush1.msra.mxu0 %v3630
          %3667 = vmatprep.subr.mxu0 %v3633
          %3668 = vmatpush1.msra.mxu0 %v3632
          %3669 = vmatprep.subr.mxu0 %v3635
          %3670 = vmatpush1.msra.mxu0 %v3634
          %3671 = vmatprep.subr.mxu0 %v3637
          %3672 = vmatpush1.msra.mxu0 %v3636
          %3673 = vmatprep.subr.mxu0 %v3639
          %3674 = vmatpush1.msra.mxu0 %v3638
          %3675 = vmatprep.subr.mxu0 %v3641
          %3676 = vmatpush1.msra.mxu0 %v3640
          %3677 = vmatprep.subr.mxu0 %v3643
          %3678 = vmatpush1.msra.mxu0 %v3642
          %3679 = vmatprep.subr.mxu0 %v3645
          %3680 = vmatpush1.msra.mxu0 %v3644
          %3681 = vmatprep.subr.mxu0 %v3647
          %3682 = vmatpush1.msra.mxu0 %v3646
          %3683 = vmatprep.subr.mxu0 %v3649
          %3684 = vmatpush1.msra.mxu0 %v3648
          %3685 = vmatprep.subr.mxu0 %v3651
          %3686 = vmatpush1.msra.mxu0 %v3650
          %3687 = vmatprep.subr.mxu0 %v3653
          %3688 = vmatpush1.msra.mxu0 %v3652
          %3689 = vmatprep.subr.mxu0 %v3655
          %3690 = vmatpush1.msra.mxu0 %v3654
          %3691 = vmatprep.subr.mxu0 %v3657
          %3692 = vmatpush1.msra.mxu0 %v3656
          %3693 = vmatprep.subr.mxu0 %v3659
          %3694 = vmatpush1.msra.mxu0 %v3658
          %3695 = vmatprep.subr.mxu0 0.0
          %3696 = vmatpush1.msra.mxu0 0.0
          %3697 = vmatprep.subr.mxu0 0.0
          %3698 = vmatpush1.msra.mxu0 0.0
          %3699 = vmatprep.subr.mxu0 0.0
          %3700 = vmatpush1.msra.mxu0 0.0
          %3701 = vmatprep.subr.mxu0 0.0
          %3702 = vmatpush1.msra.mxu0 0.0
          %3703 = vmatprep.subr.mxu0 0.0
          %3704 = vmatpush1.msra.mxu0 0.0
          %3705 = vmatprep.subr.mxu0 0.0
          %3706 = vmatpush1.msra.mxu0 0.0
          %3707 = vmatprep.subr.mxu0 0.0
          %3708 = vmatpush1.msra.mxu0 0.0
          %3709 = vmatprep.subr.mxu0 0.0
          %3710 = vmatpush1.msra.mxu0 0.0
          %3711 = vmatprep.subr.mxu0 0.0
          %3712 = vmatpush1.msra.mxu0 0.0
          %3713 = vmatprep.subr.mxu0 0.0
          %3714 = vmatpush1.msra.mxu0 0.0
          %3715 = vmatprep.subr.mxu0 0.0
          %3716 = vmatpush1.msra.mxu0 0.0
          %3717 = vmatprep.subr.mxu0 0.0
          %3718 = vmatpush1.msra.mxu0 0.0
          %3719 = vmatprep.subr.mxu0 0.0
          %3720 = vmatpush1.msra.mxu0 0.0
          %3721 = vmatprep.subr.mxu0 0.0
          %3722 = vmatpush1.msra.mxu0 0.0
          %3723 = vmatprep.subr.mxu0 0.0
          %3724 = vmatpush1.msra.mxu0 0.0
          %3725 = vmatprep.subr.mxu0 0.0
          %3726 = vmatpush1.msra.mxu0 0.0
          %3727 = vmatprep.mubr.f32.mxu0 0.0
          %3728 = vmatmul.mubr.f32.gmra.mrb[0].mxu0 %v3661
          %v3729 = vpop.f32.mrb[0].mxu0
          %v3730 = vadd.f32 0.0, %v3729
          %v3731 = vpop.f32.mrb[0].mxu0
          %v3732 = vadd.f32 0.0, %v3731
          %3733 = vdwg.mxu0
          %v3736 = vcombine.low %v3730, %v3732
          %v3738 = vunpack.c.l.s4 1966171168
          %v3739 = vunpack.c.0.s8 %v3738
          %v3740 = vlaneseq
          %v3741 = vshrl.u32 %v3740, 7
          %v3742 = vsub.s32 %v3739, %v3741
          %v3743 = vrot.slane %v3736, %v3742
          %v3745 = vunpack.c.l.s4 1966171168
          %v3746 = vunpack.c.0.s8 %v3745
          %v3747 = vlaneseq
          %v3748 = vshrl.u32 %v3747, 7
          %v3749 = vsub.s32 %v3746, %v3748
          %v3750 = vrot.slane %v3743, %v3749
          %v3752 = vadd.f32 %v3627, %v3750
          %v3753 = vld [vmem:[#allocation17 + $0xa00] sm:$0xff]
          %v3754 = vld [vmem:[#allocation17 + $0xa08] sm:$0xff]
          %v3755 = vld [vmem:[#allocation17 + $0xa10] sm:$0xff]
          %v3756 = vld [vmem:[#allocation17 + $0xa18] sm:$0xff]
          %v3757 = vld [vmem:[#allocation17 + $0xa20] sm:$0xff]
          %v3758 = vld [vmem:[#allocation17 + $0xa28] sm:$0xff]
          %v3759 = vld [vmem:[#allocation17 + $0xa30] sm:$0xff]
          %v3760 = vld [vmem:[#allocation17 + $0xa38] sm:$0xff]
          %v3761 = vld [vmem:[#allocation17 + $0xa40] sm:$0xff]
          %v3762 = vld [vmem:[#allocation17 + $0xa48] sm:$0xff]
          %v3763 = vld [vmem:[#allocation17 + $0xa50] sm:$0xff]
          %v3764 = vld [vmem:[#allocation17 + $0xa58] sm:$0xff]
          %v3765 = vld [vmem:[#allocation17 + $0xa60] sm:$0xff]
          %v3766 = vld [vmem:[#allocation17 + $0xa68] sm:$0xff]
          %v3767 = vld [vmem:[#allocation17 + $0xa70] sm:$0xff]
          %v3768 = vld [vmem:[#allocation17 + $0xa78] sm:$0xff]
          %v3769 = vld [vmem:[#allocation17 + $0xa80] sm:$0xff]
          %v3770 = vld [vmem:[#allocation17 + $0xa88] sm:$0xff]
          %v3771 = vld [vmem:[#allocation17 + $0xa90] sm:$0xff]
          %v3772 = vld [vmem:[#allocation17 + $0xa98] sm:$0xff]
          %v3773 = vld [vmem:[#allocation17 + $0xaa0] sm:$0xff]
          %v3774 = vld [vmem:[#allocation17 + $0xaa8] sm:$0xff]
          %v3775 = vld [vmem:[#allocation17 + $0xab0] sm:$0xff]
          %v3776 = vld [vmem:[#allocation17 + $0xab8] sm:$0xff]
          %v3777 = vld [vmem:[#allocation17 + $0xac0] sm:$0xff]
          %v3778 = vld [vmem:[#allocation17 + $0xac8] sm:$0xff]
          %v3779 = vld [vmem:[#allocation17 + $0xad0] sm:$0xff]
          %v3780 = vld [vmem:[#allocation17 + $0xad8] sm:$0xff]
          %v3781 = vld [vmem:[#allocation17 + $0xae0] sm:$0xff]
          %v3782 = vld [vmem:[#allocation17 + $0xae8] sm:$0xff]
          %v3783 = vld [vmem:[#allocation17 + $0xaf0] sm:$0xff]
          %v3784 = vld [vmem:[#allocation17 + $0xaf8] sm:$0xff]
          %v3785 = vrot.slane %v2506, 2
          %3787 = vmatprep.subr.mxu0 %v3754
          %3788 = vmatpush1.msra.mxu0 %v3753
          %3789 = vmatprep.subr.mxu0 %v3756
          %3790 = vmatpush1.msra.mxu0 %v3755
          %3791 = vmatprep.subr.mxu0 %v3758
          %3792 = vmatpush1.msra.mxu0 %v3757
          %3793 = vmatprep.subr.mxu0 %v3760
          %3794 = vmatpush1.msra.mxu0 %v3759
          %3795 = vmatprep.subr.mxu0 %v3762
          %3796 = vmatpush1.msra.mxu0 %v3761
          %3797 = vmatprep.subr.mxu0 %v3764
          %3798 = vmatpush1.msra.mxu0 %v3763
          %3799 = vmatprep.subr.mxu0 %v3766
          %3800 = vmatpush1.msra.mxu0 %v3765
          %3801 = vmatprep.subr.mxu0 %v3768
          %3802 = vmatpush1.msra.mxu0 %v3767
          %3803 = vmatprep.subr.mxu0 %v3770
          %3804 = vmatpush1.msra.mxu0 %v3769
          %3805 = vmatprep.subr.mxu0 %v3772
          %3806 = vmatpush1.msra.mxu0 %v3771
          %3807 = vmatprep.subr.mxu0 %v3774
          %3808 = vmatpush1.msra.mxu0 %v3773
          %3809 = vmatprep.subr.mxu0 %v3776
          %3810 = vmatpush1.msra.mxu0 %v3775
          %3811 = vmatprep.subr.mxu0 %v3778
          %3812 = vmatpush1.msra.mxu0 %v3777
          %3813 = vmatprep.subr.mxu0 %v3780
          %3814 = vmatpush1.msra.mxu0 %v3779
          %3815 = vmatprep.subr.mxu0 %v3782
          %3816 = vmatpush1.msra.mxu0 %v3781
          %3817 = vmatprep.subr.mxu0 %v3784
          %3818 = vmatpush1.msra.mxu0 %v3783
          %3819 = vmatprep.subr.mxu0 0.0
          %3820 = vmatpush1.msra.mxu0 0.0
          %3821 = vmatprep.subr.mxu0 0.0
          %3822 = vmatpush1.msra.mxu0 0.0
          %3823 = vmatprep.subr.mxu0 0.0
          %3824 = vmatpush1.msra.mxu0 0.0
          %3825 = vmatprep.subr.mxu0 0.0
          %3826 = vmatpush1.msra.mxu0 0.0
          %3827 = vmatprep.subr.mxu0 0.0
          %3828 = vmatpush1.msra.mxu0 0.0
          %3829 = vmatprep.subr.mxu0 0.0
          %3830 = vmatpush1.msra.mxu0 0.0
          %3831 = vmatprep.subr.mxu0 0.0
          %3832 = vmatpush1.msra.mxu0 0.0
          %3833 = vmatprep.subr.mxu0 0.0
          %3834 = vmatpush1.msra.mxu0 0.0
          %3835 = vmatprep.subr.mxu0 0.0
          %3836 = vmatpush1.msra.mxu0 0.0
          %3837 = vmatprep.subr.mxu0 0.0
          %3838 = vmatpush1.msra.mxu0 0.0
          %3839 = vmatprep.subr.mxu0 0.0
          %3840 = vmatpush1.msra.mxu0 0.0
          %3841 = vmatprep.subr.mxu0 0.0
          %3842 = vmatpush1.msra.mxu0 0.0
          %3843 = vmatprep.subr.mxu0 0.0
          %3844 = vmatpush1.msra.mxu0 0.0
          %3845 = vmatprep.subr.mxu0 0.0
          %3846 = vmatpush1.msra.mxu0 0.0
          %3847 = vmatprep.subr.mxu0 0.0
          %3848 = vmatpush1.msra.mxu0 0.0
          %3849 = vmatprep.subr.mxu0 0.0
          %3850 = vmatpush1.msra.mxu0 0.0
          %3851 = vmatprep.mubr.f32.mxu0 0.0
          %3852 = vmatmul.mubr.f32.gmra.mrb[0].mxu0 %v3785
          %v3853 = vpop.f32.mrb[0].mxu0
          %v3854 = vadd.f32 0.0, %v3853
          %v3855 = vpop.f32.mrb[0].mxu0
          %v3856 = vadd.f32 0.0, %v3855
          %3857 = vdwg.mxu0
          %v3860 = vcombine.low %v3854, %v3856
          %v3862 = vunpack.c.l.s4 1966171168
          %v3863 = vunpack.c.0.s8 %v3862
          %v3864 = vlaneseq
          %v3865 = vshrl.u32 %v3864, 7
          %v3866 = vsub.s32 %v3863, %v3865
          %v3867 = vrot.slane %v3860, %v3866
          %v3869 = vunpack.c.l.s4 1966171168
          %v3870 = vunpack.c.0.s8 %v3869
          %v3871 = vlaneseq
          %v3872 = vshrl.u32 %v3871, 7
          %v3873 = vsub.s32 %v3870, %v3872
          %v3874 = vrot.slane %v3867, %v3873
          %v3876 = vadd.f32 %v3752, %v3874
          %v3877 = vld [vmem:[#allocation17 + $0xb00] sm:$0xff]
          %v3878 = vld [vmem:[#allocation17 + $0xb08] sm:$0xff]
          %v3879 = vld [vmem:[#allocation17 + $0xb10] sm:$0xff]
          %v3880 = vld [vmem:[#allocation17 + $0xb18] sm:$0xff]
          %v3881 = vld [vmem:[#allocation17 + $0xb20] sm:$0xff]
          %v3882 = vld [vmem:[#allocation17 + $0xb28] sm:$0xff]
          %v3883 = vld [vmem:[#allocation17 + $0xb30] sm:$0xff]
          %v3884 = vld [vmem:[#allocation17 + $0xb38] sm:$0xff]
          %v3885 = vld [vmem:[#allocation17 + $0xb40] sm:$0xff]
          %v3886 = vld [vmem:[#allocation17 + $0xb48] sm:$0xff]
          %v3887 = vld [vmem:[#allocation17 + $0xb50] sm:$0xff]
          %v3888 = vld [vmem:[#allocation17 + $0xb58] sm:$0xff]
          %v3889 = vld [vmem:[#allocation17 + $0xb60] sm:$0xff]
          %v3890 = vld [vmem:[#allocation17 + $0xb68] sm:$0xff]
          %v3891 = vld [vmem:[#allocation17 + $0xb70] sm:$0xff]
          %v3892 = vld [vmem:[#allocation17 + $0xb78] sm:$0xff]
          %v3893 = vld [vmem:[#allocation17 + $0xb80] sm:$0xff]
          %v3894 = vld [vmem:[#allocation17 + $0xb88] sm:$0xff]
          %v3895 = vld [vmem:[#allocation17 + $0xb90] sm:$0xff]
          %v3896 = vld [vmem:[#allocation17 + $0xb98] sm:$0xff]
          %v3897 = vld [vmem:[#allocation17 + $0xba0] sm:$0xff]
          %v3898 = vld [vmem:[#allocation17 + $0xba8] sm:$0xff]
          %v3899 = vld [vmem:[#allocation17 + $0xbb0] sm:$0xff]
          %v3900 = vld [vmem:[#allocation17 + $0xbb8] sm:$0xff]
          %v3901 = vld [vmem:[#allocation17 + $0xbc0] sm:$0xff]
          %v3902 = vld [vmem:[#allocation17 + $0xbc8] sm:$0xff]
          %v3903 = vld [vmem:[#allocation17 + $0xbd0] sm:$0xff]
          %v3904 = vld [vmem:[#allocation17 + $0xbd8] sm:$0xff]
          %v3905 = vld [vmem:[#allocation17 + $0xbe0] sm:$0xff]
          %v3906 = vld [vmem:[#allocation17 + $0xbe8] sm:$0xff]
          %v3907 = vld [vmem:[#allocation17 + $0xbf0] sm:$0xff]
          %v3908 = vld [vmem:[#allocation17 + $0xbf8] sm:$0xff]
          %v3909 = vrot.slane %v2506, 3
          %3911 = vmatprep.subr.mxu0 %v3878
          %3912 = vmatpush1.msra.mxu0 %v3877
          %3913 = vmatprep.subr.mxu0 %v3880
          %3914 = vmatpush1.msra.mxu0 %v3879
          %3915 = vmatprep.subr.mxu0 %v3882
          %3916 = vmatpush1.msra.mxu0 %v3881
          %3917 = vmatprep.subr.mxu0 %v3884
          %3918 = vmatpush1.msra.mxu0 %v3883
          %3919 = vmatprep.subr.mxu0 %v3886
          %3920 = vmatpush1.msra.mxu0 %v3885
          %3921 = vmatprep.subr.mxu0 %v3888
          %3922 = vmatpush1.msra.mxu0 %v3887
          %3923 = vmatprep.subr.mxu0 %v3890
          %3924 = vmatpush1.msra.mxu0 %v3889
          %3925 = vmatprep.subr.mxu0 %v3892
          %3926 = vmatpush1.msra.mxu0 %v3891
          %3927 = vmatprep.subr.mxu0 %v3894
          %3928 = vmatpush1.msra.mxu0 %v3893
          %3929 = vmatprep.subr.mxu0 %v3896
          %3930 = vmatpush1.msra.mxu0 %v3895
          %3931 = vmatprep.subr.mxu0 %v3898
          %3932 = vmatpush1.msra.mxu0 %v3897
          %3933 = vmatprep.subr.mxu0 %v3900
          %3934 = vmatpush1.msra.mxu0 %v3899
          %3935 = vmatprep.subr.mxu0 %v3902
          %3936 = vmatpush1.msra.mxu0 %v3901
          %3937 = vmatprep.subr.mxu0 %v3904
          %3938 = vmatpush1.msra.mxu0 %v3903
          %3939 = vmatprep.subr.mxu0 %v3906
          %3940 = vmatpush1.msra.mxu0 %v3905
          %3941 = vmatprep.subr.mxu0 %v3908
          %3942 = vmatpush1.msra.mxu0 %v3907
          %3943 = vmatprep.subr.mxu0 0.0
          %3944 = vmatpush1.msra.mxu0 0.0
          %3945 = vmatprep.subr.mxu0 0.0
          %3946 = vmatpush1.msra.mxu0 0.0
          %3947 = vmatprep.subr.mxu0 0.0
          %3948 = vmatpush1.msra.mxu0 0.0
          %3949 = vmatprep.subr.mxu0 0.0
          %3950 = vmatpush1.msra.mxu0 0.0
          %3951 = vmatprep.subr.mxu0 0.0
          %3952 = vmatpush1.msra.mxu0 0.0
          %3953 = vmatprep.subr.mxu0 0.0
          %3954 = vmatpush1.msra.mxu0 0.0
          %3955 = vmatprep.subr.mxu0 0.0
          %3956 = vmatpush1.msra.mxu0 0.0
          %3957 = vmatprep.subr.mxu0 0.0
          %3958 = vmatpush1.msra.mxu0 0.0
          %3959 = vmatprep.subr.mxu0 0.0
          %3960 = vmatpush1.msra.mxu0 0.0
          %3961 = vmatprep.subr.mxu0 0.0
          %3962 = vmatpush1.msra.mxu0 0.0
          %3963 = vmatprep.subr.mxu0 0.0
          %3964 = vmatpush1.msra.mxu0 0.0
          %3965 = vmatprep.subr.mxu0 0.0
          %3966 = vmatpush1.msra.mxu0 0.0
          %3967 = vmatprep.subr.mxu0 0.0
          %3968 = vmatpush1.msra.mxu0 0.0
          %3969 = vmatprep.subr.mxu0 0.0
          %3970 = vmatpush1.msra.mxu0 0.0
          %3971 = vmatprep.subr.mxu0 0.0
          %3972 = vmatpush1.msra.mxu0 0.0
          %3973 = vmatprep.subr.mxu0 0.0
          %3974 = vmatpush1.msra.mxu0 0.0
          %3975 = vmatprep.mubr.f32.mxu0 0.0
          %3976 = vmatmul.mubr.f32.gmra.mrb[0].mxu0 %v3909
          %v3977 = vpop.f32.mrb[0].mxu0
          %v3978 = vadd.f32 0.0, %v3977
          %v3979 = vpop.f32.mrb[0].mxu0
          %v3980 = vadd.f32 0.0, %v3979
          %3981 = vdwg.mxu0
          %v3984 = vcombine.low %v3978, %v3980
          %v3986 = vunpack.c.l.s4 1966171168
          %v3987 = vunpack.c.0.s8 %v3986
          %v3988 = vlaneseq
          %v3989 = vshrl.u32 %v3988, 7
          %v3990 = vsub.s32 %v3987, %v3989
          %v3991 = vrot.slane %v3984, %v3990
          %v3993 = vunpack.c.l.s4 1966171168
          %v3994 = vunpack.c.0.s8 %v3993
          %v3995 = vlaneseq
          %v3996 = vshrl.u32 %v3995, 7
          %v3997 = vsub.s32 %v3994, %v3996
          %v3998 = vrot.slane %v3991, %v3997
          %v4000 = vadd.f32 %v3876, %v3998
          %v4001 = vld [vmem:[#allocation17 + $0xc00] sm:$0xff]
          %v4002 = vld [vmem:[#allocation17 + $0xc08] sm:$0xff]
          %v4003 = vld [vmem:[#allocation17 + $0xc10] sm:$0xff]
          %v4004 = vld [vmem:[#allocation17 + $0xc18] sm:$0xff]
          %v4005 = vld [vmem:[#allocation17 + $0xc20] sm:$0xff]
          %v4006 = vld [vmem:[#allocation17 + $0xc28] sm:$0xff]
          %v4007 = vld [vmem:[#allocation17 + $0xc30] sm:$0xff]
          %v4008 = vld [vmem:[#allocation17 + $0xc38] sm:$0xff]
          %v4009 = vld [vmem:[#allocation17 + $0xc40] sm:$0xff]
          %v4010 = vld [vmem:[#allocation17 + $0xc48] sm:$0xff]
          %v4011 = vld [vmem:[#allocation17 + $0xc50] sm:$0xff]
          %v4012 = vld [vmem:[#allocation17 + $0xc58] sm:$0xff]
          %v4013 = vld [vmem:[#allocation17 + $0xc60] sm:$0xff]
          %v4014 = vld [vmem:[#allocation17 + $0xc68] sm:$0xff]
          %v4015 = vld [vmem:[#allocation17 + $0xc70] sm:$0xff]
          %v4016 = vld [vmem:[#allocation17 + $0xc78] sm:$0xff]
          %v4017 = vld [vmem:[#allocation17 + $0xc80] sm:$0xff]
          %v4018 = vld [vmem:[#allocation17 + $0xc88] sm:$0xff]
          %v4019 = vld [vmem:[#allocation17 + $0xc90] sm:$0xff]
          %v4020 = vld [vmem:[#allocation17 + $0xc98] sm:$0xff]
          %v4021 = vld [vmem:[#allocation17 + $0xca0] sm:$0xff]
          %v4022 = vld [vmem:[#allocation17 + $0xca8] sm:$0xff]
          %v4023 = vld [vmem:[#allocation17 + $0xcb0] sm:$0xff]
          %v4024 = vld [vmem:[#allocation17 + $0xcb8] sm:$0xff]
          %v4025 = vld [vmem:[#allocation17 + $0xcc0] sm:$0xff]
          %v4026 = vld [vmem:[#allocation17 + $0xcc8] sm:$0xff]
          %v4027 = vld [vmem:[#allocation17 + $0xcd0] sm:$0xff]
          %v4028 = vld [vmem:[#allocation17 + $0xcd8] sm:$0xff]
          %v4029 = vld [vmem:[#allocation17 + $0xce0] sm:$0xff]
          %v4030 = vld [vmem:[#allocation17 + $0xce8] sm:$0xff]
          %v4031 = vld [vmem:[#allocation17 + $0xcf0] sm:$0xff]
          %v4032 = vld [vmem:[#allocation17 + $0xcf8] sm:$0xff]
          %v4033 = vrot.slane %v2506, 4
          %4035 = vmatprep.subr.mxu0 %v4002
          %4036 = vmatpush1.msra.mxu0 %v4001
          %4037 = vmatprep.subr.mxu0 %v4004
          %4038 = vmatpush1.msra.mxu0 %v4003
          %4039 = vmatprep.subr.mxu0 %v4006
          %4040 = vmatpush1.msra.mxu0 %v4005
          %4041 = vmatprep.subr.mxu0 %v4008
          %4042 = vmatpush1.msra.mxu0 %v4007
          %4043 = vmatprep.subr.mxu0 %v4010
          %4044 = vmatpush1.msra.mxu0 %v4009
          %4045 = vmatprep.subr.mxu0 %v4012
          %4046 = vmatpush1.msra.mxu0 %v4011
          %4047 = vmatprep.subr.mxu0 %v4014
          %4048 = vmatpush1.msra.mxu0 %v4013
          %4049 = vmatprep.subr.mxu0 %v4016
          %4050 = vmatpush1.msra.mxu0 %v4015
          %4051 = vmatprep.subr.mxu0 %v4018
          %4052 = vmatpush1.msra.mxu0 %v4017
          %4053 = vmatprep.subr.mxu0 %v4020
          %4054 = vmatpush1.msra.mxu0 %v4019
          %4055 = vmatprep.subr.mxu0 %v4022
          %4056 = vmatpush1.msra.mxu0 %v4021
          %4057 = vmatprep.subr.mxu0 %v4024
          %4058 = vmatpush1.msra.mxu0 %v4023
          %4059 = vmatprep.subr.mxu0 %v4026
          %4060 = vmatpush1.msra.mxu0 %v4025
          %4061 = vmatprep.subr.mxu0 %v4028
          %4062 = vmatpush1.msra.mxu0 %v4027
          %4063 = vmatprep.subr.mxu0 %v4030
          %4064 = vmatpush1.msra.mxu0 %v4029
          %4065 = vmatprep.subr.mxu0 %v4032
          %4066 = vmatpush1.msra.mxu0 %v4031
          %4067 = vmatprep.subr.mxu0 0.0
          %4068 = vmatpush1.msra.mxu0 0.0
          %4069 = vmatprep.subr.mxu0 0.0
          %4070 = vmatpush1.msra.mxu0 0.0
          %4071 = vmatprep.subr.mxu0 0.0
          %4072 = vmatpush1.msra.mxu0 0.0
          %4073 = vmatprep.subr.mxu0 0.0
          %4074 = vmatpush1.msra.mxu0 0.0
          %4075 = vmatprep.subr.mxu0 0.0
          %4076 = vmatpush1.msra.mxu0 0.0
          %4077 = vmatprep.subr.mxu0 0.0
          %4078 = vmatpush1.msra.mxu0 0.0
          %4079 = vmatprep.subr.mxu0 0.0
          %4080 = vmatpush1.msra.mxu0 0.0
          %4081 = vmatprep.subr.mxu0 0.0
          %4082 = vmatpush1.msra.mxu0 0.0
          %4083 = vmatprep.subr.mxu0 0.0
          %4084 = vmatpush1.msra.mxu0 0.0
          %4085 = vmatprep.subr.mxu0 0.0
          %4086 = vmatpush1.msra.mxu0 0.0
          %4087 = vmatprep.subr.mxu0 0.0
          %4088 = vmatpush1.msra.mxu0 0.0
          %4089 = vmatprep.subr.mxu0 0.0
          %4090 = vmatpush1.msra.mxu0 0.0
          %4091 = vmatprep.subr.mxu0 0.0
          %4092 = vmatpush1.msra.mxu0 0.0
          %4093 = vmatprep.subr.mxu0 0.0
          %4094 = vmatpush1.msra.mxu0 0.0
          %4095 = vmatprep.subr.mxu0 0.0
          %4096 = vmatpush1.msra.mxu0 0.0
          %4097 = vmatprep.subr.mxu0 0.0
          %4098 = vmatpush1.msra.mxu0 0.0
          %4099 = vmatprep.mubr.f32.mxu0 0.0
          %4100 = vmatmul.mubr.f32.gmra.mrb[0].mxu0 %v4033
          %v4101 = vpop.f32.mrb[0].mxu0
          %v4102 = vadd.f32 0.0, %v4101
          %v4103 = vpop.f32.mrb[0].mxu0
          %v4104 = vadd.f32 0.0, %v4103
          %4105 = vdwg.mxu0
          %v4108 = vcombine.low %v4102, %v4104
          %v4110 = vunpack.c.l.s4 1966171168
          %v4111 = vunpack.c.0.s8 %v4110
          %v4112 = vlaneseq
          %v4113 = vshrl.u32 %v4112, 7
          %v4114 = vsub.s32 %v4111, %v4113
          %v4115 = vrot.slane %v4108, %v4114
          %v4117 = vunpack.c.l.s4 1966171168
          %v4118 = vunpack.c.0.s8 %v4117
          %v4119 = vlaneseq
          %v4120 = vshrl.u32 %v4119, 7
          %v4121 = vsub.s32 %v4118, %v4120
          %v4122 = vrot.slane %v4115, %v4121
          %v4124 = vadd.f32 %v4000, %v4122
          %v4125 = vld [vmem:[#allocation17 + $0xd00] sm:$0xff]
          %v4126 = vld [vmem:[#allocation17 + $0xd08] sm:$0xff]
          %v4127 = vld [vmem:[#allocation17 + $0xd10] sm:$0xff]
          %v4128 = vld [vmem:[#allocation17 + $0xd18] sm:$0xff]
          %v4129 = vld [vmem:[#allocation17 + $0xd20] sm:$0xff]
          %v4130 = vld [vmem:[#allocation17 + $0xd28] sm:$0xff]
          %v4131 = vld [vmem:[#allocation17 + $0xd30] sm:$0xff]
          %v4132 = vld [vmem:[#allocation17 + $0xd38] sm:$0xff]
          %v4133 = vld [vmem:[#allocation17 + $0xd40] sm:$0xff]
          %v4134 = vld [vmem:[#allocation17 + $0xd48] sm:$0xff]
          %v4135 = vld [vmem:[#allocation17 + $0xd50] sm:$0xff]
          %v4136 = vld [vmem:[#allocation17 + $0xd58] sm:$0xff]
          %v4137 = vld [vmem:[#allocation17 + $0xd60] sm:$0xff]
          %v4138 = vld [vmem:[#allocation17 + $0xd68] sm:$0xff]
          %v4139 = vld [vmem:[#allocation17 + $0xd70] sm:$0xff]
          %v4140 = vld [vmem:[#allocation17 + $0xd78] sm:$0xff]
          %v4141 = vld [vmem:[#allocation17 + $0xd80] sm:$0xff]
          %v4142 = vld [vmem:[#allocation17 + $0xd88] sm:$0xff]
          %v4143 = vld [vmem:[#allocation17 + $0xd90] sm:$0xff]
          %v4144 = vld [vmem:[#allocation17 + $0xd98] sm:$0xff]
          %v4145 = vld [vmem:[#allocation17 + $0xda0] sm:$0xff]
          %v4146 = vld [vmem:[#allocation17 + $0xda8] sm:$0xff]
          %v4147 = vld [vmem:[#allocation17 + $0xdb0] sm:$0xff]
          %v4148 = vld [vmem:[#allocation17 + $0xdb8] sm:$0xff]
          %v4149 = vld [vmem:[#allocation17 + $0xdc0] sm:$0xff]
          %v4150 = vld [vmem:[#allocation17 + $0xdc8] sm:$0xff]
          %v4151 = vld [vmem:[#allocation17 + $0xdd0] sm:$0xff]
          %v4152 = vld [vmem:[#allocation17 + $0xdd8] sm:$0xff]
          %v4153 = vld [vmem:[#allocation17 + $0xde0] sm:$0xff]
          %v4154 = vld [vmem:[#allocation17 + $0xde8] sm:$0xff]
          %v4155 = vld [vmem:[#allocation17 + $0xdf0] sm:$0xff]
          %v4156 = vld [vmem:[#allocation17 + $0xdf8] sm:$0xff]
          %v4157 = vrot.slane %v2506, 5
          %4159 = vmatprep.subr.mxu0 %v4126
          %4160 = vmatpush1.msra.mxu0 %v4125
          %4161 = vmatprep.subr.mxu0 %v4128
          %4162 = vmatpush1.msra.mxu0 %v4127
          %4163 = vmatprep.subr.mxu0 %v4130
          %4164 = vmatpush1.msra.mxu0 %v4129
          %4165 = vmatprep.subr.mxu0 %v4132
          %4166 = vmatpush1.msra.mxu0 %v4131
          %4167 = vmatprep.subr.mxu0 %v4134
          %4168 = vmatpush1.msra.mxu0 %v4133
          %4169 = vmatprep.subr.mxu0 %v4136
          %4170 = vmatpush1.msra.mxu0 %v4135
          %4171 = vmatprep.subr.mxu0 %v4138
          %4172 = vmatpush1.msra.mxu0 %v4137
          %4173 = vmatprep.subr.mxu0 %v4140
          %4174 = vmatpush1.msra.mxu0 %v4139
          %4175 = vmatprep.subr.mxu0 %v4142
          %4176 = vmatpush1.msra.mxu0 %v4141
          %4177 = vmatprep.subr.mxu0 %v4144
          %4178 = vmatpush1.msra.mxu0 %v4143
          %4179 = vmatprep.subr.mxu0 %v4146
          %4180 = vmatpush1.msra.mxu0 %v4145
          %4181 = vmatprep.subr.mxu0 %v4148
          %4182 = vmatpush1.msra.mxu0 %v4147
          %4183 = vmatprep.subr.mxu0 %v4150
          %4184 = vmatpush1.msra.mxu0 %v4149
          %4185 = vmatprep.subr.mxu0 %v4152
          %4186 = vmatpush1.msra.mxu0 %v4151
          %4187 = vmatprep.subr.mxu0 %v4154
          %4188 = vmatpush1.msra.mxu0 %v4153
          %4189 = vmatprep.subr.mxu0 %v4156
          %4190 = vmatpush1.msra.mxu0 %v4155
          %4191 = vmatprep.subr.mxu0 0.0
          %4192 = vmatpush1.msra.mxu0 0.0
          %4193 = vmatprep.subr.mxu0 0.0
          %4194 = vmatpush1.msra.mxu0 0.0
          %4195 = vmatprep.subr.mxu0 0.0
          %4196 = vmatpush1.msra.mxu0 0.0
          %4197 = vmatprep.subr.mxu0 0.0
          %4198 = vmatpush1.msra.mxu0 0.0
          %4199 = vmatprep.subr.mxu0 0.0
          %4200 = vmatpush1.msra.mxu0 0.0
          %4201 = vmatprep.subr.mxu0 0.0
          %4202 = vmatpush1.msra.mxu0 0.0
          %4203 = vmatprep.subr.mxu0 0.0
          %4204 = vmatpush1.msra.mxu0 0.0
          %4205 = vmatprep.subr.mxu0 0.0
          %4206 = vmatpush1.msra.mxu0 0.0
          %4207 = vmatprep.subr.mxu0 0.0
          %4208 = vmatpush1.msra.mxu0 0.0
          %4209 = vmatprep.subr.mxu0 0.0
          %4210 = vmatpush1.msra.mxu0 0.0
          %4211 = vmatprep.subr.mxu0 0.0
          %4212 = vmatpush1.msra.mxu0 0.0
          %4213 = vmatprep.subr.mxu0 0.0
          %4214 = vmatpush1.msra.mxu0 0.0
          %4215 = vmatprep.subr.mxu0 0.0
          %4216 = vmatpush1.msra.mxu0 0.0
          %4217 = vmatprep.subr.mxu0 0.0
          %4218 = vmatpush1.msra.mxu0 0.0
          %4219 = vmatprep.subr.mxu0 0.0
          %4220 = vmatpush1.msra.mxu0 0.0
          %4221 = vmatprep.subr.mxu0 0.0
          %4222 = vmatpush1.msra.mxu0 0.0
          %4223 = vmatprep.mubr.f32.mxu0 0.0
          %4224 = vmatmul.mubr.f32.gmra.mrb[0].mxu0 %v4157
          %v4225 = vpop.f32.mrb[0].mxu0
          %v4226 = vadd.f32 0.0, %v4225
          %v4227 = vpop.f32.mrb[0].mxu0
          %v4228 = vadd.f32 0.0, %v4227
          %4229 = vdwg.mxu0
          %v4232 = vcombine.low %v4226, %v4228
          %v4234 = vunpack.c.l.s4 1966171168
          %v4235 = vunpack.c.0.s8 %v4234
          %v4236 = vlaneseq
          %v4237 = vshrl.u32 %v4236, 7
          %v4238 = vsub.s32 %v4235, %v4237
          %v4239 = vrot.slane %v4232, %v4238
          %v4241 = vunpack.c.l.s4 1966171168
          %v4242 = vunpack.c.0.s8 %v4241
          %v4243 = vlaneseq
          %v4244 = vshrl.u32 %v4243, 7
          %v4245 = vsub.s32 %v4242, %v4244
          %v4246 = vrot.slane %v4239, %v4245
          %v4248 = vadd.f32 %v4124, %v4246
          %v4249 = vld [vmem:[#allocation17 + $0xe00] sm:$0xff]
          %v4250 = vld [vmem:[#allocation17 + $0xe08] sm:$0xff]
          %v4251 = vld [vmem:[#allocation17 + $0xe10] sm:$0xff]
          %v4252 = vld [vmem:[#allocation17 + $0xe18] sm:$0xff]
          %v4253 = vld [vmem:[#allocation17 + $0xe20] sm:$0xff]
          %v4254 = vld [vmem:[#allocation17 + $0xe28] sm:$0xff]
          %v4255 = vld [vmem:[#allocation17 + $0xe30] sm:$0xff]
          %v4256 = vld [vmem:[#allocation17 + $0xe38] sm:$0xff]
          %v4257 = vld [vmem:[#allocation17 + $0xe40] sm:$0xff]
          %v4258 = vld [vmem:[#allocation17 + $0xe48] sm:$0xff]
          %v4259 = vld [vmem:[#allocation17 + $0xe50] sm:$0xff]
          %v4260 = vld [vmem:[#allocation17 + $0xe58] sm:$0xff]
          %v4261 = vld [vmem:[#allocation17 + $0xe60] sm:$0xff]
          %v4262 = vld [vmem:[#allocation17 + $0xe68] sm:$0xff]
          %v4263 = vld [vmem:[#allocation17 + $0xe70] sm:$0xff]
          %v4264 = vld [vmem:[#allocation17 + $0xe78] sm:$0xff]
          %v4265 = vld [vmem:[#allocation17 + $0xe80] sm:$0xff]
          %v4266 = vld [vmem:[#allocation17 + $0xe88] sm:$0xff]
          %v4267 = vld [vmem:[#allocation17 + $0xe90] sm:$0xff]
          %v4268 = vld [vmem:[#allocation17 + $0xe98] sm:$0xff]
          %v4269 = vld [vmem:[#allocation17 + $0xea0] sm:$0xff]
          %v4270 = vld [vmem:[#allocation17 + $0xea8] sm:$0xff]
          %v4271 = vld [vmem:[#allocation17 + $0xeb0] sm:$0xff]
          %v4272 = vld [vmem:[#allocation17 + $0xeb8] sm:$0xff]
          %v4273 = vld [vmem:[#allocation17 + $0xec0] sm:$0xff]
          %v4274 = vld [vmem:[#allocation17 + $0xec8] sm:$0xff]
          %v4275 = vld [vmem:[#allocation17 + $0xed0] sm:$0xff]
          %v4276 = vld [vmem:[#allocation17 + $0xed8] sm:$0xff]
          %v4277 = vld [vmem:[#allocation17 + $0xee0] sm:$0xff]
          %v4278 = vld [vmem:[#allocation17 + $0xee8] sm:$0xff]
          %v4279 = vld [vmem:[#allocation17 + $0xef0] sm:$0xff]
          %v4280 = vld [vmem:[#allocation17 + $0xef8] sm:$0xff]
          %v4281 = vrot.slane %v2506, 6
          %4283 = vmatprep.subr.mxu0 %v4250
          %4284 = vmatpush1.msra.mxu0 %v4249
          %4285 = vmatprep.subr.mxu0 %v4252
          %4286 = vmatpush1.msra.mxu0 %v4251
          %4287 = vmatprep.subr.mxu0 %v4254
          %4288 = vmatpush1.msra.mxu0 %v4253
          %4289 = vmatprep.subr.mxu0 %v4256
          %4290 = vmatpush1.msra.mxu0 %v4255
          %4291 = vmatprep.subr.mxu0 %v4258
          %4292 = vmatpush1.msra.mxu0 %v4257
          %4293 = vmatprep.subr.mxu0 %v4260
          %4294 = vmatpush1.msra.mxu0 %v4259
          %4295 = vmatprep.subr.mxu0 %v4262
          %4296 = vmatpush1.msra.mxu0 %v4261
          %4297 = vmatprep.subr.mxu0 %v4264
          %4298 = vmatpush1.msra.mxu0 %v4263
          %4299 = vmatprep.subr.mxu0 %v4266
          %4300 = vmatpush1.msra.mxu0 %v4265
          %4301 = vmatprep.subr.mxu0 %v4268
          %4302 = vmatpush1.msra.mxu0 %v4267
          %4303 = vmatprep.subr.mxu0 %v4270
          %4304 = vmatpush1.msra.mxu0 %v4269
          %4305 = vmatprep.subr.mxu0 %v4272
          %4306 = vmatpush1.msra.mxu0 %v4271
          %4307 = vmatprep.subr.mxu0 %v4274
          %4308 = vmatpush1.msra.mxu0 %v4273
          %4309 = vmatprep.subr.mxu0 %v4276
          %4310 = vmatpush1.msra.mxu0 %v4275
          %4311 = vmatprep.subr.mxu0 %v4278
          %4312 = vmatpush1.msra.mxu0 %v4277
          %4313 = vmatprep.subr.mxu0 %v4280
          %4314 = vmatpush1.msra.mxu0 %v4279
          %4315 = vmatprep.subr.mxu0 0.0
          %4316 = vmatpush1.msra.mxu0 0.0
          %4317 = vmatprep.subr.mxu0 0.0
          %4318 = vmatpush1.msra.mxu0 0.0
          %4319 = vmatprep.subr.mxu0 0.0
          %4320 = vmatpush1.msra.mxu0 0.0
          %4321 = vmatprep.subr.mxu0 0.0
          %4322 = vmatpush1.msra.mxu0 0.0
          %4323 = vmatprep.subr.mxu0 0.0
          %4324 = vmatpush1.msra.mxu0 0.0
          %4325 = vmatprep.subr.mxu0 0.0
          %4326 = vmatpush1.msra.mxu0 0.0
          %4327 = vmatprep.subr.mxu0 0.0
          %4328 = vmatpush1.msra.mxu0 0.0
          %4329 = vmatprep.subr.mxu0 0.0
          %4330 = vmatpush1.msra.mxu0 0.0
          %4331 = vmatprep.subr.mxu0 0.0
          %4332 = vmatpush1.msra.mxu0 0.0
          %4333 = vmatprep.subr.mxu0 0.0
          %4334 = vmatpush1.msra.mxu0 0.0
          %4335 = vmatprep.subr.mxu0 0.0
          %4336 = vmatpush1.msra.mxu0 0.0
          %4337 = vmatprep.subr.mxu0 0.0
          %4338 = vmatpush1.msra.mxu0 0.0
          %4339 = vmatprep.subr.mxu0 0.0
          %4340 = vmatpush1.msra.mxu0 0.0
          %4341 = vmatprep.subr.mxu0 0.0
          %4342 = vmatpush1.msra.mxu0 0.0
          %4343 = vmatprep.subr.mxu0 0.0
          %4344 = vmatpush1.msra.mxu0 0.0
          %4345 = vmatprep.subr.mxu0 0.0
          %4346 = vmatpush1.msra.mxu0 0.0
          %4347 = vmatprep.mubr.f32.mxu0 0.0
          %4348 = vmatmul.mubr.f32.gmra.mrb[0].mxu0 %v4281
          %v4349 = vpop.f32.mrb[0].mxu0
          %v4350 = vadd.f32 0.0, %v4349
          %v4351 = vpop.f32.mrb[0].mxu0
          %v4352 = vadd.f32 0.0, %v4351
          %4353 = vdwg.mxu0
          %v4356 = vcombine.low %v4350, %v4352
          %v4358 = vunpack.c.l.s4 1966171168
          %v4359 = vunpack.c.0.s8 %v4358
          %v4360 = vlaneseq
          %v4361 = vshrl.u32 %v4360, 7
          %v4362 = vsub.s32 %v4359, %v4361
          %v4363 = vrot.slane %v4356, %v4362
          %v4365 = vunpack.c.l.s4 1966171168
          %v4366 = vunpack.c.0.s8 %v4365
          %v4367 = vlaneseq
          %v4368 = vshrl.u32 %v4367, 7
          %v4369 = vsub.s32 %v4366, %v4368
          %v4370 = vrot.slane %v4363, %v4369
          %v4372 = vadd.f32 %v4248, %v4370
          %v4373 = vld [vmem:[#allocation17 + $0xf00] sm:$0xff]
          %v4374 = vld [vmem:[#allocation17 + $0xf08] sm:$0xff]
          %v4375 = vld [vmem:[#allocation17 + $0xf10] sm:$0xff]
          %v4376 = vld [vmem:[#allocation17 + $0xf18] sm:$0xff]
          %v4377 = vld [vmem:[#allocation17 + $0xf20] sm:$0xff]
          %v4378 = vld [vmem:[#allocation17 + $0xf28] sm:$0xff]
          %v4379 = vld [vmem:[#allocation17 + $0xf30] sm:$0xff]
          %v4380 = vld [vmem:[#allocation17 + $0xf38] sm:$0xff]
          %v4381 = vld [vmem:[#allocation17 + $0xf40] sm:$0xff]
          %v4382 = vld [vmem:[#allocation17 + $0xf48] sm:$0xff]
          %v4383 = vld [vmem:[#allocation17 + $0xf50] sm:$0xff]
          %v4384 = vld [vmem:[#allocation17 + $0xf58] sm:$0xff]
          %v4385 = vld [vmem:[#allocation17 + $0xf60] sm:$0xff]
          %v4386 = vld [vmem:[#allocation17 + $0xf68] sm:$0xff]
          %v4387 = vld [vmem:[#allocation17 + $0xf70] sm:$0xff]
          %v4388 = vld [vmem:[#allocation17 + $0xf78] sm:$0xff]
          %v4389 = vld [vmem:[#allocation17 + $0xf80] sm:$0xff]
          %v4390 = vld [vmem:[#allocation17 + $0xf88] sm:$0xff]
          %v4391 = vld [vmem:[#allocation17 + $0xf90] sm:$0xff]
          %v4392 = vld [vmem:[#allocation17 + $0xf98] sm:$0xff]
          %v4393 = vld [vmem:[#allocation17 + $0xfa0] sm:$0xff]
          %v4394 = vld [vmem:[#allocation17 + $0xfa8] sm:$0xff]
          %v4395 = vld [vmem:[#allocation17 + $0xfb0] sm:$0xff]
          %v4396 = vld [vmem:[#allocation17 + $0xfb8] sm:$0xff]
          %v4397 = vld [vmem:[#allocation17 + $0xfc0] sm:$0xff]
          %v4398 = vld [vmem:[#allocation17 + $0xfc8] sm:$0xff]
          %v4399 = vld [vmem:[#allocation17 + $0xfd0] sm:$0xff]
          %v4400 = vld [vmem:[#allocation17 + $0xfd8] sm:$0xff]
          %v4401 = vld [vmem:[#allocation17 + $0xfe0] sm:$0xff]
          %v4402 = vld [vmem:[#allocation17 + $0xfe8] sm:$0xff]
          %v4403 = vld [vmem:[#allocation17 + $0xff0] sm:$0xff]
          %v4404 = vld [vmem:[#allocation17 + $0xff8] sm:$0xff]
          %v4405 = vrot.slane %v2506, 7
          %4407 = vmatprep.subr.mxu0 %v4374
          %4408 = vmatpush1.msra.mxu0 %v4373
          %4409 = vmatprep.subr.mxu0 %v4376
          %4410 = vmatpush1.msra.mxu0 %v4375
          %4411 = vmatprep.subr.mxu0 %v4378
          %4412 = vmatpush1.msra.mxu0 %v4377
          %4413 = vmatprep.subr.mxu0 %v4380
          %4414 = vmatpush1.msra.mxu0 %v4379
          %4415 = vmatprep.subr.mxu0 %v4382
          %4416 = vmatpush1.msra.mxu0 %v4381
          %4417 = vmatprep.subr.mxu0 %v4384
          %4418 = vmatpush1.msra.mxu0 %v4383
          %4419 = vmatprep.subr.mxu0 %v4386
          %4420 = vmatpush1.msra.mxu0 %v4385
          %4421 = vmatprep.subr.mxu0 %v4388
          %4422 = vmatpush1.msra.mxu0 %v4387
          %4423 = vmatprep.subr.mxu0 %v4390
          %4424 = vmatpush1.msra.mxu0 %v4389
          %4425 = vmatprep.subr.mxu0 %v4392
          %4426 = vmatpush1.msra.mxu0 %v4391
          %4427 = vmatprep.subr.mxu0 %v4394
          %4428 = vmatpush1.msra.mxu0 %v4393
          %4429 = vmatprep.subr.mxu0 %v4396
          %4430 = vmatpush1.msra.mxu0 %v4395
          %4431 = vmatprep.subr.mxu0 %v4398
          %4432 = vmatpush1.msra.mxu0 %v4397
          %4433 = vmatprep.subr.mxu0 %v4400
          %4434 = vmatpush1.msra.mxu0 %v4399
          %4435 = vmatprep.subr.mxu0 %v4402
          %4436 = vmatpush1.msra.mxu0 %v4401
          %4437 = vmatprep.subr.mxu0 %v4404
          %4438 = vmatpush1.msra.mxu0 %v4403
          %4439 = vmatprep.subr.mxu0 0.0
          %4440 = vmatpush1.msra.mxu0 0.0
          %4441 = vmatprep.subr.mxu0 0.0
          %4442 = vmatpush1.msra.mxu0 0.0
          %4443 = vmatprep.subr.mxu0 0.0
          %4444 = vmatpush1.msra.mxu0 0.0
          %4445 = vmatprep.subr.mxu0 0.0
          %4446 = vmatpush1.msra.mxu0 0.0
          %4447 = vmatprep.subr.mxu0 0.0
          %4448 = vmatpush1.msra.mxu0 0.0
          %4449 = vmatprep.subr.mxu0 0.0
          %4450 = vmatpush1.msra.mxu0 0.0
          %4451 = vmatprep.subr.mxu0 0.0
          %4452 = vmatpush1.msra.mxu0 0.0
          %4453 = vmatprep.subr.mxu0 0.0
          %4454 = vmatpush1.msra.mxu0 0.0
          %4455 = vmatprep.subr.mxu0 0.0
          %4456 = vmatpush1.msra.mxu0 0.0
          %4457 = vmatprep.subr.mxu0 0.0
          %4458 = vmatpush1.msra.mxu0 0.0
          %4459 = vmatprep.subr.mxu0 0.0
          %4460 = vmatpush1.msra.mxu0 0.0
          %4461 = vmatprep.subr.mxu0 0.0
          %4462 = vmatpush1.msra.mxu0 0.0
          %4463 = vmatprep.subr.mxu0 0.0
          %4464 = vmatpush1.msra.mxu0 0.0
          %4465 = vmatprep.subr.mxu0 0.0
          %4466 = vmatpush1.msra.mxu0 0.0
          %4467 = vmatprep.subr.mxu0 0.0
          %4468 = vmatpush1.msra.mxu0 0.0
          %4469 = vmatprep.subr.mxu0 0.0
          %4470 = vmatpush1.msra.mxu0 0.0
          %4471 = vmatprep.mubr.f32.mxu0 0.0
          %4472 = vmatmul.mubr.f32.gmra.mrb[0].mxu0 %v4405
          %v4473 = vpop.f32.mrb[0].mxu0
          %v4474 = vadd.f32 0.0, %v4473
          %v4475 = vpop.f32.mrb[0].mxu0
          %v4476 = vadd.f32 0.0, %v4475
          %4477 = vdwg.mxu0
          %v4480 = vcombine.low %v4474, %v4476
          %v4482 = vunpack.c.l.s4 1966171168
          %v4483 = vunpack.c.0.s8 %v4482
          %v4484 = vlaneseq
          %v4485 = vshrl.u32 %v4484, 7
          %v4486 = vsub.s32 %v4483, %v4485
          %v4487 = vrot.slane %v4480, %v4486
          %v4489 = vunpack.c.l.s4 1966171168
          %v4490 = vunpack.c.0.s8 %v4489
          %v4491 = vlaneseq
          %v4492 = vshrl.u32 %v4491, 7
          %v4493 = vsub.s32 %v4490, %v4492
          %v4494 = vrot.slane %v4487, %v4493
          %v4496 = vadd.f32 %v4372, %v4494
          %v4497 = vld [vmem:[#allocation17 + $0x1000] sm:$0xff]
          %v4498 = vld [vmem:[#allocation17 + $0x1008] sm:$0xff]
          %v4499 = vld [vmem:[#allocation17 + $0x1010] sm:$0xff]
          %v4500 = vld [vmem:[#allocation17 + $0x1018] sm:$0xff]
          %v4501 = vld [vmem:[#allocation17 + $0x1020] sm:$0xff]
          %v4502 = vld [vmem:[#allocation17 + $0x1028] sm:$0xff]
          %v4503 = vld [vmem:[#allocation17 + $0x1030] sm:$0xff]
          %v4504 = vld [vmem:[#allocation17 + $0x1038] sm:$0xff]
          %v4505 = vld [vmem:[#allocation17 + $0x1040] sm:$0xff]
          %v4506 = vld [vmem:[#allocation17 + $0x1048] sm:$0xff]
          %v4507 = vld [vmem:[#allocation17 + $0x1050] sm:$0xff]
          %v4508 = vld [vmem:[#allocation17 + $0x1058] sm:$0xff]
          %v4509 = vld [vmem:[#allocation17 + $0x1060] sm:$0xff]
          %v4510 = vld [vmem:[#allocation17 + $0x1068] sm:$0xff]
          %v4511 = vld [vmem:[#allocation17 + $0x1070] sm:$0xff]
          %v4512 = vld [vmem:[#allocation17 + $0x1078] sm:$0xff]
          %v4513 = vld [vmem:[#allocation17 + $0x1080] sm:$0xff]
          %v4514 = vld [vmem:[#allocation17 + $0x1088] sm:$0xff]
          %v4515 = vld [vmem:[#allocation17 + $0x1090] sm:$0xff]
          %v4516 = vld [vmem:[#allocation17 + $0x1098] sm:$0xff]
          %v4517 = vld [vmem:[#allocation17 + $0x10a0] sm:$0xff]
          %v4518 = vld [vmem:[#allocation17 + $0x10a8] sm:$0xff]
          %v4519 = vld [vmem:[#allocation17 + $0x10b0] sm:$0xff]
          %v4520 = vld [vmem:[#allocation17 + $0x10b8] sm:$0xff]
          %v4521 = vld [vmem:[#allocation17 + $0x10c0] sm:$0xff]
          %v4522 = vld [vmem:[#allocation17 + $0x10c8] sm:$0xff]
          %v4523 = vld [vmem:[#allocation17 + $0x10d0] sm:$0xff]
          %v4524 = vld [vmem:[#allocation17 + $0x10d8] sm:$0xff]
          %v4525 = vld [vmem:[#allocation17 + $0x10e0] sm:$0xff]
          %v4526 = vld [vmem:[#allocation17 + $0x10e8] sm:$0xff]
          %v4527 = vld [vmem:[#allocation17 + $0x10f0] sm:$0xff]
          %v4528 = vld [vmem:[#allocation17 + $0x10f8] sm:$0xff]
          %4529 = vmatprep.subr.mxu0 %v4498
          %4530 = vmatpush1.msra.mxu0 %v4497
          %4531 = vmatprep.subr.mxu0 %v4500
          %4532 = vmatpush1.msra.mxu0 %v4499
          %4533 = vmatprep.subr.mxu0 %v4502
          %4534 = vmatpush1.msra.mxu0 %v4501
          %4535 = vmatprep.subr.mxu0 %v4504
          %4536 = vmatpush1.msra.mxu0 %v4503
          %4537 = vmatprep.subr.mxu0 %v4506
          %4538 = vmatpush1.msra.mxu0 %v4505
          %4539 = vmatprep.subr.mxu0 %v4508
          %4540 = vmatpush1.msra.mxu0 %v4507
          %4541 = vmatprep.subr.mxu0 %v4510
          %4542 = vmatpush1.msra.mxu0 %v4509
          %4543 = vmatprep.subr.mxu0 %v4512
          %4544 = vmatpush1.msra.mxu0 %v4511
          %4545 = vmatprep.subr.mxu0 %v4514
          %4546 = vmatpush1.msra.mxu0 %v4513
          %4547 = vmatprep.subr.mxu0 %v4516
          %4548 = vmatpush1.msra.mxu0 %v4515
          %4549 = vmatprep.subr.mxu0 %v4518
          %4550 = vmatpush1.msra.mxu0 %v4517
          %4551 = vmatprep.subr.mxu0 %v4520
          %4552 = vmatpush1.msra.mxu0 %v4519
          %4553 = vmatprep.subr.mxu0 %v4522
          %4554 = vmatpush1.msra.mxu0 %v4521
          %4555 = vmatprep.subr.mxu0 %v4524
          %4556 = vmatpush1.msra.mxu0 %v4523
          %4557 = vmatprep.subr.mxu0 %v4526
          %4558 = vmatpush1.msra.mxu0 %v4525
          %4559 = vmatprep.subr.mxu0 %v4528
          %4560 = vmatpush1.msra.mxu0 %v4527
          %4561 = vmatprep.subr.mxu0 0.0
          %4562 = vmatpush1.msra.mxu0 0.0
          %4563 = vmatprep.subr.mxu0 0.0
          %4564 = vmatpush1.msra.mxu0 0.0
          %4565 = vmatprep.subr.mxu0 0.0
          %4566 = vmatpush1.msra.mxu0 0.0
          %4567 = vmatprep.subr.mxu0 0.0
          %4568 = vmatpush1.msra.mxu0 0.0
          %4569 = vmatprep.subr.mxu0 0.0
          %4570 = vmatpush1.msra.mxu0 0.0
          %4571 = vmatprep.subr.mxu0 0.0
          %4572 = vmatpush1.msra.mxu0 0.0
          %4573 = vmatprep.subr.mxu0 0.0
          %4574 = vmatpush1.msra.mxu0 0.0
          %4575 = vmatprep.subr.mxu0 0.0
          %4576 = vmatpush1.msra.mxu0 0.0
          %4577 = vmatprep.subr.mxu0 0.0
          %4578 = vmatpush1.msra.mxu0 0.0
          %4579 = vmatprep.subr.mxu0 0.0
          %4580 = vmatpush1.msra.mxu0 0.0
          %4581 = vmatprep.subr.mxu0 0.0
          %4582 = vmatpush1.msra.mxu0 0.0
          %4583 = vmatprep.subr.mxu0 0.0
          %4584 = vmatpush1.msra.mxu0 0.0
          %4585 = vmatprep.subr.mxu0 0.0
          %4586 = vmatpush1.msra.mxu0 0.0
          %4587 = vmatprep.subr.mxu0 0.0
          %4588 = vmatpush1.msra.mxu0 0.0
          %4589 = vmatprep.subr.mxu0 0.0
          %4590 = vmatpush1.msra.mxu0 0.0
          %4591 = vmatprep.subr.mxu0 0.0
          %4592 = vmatpush1.msra.mxu0 0.0
          %4593 = vmatprep.mubr.f32.mxu0 0.0
          %4594 = vmatmul.mubr.f32.gmra.mrb[0].mxu0 %v2511
          %v4595 = vpop.f32.mrb[0].mxu0
          %v4596 = vadd.f32 0.0, %v4595
          %v4597 = vpop.f32.mrb[0].mxu0
          %v4598 = vadd.f32 0.0, %v4597
          %4599 = vdwg.mxu0
          %v4602 = vcombine.low %v4596, %v4598
          %v4604 = vunpack.c.l.s4 1966171168
          %v4605 = vunpack.c.0.s8 %v4604
          %v4606 = vlaneseq
          %v4607 = vshrl.u32 %v4606, 7
          %v4608 = vsub.s32 %v4605, %v4607
          %v4609 = vrot.slane %v4602, %v4608
          %v4611 = vunpack.c.l.s4 1966171168
          %v4612 = vunpack.c.0.s8 %v4611
          %v4613 = vlaneseq
          %v4614 = vshrl.u32 %v4613, 7
          %v4615 = vsub.s32 %v4612, %v4614
          %v4616 = vrot.slane %v4609, %v4615
          %v4618 = vadd.f32 %v4496, %v4616
          %v4619 = vld [vmem:[#allocation17 + $0x1100] sm:$0xff]
          %v4620 = vld [vmem:[#allocation17 + $0x1108] sm:$0xff]
          %v4621 = vld [vmem:[#allocation17 + $0x1110] sm:$0xff]
          %v4622 = vld [vmem:[#allocation17 + $0x1118] sm:$0xff]
          %v4623 = vld [vmem:[#allocation17 + $0x1120] sm:$0xff]
          %v4624 = vld [vmem:[#allocation17 + $0x1128] sm:$0xff]
          %v4625 = vld [vmem:[#allocation17 + $0x1130] sm:$0xff]
          %v4626 = vld [vmem:[#allocation17 + $0x1138] sm:$0xff]
          %v4627 = vld [vmem:[#allocation17 + $0x1140] sm:$0xff]
          %v4628 = vld [vmem:[#allocation17 + $0x1148] sm:$0xff]
          %v4629 = vld [vmem:[#allocation17 + $0x1150] sm:$0xff]
          %v4630 = vld [vmem:[#allocation17 + $0x1158] sm:$0xff]
          %v4631 = vld [vmem:[#allocation17 + $0x1160] sm:$0xff]
          %v4632 = vld [vmem:[#allocation17 + $0x1168] sm:$0xff]
          %v4633 = vld [vmem:[#allocation17 + $0x1170] sm:$0xff]
          %v4634 = vld [vmem:[#allocation17 + $0x1178] sm:$0xff]
          %v4635 = vld [vmem:[#allocation17 + $0x1180] sm:$0xff]
          %v4636 = vld [vmem:[#allocation17 + $0x1188] sm:$0xff]
          %v4637 = vld [vmem:[#allocation17 + $0x1190] sm:$0xff]
          %v4638 = vld [vmem:[#allocation17 + $0x1198] sm:$0xff]
          %v4639 = vld [vmem:[#allocation17 + $0x11a0] sm:$0xff]
          %v4640 = vld [vmem:[#allocation17 + $0x11a8] sm:$0xff]
          %v4641 = vld [vmem:[#allocation17 + $0x11b0] sm:$0xff]
          %v4642 = vld [vmem:[#allocation17 + $0x11b8] sm:$0xff]
          %v4643 = vld [vmem:[#allocation17 + $0x11c0] sm:$0xff]
          %v4644 = vld [vmem:[#allocation17 + $0x11c8] sm:$0xff]
          %v4645 = vld [vmem:[#allocation17 + $0x11d0] sm:$0xff]
          %v4646 = vld [vmem:[#allocation17 + $0x11d8] sm:$0xff]
          %v4647 = vld [vmem:[#allocation17 + $0x11e0] sm:$0xff]
          %v4648 = vld [vmem:[#allocation17 + $0x11e8] sm:$0xff]
          %v4649 = vld [vmem:[#allocation17 + $0x11f0] sm:$0xff]
          %v4650 = vld [vmem:[#allocation17 + $0x11f8] sm:$0xff]
          %v4652 = vrot.slane %v2511, 1
          %4654 = vmatprep.subr.mxu0 %v4620
          %4655 = vmatpush1.msra.mxu0 %v4619
          %4656 = vmatprep.subr.mxu0 %v4622
          %4657 = vmatpush1.msra.mxu0 %v4621
          %4658 = vmatprep.subr.mxu0 %v4624
          %4659 = vmatpush1.msra.mxu0 %v4623
          %4660 = vmatprep.subr.mxu0 %v4626
          %4661 = vmatpush1.msra.mxu0 %v4625
          %4662 = vmatprep.subr.mxu0 %v4628
          %4663 = vmatpush1.msra.mxu0 %v4627
          %4664 = vmatprep.subr.mxu0 %v4630
          %4665 = vmatpush1.msra.mxu0 %v4629
          %4666 = vmatprep.subr.mxu0 %v4632
          %4667 = vmatpush1.msra.mxu0 %v4631
          %4668 = vmatprep.subr.mxu0 %v4634
          %4669 = vmatpush1.msra.mxu0 %v4633
          %4670 = vmatprep.subr.mxu0 %v4636
          %4671 = vmatpush1.msra.mxu0 %v4635
          %4672 = vmatprep.subr.mxu0 %v4638
          %4673 = vmatpush1.msra.mxu0 %v4637
          %4674 = vmatprep.subr.mxu0 %v4640
          %4675 = vmatpush1.msra.mxu0 %v4639
          %4676 = vmatprep.subr.mxu0 %v4642
          %4677 = vmatpush1.msra.mxu0 %v4641
          %4678 = vmatprep.subr.mxu0 %v4644
          %4679 = vmatpush1.msra.mxu0 %v4643
          %4680 = vmatprep.subr.mxu0 %v4646
          %4681 = vmatpush1.msra.mxu0 %v4645
          %4682 = vmatprep.subr.mxu0 %v4648
          %4683 = vmatpush1.msra.mxu0 %v4647
          %4684 = vmatprep.subr.mxu0 %v4650
          %4685 = vmatpush1.msra.mxu0 %v4649
          %4686 = vmatprep.subr.mxu0 0.0
          %4687 = vmatpush1.msra.mxu0 0.0
          %4688 = vmatprep.subr.mxu0 0.0
          %4689 = vmatpush1.msra.mxu0 0.0
          %4690 = vmatprep.subr.mxu0 0.0
          %4691 = vmatpush1.msra.mxu0 0.0
          %4692 = vmatprep.subr.mxu0 0.0
          %4693 = vmatpush1.msra.mxu0 0.0
          %4694 = vmatprep.subr.mxu0 0.0
          %4695 = vmatpush1.msra.mxu0 0.0
          %4696 = vmatprep.subr.mxu0 0.0
          %4697 = vmatpush1.msra.mxu0 0.0
          %4698 = vmatprep.subr.mxu0 0.0
          %4699 = vmatpush1.msra.mxu0 0.0
          %4700 = vmatprep.subr.mxu0 0.0
          %4701 = vmatpush1.msra.mxu0 0.0
          %4702 = vmatprep.subr.mxu0 0.0
          %4703 = vmatpush1.msra.mxu0 0.0
          %4704 = vmatprep.subr.mxu0 0.0
          %4705 = vmatpush1.msra.mxu0 0.0
          %4706 = vmatprep.subr.mxu0 0.0
          %4707 = vmatpush1.msra.mxu0 0.0
          %4708 = vmatprep.subr.mxu0 0.0
          %4709 = vmatpush1.msra.mxu0 0.0
          %4710 = vmatprep.subr.mxu0 0.0
          %4711 = vmatpush1.msra.mxu0 0.0
          %4712 = vmatprep.subr.mxu0 0.0
          %4713 = vmatpush1.msra.mxu0 0.0
          %4714 = vmatprep.subr.mxu0 0.0
          %4715 = vmatpush1.msra.mxu0 0.0
          %4716 = vmatprep.subr.mxu0 0.0
          %4717 = vmatpush1.msra.mxu0 0.0
          %4718 = vmatprep.mubr.f32.mxu0 0.0
          %4719 = vmatmul.mubr.f32.gmra.mrb[0].mxu0 %v4652
          %v4720 = vpop.f32.mrb[0].mxu0
          %v4721 = vadd.f32 0.0, %v4720
          %v4722 = vpop.f32.mrb[0].mxu0
          %v4723 = vadd.f32 0.0, %v4722
          %4724 = vdwg.mxu0
          %v4727 = vcombine.low %v4721, %v4723
          %v4729 = vunpack.c.l.s4 1966171168
          %v4730 = vunpack.c.0.s8 %v4729
          %v4731 = vlaneseq
          %v4732 = vshrl.u32 %v4731, 7
          %v4733 = vsub.s32 %v4730, %v4732
          %v4734 = vrot.slane %v4727, %v4733
          %v4736 = vunpack.c.l.s4 1966171168
          %v4737 = vunpack.c.0.s8 %v4736
          %v4738 = vlaneseq
          %v4739 = vshrl.u32 %v4738, 7
          %v4740 = vsub.s32 %v4737, %v4739
          %v4741 = vrot.slane %v4734, %v4740
          %v4743 = vadd.f32 %v4618, %v4741
          %v4744 = vld [vmem:[#allocation17 + $0x1200] sm:$0xff]
          %v4745 = vld [vmem:[#allocation17 + $0x1208] sm:$0xff]
          %v4746 = vld [vmem:[#allocation17 + $0x1210] sm:$0xff]
          %v4747 = vld [vmem:[#allocation17 + $0x1218] sm:$0xff]
          %v4748 = vld [vmem:[#allocation17 + $0x1220] sm:$0xff]
          %v4749 = vld [vmem:[#allocation17 + $0x1228] sm:$0xff]
          %v4750 = vld [vmem:[#allocation17 + $0x1230] sm:$0xff]
          %v4751 = vld [vmem:[#allocation17 + $0x1238] sm:$0xff]
          %v4752 = vld [vmem:[#allocation17 + $0x1240] sm:$0xff]
          %v4753 = vld [vmem:[#allocation17 + $0x1248] sm:$0xff]
          %v4754 = vld [vmem:[#allocation17 + $0x1250] sm:$0xff]
          %v4755 = vld [vmem:[#allocation17 + $0x1258] sm:$0xff]
          %v4756 = vld [vmem:[#allocation17 + $0x1260] sm:$0xff]
          %v4757 = vld [vmem:[#allocation17 + $0x1268] sm:$0xff]
          %v4758 = vld [vmem:[#allocation17 + $0x1270] sm:$0xff]
          %v4759 = vld [vmem:[#allocation17 + $0x1278] sm:$0xff]
          %v4760 = vld [vmem:[#allocation17 + $0x1280] sm:$0xff]
          %v4761 = vld [vmem:[#allocation17 + $0x1288] sm:$0xff]
          %v4762 = vld [vmem:[#allocation17 + $0x1290] sm:$0xff]
          %v4763 = vld [vmem:[#allocation17 + $0x1298] sm:$0xff]
          %v4764 = vld [vmem:[#allocation17 + $0x12a0] sm:$0xff]
          %v4765 = vld [vmem:[#allocation17 + $0x12a8] sm:$0xff]
          %v4766 = vld [vmem:[#allocation17 + $0x12b0] sm:$0xff]
          %v4767 = vld [vmem:[#allocation17 + $0x12b8] sm:$0xff]
          %v4768 = vld [vmem:[#allocation17 + $0x12c0] sm:$0xff]
          %v4769 = vld [vmem:[#allocation17 + $0x12c8] sm:$0xff]
          %v4770 = vld [vmem:[#allocation17 + $0x12d0] sm:$0xff]
          %v4771 = vld [vmem:[#allocation17 + $0x12d8] sm:$0xff]
          %v4772 = vld [vmem:[#allocation17 + $0x12e0] sm:$0xff]
          %v4773 = vld [vmem:[#allocation17 + $0x12e8] sm:$0xff]
          %v4774 = vld [vmem:[#allocation17 + $0x12f0] sm:$0xff]
          %v4775 = vld [vmem:[#allocation17 + $0x12f8] sm:$0xff]
          %v4776 = vrot.slane %v2511, 2
          %4778 = vmatprep.subr.mxu0 %v4745
          %4779 = vmatpush1.msra.mxu0 %v4744
          %4780 = vmatprep.subr.mxu0 %v4747
          %4781 = vmatpush1.msra.mxu0 %v4746
          %4782 = vmatprep.subr.mxu0 %v4749
          %4783 = vmatpush1.msra.mxu0 %v4748
          %4784 = vmatprep.subr.mxu0 %v4751
          %4785 = vmatpush1.msra.mxu0 %v4750
          %4786 = vmatprep.subr.mxu0 %v4753
          %4787 = vmatpush1.msra.mxu0 %v4752
          %4788 = vmatprep.subr.mxu0 %v4755
          %4789 = vmatpush1.msra.mxu0 %v4754
          %4790 = vmatprep.subr.mxu0 %v4757
          %4791 = vmatpush1.msra.mxu0 %v4756
          %4792 = vmatprep.subr.mxu0 %v4759
          %4793 = vmatpush1.msra.mxu0 %v4758
          %4794 = vmatprep.subr.mxu0 %v4761
          %4795 = vmatpush1.msra.mxu0 %v4760
          %4796 = vmatprep.subr.mxu0 %v4763
          %4797 = vmatpush1.msra.mxu0 %v4762
          %4798 = vmatprep.subr.mxu0 %v4765
          %4799 = vmatpush1.msra.mxu0 %v4764
          %4800 = vmatprep.subr.mxu0 %v4767
          %4801 = vmatpush1.msra.mxu0 %v4766
          %4802 = vmatprep.subr.mxu0 %v4769
          %4803 = vmatpush1.msra.mxu0 %v4768
          %4804 = vmatprep.subr.mxu0 %v4771
          %4805 = vmatpush1.msra.mxu0 %v4770
          %4806 = vmatprep.subr.mxu0 %v4773
          %4807 = vmatpush1.msra.mxu0 %v4772
          %4808 = vmatprep.subr.mxu0 %v4775
          %4809 = vmatpush1.msra.mxu0 %v4774
          %4810 = vmatprep.subr.mxu0 0.0
          %4811 = vmatpush1.msra.mxu0 0.0
          %4812 = vmatprep.subr.mxu0 0.0
          %4813 = vmatpush1.msra.mxu0 0.0
          %4814 = vmatprep.subr.mxu0 0.0
          %4815 = vmatpush1.msra.mxu0 0.0
          %4816 = vmatprep.subr.mxu0 0.0
          %4817 = vmatpush1.msra.mxu0 0.0
          %4818 = vmatprep.subr.mxu0 0.0
          %4819 = vmatpush1.msra.mxu0 0.0
          %4820 = vmatprep.subr.mxu0 0.0
          %4821 = vmatpush1.msra.mxu0 0.0
          %4822 = vmatprep.subr.mxu0 0.0
          %4823 = vmatpush1.msra.mxu0 0.0
          %4824 = vmatprep.subr.mxu0 0.0
          %4825 = vmatpush1.msra.mxu0 0.0
          %4826 = vmatprep.subr.mxu0 0.0
          %4827 = vmatpush1.msra.mxu0 0.0
          %4828 = vmatprep.subr.mxu0 0.0
          %4829 = vmatpush1.msra.mxu0 0.0
          %4830 = vmatprep.subr.mxu0 0.0
          %4831 = vmatpush1.msra.mxu0 0.0
          %4832 = vmatprep.subr.mxu0 0.0
          %4833 = vmatpush1.msra.mxu0 0.0
          %4834 = vmatprep.subr.mxu0 0.0
          %4835 = vmatpush1.msra.mxu0 0.0
          %4836 = vmatprep.subr.mxu0 0.0
          %4837 = vmatpush1.msra.mxu0 0.0
          %4838 = vmatprep.subr.mxu0 0.0
          %4839 = vmatpush1.msra.mxu0 0.0
          %4840 = vmatprep.subr.mxu0 0.0
          %4841 = vmatpush1.msra.mxu0 0.0
          %4842 = vmatprep.mubr.f32.mxu0 0.0
          %4843 = vmatmul.mubr.f32.gmra.mrb[0].mxu0 %v4776
          %v4844 = vpop.f32.mrb[0].mxu0
          %v4845 = vadd.f32 0.0, %v4844
          %v4846 = vpop.f32.mrb[0].mxu0
          %v4847 = vadd.f32 0.0, %v4846
          %4848 = vdwg.mxu0
          %v4851 = vcombine.low %v4845, %v4847
          %v4853 = vunpack.c.l.s4 1966171168
          %v4854 = vunpack.c.0.s8 %v4853
          %v4855 = vlaneseq
          %v4856 = vshrl.u32 %v4855, 7
          %v4857 = vsub.s32 %v4854, %v4856
          %v4858 = vrot.slane %v4851, %v4857
          %v4860 = vunpack.c.l.s4 1966171168
          %v4861 = vunpack.c.0.s8 %v4860
          %v4862 = vlaneseq
          %v4863 = vshrl.u32 %v4862, 7
          %v4864 = vsub.s32 %v4861, %v4863
          %v4865 = vrot.slane %v4858, %v4864
          %v4867 = vadd.f32 %v4743, %v4865
          %v4868 = vld [vmem:[#allocation17 + $0x1300] sm:$0xff]
          %v4869 = vld [vmem:[#allocation17 + $0x1308] sm:$0xff]
          %v4870 = vld [vmem:[#allocation17 + $0x1310] sm:$0xff]
          %v4871 = vld [vmem:[#allocation17 + $0x1318] sm:$0xff]
          %v4872 = vld [vmem:[#allocation17 + $0x1320] sm:$0xff]
          %v4873 = vld [vmem:[#allocation17 + $0x1328] sm:$0xff]
          %v4874 = vld [vmem:[#allocation17 + $0x1330] sm:$0xff]
          %v4875 = vld [vmem:[#allocation17 + $0x1338] sm:$0xff]
          %v4876 = vld [vmem:[#allocation17 + $0x1340] sm:$0xff]
          %v4877 = vld [vmem:[#allocation17 + $0x1348] sm:$0xff]
          %v4878 = vld [vmem:[#allocation17 + $0x1350] sm:$0xff]
          %v4879 = vld [vmem:[#allocation17 + $0x1358] sm:$0xff]
          %v4880 = vld [vmem:[#allocation17 + $0x1360] sm:$0xff]
          %v4881 = vld [vmem:[#allocation17 + $0x1368] sm:$0xff]
          %v4882 = vld [vmem:[#allocation17 + $0x1370] sm:$0xff]
          %v4883 = vld [vmem:[#allocation17 + $0x1378] sm:$0xff]
          %v4884 = vld [vmem:[#allocation17 + $0x1380] sm:$0xff]
          %v4885 = vld [vmem:[#allocation17 + $0x1388] sm:$0xff]
          %v4886 = vld [vmem:[#allocation17 + $0x1390] sm:$0xff]
          %v4887 = vld [vmem:[#allocation17 + $0x1398] sm:$0xff]
          %v4888 = vld [vmem:[#allocation17 + $0x13a0] sm:$0xff]
          %v4889 = vld [vmem:[#allocation17 + $0x13a8] sm:$0xff]
          %v4890 = vld [vmem:[#allocation17 + $0x13b0] sm:$0xff]
          %v4891 = vld [vmem:[#allocation17 + $0x13b8] sm:$0xff]
          %v4892 = vld [vmem:[#allocation17 + $0x13c0] sm:$0xff]
          %v4893 = vld [vmem:[#allocation17 + $0x13c8] sm:$0xff]
          %v4894 = vld [vmem:[#allocation17 + $0x13d0] sm:$0xff]
          %v4895 = vld [vmem:[#allocation17 + $0x13d8] sm:$0xff]
          %v4896 = vld [vmem:[#allocation17 + $0x13e0] sm:$0xff]
          %v4897 = vld [vmem:[#allocation17 + $0x13e8] sm:$0xff]
          %v4898 = vld [vmem:[#allocation17 + $0x13f0] sm:$0xff]
          %v4899 = vld [vmem:[#allocation17 + $0x13f8] sm:$0xff]
          %v4900 = vrot.slane %v2511, 3
          %4902 = vmatprep.subr.mxu0 %v4869
          %4903 = vmatpush1.msra.mxu0 %v4868
          %4904 = vmatprep.subr.mxu0 %v4871
          %4905 = vmatpush1.msra.mxu0 %v4870
          %4906 = vmatprep.subr.mxu0 %v4873
          %4907 = vmatpush1.msra.mxu0 %v4872
          %4908 = vmatprep.subr.mxu0 %v4875
          %4909 = vmatpush1.msra.mxu0 %v4874
          %4910 = vmatprep.subr.mxu0 %v4877
          %4911 = vmatpush1.msra.mxu0 %v4876
          %4912 = vmatprep.subr.mxu0 %v4879
          %4913 = vmatpush1.msra.mxu0 %v4878
          %4914 = vmatprep.subr.mxu0 %v4881
          %4915 = vmatpush1.msra.mxu0 %v4880
          %4916 = vmatprep.subr.mxu0 %v4883
          %4917 = vmatpush1.msra.mxu0 %v4882
          %4918 = vmatprep.subr.mxu0 %v4885
          %4919 = vmatpush1.msra.mxu0 %v4884
          %4920 = vmatprep.subr.mxu0 %v4887
          %4921 = vmatpush1.msra.mxu0 %v4886
          %4922 = vmatprep.subr.mxu0 %v4889
          %4923 = vmatpush1.msra.mxu0 %v4888
          %4924 = vmatprep.subr.mxu0 %v4891
          %4925 = vmatpush1.msra.mxu0 %v4890
          %4926 = vmatprep.subr.mxu0 %v4893
          %4927 = vmatpush1.msra.mxu0 %v4892
          %4928 = vmatprep.subr.mxu0 %v4895
          %4929 = vmatpush1.msra.mxu0 %v4894
          %4930 = vmatprep.subr.mxu0 %v4897
          %4931 = vmatpush1.msra.mxu0 %v4896
          %4932 = vmatprep.subr.mxu0 %v4899
          %4933 = vmatpush1.msra.mxu0 %v4898
          %4934 = vmatprep.subr.mxu0 0.0
          %4935 = vmatpush1.msra.mxu0 0.0
          %4936 = vmatprep.subr.mxu0 0.0
          %4937 = vmatpush1.msra.mxu0 0.0
          %4938 = vmatprep.subr.mxu0 0.0
          %4939 = vmatpush1.msra.mxu0 0.0
          %4940 = vmatprep.subr.mxu0 0.0
          %4941 = vmatpush1.msra.mxu0 0.0
          %4942 = vmatprep.subr.mxu0 0.0
          %4943 = vmatpush1.msra.mxu0 0.0
          %4944 = vmatprep.subr.mxu0 0.0
          %4945 = vmatpush1.msra.mxu0 0.0
          %4946 = vmatprep.subr.mxu0 0.0
          %4947 = vmatpush1.msra.mxu0 0.0
          %4948 = vmatprep.subr.mxu0 0.0
          %4949 = vmatpush1.msra.mxu0 0.0
          %4950 = vmatprep.subr.mxu0 0.0
          %4951 = vmatpush1.msra.mxu0 0.0
          %4952 = vmatprep.subr.mxu0 0.0
          %4953 = vmatpush1.msra.mxu0 0.0
          %4954 = vmatprep.subr.mxu0 0.0
          %4955 = vmatpush1.msra.mxu0 0.0
          %4956 = vmatprep.subr.mxu0 0.0
          %4957 = vmatpush1.msra.mxu0 0.0
          %4958 = vmatprep.subr.mxu0 0.0
          %4959 = vmatpush1.msra.mxu0 0.0
          %4960 = vmatprep.subr.mxu0 0.0
          %4961 = vmatpush1.msra.mxu0 0.0
          %4962 = vmatprep.subr.mxu0 0.0
          %4963 = vmatpush1.msra.mxu0 0.0
          %4964 = vmatprep.subr.mxu0 0.0
          %4965 = vmatpush1.msra.mxu0 0.0
          %4966 = vmatprep.mubr.f32.mxu0 0.0
          %4967 = vmatmul.mubr.f32.gmra.mrb[0].mxu0 %v4900
          %v4968 = vpop.f32.mrb[0].mxu0
          %v4969 = vadd.f32 0.0, %v4968
          %v4970 = vpop.f32.mrb[0].mxu0
          %v4971 = vadd.f32 0.0, %v4970
          %4972 = vdwg.mxu0
          %v4975 = vcombine.low %v4969, %v4971
          %v4977 = vunpack.c.l.s4 1966171168
          %v4978 = vunpack.c.0.s8 %v4977
          %v4979 = vlaneseq
          %v4980 = vshrl.u32 %v4979, 7
          %v4981 = vsub.s32 %v4978, %v4980
          %v4982 = vrot.slane %v4975, %v4981
          %v4984 = vunpack.c.l.s4 1966171168
          %v4985 = vunpack.c.0.s8 %v4984
          %v4986 = vlaneseq
          %v4987 = vshrl.u32 %v4986, 7
          %v4988 = vsub.s32 %v4985, %v4987
          %v4989 = vrot.slane %v4982, %v4988
          %v4991 = vadd.f32 %v4867, %v4989
          %v4992 = vld [vmem:[#allocation17 + $0x1400] sm:$0xff]
          %v4993 = vld [vmem:[#allocation17 + $0x1408] sm:$0xff]
          %v4994 = vld [vmem:[#allocation17 + $0x1410] sm:$0xff]
          %v4995 = vld [vmem:[#allocation17 + $0x1418] sm:$0xff]
          %v4996 = vld [vmem:[#allocation17 + $0x1420] sm:$0xff]
          %v4997 = vld [vmem:[#allocation17 + $0x1428] sm:$0xff]
          %v4998 = vld [vmem:[#allocation17 + $0x1430] sm:$0xff]
          %v4999 = vld [vmem:[#allocation17 + $0x1438] sm:$0xff]
          %v5000 = vld [vmem:[#allocation17 + $0x1440] sm:$0xff]
          %v5001 = vld [vmem:[#allocation17 + $0x1448] sm:$0xff]
          %v5002 = vld [vmem:[#allocation17 + $0x1450] sm:$0xff]
          %v5003 = vld [vmem:[#allocation17 + $0x1458] sm:$0xff]
          %v5004 = vld [vmem:[#allocation17 + $0x1460] sm:$0xff]
          %v5005 = vld [vmem:[#allocation17 + $0x1468] sm:$0xff]
          %v5006 = vld [vmem:[#allocation17 + $0x1470] sm:$0xff]
          %v5007 = vld [vmem:[#allocation17 + $0x1478] sm:$0xff]
          %v5008 = vld [vmem:[#allocation17 + $0x1480] sm:$0xff]
          %v5009 = vld [vmem:[#allocation17 + $0x1488] sm:$0xff]
          %v5010 = vld [vmem:[#allocation17 + $0x1490] sm:$0xff]
          %v5011 = vld [vmem:[#allocation17 + $0x1498] sm:$0xff]
          %v5012 = vld [vmem:[#allocation17 + $0x14a0] sm:$0xff]
          %v5013 = vld [vmem:[#allocation17 + $0x14a8] sm:$0xff]
          %v5014 = vld [vmem:[#allocation17 + $0x14b0] sm:$0xff]
          %v5015 = vld [vmem:[#allocation17 + $0x14b8] sm:$0xff]
          %v5016 = vld [vmem:[#allocation17 + $0x14c0] sm:$0xff]
          %v5017 = vld [vmem:[#allocation17 + $0x14c8] sm:$0xff]
          %v5018 = vld [vmem:[#allocation17 + $0x14d0] sm:$0xff]
          %v5019 = vld [vmem:[#allocation17 + $0x14d8] sm:$0xff]
          %v5020 = vld [vmem:[#allocation17 + $0x14e0] sm:$0xff]
          %v5021 = vld [vmem:[#allocation17 + $0x14e8] sm:$0xff]
          %v5022 = vld [vmem:[#allocation17 + $0x14f0] sm:$0xff]
          %v5023 = vld [vmem:[#allocation17 + $0x14f8] sm:$0xff]
          %v5024 = vrot.slane %v2511, 4
          %5026 = vmatprep.subr.mxu0 %v4993
          %5027 = vmatpush1.msra.mxu0 %v4992
          %5028 = vmatprep.subr.mxu0 %v4995
          %5029 = vmatpush1.msra.mxu0 %v4994
          %5030 = vmatprep.subr.mxu0 %v4997
          %5031 = vmatpush1.msra.mxu0 %v4996
          %5032 = vmatprep.subr.mxu0 %v4999
          %5033 = vmatpush1.msra.mxu0 %v4998
          %5034 = vmatprep.subr.mxu0 %v5001
          %5035 = vmatpush1.msra.mxu0 %v5000
          %5036 = vmatprep.subr.mxu0 %v5003
          %5037 = vmatpush1.msra.mxu0 %v5002
          %5038 = vmatprep.subr.mxu0 %v5005
          %5039 = vmatpush1.msra.mxu0 %v5004
          %5040 = vmatprep.subr.mxu0 %v5007
          %5041 = vmatpush1.msra.mxu0 %v5006
          %5042 = vmatprep.subr.mxu0 %v5009
          %5043 = vmatpush1.msra.mxu0 %v5008
          %5044 = vmatprep.subr.mxu0 %v5011
          %5045 = vmatpush1.msra.mxu0 %v5010
          %5046 = vmatprep.subr.mxu0 %v5013
          %5047 = vmatpush1.msra.mxu0 %v5012
          %5048 = vmatprep.subr.mxu0 %v5015
          %5049 = vmatpush1.msra.mxu0 %v5014
          %5050 = vmatprep.subr.mxu0 %v5017
          %5051 = vmatpush1.msra.mxu0 %v5016
          %5052 = vmatprep.subr.mxu0 %v5019
          %5053 = vmatpush1.msra.mxu0 %v5018
          %5054 = vmatprep.subr.mxu0 %v5021
          %5055 = vmatpush1.msra.mxu0 %v5020
          %5056 = vmatprep.subr.mxu0 %v5023
          %5057 = vmatpush1.msra.mxu0 %v5022
          %5058 = vmatprep.subr.mxu0 0.0
          %5059 = vmatpush1.msra.mxu0 0.0
          %5060 = vmatprep.subr.mxu0 0.0
          %5061 = vmatpush1.msra.mxu0 0.0
          %5062 = vmatprep.subr.mxu0 0.0
          %5063 = vmatpush1.msra.mxu0 0.0
          %5064 = vmatprep.subr.mxu0 0.0
          %5065 = vmatpush1.msra.mxu0 0.0
          %5066 = vmatprep.subr.mxu0 0.0
          %5067 = vmatpush1.msra.mxu0 0.0
          %5068 = vmatprep.subr.mxu0 0.0
          %5069 = vmatpush1.msra.mxu0 0.0
          %5070 = vmatprep.subr.mxu0 0.0
          %5071 = vmatpush1.msra.mxu0 0.0
          %5072 = vmatprep.subr.mxu0 0.0
          %5073 = vmatpush1.msra.mxu0 0.0
          %5074 = vmatprep.subr.mxu0 0.0
          %5075 = vmatpush1.msra.mxu0 0.0
          %5076 = vmatprep.subr.mxu0 0.0
          %5077 = vmatpush1.msra.mxu0 0.0
          %5078 = vmatprep.subr.mxu0 0.0
          %5079 = vmatpush1.msra.mxu0 0.0
          %5080 = vmatprep.subr.mxu0 0.0
          %5081 = vmatpush1.msra.mxu0 0.0
          %5082 = vmatprep.subr.mxu0 0.0
          %5083 = vmatpush1.msra.mxu0 0.0
          %5084 = vmatprep.subr.mxu0 0.0
          %5085 = vmatpush1.msra.mxu0 0.0
          %5086 = vmatprep.subr.mxu0 0.0
          %5087 = vmatpush1.msra.mxu0 0.0
          %5088 = vmatprep.subr.mxu0 0.0
          %5089 = vmatpush1.msra.mxu0 0.0
          %5090 = vmatprep.mubr.f32.mxu0 0.0
          %5091 = vmatmul.mubr.f32.gmra.mrb[0].mxu0 %v5024
          %v5092 = vpop.f32.mrb[0].mxu0
          %v5093 = vadd.f32 0.0, %v5092
          %v5094 = vpop.f32.mrb[0].mxu0
          %v5095 = vadd.f32 0.0, %v5094
          %5096 = vdwg.mxu0
          %v5099 = vcombine.low %v5093, %v5095
          %v5101 = vunpack.c.l.s4 1966171168
          %v5102 = vunpack.c.0.s8 %v5101
          %v5103 = vlaneseq
          %v5104 = vshrl.u32 %v5103, 7
          %v5105 = vsub.s32 %v5102, %v5104
          %v5106 = vrot.slane %v5099, %v5105
          %v5108 = vunpack.c.l.s4 1966171168
          %v5109 = vunpack.c.0.s8 %v5108
          %v5110 = vlaneseq
          %v5111 = vshrl.u32 %v5110, 7
          %v5112 = vsub.s32 %v5109, %v5111
          %v5113 = vrot.slane %v5106, %v5112
          %v5115 = vadd.f32 %v4991, %v5113
          %v5116 = vld [vmem:[#allocation17 + $0x1500] sm:$0xff]
          %v5117 = vld [vmem:[#allocation17 + $0x1508] sm:$0xff]
          %v5118 = vld [vmem:[#allocation17 + $0x1510] sm:$0xff]
          %v5119 = vld [vmem:[#allocation17 + $0x1518] sm:$0xff]
          %v5120 = vld [vmem:[#allocation17 + $0x1520] sm:$0xff]
          %v5121 = vld [vmem:[#allocation17 + $0x1528] sm:$0xff]
          %v5122 = vld [vmem:[#allocation17 + $0x1530] sm:$0xff]
          %v5123 = vld [vmem:[#allocation17 + $0x1538] sm:$0xff]
          %v5124 = vld [vmem:[#allocation17 + $0x1540] sm:$0xff]
          %v5125 = vld [vmem:[#allocation17 + $0x1548] sm:$0xff]
          %v5126 = vld [vmem:[#allocation17 + $0x1550] sm:$0xff]
          %v5127 = vld [vmem:[#allocation17 + $0x1558] sm:$0xff]
          %v5128 = vld [vmem:[#allocation17 + $0x1560] sm:$0xff]
          %v5129 = vld [vmem:[#allocation17 + $0x1568] sm:$0xff]
          %v5130 = vld [vmem:[#allocation17 + $0x1570] sm:$0xff]
          %v5131 = vld [vmem:[#allocation17 + $0x1578] sm:$0xff]
          %v5132 = vld [vmem:[#allocation17 + $0x1580] sm:$0xff]
          %v5133 = vld [vmem:[#allocation17 + $0x1588] sm:$0xff]
          %v5134 = vld [vmem:[#allocation17 + $0x1590] sm:$0xff]
          %v5135 = vld [vmem:[#allocation17 + $0x1598] sm:$0xff]
          %v5136 = vld [vmem:[#allocation17 + $0x15a0] sm:$0xff]
          %v5137 = vld [vmem:[#allocation17 + $0x15a8] sm:$0xff]
          %v5138 = vld [vmem:[#allocation17 + $0x15b0] sm:$0xff]
          %v5139 = vld [vmem:[#allocation17 + $0x15b8] sm:$0xff]
          %v5140 = vld [vmem:[#allocation17 + $0x15c0] sm:$0xff]
          %v5141 = vld [vmem:[#allocation17 + $0x15c8] sm:$0xff]
          %v5142 = vld [vmem:[#allocation17 + $0x15d0] sm:$0xff]
          %v5143 = vld [vmem:[#allocation17 + $0x15d8] sm:$0xff]
          %v5144 = vld [vmem:[#allocation17 + $0x15e0] sm:$0xff]
          %v5145 = vld [vmem:[#allocation17 + $0x15e8] sm:$0xff]
          %v5146 = vld [vmem:[#allocation17 + $0x15f0] sm:$0xff]
          %v5147 = vld [vmem:[#allocation17 + $0x15f8] sm:$0xff]
          %v5148 = vrot.slane %v2511, 5
          %5150 = vmatprep.subr.mxu0 %v5117
          %5151 = vmatpush1.msra.mxu0 %v5116
          %5152 = vmatprep.subr.mxu0 %v5119
          %5153 = vmatpush1.msra.mxu0 %v5118
          %5154 = vmatprep.subr.mxu0 %v5121
          %5155 = vmatpush1.msra.mxu0 %v5120
          %5156 = vmatprep.subr.mxu0 %v5123
          %5157 = vmatpush1.msra.mxu0 %v5122
          %5158 = vmatprep.subr.mxu0 %v5125
          %5159 = vmatpush1.msra.mxu0 %v5124
          %5160 = vmatprep.subr.mxu0 %v5127
          %5161 = vmatpush1.msra.mxu0 %v5126
          %5162 = vmatprep.subr.mxu0 %v5129
          %5163 = vmatpush1.msra.mxu0 %v5128
          %5164 = vmatprep.subr.mxu0 %v5131
          %5165 = vmatpush1.msra.mxu0 %v5130
          %5166 = vmatprep.subr.mxu0 %v5133
          %5167 = vmatpush1.msra.mxu0 %v5132
          %5168 = vmatprep.subr.mxu0 %v5135
          %5169 = vmatpush1.msra.mxu0 %v5134
          %5170 = vmatprep.subr.mxu0 %v5137
          %5171 = vmatpush1.msra.mxu0 %v5136
          %5172 = vmatprep.subr.mxu0 %v5139
          %5173 = vmatpush1.msra.mxu0 %v5138
          %5174 = vmatprep.subr.mxu0 %v5141
          %5175 = vmatpush1.msra.mxu0 %v5140
          %5176 = vmatprep.subr.mxu0 %v5143
          %5177 = vmatpush1.msra.mxu0 %v5142
          %5178 = vmatprep.subr.mxu0 %v5145
          %5179 = vmatpush1.msra.mxu0 %v5144
          %5180 = vmatprep.subr.mxu0 %v5147
          %5181 = vmatpush1.msra.mxu0 %v5146
          %5182 = vmatprep.subr.mxu0 0.0
          %5183 = vmatpush1.msra.mxu0 0.0
          %5184 = vmatprep.subr.mxu0 0.0
          %5185 = vmatpush1.msra.mxu0 0.0
          %5186 = vmatprep.subr.mxu0 0.0
          %5187 = vmatpush1.msra.mxu0 0.0
          %5188 = vmatprep.subr.mxu0 0.0
          %5189 = vmatpush1.msra.mxu0 0.0
          %5190 = vmatprep.subr.mxu0 0.0
          %5191 = vmatpush1.msra.mxu0 0.0
          %5192 = vmatprep.subr.mxu0 0.0
          %5193 = vmatpush1.msra.mxu0 0.0
          %5194 = vmatprep.subr.mxu0 0.0
          %5195 = vmatpush1.msra.mxu0 0.0
          %5196 = vmatprep.subr.mxu0 0.0
          %5197 = vmatpush1.msra.mxu0 0.0
          %5198 = vmatprep.subr.mxu0 0.0
          %5199 = vmatpush1.msra.mxu0 0.0
          %5200 = vmatprep.subr.mxu0 0.0
          %5201 = vmatpush1.msra.mxu0 0.0
          %5202 = vmatprep.subr.mxu0 0.0
          %5203 = vmatpush1.msra.mxu0 0.0
          %5204 = vmatprep.subr.mxu0 0.0
          %5205 = vmatpush1.msra.mxu0 0.0
          %5206 = vmatprep.subr.mxu0 0.0
          %5207 = vmatpush1.msra.mxu0 0.0
          %5208 = vmatprep.subr.mxu0 0.0
          %5209 = vmatpush1.msra.mxu0 0.0
          %5210 = vmatprep.subr.mxu0 0.0
          %5211 = vmatpush1.msra.mxu0 0.0
          %5212 = vmatprep.subr.mxu0 0.0
          %5213 = vmatpush1.msra.mxu0 0.0
          %5214 = vmatprep.mubr.f32.mxu0 0.0
          %5215 = vmatmul.mubr.f32.gmra.mrb[0].mxu0 %v5148
          %v5216 = vpop.f32.mrb[0].mxu0
          %v5217 = vadd.f32 0.0, %v5216
          %v5218 = vpop.f32.mrb[0].mxu0
          %v5219 = vadd.f32 0.0, %v5218
          %5220 = vdwg.mxu0
          %v5223 = vcombine.low %v5217, %v5219
          %v5225 = vunpack.c.l.s4 1966171168
          %v5226 = vunpack.c.0.s8 %v5225
          %v5227 = vlaneseq
          %v5228 = vshrl.u32 %v5227, 7
          %v5229 = vsub.s32 %v5226, %v5228
          %v5230 = vrot.slane %v5223, %v5229
          %v5232 = vunpack.c.l.s4 1966171168
          %v5233 = vunpack.c.0.s8 %v5232
          %v5234 = vlaneseq
          %v5235 = vshrl.u32 %v5234, 7
          %v5236 = vsub.s32 %v5233, %v5235
          %v5237 = vrot.slane %v5230, %v5236
          %v5239 = vadd.f32 %v5115, %v5237
          %v5240 = vld [vmem:[#allocation17 + $0x1600] sm:$0xff]
          %v5241 = vld [vmem:[#allocation17 + $0x1608] sm:$0xff]
          %v5242 = vld [vmem:[#allocation17 + $0x1610] sm:$0xff]
          %v5243 = vld [vmem:[#allocation17 + $0x1618] sm:$0xff]
          %v5244 = vld [vmem:[#allocation17 + $0x1620] sm:$0xff]
          %v5245 = vld [vmem:[#allocation17 + $0x1628] sm:$0xff]
          %v5246 = vld [vmem:[#allocation17 + $0x1630] sm:$0xff]
          %v5247 = vld [vmem:[#allocation17 + $0x1638] sm:$0xff]
          %v5248 = vld [vmem:[#allocation17 + $0x1640] sm:$0xff]
          %v5249 = vld [vmem:[#allocation17 + $0x1648] sm:$0xff]
          %v5250 = vld [vmem:[#allocation17 + $0x1650] sm:$0xff]
          %v5251 = vld [vmem:[#allocation17 + $0x1658] sm:$0xff]
          %v5252 = vld [vmem:[#allocation17 + $0x1660] sm:$0xff]
          %v5253 = vld [vmem:[#allocation17 + $0x1668] sm:$0xff]
          %v5254 = vld [vmem:[#allocation17 + $0x1670] sm:$0xff]
          %v5255 = vld [vmem:[#allocation17 + $0x1678] sm:$0xff]
          %v5256 = vld [vmem:[#allocation17 + $0x1680] sm:$0xff]
          %v5257 = vld [vmem:[#allocation17 + $0x1688] sm:$0xff]
          %v5258 = vld [vmem:[#allocation17 + $0x1690] sm:$0xff]
          %v5259 = vld [vmem:[#allocation17 + $0x1698] sm:$0xff]
          %v5260 = vld [vmem:[#allocation17 + $0x16a0] sm:$0xff]
          %v5261 = vld [vmem:[#allocation17 + $0x16a8] sm:$0xff]
          %v5262 = vld [vmem:[#allocation17 + $0x16b0] sm:$0xff]
          %v5263 = vld [vmem:[#allocation17 + $0x16b8] sm:$0xff]
          %v5264 = vld [vmem:[#allocation17 + $0x16c0] sm:$0xff]
          %v5265 = vld [vmem:[#allocation17 + $0x16c8] sm:$0xff]
          %v5266 = vld [vmem:[#allocation17 + $0x16d0] sm:$0xff]
          %v5267 = vld [vmem:[#allocation17 + $0x16d8] sm:$0xff]
          %v5268 = vld [vmem:[#allocation17 + $0x16e0] sm:$0xff]
          %v5269 = vld [vmem:[#allocation17 + $0x16e8] sm:$0xff]
          %v5270 = vld [vmem:[#allocation17 + $0x16f0] sm:$0xff]
          %v5271 = vld [vmem:[#allocation17 + $0x16f8] sm:$0xff]
          %v5272 = vrot.slane %v2511, 6
          %5274 = vmatprep.subr.mxu0 %v5241
          %5275 = vmatpush1.msra.mxu0 %v5240
          %5276 = vmatprep.subr.mxu0 %v5243
          %5277 = vmatpush1.msra.mxu0 %v5242
          %5278 = vmatprep.subr.mxu0 %v5245
          %5279 = vmatpush1.msra.mxu0 %v5244
          %5280 = vmatprep.subr.mxu0 %v5247
          %5281 = vmatpush1.msra.mxu0 %v5246
          %5282 = vmatprep.subr.mxu0 %v5249
          %5283 = vmatpush1.msra.mxu0 %v5248
          %5284 = vmatprep.subr.mxu0 %v5251
          %5285 = vmatpush1.msra.mxu0 %v5250
          %5286 = vmatprep.subr.mxu0 %v5253
          %5287 = vmatpush1.msra.mxu0 %v5252
          %5288 = vmatprep.subr.mxu0 %v5255
          %5289 = vmatpush1.msra.mxu0 %v5254
          %5290 = vmatprep.subr.mxu0 %v5257
          %5291 = vmatpush1.msra.mxu0 %v5256
          %5292 = vmatprep.subr.mxu0 %v5259
          %5293 = vmatpush1.msra.mxu0 %v5258
          %5294 = vmatprep.subr.mxu0 %v5261
          %5295 = vmatpush1.msra.mxu0 %v5260
          %5296 = vmatprep.subr.mxu0 %v5263
          %5297 = vmatpush1.msra.mxu0 %v5262
          %5298 = vmatprep.subr.mxu0 %v5265
          %5299 = vmatpush1.msra.mxu0 %v5264
          %5300 = vmatprep.subr.mxu0 %v5267
          %5301 = vmatpush1.msra.mxu0 %v5266
          %5302 = vmatprep.subr.mxu0 %v5269
          %5303 = vmatpush1.msra.mxu0 %v5268
          %5304 = vmatprep.subr.mxu0 %v5271
          %5305 = vmatpush1.msra.mxu0 %v5270
          %5306 = vmatprep.subr.mxu0 0.0
          %5307 = vmatpush1.msra.mxu0 0.0
          %5308 = vmatprep.subr.mxu0 0.0
          %5309 = vmatpush1.msra.mxu0 0.0
          %5310 = vmatprep.subr.mxu0 0.0
          %5311 = vmatpush1.msra.mxu0 0.0
          %5312 = vmatprep.subr.mxu0 0.0
          %5313 = vmatpush1.msra.mxu0 0.0
          %5314 = vmatprep.subr.mxu0 0.0
          %5315 = vmatpush1.msra.mxu0 0.0
          %5316 = vmatprep.subr.mxu0 0.0
          %5317 = vmatpush1.msra.mxu0 0.0
          %5318 = vmatprep.subr.mxu0 0.0
          %5319 = vmatpush1.msra.mxu0 0.0
          %5320 = vmatprep.subr.mxu0 0.0
          %5321 = vmatpush1.msra.mxu0 0.0
          %5322 = vmatprep.subr.mxu0 0.0
          %5323 = vmatpush1.msra.mxu0 0.0
          %5324 = vmatprep.subr.mxu0 0.0
          %5325 = vmatpush1.msra.mxu0 0.0
          %5326 = vmatprep.subr.mxu0 0.0
          %5327 = vmatpush1.msra.mxu0 0.0
          %5328 = vmatprep.subr.mxu0 0.0
          %5329 = vmatpush1.msra.mxu0 0.0
          %5330 = vmatprep.subr.mxu0 0.0
          %5331 = vmatpush1.msra.mxu0 0.0
          %5332 = vmatprep.subr.mxu0 0.0
          %5333 = vmatpush1.msra.mxu0 0.0
          %5334 = vmatprep.subr.mxu0 0.0
          %5335 = vmatpush1.msra.mxu0 0.0
          %5336 = vmatprep.subr.mxu0 0.0
          %5337 = vmatpush1.msra.mxu0 0.0
          %5338 = vmatprep.mubr.f32.mxu0 0.0
          %5339 = vmatmul.mubr.f32.gmra.mrb[0].mxu0 %v5272
          %v5340 = vpop.f32.mrb[0].mxu0
          %v5341 = vadd.f32 0.0, %v5340
          %v5342 = vpop.f32.mrb[0].mxu0
          %v5343 = vadd.f32 0.0, %v5342
          %5344 = vdwg.mxu0
          %v5347 = vcombine.low %v5341, %v5343
          %v5349 = vunpack.c.l.s4 1966171168
          %v5350 = vunpack.c.0.s8 %v5349
          %v5351 = vlaneseq
          %v5352 = vshrl.u32 %v5351, 7
          %v5353 = vsub.s32 %v5350, %v5352
          %v5354 = vrot.slane %v5347, %v5353
          %v5356 = vunpack.c.l.s4 1966171168
          %v5357 = vunpack.c.0.s8 %v5356
          %v5358 = vlaneseq
          %v5359 = vshrl.u32 %v5358, 7
          %v5360 = vsub.s32 %v5357, %v5359
          %v5361 = vrot.slane %v5354, %v5360
          %v5363 = vadd.f32 %v5239, %v5361
          %v5364 = vld [vmem:[#allocation17 + $0x1700] sm:$0xff]
          %v5365 = vld [vmem:[#allocation17 + $0x1708] sm:$0xff]
          %v5366 = vld [vmem:[#allocation17 + $0x1710] sm:$0xff]
          %v5367 = vld [vmem:[#allocation17 + $0x1718] sm:$0xff]
          %v5368 = vld [vmem:[#allocation17 + $0x1720] sm:$0xff]
          %v5369 = vld [vmem:[#allocation17 + $0x1728] sm:$0xff]
          %v5370 = vld [vmem:[#allocation17 + $0x1730] sm:$0xff]
          %v5371 = vld [vmem:[#allocation17 + $0x1738] sm:$0xff]
          %v5372 = vld [vmem:[#allocation17 + $0x1740] sm:$0xff]
          %v5373 = vld [vmem:[#allocation17 + $0x1748] sm:$0xff]
          %v5374 = vld [vmem:[#allocation17 + $0x1750] sm:$0xff]
          %v5375 = vld [vmem:[#allocation17 + $0x1758] sm:$0xff]
          %v5376 = vld [vmem:[#allocation17 + $0x1760] sm:$0xff]
          %v5377 = vld [vmem:[#allocation17 + $0x1768] sm:$0xff]
          %v5378 = vld [vmem:[#allocation17 + $0x1770] sm:$0xff]
          %v5379 = vld [vmem:[#allocation17 + $0x1778] sm:$0xff]
          %v5380 = vld [vmem:[#allocation17 + $0x1780] sm:$0xff]
          %v5381 = vld [vmem:[#allocation17 + $0x1788] sm:$0xff]
          %v5382 = vld [vmem:[#allocation17 + $0x1790] sm:$0xff]
          %v5383 = vld [vmem:[#allocation17 + $0x1798] sm:$0xff]
          %v5384 = vld [vmem:[#allocation17 + $0x17a0] sm:$0xff]
          %v5385 = vld [vmem:[#allocation17 + $0x17a8] sm:$0xff]
          %v5386 = vld [vmem:[#allocation17 + $0x17b0] sm:$0xff]
          %v5387 = vld [vmem:[#allocation17 + $0x17b8] sm:$0xff]
          %v5388 = vld [vmem:[#allocation17 + $0x17c0] sm:$0xff]
          %v5389 = vld [vmem:[#allocation17 + $0x17c8] sm:$0xff]
          %v5390 = vld [vmem:[#allocation17 + $0x17d0] sm:$0xff]
          %v5391 = vld [vmem:[#allocation17 + $0x17d8] sm:$0xff]
          %v5392 = vld [vmem:[#allocation17 + $0x17e0] sm:$0xff]
          %v5393 = vld [vmem:[#allocation17 + $0x17e8] sm:$0xff]
          %v5394 = vld [vmem:[#allocation17 + $0x17f0] sm:$0xff]
          %v5395 = vld [vmem:[#allocation17 + $0x17f8] sm:$0xff]
          %v5396 = vrot.slane %v2511, 7
          %5398 = vmatprep.subr.mxu0 %v5365
          %5399 = vmatpush1.msra.mxu0 %v5364
          %5400 = vmatprep.subr.mxu0 %v5367
          %5401 = vmatpush1.msra.mxu0 %v5366
          %5402 = vmatprep.subr.mxu0 %v5369
          %5403 = vmatpush1.msra.mxu0 %v5368
          %5404 = vmatprep.subr.mxu0 %v5371
          %5405 = vmatpush1.msra.mxu0 %v5370
          %5406 = vmatprep.subr.mxu0 %v5373
          %5407 = vmatpush1.msra.mxu0 %v5372
          %5408 = vmatprep.subr.mxu0 %v5375
          %5409 = vmatpush1.msra.mxu0 %v5374
          %5410 = vmatprep.subr.mxu0 %v5377
          %5411 = vmatpush1.msra.mxu0 %v5376
          %5412 = vmatprep.subr.mxu0 %v5379
          %5413 = vmatpush1.msra.mxu0 %v5378
          %5414 = vmatprep.subr.mxu0 %v5381
          %5415 = vmatpush1.msra.mxu0 %v5380
          %5416 = vmatprep.subr.mxu0 %v5383
          %5417 = vmatpush1.msra.mxu0 %v5382
          %5418 = vmatprep.subr.mxu0 %v5385
          %5419 = vmatpush1.msra.mxu0 %v5384
          %5420 = vmatprep.subr.mxu0 %v5387
          %5421 = vmatpush1.msra.mxu0 %v5386
          %5422 = vmatprep.subr.mxu0 %v5389
          %5423 = vmatpush1.msra.mxu0 %v5388
          %5424 = vmatprep.subr.mxu0 %v5391
          %5425 = vmatpush1.msra.mxu0 %v5390
          %5426 = vmatprep.subr.mxu0 %v5393
          %5427 = vmatpush1.msra.mxu0 %v5392
          %5428 = vmatprep.subr.mxu0 %v5395
          %5429 = vmatpush1.msra.mxu0 %v5394
          %5430 = vmatprep.subr.mxu0 0.0
          %5431 = vmatpush1.msra.mxu0 0.0
          %5432 = vmatprep.subr.mxu0 0.0
          %5433 = vmatpush1.msra.mxu0 0.0
          %5434 = vmatprep.subr.mxu0 0.0
          %5435 = vmatpush1.msra.mxu0 0.0
          %5436 = vmatprep.subr.mxu0 0.0
          %5437 = vmatpush1.msra.mxu0 0.0
          %5438 = vmatprep.subr.mxu0 0.0
          %5439 = vmatpush1.msra.mxu0 0.0
          %5440 = vmatprep.subr.mxu0 0.0
          %5441 = vmatpush1.msra.mxu0 0.0
          %5442 = vmatprep.subr.mxu0 0.0
          %5443 = vmatpush1.msra.mxu0 0.0
          %5444 = vmatprep.subr.mxu0 0.0
          %5445 = vmatpush1.msra.mxu0 0.0
          %5446 = vmatprep.subr.mxu0 0.0
          %5447 = vmatpush1.msra.mxu0 0.0
          %5448 = vmatprep.subr.mxu0 0.0
          %5449 = vmatpush1.msra.mxu0 0.0
          %5450 = vmatprep.subr.mxu0 0.0
          %5451 = vmatpush1.msra.mxu0 0.0
          %5452 = vmatprep.subr.mxu0 0.0
          %5453 = vmatpush1.msra.mxu0 0.0
          %5454 = vmatprep.subr.mxu0 0.0
          %5455 = vmatpush1.msra.mxu0 0.0
          %5456 = vmatprep.subr.mxu0 0.0
          %5457 = vmatpush1.msra.mxu0 0.0
          %5458 = vmatprep.subr.mxu0 0.0
          %5459 = vmatpush1.msra.mxu0 0.0
          %5460 = vmatprep.subr.mxu0 0.0
          %5461 = vmatpush1.msra.mxu0 0.0
          %5462 = vmatprep.mubr.f32.mxu0 0.0
          %5463 = vmatmul.mubr.f32.gmra.mrb[0].mxu0 %v5396
          %v5464 = vpop.f32.mrb[0].mxu0
          %v5465 = vadd.f32 0.0, %v5464
          %v5466 = vpop.f32.mrb[0].mxu0
          %v5467 = vadd.f32 0.0, %v5466
          %5468 = vdwg.mxu0
          %v5471 = vcombine.low %v5465, %v5467
          %v5473 = vunpack.c.l.s4 1966171168
          %v5474 = vunpack.c.0.s8 %v5473
          %v5475 = vlaneseq
          %v5476 = vshrl.u32 %v5475, 7
          %v5477 = vsub.s32 %v5474, %v5476
          %v5478 = vrot.slane %v5471, %v5477
          %v5480 = vunpack.c.l.s4 1966171168
          %v5481 = vunpack.c.0.s8 %v5480
          %v5482 = vlaneseq
          %v5483 = vshrl.u32 %v5482, 7
          %v5484 = vsub.s32 %v5481, %v5483
          %v5485 = vrot.slane %v5478, %v5484
          %v5487 = vadd.f32 %v5363, %v5485
          %v5488 = vld [vmem:[#allocation23] sm:$0x3]
          %v5489 = vsub.f32 %v5487, %v5488
          %v5490 = vld [vmem:[#allocation24] sm:$0x3]
          %v5491 = vadd.f32 %v5490, 1e-05
          %v5492 = vrsqrt.pop %v5491
          %v5493 = vmul.f32 %v5489, %v5492
          %v5494 = vld [vmem:[#allocation20] sm:$0x3]
          %v5495 = vmul.f32 %v5493, %v5494
          %v5496 = vld [vmem:[#allocation21] sm:$0x3]
          %v5497 = vadd.f32 %v5495, %v5496
          %v5498 = vmax.f32 %v5497, 0.0
          %v5499 = vld [vmem:[#allocation26] sm:$0x3]
          %v5500 = vmul.f32 %v5498, %v5499
          %v5502 = vlaneseq
          %v5503 = vshrl.u32 %v5502, 7
          %v5504 = vsub.s32 0, %v5503
          %v5505 = vrot.slane %v5500, %v5504
          %v5506 = vlaneseq
          %v5507 = vshrl.u32 %v5506, 7
          %v5508 = vsub.s32 1, %v5507
          %v5509 = vrot.slane %v5500, %v5508
          %v5512 = vsel %vm1325, %v5505, 0.0
          %v5513 = vsel %vm1325, %v5509, 0.0
          %v5514 = vadd.f32 %v5512, %v5513
          %5515 = vadd.xlane.f32.xlu0 %v5514
          %v5516 = vpop.xlane.xlu0 %5515
          %v5517 = vld [vmem:[#allocation3] sm:$0x1]
          %v5518 = vadd.f32 %v5516, %v5517
          %vm5519 = vcmask 0
          %5520 = vst.msk [vmem:[%s850] sm:$0x1] %vm5519, %v5518
        $region164: #{dqn_forward.1} parent=91 // pred_fallthru
          _
        %p5521 = scmp.lt.s32.totalorder %s47, 1
        %s5522 = scalar_select %p5521, %s47, 1
        %s5523 = scalar_lea.vmem %s18, %s5522
        // Predicated region
        $region165: #{dqn_forward.1} parent=91 // pred_check
          %p5524 = pneg %p463
        $region166: #{dqn_forward.1} parent=91 // pred_check_branch
          %5526 = sbr.rel (%p5524) target = $region168
        $region167: #{dqn_forward.1} parent=91 // pred_region
          _
        $region168: #{dqn_forward.1} parent=91 // pred_fallthru
          _
      $region92: #{dqn_forward.1} parent=5 // pred_fallthru
        _
      %p5527 = scmp.le.s32.totalorder 2, %s38
      // Predicated region
      $region169: #{dqn_forward.1} parent=5 // pred_check
        %p5528 = pneg %p5527
      $region170: #{dqn_forward.1} parent=5 // pred_check_branch
        %5530 = sbr.rel (%p5528) target = $region172
      $region171: #{dqn_forward.1} parent=5 // pred_region
        %s5531 = ssub.s32 %s38, 2
        // Predicated region
        $region173: #{dqn_forward.1} parent=171 // pred_check
          %p5532 = pneg %p469
        $region174: #{dqn_forward.1} parent=171 // pred_check_branch
          %5534 = sbr.rel (%p5532) target = $region176
        $region175: #{dqn_forward.1} parent=171 // pred_region
          %p5535 = scmp.lt.s32.totalorder %s49, 1
          %s5536 = scalar_select %p5535, %s49, 1
          %s5537 = scalar_lea.vmem %s18, %s5536
        $region176: #{dqn_forward.1} parent=171 // pred_fallthru
          _
      $region172: #{dqn_forward.1} parent=5 // pred_fallthru
        _
    $region6: #{dqn_forward.1} parent=1 // loop_footer
      %s42 = sadd.s32 1, %s38
    $region7: #{dqn_forward.1} parent=1 // loop_footer_branch
      %37 = sbr.rel target = $region3
    $region8: #{dqn_forward.1} parent=1 // loop_exit
      _
    %5538 = vsyncpa [#allocation5], 1
    %s5539 = scalar_lea.sflag [#allocation5], 1
    %5540 = vsyncpa %s5539, 1
    %5541 = vsyncpa [#allocation7], 1
    %s5542 = scalar_lea.sflag [#allocation7], 1
    %5543 = vsyncpa %s5542, 1
    %5544 = vsyncpa [#allocation10], 1
    %5545 = vsyncpa [#allocation13], 1
    %5546 = vsyncpa [#allocation16], 1
    %5547 = vsyncpa [#allocation19], 1
    %5548 = vsyncpa [#allocation22], 1
    %5549 = vsyncpa [#allocation25], 1

</llo_original>
